<compile_context>
chip_gen: v6e
topology: v6e:2x2x1
jax: 0.10.0
libtpu: 0.0.40
codegen_flags: <defaults>
</compile_context>

<pallas_src>
import math
from functools import partial

import jax
import jax.numpy as jnp
from jax.experimental import pallas as pl
from jax.experimental.pallas import tpu as pltpu

# ---------------- model config (tiny BERT) ----------------
VOCAB = 100
TYPE_VOCAB = 2
MAX_POS = 16
HIDDEN = 32
NUM_HEADS = 4
HEAD_DIM = HIDDEN // NUM_HEADS
INTERMEDIATE = 64
NUM_LAYERS = 2
LN_EPS = 1e-12

BATCH = 2
SEQ = 8


# ---------------- in-kernel helpers ----------------
def _layernorm(x, gamma, beta):
    mu = jnp.mean(x, axis=-1, keepdims=True)
    var = jnp.mean((x - mu) * (x - mu), axis=-1, keepdims=True)
    return (x - mu) * jax.lax.rsqrt(var + LN_EPS) * gamma + beta


# ---------------- fused encoder kernel ----------------
def bert_encoder_kernel(B, S, emb_ref, bias_ref, emb_ln_ref,
                        wqkv_ref, bqkv_ref, wo_ref, hvecs_ref,
                        w1_ref, b1_ref, w2_ref, pool_w_ref, pool_b_ref,
                        hid_ref, pool_ref):
    # embedding LayerNorm
    eln = emb_ln_ref[...]                                     # (2, H): [gamma; beta]
    x = _layernorm(emb_ref[...], eln[0:1, :], eln[1:2, :])    # (B*S, H)

    for l in range(NUM_LAYERS):                               # static unroll (L=2)
        hv = hvecs_ref[l]                                     # (6, H)
        bo, g1, be1 = hv[0:1], hv[1:2], hv[2:3]
        b2, g2, be2 = hv[3:4], hv[4:5], hv[5:6]

        # fused QKV projection: one MXU matmul (1/sqrt(head_dim) folded into Wq)
        qkv = jnp.dot(x, wqkv_ref[l],
                      preferred_element_type=jnp.float32) + bqkv_ref[l]   # (B*S, 3H)

        ctx_rows = []
        for b in range(B):                                    # static loop (B=2)
            qkv_b = qkv[b * S:(b + 1) * S, :]                 # (S, 3H)
            # head-major rearrangement using only a 2-D transpose, a natural
            # leading-dim split and a minor-dims swap (no lane slicing/concat).
            heads = qkv_b.T.reshape(3 * NUM_HEADS, HEAD_DIM, S)   # (3NH, HD, S)
            heads = jnp.swapaxes(heads, 1, 2)                     # (3NH, S, HD)
            q_h = heads[0:NUM_HEADS]                              # (NH, S, HD)
            k_h = heads[NUM_HEADS:2 * NUM_HEADS]
            v_h = heads[2 * NUM_HEADS:3 * NUM_HEADS]

            s = jnp.einsum('hqd,hkd->hqk', q_h, k_h,
                           preferred_element_type=jnp.float32)    # (NH, S, S)
            s = s + bias_ref[b]                                   # additive mask bias
            s = s - jnp.max(s, axis=-1, keepdims=True)
            p = jnp.exp(s)
            p = p * pl.reciprocal(jnp.sum(p, axis=-1, keepdims=True), approx=True)
            c = jnp.einsum('hqk,hkd->hqd', p, v_h,
                           preferred_element_type=jnp.float32)    # (NH, S, HD)
            c = jnp.swapaxes(c, 1, 2).reshape(HIDDEN, S)          # (H, S)
            ctx_rows.append(c.T)                                  # (S, H)
        ctx = jnp.concatenate(ctx_rows, axis=0)                   # (B*S, H)

        attn_out = jnp.dot(ctx, wo_ref[l],
                           preferred_element_type=jnp.float32) + bo
        h1 = _layernorm(x + attn_out, g1, be1)

        ff = jnp.dot(h1, w1_ref[l], preferred_element_type=jnp.float32) + b1_ref[l]
        # TODO(synk): HF BERT default is exact (erf) GELU; tanh approximation used here.
        ff = jax.nn.gelu(ff, approximate=True)
        ff = jnp.dot(ff, w2_ref[l], preferred_element_type=jnp.float32) + b2
        x = _layernorm(h1 + ff, g2, be2)

    hid_ref[...] = x

    # pooler on the [CLS] row of each batch element
    cls = jnp.concatenate([x[b * S:b * S + 1, :] for b in range(B)], axis=0)   # (B, H)
    pool_ref[...] = jnp.tanh(
        jnp.dot(cls, pool_w_ref[...], preferred_element_type=jnp.float32)
        + pool_b_ref[...])


# ---------------- Pallas wrapper ----------------
def _vmem_spec():
    return pl.BlockSpec(memory_space=pltpu.MemorySpace.VMEM)


@jax.jit
def bert_forward(params, input_ids, attention_mask):
    B, S = input_ids.shape
    H = HIDDEN

    # embedding gather + sum is glue, done in plain JAX
    emb = (jnp.take(params["word_emb"], input_ids, axis=0)
           + params["pos_emb"][None, :S, :]
           + params["type_emb"][0][None, None, :])
    emb2d = emb.reshape(B * S, H).astype(jnp.float32)

    # full additive attention-mask bias built outside the kernel: (B, S, S)
    bias = (1.0 - attention_mask.astype(jnp.float32)) * -1e9          # (B, S)
    bias = jnp.broadcast_to(bias[:, None, :], (B, S, S))

    args = (emb2d, bias, params["emb_ln"],
            params["wqkv"], params["bqkv"], params["wo"], params["hvecs"],
            params["w1"], params["b1"], params["w2"],
            params["wp"], params["bp"])

    n = B * S
    flops = NUM_LAYERS * (2 * n * H * 3 * H
                          + 4 * B * NUM_HEADS * S * S * HEAD_DIM
                          + 2 * n * H * H
                          + 4 * n * H * INTERMEDIATE) + 2 * B * H * H
    transcendentals = NUM_LAYERS * (B * NUM_HEADS * S * S + n * INTERMEDIATE + 5 * n) + B * H
    bytes_accessed = 4 * (sum(int(a.size) for a in args) + n * H + B * H)

    hid2d, pooled = pl.pallas_call(
        partial(bert_encoder_kernel, B, S),
        out_shape=(jax.ShapeDtypeStruct((B * S, H), jnp.float32),
                   jax.ShapeDtypeStruct((B, H), jnp.float32)),
        in_specs=[_vmem_spec() for _ in args],
        out_specs=(_vmem_spec(), _vmem_spec()),
        cost_estimate=pl.CostEstimate(flops=flops,
                                      transcendentals=transcendentals,
                                      bytes_accessed=bytes_accessed),
    )(*args)

    # matches HF BertModel: (last_hidden_state, pooler_output)
    return hid2d.reshape(B, S, H), pooled


# ---------------- parameter init (deterministic, pre-packed) ----------------
def init_params(key):
    std = 0.02
    keys = iter(jax.random.split(key, 64))

    def dense(din, dout):
        return (std * jax.random.normal(next(keys), (din, dout), jnp.float32),
                jnp.zeros((1, dout), jnp.float32))

    scale = 1.0 / math.sqrt(HEAD_DIM)

    wqkv_l, bqkv_l, wo_l, hvec_l, w1_l, b1_l, w2_l = [], [], [], [], [], [], []
    for _ in range(NUM_LAYERS):
        wq, bq = dense(HIDDEN, HIDDEN)
        wk, bk = dense(HIDDEN, HIDDEN)
        wv, bv = dense(HIDDEN, HIDDEN)
        wo, bo = dense(HIDDEN, HIDDEN)
        w1, b1 = dense(HIDDEN, INTERMEDIATE)
        w2, b2 = dense(INTERMEDIATE, HIDDEN)
        g1 = jnp.ones((1, HIDDEN), jnp.float32)
        be1 = jnp.zeros((1, HIDDEN), jnp.float32)
        g2 = jnp.ones((1, HIDDEN), jnp.float32)
        be2 = jnp.zeros((1, HIDDEN), jnp.float32)
        # fuse QKV; fold the attention scale 1/sqrt(head_dim) into Wq / bq
        wqkv_l.append(jnp.concatenate([wq * scale, wk, wv], axis=1))    # (H, 3H)
        bqkv_l.append(jnp.concatenate([bq * scale, bk, bv], axis=1))    # (1, 3H)
        wo_l.append(wo)
        hvec_l.append(jnp.concatenate([bo, g1, be1, b2, g2, be2], axis=0))   # (6, H)
        w1_l.append(w1)
        b1_l.append(b1)
        w2_l.append(w2)

    wp, bp = dense(HIDDEN, HIDDEN)
    return {
        "word_emb": std * jax.random.normal(next(keys), (VOCAB, HIDDEN), jnp.float32),
        "pos_emb": std * jax.random.normal(next(keys), (MAX_POS, HIDDEN), jnp.float32),
        "type_emb": std * jax.random.normal(next(keys), (TYPE_VOCAB, HIDDEN), jnp.float32),
        "emb_ln": jnp.concatenate([jnp.ones((1, HIDDEN), jnp.float32),
                                   jnp.zeros((1, HIDDEN), jnp.float32)], axis=0),  # (2, H)
        "wqkv": jnp.stack(wqkv_l),    # (L, H, 3H)
        "bqkv": jnp.stack(bqkv_l),    # (L, 1, 3H)
        "wo": jnp.stack(wo_l),        # (L, H, H)
        "hvecs": jnp.stack(hvec_l),   # (L, 6, H): bo, g1, be1, b2, g2, be2
        "w1": jnp.stack(w1_l),        # (L, H, I)
        "b1": jnp.stack(b1_l),        # (L, 1, I)
        "w2": jnp.stack(w2_l),        # (L, I, H)
        "wp": wp, "bp": bp,
    }


if __name__ == "__main__":
    key = jax.random.PRNGKey(0)
    pkey, idkey = jax.random.split(key)
    params = init_params(pkey)

    input_ids = jax.random.randint(idkey, (BATCH, SEQ), 0, VOCAB, dtype=jnp.int32)
    attention_mask = jnp.array(
        [[1, 1, 1, 1, 1, 1, 1, 0],
         [1, 1, 1, 1, 1, 0, 0, 0]], dtype=jnp.int32)

    last_hidden, pooled = bert_forward(params, input_ids, attention_mask)
    jax.block_until_ready((last_hidden, pooled))

    assert last_hidden.shape == (BATCH, SEQ, HIDDEN)
    assert pooled.shape == (BATCH, HIDDEN)
    assert bool(jnp.all(jnp.isfinite(last_hidden))) and bool(jnp.all(jnp.isfinite(pooled)))
    print("KERNEL_OK")
</pallas_src>

<mosaic_0001>
module attributes {stable_mosaic.version = 11 : i64} {
  func.func @bert_encoder_kernel(%arg0: memref<16x32xf32, #tpu.memory_space<vmem>>, %arg1: memref<2x8x8xf32, #tpu.memory_space<vmem>>, %arg2: memref<2x32xf32, #tpu.memory_space<vmem>>, %arg3: memref<2x32x96xf32, #tpu.memory_space<vmem>>, %arg4: memref<2x1x96xf32, #tpu.memory_space<vmem>>, %arg5: memref<2x32x32xf32, #tpu.memory_space<vmem>>, %arg6: memref<2x6x32xf32, #tpu.memory_space<vmem>>, %arg7: memref<2x32x64xf32, #tpu.memory_space<vmem>>, %arg8: memref<2x1x64xf32, #tpu.memory_space<vmem>>, %arg9: memref<2x64x32xf32, #tpu.memory_space<vmem>>, %arg10: memref<32x32xf32, #tpu.memory_space<vmem>>, %arg11: memref<1x32xf32, #tpu.memory_space<vmem>>, %arg12: memref<16x32xf32, #tpu.memory_space<vmem>>, %arg13: memref<2x32xf32, #tpu.memory_space<vmem>>) attributes {dimension_semantics = [], scalar_prefetch = 0 : i64, scratch_operands = 0 : i64, tpu.core_type = #tpu.core_type<tc>} {
    %c0 = arith.constant 0 : index
    %c0_0 = arith.constant 0 : index
    %0 = vector.load %arg2[%c0, %c0_0] : memref<2x32xf32, #tpu.memory_space<vmem>>, vector<2x32xf32>
    %c0_1 = arith.constant 0 : index
    %c0_2 = arith.constant 0 : index
    %1 = vector.load %arg0[%c0_1, %c0_2] : memref<16x32xf32, #tpu.memory_space<vmem>>, vector<16x32xf32>
    %2 = vector.extract_strided_slice %0 {offsets = [0, 0], sizes = [1, 32], strides = [1, 1]} : vector<2x32xf32> to vector<1x32xf32>
    %3 = vector.extract_strided_slice %0 {offsets = [1, 0], sizes = [1, 32], strides = [1, 1]} : vector<2x32xf32> to vector<1x32xf32>
    %cst = arith.constant dense<0.000000e+00> : vector<16xf32>
    %4 = vector.multi_reduction <add>, %1, %cst [1] : vector<16x32xf32> to vector<16xf32>
    %5 = vector.shape_cast %4 : vector<16xf32> to vector<16x1xf32>
    %cst_3 = arith.constant 3.200000e+01 : f32
    %6 = vector.broadcast %cst_3 : f32 to vector<16x1xf32>
    %7 = arith.divf %5, %6 : vector<16x1xf32>
    %8 = vector.broadcast %7 : vector<16x1xf32> to vector<16x32xf32>
    %9 = arith.subf %1, %8 : vector<16x32xf32>
    %10 = vector.broadcast %7 : vector<16x1xf32> to vector<16x32xf32>
    %11 = arith.subf %1, %10 : vector<16x32xf32>
    %12 = arith.mulf %9, %11 : vector<16x32xf32>
    %cst_4 = arith.constant dense<0.000000e+00> : vector<16xf32>
    %13 = vector.multi_reduction <add>, %12, %cst_4 [1] : vector<16x32xf32> to vector<16xf32>
    %14 = vector.shape_cast %13 : vector<16xf32> to vector<16x1xf32>
    %cst_5 = arith.constant 3.200000e+01 : f32
    %15 = vector.broadcast %cst_5 : f32 to vector<16x1xf32>
    %16 = arith.divf %14, %15 : vector<16x1xf32>
    %17 = vector.broadcast %7 : vector<16x1xf32> to vector<16x32xf32>
    %18 = arith.subf %1, %17 : vector<16x32xf32>
    %cst_6 = arith.constant 9.99999996E-13 : f32
    %19 = vector.broadcast %cst_6 : f32 to vector<16x1xf32>
    %20 = arith.addf %16, %19 : vector<16x1xf32>
    %21 = math.rsqrt %20 : vector<16x1xf32>
    %22 = vector.broadcast %21 : vector<16x1xf32> to vector<16x32xf32>
    %23 = arith.mulf %18, %22 : vector<16x32xf32>
    %24 = vector.broadcast %2 : vector<1x32xf32> to vector<16x32xf32>
    %25 = arith.mulf %23, %24 : vector<16x32xf32>
    %26 = vector.broadcast %3 : vector<1x32xf32> to vector<16x32xf32>
    %27 = arith.addf %25, %26 : vector<16x32xf32>
    %c0_7 = arith.constant 0 : index
    %c0_8 = arith.constant 0 : index
    %c0_9 = arith.constant 0 : index
    %28 = vector.load %arg6[%c0_7, %c0_8, %c0_9] : memref<2x6x32xf32, #tpu.memory_space<vmem>>, vector<1x6x32xf32>
    %29 = vector.shape_cast %28 : vector<1x6x32xf32> to vector<6x32xf32>
    %30 = vector.extract_strided_slice %29 {offsets = [0, 0], sizes = [1, 32], strides = [1, 1]} : vector<6x32xf32> to vector<1x32xf32>
    %31 = vector.extract_strided_slice %29 {offsets = [1, 0], sizes = [1, 32], strides = [1, 1]} : vector<6x32xf32> to vector<1x32xf32>
    %32 = vector.extract_strided_slice %29 {offsets = [2, 0], sizes = [1, 32], strides = [1, 1]} : vector<6x32xf32> to vector<1x32xf32>
    %33 = vector.extract_strided_slice %29 {offsets = [3, 0], sizes = [1, 32], strides = [1, 1]} : vector<6x32xf32> to vector<1x32xf32>
    %34 = vector.extract_strided_slice %29 {offsets = [4, 0], sizes = [1, 32], strides = [1, 1]} : vector<6x32xf32> to vector<1x32xf32>
    %35 = vector.extract_strided_slice %29 {offsets = [5, 0], sizes = [1, 32], strides = [1, 1]} : vector<6x32xf32> to vector<1x32xf32>
    %c0_10 = arith.constant 0 : index
    %c0_11 = arith.constant 0 : index
    %c0_12 = arith.constant 0 : index
    %36 = vector.load %arg3[%c0_10, %c0_11, %c0_12] : memref<2x32x96xf32, #tpu.memory_space<vmem>>, vector<1x32x96xf32>
    %37 = vector.shape_cast %36 : vector<1x32x96xf32> to vector<32x96xf32>
    %cst_13 = arith.constant dense<0.000000e+00> : vector<16x96xf32>
    %38 = tpu.matmul %27, %37, %cst_13 {dimension_numbers = #tpu.dot_dimension_numbers<[1], [0], [0], [1], [0, 0, 1, 1], [], []>} : vector<16x32xf32>, vector<32x96xf32>, vector<16x96xf32> -> vector<16x96xf32>
    %c0_14 = arith.constant 0 : index
    %c0_15 = arith.constant 0 : index
    %c0_16 = arith.constant 0 : index
    %39 = vector.load %arg4[%c0_14, %c0_15, %c0_16] : memref<2x1x96xf32, #tpu.memory_space<vmem>>, vector<1x1x96xf32>
    %40 = vector.shape_cast %39 : vector<1x1x96xf32> to vector<1x96xf32>
    %41 = vector.broadcast %40 : vector<1x96xf32> to vector<16x96xf32>
    %42 = arith.addf %38, %41 : vector<16x96xf32>
    %43 = vector.extract_strided_slice %42 {offsets = [0, 0], sizes = [8, 96], strides = [1, 1]} : vector<16x96xf32> to vector<8x96xf32>
    %44 = tpu.transpose %43, [1, 0] : vector<8x96xf32> -> vector<96x8xf32>
    %45 = vector.shape_cast %44 : vector<96x8xf32> to vector<12x8x8xf32>
    %46 = tpu.transpose %45, [0, 2, 1] : vector<12x8x8xf32> -> vector<12x8x8xf32>
    %47 = vector.extract_strided_slice %46 {offsets = [0, 0, 0], sizes = [4, 8, 8], strides = [1, 1, 1]} : vector<12x8x8xf32> to vector<4x8x8xf32>
    %48 = vector.extract_strided_slice %46 {offsets = [4, 0, 0], sizes = [4, 8, 8], strides = [1, 1, 1]} : vector<12x8x8xf32> to vector<4x8x8xf32>
    %49 = vector.extract_strided_slice %46 {offsets = [8, 0, 0], sizes = [4, 8, 8], strides = [1, 1, 1]} : vector<12x8x8xf32> to vector<4x8x8xf32>
    "tpu.trace_start"() <{level = 10 : i32, message = "hqd,hkd->hqk"}> : () -> ()
    %cst_17 = arith.constant dense<0.000000e+00> : vector<4x8x8xf32>
    %50 = tpu.matmul %47, %48, %cst_17 {dimension_numbers = #tpu.dot_dimension_numbers<[2], [2], [1], [1], [0, 0, 0, 1, 1, 1], [0], [0]>} : vector<4x8x8xf32>, vector<4x8x8xf32>, vector<4x8x8xf32> -> vector<4x8x8xf32>
    "tpu.trace_stop"() : () -> ()
    %c0_18 = arith.constant 0 : index
    %c0_19 = arith.constant 0 : index
    %c0_20 = arith.constant 0 : index
    %51 = vector.load %arg1[%c0_18, %c0_19, %c0_20] : memref<2x8x8xf32, #tpu.memory_space<vmem>>, vector<1x8x8xf32>
    %52 = vector.shape_cast %51 : vector<1x8x8xf32> to vector<8x8xf32>
    %53 = vector.shape_cast %52 : vector<8x8xf32> to vector<1x8x8xf32>
    %54 = vector.broadcast %53 : vector<1x8x8xf32> to vector<4x8x8xf32>
    %55 = arith.addf %50, %54 : vector<4x8x8xf32>
    %cst_21 = arith.constant dense<0xFF800000> : vector<4x8xf32>
    %56 = vector.multi_reduction <maximumf>, %55, %cst_21 [2] : vector<4x8x8xf32> to vector<4x8xf32>
    %57 = vector.shape_cast %56 : vector<4x8xf32> to vector<4x8x1xf32>
    %58 = vector.broadcast %57 : vector<4x8x1xf32> to vector<4x8x8xf32>
    %59 = arith.subf %55, %58 : vector<4x8x8xf32>
    %60 = math.exp %59 : vector<4x8x8xf32>
    %cst_22 = arith.constant dense<0.000000e+00> : vector<4x8xf32>
    %61 = vector.multi_reduction <add>, %60, %cst_22 [2] : vector<4x8x8xf32> to vector<4x8xf32>
    %62 = vector.shape_cast %61 : vector<4x8xf32> to vector<4x8x1xf32>
    %63 = tpu.reciprocal %62 {approx = true} : vector<4x8x1xf32> -> vector<4x8x1xf32>
    %64 = vector.broadcast %63 : vector<4x8x1xf32> to vector<4x8x8xf32>
    %65 = arith.mulf %60, %64 : vector<4x8x8xf32>
    "tpu.trace_start"() <{level = 10 : i32, message = "hqk,hkd->hqd"}> : () -> ()
    %cst_23 = arith.constant dense<0.000000e+00> : vector<4x8x8xf32>
    %66 = tpu.matmul %65, %49, %cst_23 {dimension_numbers = #tpu.dot_dimension_numbers<[2], [1], [1], [2], [0, 0, 0, 1, 1, 2], [0], [0]>} : vector<4x8x8xf32>, vector<4x8x8xf32>, vector<4x8x8xf32> -> vector<4x8x8xf32>
    "tpu.trace_stop"() : () -> ()
    %67 = tpu.transpose %66, [0, 2, 1] : vector<4x8x8xf32> -> vector<4x8x8xf32>
    %68 = vector.shape_cast %67 : vector<4x8x8xf32> to vector<32x8xf32>
    %69 = tpu.transpose %68, [1, 0] : vector<32x8xf32> -> vector<8x32xf32>
    %70 = vector.extract_strided_slice %42 {offsets = [8, 0], sizes = [8, 96], strides = [1, 1]} : vector<16x96xf32> to vector<8x96xf32>
    %71 = tpu.transpose %70, [1, 0] : vector<8x96xf32> -> vector<96x8xf32>
    %72 = vector.shape_cast %71 : vector<96x8xf32> to vector<12x8x8xf32>
    %73 = tpu.transpose %72, [0, 2, 1] : vector<12x8x8xf32> -> vector<12x8x8xf32>
    %74 = vector.extract_strided_slice %73 {offsets = [0, 0, 0], sizes = [4, 8, 8], strides = [1, 1, 1]} : vector<12x8x8xf32> to vector<4x8x8xf32>
    %75 = vector.extract_strided_slice %73 {offsets = [4, 0, 0], sizes = [4, 8, 8], strides = [1, 1, 1]} : vector<12x8x8xf32> to vector<4x8x8xf32>
    %76 = vector.extract_strided_slice %73 {offsets = [8, 0, 0], sizes = [4, 8, 8], strides = [1, 1, 1]} : vector<12x8x8xf32> to vector<4x8x8xf32>
    "tpu.trace_start"() <{level = 10 : i32, message = "hqd,hkd->hqk"}> : () -> ()
    %cst_24 = arith.constant dense<0.000000e+00> : vector<4x8x8xf32>
    %77 = tpu.matmul %74, %75, %cst_24 {dimension_numbers = #tpu.dot_dimension_numbers<[2], [2], [1], [1], [0, 0, 0, 1, 1, 1], [0], [0]>} : vector<4x8x8xf32>, vector<4x8x8xf32>, vector<4x8x8xf32> -> vector<4x8x8xf32>
    "tpu.trace_stop"() : () -> ()
    %c1 = arith.constant 1 : index
    %c0_25 = arith.constant 0 : index
    %c0_26 = arith.constant 0 : index
    %78 = vector.load %arg1[%c1, %c0_25, %c0_26] : memref<2x8x8xf32, #tpu.memory_space<vmem>>, vector<1x8x8xf32>
    %79 = vector.shape_cast %78 : vector<1x8x8xf32> to vector<8x8xf32>
    %80 = vector.shape_cast %79 : vector<8x8xf32> to vector<1x8x8xf32>
    %81 = vector.broadcast %80 : vector<1x8x8xf32> to vector<4x8x8xf32>
    %82 = arith.addf %77, %81 : vector<4x8x8xf32>
    %cst_27 = arith.constant dense<0xFF800000> : vector<4x8xf32>
    %83 = vector.multi_reduction <maximumf>, %82, %cst_27 [2] : vector<4x8x8xf32> to vector<4x8xf32>
    %84 = vector.shape_cast %83 : vector<4x8xf32> to vector<4x8x1xf32>
    %85 = vector.broadcast %84 : vector<4x8x1xf32> to vector<4x8x8xf32>
    %86 = arith.subf %82, %85 : vector<4x8x8xf32>
    %87 = math.exp %86 : vector<4x8x8xf32>
    %cst_28 = arith.constant dense<0.000000e+00> : vector<4x8xf32>
    %88 = vector.multi_reduction <add>, %87, %cst_28 [2] : vector<4x8x8xf32> to vector<4x8xf32>
    %89 = vector.shape_cast %88 : vector<4x8xf32> to vector<4x8x1xf32>
    %90 = tpu.reciprocal %89 {approx = true} : vector<4x8x1xf32> -> vector<4x8x1xf32>
    %91 = vector.broadcast %90 : vector<4x8x1xf32> to vector<4x8x8xf32>
    %92 = arith.mulf %87, %91 : vector<4x8x8xf32>
    "tpu.trace_start"() <{level = 10 : i32, message = "hqk,hkd->hqd"}> : () -> ()
    %cst_29 = arith.constant dense<0.000000e+00> : vector<4x8x8xf32>
    %93 = tpu.matmul %92, %76, %cst_29 {dimension_numbers = #tpu.dot_dimension_numbers<[2], [1], [1], [2], [0, 0, 0, 1, 1, 2], [0], [0]>} : vector<4x8x8xf32>, vector<4x8x8xf32>, vector<4x8x8xf32> -> vector<4x8x8xf32>
    "tpu.trace_stop"() : () -> ()
    %94 = tpu.transpose %93, [0, 2, 1] : vector<4x8x8xf32> -> vector<4x8x8xf32>
    %95 = vector.shape_cast %94 : vector<4x8x8xf32> to vector<32x8xf32>
    %96 = tpu.transpose %95, [1, 0] : vector<32x8xf32> -> vector<8x32xf32>
    %97 = tpu.concatenate %69, %96 in 0 : vector<8x32xf32>, vector<8x32xf32> -> vector<16x32xf32>
    %c0_30 = arith.constant 0 : index
    %c0_31 = arith.constant 0 : index
    %c0_32 = arith.constant 0 : index
    %98 = vector.load %arg5[%c0_30, %c0_31, %c0_32] : memref<2x32x32xf32, #tpu.memory_space<vmem>>, vector<1x32x32xf32>
    %99 = vector.shape_cast %98 : vector<1x32x32xf32> to vector<32x32xf32>
    %cst_33 = arith.constant dense<0.000000e+00> : vector<16x32xf32>
    %100 = tpu.matmul %97, %99, %cst_33 {dimension_numbers = #tpu.dot_dimension_numbers<[1], [0], [0], [1], [0, 0, 1, 1], [], []>} : vector<16x32xf32>, vector<32x32xf32>, vector<16x32xf32> -> vector<16x32xf32>
    %101 = vector.broadcast %30 : vector<1x32xf32> to vector<16x32xf32>
    %102 = arith.addf %100, %101 : vector<16x32xf32>
    %103 = arith.addf %27, %102 : vector<16x32xf32>
    %cst_34 = arith.constant dense<0.000000e+00> : vector<16xf32>
    %104 = vector.multi_reduction <add>, %103, %cst_34 [1] : vector<16x32xf32> to vector<16xf32>
    %105 = vector.shape_cast %104 : vector<16xf32> to vector<16x1xf32>
    %cst_35 = arith.constant 3.200000e+01 : f32
    %106 = vector.broadcast %cst_35 : f32 to vector<16x1xf32>
    %107 = arith.divf %105, %106 : vector<16x1xf32>
    %108 = vector.broadcast %107 : vector<16x1xf32> to vector<16x32xf32>
    %109 = arith.subf %103, %108 : vector<16x32xf32>
    %110 = vector.broadcast %107 : vector<16x1xf32> to vector<16x32xf32>
    %111 = arith.subf %103, %110 : vector<16x32xf32>
    %112 = arith.mulf %109, %111 : vector<16x32xf32>
    %cst_36 = arith.constant dense<0.000000e+00> : vector<16xf32>
    %113 = vector.multi_reduction <add>, %112, %cst_36 [1] : vector<16x32xf32> to vector<16xf32>
    %114 = vector.shape_cast %113 : vector<16xf32> to vector<16x1xf32>
    %cst_37 = arith.constant 3.200000e+01 : f32
    %115 = vector.broadcast %cst_37 : f32 to vector<16x1xf32>
    %116 = arith.divf %114, %115 : vector<16x1xf32>
    %117 = vector.broadcast %107 : vector<16x1xf32> to vector<16x32xf32>
    %118 = arith.subf %103, %117 : vector<16x32xf32>
    %cst_38 = arith.constant 9.99999996E-13 : f32
    %119 = vector.broadcast %cst_38 : f32 to vector<16x1xf32>
    %120 = arith.addf %116, %119 : vector<16x1xf32>
    %121 = math.rsqrt %120 : vector<16x1xf32>
    %122 = vector.broadcast %121 : vector<16x1xf32> to vector<16x32xf32>
    %123 = arith.mulf %118, %122 : vector<16x32xf32>
    %124 = vector.broadcast %31 : vector<1x32xf32> to vector<16x32xf32>
    %125 = arith.mulf %123, %124 : vector<16x32xf32>
    %126 = vector.broadcast %32 : vector<1x32xf32> to vector<16x32xf32>
    %127 = arith.addf %125, %126 : vector<16x32xf32>
    %c0_39 = arith.constant 0 : index
    %c0_40 = arith.constant 0 : index
    %c0_41 = arith.constant 0 : index
    %128 = vector.load %arg7[%c0_39, %c0_40, %c0_41] : memref<2x32x64xf32, #tpu.memory_space<vmem>>, vector<1x32x64xf32>
    %129 = vector.shape_cast %128 : vector<1x32x64xf32> to vector<32x64xf32>
    %cst_42 = arith.constant dense<0.000000e+00> : vector<16x64xf32>
    %130 = tpu.matmul %127, %129, %cst_42 {dimension_numbers = #tpu.dot_dimension_numbers<[1], [0], [0], [1], [0, 0, 1, 1], [], []>} : vector<16x32xf32>, vector<32x64xf32>, vector<16x64xf32> -> vector<16x64xf32>
    %c0_43 = arith.constant 0 : index
    %c0_44 = arith.constant 0 : index
    %c0_45 = arith.constant 0 : index
    %131 = vector.load %arg8[%c0_43, %c0_44, %c0_45] : memref<2x1x64xf32, #tpu.memory_space<vmem>>, vector<1x1x64xf32>
    %132 = vector.shape_cast %131 : vector<1x1x64xf32> to vector<1x64xf32>
    %133 = vector.broadcast %132 : vector<1x64xf32> to vector<16x64xf32>
    %134 = arith.addf %130, %133 : vector<16x64xf32>
    %135 = arith.mulf %134, %134 : vector<16x64xf32>
    %136 = arith.mulf %134, %135 : vector<16x64xf32>
    %cst_46 = arith.constant 4.471500e-02 : f32
    %137 = vector.broadcast %cst_46 : f32 to vector<16x64xf32>
    %138 = arith.mulf %137, %136 : vector<16x64xf32>
    %139 = arith.addf %134, %138 : vector<16x64xf32>
    %cst_47 = arith.constant 0.797884583 : f32
    %140 = vector.broadcast %cst_47 : f32 to vector<16x64xf32>
    %141 = arith.mulf %140, %139 : vector<16x64xf32>
    %142 = math.tanh %141 : vector<16x64xf32>
    %cst_48 = arith.constant 1.000000e+00 : f32
    %143 = vector.broadcast %cst_48 : f32 to vector<16x64xf32>
    %144 = arith.addf %143, %142 : vector<16x64xf32>
    %cst_49 = arith.constant 5.000000e-01 : f32
    %145 = vector.broadcast %cst_49 : f32 to vector<16x64xf32>
    %146 = arith.mulf %145, %144 : vector<16x64xf32>
    %147 = arith.mulf %134, %146 : vector<16x64xf32>
    %c0_50 = arith.constant 0 : index
    %c0_51 = arith.constant 0 : index
    %c0_52 = arith.constant 0 : index
    %148 = vector.load %arg9[%c0_50, %c0_51, %c0_52] : memref<2x64x32xf32, #tpu.memory_space<vmem>>, vector<1x64x32xf32>
    %149 = vector.shape_cast %148 : vector<1x64x32xf32> to vector<64x32xf32>
    %cst_53 = arith.constant dense<0.000000e+00> : vector<16x32xf32>
    %150 = tpu.matmul %147, %149, %cst_53 {dimension_numbers = #tpu.dot_dimension_numbers<[1], [0], [0], [1], [0, 0, 1, 1], [], []>} : vector<16x64xf32>, vector<64x32xf32>, vector<16x32xf32> -> vector<16x32xf32>
    %151 = vector.broadcast %33 : vector<1x32xf32> to vector<16x32xf32>
    %152 = arith.addf %150, %151 : vector<16x32xf32>
    %153 = arith.addf %127, %152 : vector<16x32xf32>
    %cst_54 = arith.constant dense<0.000000e+00> : vector<16xf32>
    %154 = vector.multi_reduction <add>, %153, %cst_54 [1] : vector<16x32xf32> to vector<16xf32>
    %155 = vector.shape_cast %154 : vector<16xf32> to vector<16x1xf32>
    %cst_55 = arith.constant 3.200000e+01 : f32
    %156 = vector.broadcast %cst_55 : f32 to vector<16x1xf32>
    %157 = arith.divf %155, %156 : vector<16x1xf32>
    %158 = vector.broadcast %157 : vector<16x1xf32> to vector<16x32xf32>
    %159 = arith.subf %153, %158 : vector<16x32xf32>
    %160 = vector.broadcast %157 : vector<16x1xf32> to vector<16x32xf32>
    %161 = arith.subf %153, %160 : vector<16x32xf32>
    %162 = arith.mulf %159, %161 : vector<16x32xf32>
    %cst_56 = arith.constant dense<0.000000e+00> : vector<16xf32>
    %163 = vector.multi_reduction <add>, %162, %cst_56 [1] : vector<16x32xf32> to vector<16xf32>
    %164 = vector.shape_cast %163 : vector<16xf32> to vector<16x1xf32>
    %cst_57 = arith.constant 3.200000e+01 : f32
    %165 = vector.broadcast %cst_57 : f32 to vector<16x1xf32>
    %166 = arith.divf %164, %165 : vector<16x1xf32>
    %167 = vector.broadcast %157 : vector<16x1xf32> to vector<16x32xf32>
    %168 = arith.subf %153, %167 : vector<16x32xf32>
    %cst_58 = arith.constant 9.99999996E-13 : f32
    %169 = vector.broadcast %cst_58 : f32 to vector<16x1xf32>
    %170 = arith.addf %166, %169 : vector<16x1xf32>
    %171 = math.rsqrt %170 : vector<16x1xf32>
    %172 = vector.broadcast %171 : vector<16x1xf32> to vector<16x32xf32>
    %173 = arith.mulf %168, %172 : vector<16x32xf32>
    %174 = vector.broadcast %34 : vector<1x32xf32> to vector<16x32xf32>
    %175 = arith.mulf %173, %174 : vector<16x32xf32>
    %176 = vector.broadcast %35 : vector<1x32xf32> to vector<16x32xf32>
    %177 = arith.addf %175, %176 : vector<16x32xf32>
    %c1_59 = arith.constant 1 : index
    %c0_60 = arith.constant 0 : index
    %c0_61 = arith.constant 0 : index
    %178 = vector.load %arg6[%c1_59, %c0_60, %c0_61] : memref<2x6x32xf32, #tpu.memory_space<vmem>>, vector<1x6x32xf32>
    %179 = vector.shape_cast %178 : vector<1x6x32xf32> to vector<6x32xf32>
    %180 = vector.extract_strided_slice %179 {offsets = [0, 0], sizes = [1, 32], strides = [1, 1]} : vector<6x32xf32> to vector<1x32xf32>
    %181 = vector.extract_strided_slice %179 {offsets = [1, 0], sizes = [1, 32], strides = [1, 1]} : vector<6x32xf32> to vector<1x32xf32>
    %182 = vector.extract_strided_slice %179 {offsets = [2, 0], sizes = [1, 32], strides = [1, 1]} : vector<6x32xf32> to vector<1x32xf32>
    %183 = vector.extract_strided_slice %179 {offsets = [3, 0], sizes = [1, 32], strides = [1, 1]} : vector<6x32xf32> to vector<1x32xf32>
    %184 = vector.extract_strided_slice %179 {offsets = [4, 0], sizes = [1, 32], strides = [1, 1]} : vector<6x32xf32> to vector<1x32xf32>
    %185 = vector.extract_strided_slice %179 {offsets = [5, 0], sizes = [1, 32], strides = [1, 1]} : vector<6x32xf32> to vector<1x32xf32>
    %c1_62 = arith.constant 1 : index
    %c0_63 = arith.constant 0 : index
    %c0_64 = arith.constant 0 : index
    %186 = vector.load %arg3[%c1_62, %c0_63, %c0_64] : memref<2x32x96xf32, #tpu.memory_space<vmem>>, vector<1x32x96xf32>
    %187 = vector.shape_cast %186 : vector<1x32x96xf32> to vector<32x96xf32>
    %cst_65 = arith.constant dense<0.000000e+00> : vector<16x96xf32>
    %188 = tpu.matmul %177, %187, %cst_65 {dimension_numbers = #tpu.dot_dimension_numbers<[1], [0], [0], [1], [0, 0, 1, 1], [], []>} : vector<16x32xf32>, vector<32x96xf32>, vector<16x96xf32> -> vector<16x96xf32>
    %c1_66 = arith.constant 1 : index
    %c0_67 = arith.constant 0 : index
    %c0_68 = arith.constant 0 : index
    %189 = vector.load %arg4[%c1_66, %c0_67, %c0_68] : memref<2x1x96xf32, #tpu.memory_space<vmem>>, vector<1x1x96xf32>
    %190 = vector.shape_cast %189 : vector<1x1x96xf32> to vector<1x96xf32>
    %191 = vector.broadcast %190 : vector<1x96xf32> to vector<16x96xf32>
    %192 = arith.addf %188, %191 : vector<16x96xf32>
    %193 = vector.extract_strided_slice %192 {offsets = [0, 0], sizes = [8, 96], strides = [1, 1]} : vector<16x96xf32> to vector<8x96xf32>
    %194 = tpu.transpose %193, [1, 0] : vector<8x96xf32> -> vector<96x8xf32>
    %195 = vector.shape_cast %194 : vector<96x8xf32> to vector<12x8x8xf32>
    %196 = tpu.transpose %195, [0, 2, 1] : vector<12x8x8xf32> -> vector<12x8x8xf32>
    %197 = vector.extract_strided_slice %196 {offsets = [0, 0, 0], sizes = [4, 8, 8], strides = [1, 1, 1]} : vector<12x8x8xf32> to vector<4x8x8xf32>
    %198 = vector.extract_strided_slice %196 {offsets = [4, 0, 0], sizes = [4, 8, 8], strides = [1, 1, 1]} : vector<12x8x8xf32> to vector<4x8x8xf32>
    %199 = vector.extract_strided_slice %196 {offsets = [8, 0, 0], sizes = [4, 8, 8], strides = [1, 1, 1]} : vector<12x8x8xf32> to vector<4x8x8xf32>
    "tpu.trace_start"() <{level = 10 : i32, message = "hqd,hkd->hqk"}> : () -> ()
    %cst_69 = arith.constant dense<0.000000e+00> : vector<4x8x8xf32>
    %200 = tpu.matmul %197, %198, %cst_69 {dimension_numbers = #tpu.dot_dimension_numbers<[2], [2], [1], [1], [0, 0, 0, 1, 1, 1], [0], [0]>} : vector<4x8x8xf32>, vector<4x8x8xf32>, vector<4x8x8xf32> -> vector<4x8x8xf32>
    "tpu.trace_stop"() : () -> ()
    %c0_70 = arith.constant 0 : index
    %c0_71 = arith.constant 0 : index
    %c0_72 = arith.constant 0 : index
    %201 = vector.load %arg1[%c0_70, %c0_71, %c0_72] : memref<2x8x8xf32, #tpu.memory_space<vmem>>, vector<1x8x8xf32>
    %202 = vector.shape_cast %201 : vector<1x8x8xf32> to vector<8x8xf32>
    %203 = vector.shape_cast %202 : vector<8x8xf32> to vector<1x8x8xf32>
    %204 = vector.broadcast %203 : vector<1x8x8xf32> to vector<4x8x8xf32>
    %205 = arith.addf %200, %204 : vector<4x8x8xf32>
    %cst_73 = arith.constant dense<0xFF800000> : vector<4x8xf32>
    %206 = vector.multi_reduction <maximumf>, %205, %cst_73 [2] : vector<4x8x8xf32> to vector<4x8xf32>
    %207 = vector.shape_cast %206 : vector<4x8xf32> to vector<4x8x1xf32>
    %208 = vector.broadcast %207 : vector<4x8x1xf32> to vector<4x8x8xf32>
    %209 = arith.subf %205, %208 : vector<4x8x8xf32>
    %210 = math.exp %209 : vector<4x8x8xf32>
    %cst_74 = arith.constant dense<0.000000e+00> : vector<4x8xf32>
    %211 = vector.multi_reduction <add>, %210, %cst_74 [2] : vector<4x8x8xf32> to vector<4x8xf32>
    %212 = vector.shape_cast %211 : vector<4x8xf32> to vector<4x8x1xf32>
    %213 = tpu.reciprocal %212 {approx = true} : vector<4x8x1xf32> -> vector<4x8x1xf32>
    %214 = vector.broadcast %213 : vector<4x8x1xf32> to vector<4x8x8xf32>
    %215 = arith.mulf %210, %214 : vector<4x8x8xf32>
    "tpu.trace_start"() <{level = 10 : i32, message = "hqk,hkd->hqd"}> : () -> ()
    %cst_75 = arith.constant dense<0.000000e+00> : vector<4x8x8xf32>
    %216 = tpu.matmul %215, %199, %cst_75 {dimension_numbers = #tpu.dot_dimension_numbers<[2], [1], [1], [2], [0, 0, 0, 1, 1, 2], [0], [0]>} : vector<4x8x8xf32>, vector<4x8x8xf32>, vector<4x8x8xf32> -> vector<4x8x8xf32>
    "tpu.trace_stop"() : () -> ()
    %217 = tpu.transpose %216, [0, 2, 1] : vector<4x8x8xf32> -> vector<4x8x8xf32>
    %218 = vector.shape_cast %217 : vector<4x8x8xf32> to vector<32x8xf32>
    %219 = tpu.transpose %218, [1, 0] : vector<32x8xf32> -> vector<8x32xf32>
    %220 = vector.extract_strided_slice %192 {offsets = [8, 0], sizes = [8, 96], strides = [1, 1]} : vector<16x96xf32> to vector<8x96xf32>
    %221 = tpu.transpose %220, [1, 0] : vector<8x96xf32> -> vector<96x8xf32>
    %222 = vector.shape_cast %221 : vector<96x8xf32> to vector<12x8x8xf32>
    %223 = tpu.transpose %222, [0, 2, 1] : vector<12x8x8xf32> -> vector<12x8x8xf32>
    %224 = vector.extract_strided_slice %223 {offsets = [0, 0, 0], sizes = [4, 8, 8], strides = [1, 1, 1]} : vector<12x8x8xf32> to vector<4x8x8xf32>
    %225 = vector.extract_strided_slice %223 {offsets = [4, 0, 0], sizes = [4, 8, 8], strides = [1, 1, 1]} : vector<12x8x8xf32> to vector<4x8x8xf32>
    %226 = vector.extract_strided_slice %223 {offsets = [8, 0, 0], sizes = [4, 8, 8], strides = [1, 1, 1]} : vector<12x8x8xf32> to vector<4x8x8xf32>
    "tpu.trace_start"() <{level = 10 : i32, message = "hqd,hkd->hqk"}> : () -> ()
    %cst_76 = arith.constant dense<0.000000e+00> : vector<4x8x8xf32>
    %227 = tpu.matmul %224, %225, %cst_76 {dimension_numbers = #tpu.dot_dimension_numbers<[2], [2], [1], [1], [0, 0, 0, 1, 1, 1], [0], [0]>} : vector<4x8x8xf32>, vector<4x8x8xf32>, vector<4x8x8xf32> -> vector<4x8x8xf32>
    "tpu.trace_stop"() : () -> ()
    %c1_77 = arith.constant 1 : index
    %c0_78 = arith.constant 0 : index
    %c0_79 = arith.constant 0 : index
    %228 = vector.load %arg1[%c1_77, %c0_78, %c0_79] : memref<2x8x8xf32, #tpu.memory_space<vmem>>, vector<1x8x8xf32>
    %229 = vector.shape_cast %228 : vector<1x8x8xf32> to vector<8x8xf32>
    %230 = vector.shape_cast %229 : vector<8x8xf32> to vector<1x8x8xf32>
    %231 = vector.broadcast %230 : vector<1x8x8xf32> to vector<4x8x8xf32>
    %232 = arith.addf %227, %231 : vector<4x8x8xf32>
    %cst_80 = arith.constant dense<0xFF800000> : vector<4x8xf32>
    %233 = vector.multi_reduction <maximumf>, %232, %cst_80 [2] : vector<4x8x8xf32> to vector<4x8xf32>
    %234 = vector.shape_cast %233 : vector<4x8xf32> to vector<4x8x1xf32>
    %235 = vector.broadcast %234 : vector<4x8x1xf32> to vector<4x8x8xf32>
    %236 = arith.subf %232, %235 : vector<4x8x8xf32>
    %237 = math.exp %236 : vector<4x8x8xf32>
    %cst_81 = arith.constant dense<0.000000e+00> : vector<4x8xf32>
    %238 = vector.multi_reduction <add>, %237, %cst_81 [2] : vector<4x8x8xf32> to vector<4x8xf32>
    %239 = vector.shape_cast %238 : vector<4x8xf32> to vector<4x8x1xf32>
    %240 = tpu.reciprocal %239 {approx = true} : vector<4x8x1xf32> -> vector<4x8x1xf32>
    %241 = vector.broadcast %240 : vector<4x8x1xf32> to vector<4x8x8xf32>
    %242 = arith.mulf %237, %241 : vector<4x8x8xf32>
    "tpu.trace_start"() <{level = 10 : i32, message = "hqk,hkd->hqd"}> : () -> ()
    %cst_82 = arith.constant dense<0.000000e+00> : vector<4x8x8xf32>
    %243 = tpu.matmul %242, %226, %cst_82 {dimension_numbers = #tpu.dot_dimension_numbers<[2], [1], [1], [2], [0, 0, 0, 1, 1, 2], [0], [0]>} : vector<4x8x8xf32>, vector<4x8x8xf32>, vector<4x8x8xf32> -> vector<4x8x8xf32>
    "tpu.trace_stop"() : () -> ()
    %244 = tpu.transpose %243, [0, 2, 1] : vector<4x8x8xf32> -> vector<4x8x8xf32>
    %245 = vector.shape_cast %244 : vector<4x8x8xf32> to vector<32x8xf32>
    %246 = tpu.transpose %245, [1, 0] : vector<32x8xf32> -> vector<8x32xf32>
    %247 = tpu.concatenate %219, %246 in 0 : vector<8x32xf32>, vector<8x32xf32> -> vector<16x32xf32>
    %c1_83 = arith.constant 1 : index
    %c0_84 = arith.constant 0 : index
    %c0_85 = arith.constant 0 : index
    %248 = vector.load %arg5[%c1_83, %c0_84, %c0_85] : memref<2x32x32xf32, #tpu.memory_space<vmem>>, vector<1x32x32xf32>
    %249 = vector.shape_cast %248 : vector<1x32x32xf32> to vector<32x32xf32>
    %cst_86 = arith.constant dense<0.000000e+00> : vector<16x32xf32>
    %250 = tpu.matmul %247, %249, %cst_86 {dimension_numbers = #tpu.dot_dimension_numbers<[1], [0], [0], [1], [0, 0, 1, 1], [], []>} : vector<16x32xf32>, vector<32x32xf32>, vector<16x32xf32> -> vector<16x32xf32>
    %251 = vector.broadcast %180 : vector<1x32xf32> to vector<16x32xf32>
    %252 = arith.addf %250, %251 : vector<16x32xf32>
    %253 = arith.addf %177, %252 : vector<16x32xf32>
    %cst_87 = arith.constant dense<0.000000e+00> : vector<16xf32>
    %254 = vector.multi_reduction <add>, %253, %cst_87 [1] : vector<16x32xf32> to vector<16xf32>
    %255 = vector.shape_cast %254 : vector<16xf32> to vector<16x1xf32>
    %cst_88 = arith.constant 3.200000e+01 : f32
    %256 = vector.broadcast %cst_88 : f32 to vector<16x1xf32>
    %257 = arith.divf %255, %256 : vector<16x1xf32>
    %258 = vector.broadcast %257 : vector<16x1xf32> to vector<16x32xf32>
    %259 = arith.subf %253, %258 : vector<16x32xf32>
    %260 = vector.broadcast %257 : vector<16x1xf32> to vector<16x32xf32>
    %261 = arith.subf %253, %260 : vector<16x32xf32>
    %262 = arith.mulf %259, %261 : vector<16x32xf32>
    %cst_89 = arith.constant dense<0.000000e+00> : vector<16xf32>
    %263 = vector.multi_reduction <add>, %262, %cst_89 [1] : vector<16x32xf32> to vector<16xf32>
    %264 = vector.shape_cast %263 : vector<16xf32> to vector<16x1xf32>
    %cst_90 = arith.constant 3.200000e+01 : f32
    %265 = vector.broadcast %cst_90 : f32 to vector<16x1xf32>
    %266 = arith.divf %264, %265 : vector<16x1xf32>
    %267 = vector.broadcast %257 : vector<16x1xf32> to vector<16x32xf32>
    %268 = arith.subf %253, %267 : vector<16x32xf32>
    %cst_91 = arith.constant 9.99999996E-13 : f32
    %269 = vector.broadcast %cst_91 : f32 to vector<16x1xf32>
    %270 = arith.addf %266, %269 : vector<16x1xf32>
    %271 = math.rsqrt %270 : vector<16x1xf32>
    %272 = vector.broadcast %271 : vector<16x1xf32> to vector<16x32xf32>
    %273 = arith.mulf %268, %272 : vector<16x32xf32>
    %274 = vector.broadcast %181 : vector<1x32xf32> to vector<16x32xf32>
    %275 = arith.mulf %273, %274 : vector<16x32xf32>
    %276 = vector.broadcast %182 : vector<1x32xf32> to vector<16x32xf32>
    %277 = arith.addf %275, %276 : vector<16x32xf32>
    %c1_92 = arith.constant 1 : index
    %c0_93 = arith.constant 0 : index
    %c0_94 = arith.constant 0 : index
    %278 = vector.load %arg7[%c1_92, %c0_93, %c0_94] : memref<2x32x64xf32, #tpu.memory_space<vmem>>, vector<1x32x64xf32>
    %279 = vector.shape_cast %278 : vector<1x32x64xf32> to vector<32x64xf32>
    %cst_95 = arith.constant dense<0.000000e+00> : vector<16x64xf32>
    %280 = tpu.matmul %277, %279, %cst_95 {dimension_numbers = #tpu.dot_dimension_numbers<[1], [0], [0], [1], [0, 0, 1, 1], [], []>} : vector<16x32xf32>, vector<32x64xf32>, vector<16x64xf32> -> vector<16x64xf32>
    %c1_96 = arith.constant 1 : index
    %c0_97 = arith.constant 0 : index
    %c0_98 = arith.constant 0 : index
    %281 = vector.load %arg8[%c1_96, %c0_97, %c0_98] : memref<2x1x64xf32, #tpu.memory_space<vmem>>, vector<1x1x64xf32>
    %282 = vector.shape_cast %281 : vector<1x1x64xf32> to vector<1x64xf32>
    %283 = vector.broadcast %282 : vector<1x64xf32> to vector<16x64xf32>
    %284 = arith.addf %280, %283 : vector<16x64xf32>
    %285 = arith.mulf %284, %284 : vector<16x64xf32>
    %286 = arith.mulf %284, %285 : vector<16x64xf32>
    %cst_99 = arith.constant 4.471500e-02 : f32
    %287 = vector.broadcast %cst_99 : f32 to vector<16x64xf32>
    %288 = arith.mulf %287, %286 : vector<16x64xf32>
    %289 = arith.addf %284, %288 : vector<16x64xf32>
    %cst_100 = arith.constant 0.797884583 : f32
    %290 = vector.broadcast %cst_100 : f32 to vector<16x64xf32>
    %291 = arith.mulf %290, %289 : vector<16x64xf32>
    %292 = math.tanh %291 : vector<16x64xf32>
    %cst_101 = arith.constant 1.000000e+00 : f32
    %293 = vector.broadcast %cst_101 : f32 to vector<16x64xf32>
    %294 = arith.addf %293, %292 : vector<16x64xf32>
    %cst_102 = arith.constant 5.000000e-01 : f32
    %295 = vector.broadcast %cst_102 : f32 to vector<16x64xf32>
    %296 = arith.mulf %295, %294 : vector<16x64xf32>
    %297 = arith.mulf %284, %296 : vector<16x64xf32>
    %c1_103 = arith.constant 1 : index
    %c0_104 = arith.constant 0 : index
    %c0_105 = arith.constant 0 : index
    %298 = vector.load %arg9[%c1_103, %c0_104, %c0_105] : memref<2x64x32xf32, #tpu.memory_space<vmem>>, vector<1x64x32xf32>
    %299 = vector.shape_cast %298 : vector<1x64x32xf32> to vector<64x32xf32>
    %cst_106 = arith.constant dense<0.000000e+00> : vector<16x32xf32>
    %300 = tpu.matmul %297, %299, %cst_106 {dimension_numbers = #tpu.dot_dimension_numbers<[1], [0], [0], [1], [0, 0, 1, 1], [], []>} : vector<16x64xf32>, vector<64x32xf32>, vector<16x32xf32> -> vector<16x32xf32>
    %301 = vector.broadcast %183 : vector<1x32xf32> to vector<16x32xf32>
    %302 = arith.addf %300, %301 : vector<16x32xf32>
    %303 = arith.addf %277, %302 : vector<16x32xf32>
    %cst_107 = arith.constant dense<0.000000e+00> : vector<16xf32>
    %304 = vector.multi_reduction <add>, %303, %cst_107 [1] : vector<16x32xf32> to vector<16xf32>
    %305 = vector.shape_cast %304 : vector<16xf32> to vector<16x1xf32>
    %cst_108 = arith.constant 3.200000e+01 : f32
    %306 = vector.broadcast %cst_108 : f32 to vector<16x1xf32>
    %307 = arith.divf %305, %306 : vector<16x1xf32>
    %308 = vector.broadcast %307 : vector<16x1xf32> to vector<16x32xf32>
    %309 = arith.subf %303, %308 : vector<16x32xf32>
    %310 = vector.broadcast %307 : vector<16x1xf32> to vector<16x32xf32>
    %311 = arith.subf %303, %310 : vector<16x32xf32>
    %312 = arith.mulf %309, %311 : vector<16x32xf32>
    %cst_109 = arith.constant dense<0.000000e+00> : vector<16xf32>
    %313 = vector.multi_reduction <add>, %312, %cst_109 [1] : vector<16x32xf32> to vector<16xf32>
    %314 = vector.shape_cast %313 : vector<16xf32> to vector<16x1xf32>
    %cst_110 = arith.constant 3.200000e+01 : f32
    %315 = vector.broadcast %cst_110 : f32 to vector<16x1xf32>
    %316 = arith.divf %314, %315 : vector<16x1xf32>
    %317 = vector.broadcast %307 : vector<16x1xf32> to vector<16x32xf32>
    %318 = arith.subf %303, %317 : vector<16x32xf32>
    %cst_111 = arith.constant 9.99999996E-13 : f32
    %319 = vector.broadcast %cst_111 : f32 to vector<16x1xf32>
    %320 = arith.addf %316, %319 : vector<16x1xf32>
    %321 = math.rsqrt %320 : vector<16x1xf32>
    %322 = vector.broadcast %321 : vector<16x1xf32> to vector<16x32xf32>
    %323 = arith.mulf %318, %322 : vector<16x32xf32>
    %324 = vector.broadcast %184 : vector<1x32xf32> to vector<16x32xf32>
    %325 = arith.mulf %323, %324 : vector<16x32xf32>
    %326 = vector.broadcast %185 : vector<1x32xf32> to vector<16x32xf32>
    %327 = arith.addf %325, %326 : vector<16x32xf32>
    %c0_112 = arith.constant 0 : index
    %c0_113 = arith.constant 0 : index
    %328 = vector.load %arg12[%c0_112, %c0_113] : memref<16x32xf32, #tpu.memory_space<vmem>>, vector<16x32xf32>
    tpu.vector_store %arg12[%c0_112, %c0_113], %327 {strides = array<i32>} : memref<16x32xf32, #tpu.memory_space<vmem>>, vector<16x32xf32>,
    %329 = vector.extract_strided_slice %327 {offsets = [0, 0], sizes = [1, 32], strides = [1, 1]} : vector<16x32xf32> to vector<1x32xf32>
    %330 = vector.extract_strided_slice %327 {offsets = [8, 0], sizes = [1, 32], strides = [1, 1]} : vector<16x32xf32> to vector<1x32xf32>
    %331 = tpu.concatenate %329, %330 in 0 : vector<1x32xf32>, vector<1x32xf32> -> vector<2x32xf32>
    %c0_114 = arith.constant 0 : index
    %c0_115 = arith.constant 0 : index
    %332 = vector.load %arg10[%c0_114, %c0_115] : memref<32x32xf32, #tpu.memory_space<vmem>>, vector<32x32xf32>
    %cst_116 = arith.constant dense<0.000000e+00> : vector<2x32xf32>
    %333 = tpu.matmul %331, %332, %cst_116 {dimension_numbers = #tpu.dot_dimension_numbers<[1], [0], [0], [1], [0, 0, 1, 1], [], []>} : vector<2x32xf32>, vector<32x32xf32>, vector<2x32xf32> -> vector<2x32xf32>
    %c0_117 = arith.constant 0 : index
    %c0_118 = arith.constant 0 : index
    %334 = vector.load %arg11[%c0_117, %c0_118] : memref<1x32xf32, #tpu.memory_space<vmem>>, vector<1x32xf32>
    %335 = vector.broadcast %334 : vector<1x32xf32> to vector<2x32xf32>
    %336 = arith.addf %333, %335 : vector<2x32xf32>
    %337 = math.tanh %336 : vector<2x32xf32>
    %c0_119 = arith.constant 0 : index
    %c0_120 = arith.constant 0 : index
    %338 = vector.load %arg13[%c0_119, %c0_120] : memref<2x32xf32, #tpu.memory_space<vmem>>, vector<2x32xf32>
    tpu.vector_store %arg13[%c0_119, %c0_120], %337 {strides = array<i32>} : memref<2x32xf32, #tpu.memory_space<vmem>>, vector<2x32xf32>,
    return
  }
}

</mosaic_0001>

<llo_original>
// kernel: bert_forward.1
$region0: #{bert_forward.1}
  #allocation0 [shape = 'u32[]', space=smem, size = 0x4, offset = 0x4, fixed_abs, tag = 'smem constant byte address 0x4 - core index']
  #allocation1 [shape = 'u32[144,128]{1,0:T(1,128)}', space=vmem, size = 0x12000, scoped, tag = 'internal scratch']
  %s0 = inlined_call_operand.vmem [shape: f32[16,32], index: 0, kind: input, shape index: {}]
  %s1 = inlined_call_operand.vmem [shape: f32[2,8,8], index: 1, kind: input, shape index: {}]
  %s2 = inlined_call_operand.vmem [shape: f32[2,32], index: 2, kind: input, shape index: {}]
  %s3 = inlined_call_operand.vmem [shape: f32[2,32,96], index: 3, kind: input, shape index: {}]
  %s4 = inlined_call_operand.vmem [shape: f32[2,1,96], index: 4, kind: input, shape index: {}]
  %s5 = inlined_call_operand.vmem [shape: f32[2,32,32], index: 5, kind: input, shape index: {}]
  %s6 = inlined_call_operand.vmem [shape: f32[2,6,32], index: 6, kind: input, shape index: {}]
  %s7 = inlined_call_operand.vmem [shape: f32[2,32,64], index: 7, kind: input, shape index: {}]
  %s8 = inlined_call_operand.vmem [shape: f32[2,1,64], index: 8, kind: input, shape index: {}]
  %s9 = inlined_call_operand.vmem [shape: f32[2,64,32], index: 9, kind: input, shape index: {}]
  %s10 = inlined_call_operand.vmem [shape: f32[32,32], index: 10, kind: input, shape index: {}]
  %s11 = inlined_call_operand.vmem [shape: f32[1,32], index: 11, kind: input, shape index: {}]
  %s12 = inlined_call_operand.hbm [shape: f32[16,32], index: 12, kind: output, shape index: {0}]
  %s13 = inlined_call_operand.hbm [shape: f32[2,32], index: 13, kind: output, shape index: {1}]
  %14 = xla_tuple %s12, %s13
  %s15 = sld [smem:[#allocation0]]
  $region66: #{bert_forward.1} parent=0
    _
  %s17 = ssub.s32 1, %s15
  %s18 = scalar_select 0, %s17, %s15
  $region1: #{bert_forward.1} parent=0
    #allocation2 [shape = 'u8[8192]{0}', space=vmem, size = 0x2000, scoped, tag = 'output window, operand 0, single buffered']
    #allocation3 [shape = 's32[1]{0}', space=sflag, size = 0x4, scoped, tag = 'scoped memory for bert_forward.1']
    #allocation4 [shape = 'u8[1024]{0}', space=vmem, size = 0x400, scoped, tag = 'output window, operand 1, single buffered']
    #allocation5 [shape = 's32[1]{0}', space=sflag, size = 0x4, scoped, tag = 'scoped memory for bert_forward.1']
    %19 = vsyncpa [#allocation3], 0
    %20 = vsyncpa [#allocation5], 0
    // Predicated region
    $region2: #{bert_forward.1} parent=1 // pred_check
      _
    $region3: #{bert_forward.1} parent=1 // pred_check_branch
      %22 = sbr.rel (0) target = $region5
    $region4: #{bert_forward.1} parent=1 // pred_region
      _
    $region5: #{bert_forward.1} parent=1 // pred_fallthru
      _
    // Predicated region
    $region6: #{bert_forward.1} parent=1 // pred_check
      _
    $region7: #{bert_forward.1} parent=1 // pred_check_branch
      %24 = sbr.rel (0) target = $region9
    $region8: #{bert_forward.1} parent=1 // pred_region
      _
    $region9: #{bert_forward.1} parent=1 // pred_fallthru
      _
    // Predicated region
    $region10: #{bert_forward.1} parent=1 // pred_check
      _
    $region11: #{bert_forward.1} parent=1 // pred_check_branch
      %26 = sbr.rel (0) target = $region13
    $region12: #{bert_forward.1} parent=1 // pred_region
      _
    $region13: #{bert_forward.1} parent=1 // pred_fallthru
      _
    // Predicated region
    $region14: #{bert_forward.1} parent=1 // pred_check
      _
    $region15: #{bert_forward.1} parent=1 // pred_check_branch
      %28 = sbr.rel (0) target = $region17
    $region16: #{bert_forward.1} parent=1 // pred_region
      _
    $region17: #{bert_forward.1} parent=1 // pred_fallthru
      _
    // Predicated region
    $region18: #{bert_forward.1} parent=1 // pred_check
      _
    $region19: #{bert_forward.1} parent=1 // pred_check_branch
      %30 = sbr.rel (0) target = $region21
    $region20: #{bert_forward.1} parent=1 // pred_region
      _
    $region21: #{bert_forward.1} parent=1 // pred_fallthru
      _
    // Predicated region
    $region22: #{bert_forward.1} parent=1 // pred_check
      _
    $region23: #{bert_forward.1} parent=1 // pred_check_branch
      %32 = sbr.rel (0) target = $region25
    $region24: #{bert_forward.1} parent=1 // pred_region
      _
    $region25: #{bert_forward.1} parent=1 // pred_fallthru
      _
    // Predicated region
    $region26: #{bert_forward.1} parent=1 // pred_check
      _
    $region27: #{bert_forward.1} parent=1 // pred_check_branch
      %34 = sbr.rel (0) target = $region29
    $region28: #{bert_forward.1} parent=1 // pred_region
      _
    $region29: #{bert_forward.1} parent=1 // pred_fallthru
      _
    // Predicated region
    $region30: #{bert_forward.1} parent=1 // pred_check
      _
    $region31: #{bert_forward.1} parent=1 // pred_check_branch
      %36 = sbr.rel (0) target = $region33
    $region32: #{bert_forward.1} parent=1 // pred_region
      _
    $region33: #{bert_forward.1} parent=1 // pred_fallthru
      _
    // Predicated region
    $region34: #{bert_forward.1} parent=1 // pred_check
      _
    $region35: #{bert_forward.1} parent=1 // pred_check_branch
      %38 = sbr.rel (0) target = $region37
    $region36: #{bert_forward.1} parent=1 // pred_region
      _
    $region37: #{bert_forward.1} parent=1 // pred_fallthru
      _
    // Predicated region
    $region38: #{bert_forward.1} parent=1 // pred_check
      _
    $region39: #{bert_forward.1} parent=1 // pred_check_branch
      %40 = sbr.rel (0) target = $region41
    $region40: #{bert_forward.1} parent=1 // pred_region
      _
    $region41: #{bert_forward.1} parent=1 // pred_fallthru
      _
    // Predicated region
    $region42: #{bert_forward.1} parent=1 // pred_check
      _
    $region43: #{bert_forward.1} parent=1 // pred_check_branch
      %42 = sbr.rel (0) target = $region45
    $region44: #{bert_forward.1} parent=1 // pred_region
      _
    $region45: #{bert_forward.1} parent=1 // pred_fallthru
      _
    // Predicated region
    $region46: #{bert_forward.1} parent=1 // pred_check
      _
    $region47: #{bert_forward.1} parent=1 // pred_check_branch
      %44 = sbr.rel (0) target = $region49
    $region48: #{bert_forward.1} parent=1 // pred_region
      _
    $region49: #{bert_forward.1} parent=1 // pred_fallthru
      _
    %v45 = vld [vmem:[%s2] sm:$0x3]
    %v46 = vld [vmem:[%s0] sm:$0xff]
    %v47 = vld [vmem:[%s0 + $0x8] sm:$0xff]
    %vm48 = vcmask 261120
    %v49 = vsel %vm48, %v46, 0.0
    %50 = vadd.xlane.f32.xlu0 %v49
    %v51 = vpop.xlane.xlu0 %50
    %v52 = vsel %vm48, %v47, 0.0
    %53 = vadd.xlane.f32.xlu0 %v52
    %v54 = vpop.xlane.xlu0 %53
    %v55 = vrcp.pop 32.0
    %v56 = vmul.f32 %v51, %v55
    %v57 = vmul.f32 %v54, %v55
    %v58 = vsub.f32 %v46, %v56
    %v59 = vsub.f32 %v47, %v57
    %v60 = vmul.f32 %v58, %v58
    %v61 = vmul.f32 %v59, %v59
    %v62 = vsel %vm48, %v60, 0.0
    %63 = vadd.xlane.f32.xlu0 %v62
    %v64 = vpop.xlane.xlu0 %63
    %v65 = vsel %vm48, %v61, 0.0
    %66 = vadd.xlane.f32.xlu0 %v65
    %v67 = vpop.xlane.xlu0 %66
    %v68 = vmul.f32 %v64, %v55
    %v69 = vmul.f32 %v67, %v55
    %v70 = vadd.f32 %v68, 1e-12
    %v71 = vadd.f32 %v69, 1e-12
    %v72 = vrsqrt.pop %v70
    %v73 = vrsqrt.pop %v71
    %v74 = vmul.f32 %v58, %v72
    %v75 = vmul.f32 %v59, %v73
    %v76 = vlaneseq
    %v77 = vshrl.u32 %v76, 7
    %v78 = vsub.s32 0, %v77
    %v79 = vrot.slane %v45, %v78
    %v80 = vmul.f32 %v74, %v79
    %v81 = vmul.f32 %v75, %v79
    %v82 = vlaneseq
    %v83 = vshrl.u32 %v82, 7
    %v84 = vsub.s32 1, %v83
    %v85 = vrot.slane %v45, %v84
    %v86 = vadd.f32 %v80, %v85
    %v87 = vadd.f32 %v81, %v85
    %v88 = vld [vmem:[%s6] sm:$0x3f]
    %v89 = vld [vmem:[%s3] sm:$0xff]
    %v90 = vld [vmem:[%s3 + $0x8] sm:$0xff]
    %v91 = vld [vmem:[%s3 + $0x10] sm:$0xff]
    %v92 = vld [vmem:[%s3 + $0x18] sm:$0xff]
    %v93 = vld [vmem:[%s4] sm:$0x1]
    %v95 = vlaneseq
    %v96 = vshrl.u32 %v95, 7
    %v97 = vsub.s32 0, %v96
    %v98 = vrot.slane %v93, %v97
    %v101 = vsel %vm48, %v86, 0
    %v104 = vsel %vm48, %v87, 0
    %106 = vmatprep.subr.mxu0 0.0
    %107 = vmatpush1.msra.mxu0 0.0
    %108 = vmatprep.subr.mxu0 0.0
    %109 = vmatpush1.msra.mxu0 0.0
    %110 = vmatprep.subr.mxu0 0.0
    %111 = vmatpush1.msra.mxu0 0.0
    %112 = vmatprep.subr.mxu0 0.0
    %113 = vmatpush1.msra.mxu0 0.0
    %114 = vmatprep.subr.mxu0 0.0
    %115 = vmatpush1.msra.mxu0 0.0
    %116 = vmatprep.subr.mxu0 0.0
    %117 = vmatpush1.msra.mxu0 0.0
    %118 = vmatprep.subr.mxu0 0.0
    %119 = vmatpush1.msra.mxu0 0.0
    %120 = vmatprep.subr.mxu0 0.0
    %121 = vmatpush1.msra.mxu0 0.0
    %122 = vmatprep.subr.mxu0 0.0
    %123 = vmatpush1.msra.mxu0 0.0
    %124 = vmatprep.subr.mxu0 0.0
    %125 = vmatpush1.msra.mxu0 0.0
    %126 = vmatprep.subr.mxu0 0.0
    %127 = vmatpush1.msra.mxu0 0.0
    %128 = vmatprep.subr.mxu0 0.0
    %129 = vmatpush1.msra.mxu0 0.0
    %130 = vmatprep.subr.mxu0 0.0
    %131 = vmatpush1.msra.mxu0 %v92
    %132 = vmatprep.subr.mxu0 0.0
    %133 = vmatpush1.msra.mxu0 %v91
    %134 = vmatprep.subr.mxu0 0.0
    %135 = vmatpush1.msra.mxu0 %v90
    %136 = vmatprep.subr.mxu0 0.0
    %137 = vmatpush1.msra.mxu0 %v89
    %138 = vmatprep.subr.mxu0 0.0
    %139 = vmatpush2.msra.mxu0 0.0
    %140 = vmatprep.subr.mxu0 0.0
    %141 = vmatpush2.msra.mxu0 0.0
    %142 = vmatprep.subr.mxu0 0.0
    %143 = vmatpush2.msra.mxu0 0.0
    %144 = vmatprep.subr.mxu0 0.0
    %145 = vmatpush2.msra.mxu0 0.0
    %146 = vmatprep.subr.mxu0 0.0
    %147 = vmatpush2.msra.mxu0 0.0
    %148 = vmatprep.subr.mxu0 0.0
    %149 = vmatpush2.msra.mxu0 0.0
    %150 = vmatprep.subr.mxu0 0.0
    %151 = vmatpush2.msra.mxu0 0.0
    %152 = vmatprep.subr.mxu0 0.0
    %153 = vmatpush2.msra.mxu0 0.0
    %154 = vmatprep.subr.mxu0 0.0
    %155 = vmatpush2.msra.mxu0 0.0
    %156 = vmatprep.subr.mxu0 0.0
    %157 = vmatpush2.msra.mxu0 0.0
    %158 = vmatprep.subr.mxu0 0.0
    %159 = vmatpush2.msra.mxu0 0.0
    %160 = vmatprep.subr.mxu0 0.0
    %161 = vmatpush2.msra.mxu0 0.0
    %162 = vmatprep.subr.mxu0 0.0
    %163 = vmatpush2.msra.mxu0 0.0
    %164 = vmatprep.subr.mxu0 0.0
    %165 = vmatpush2.msra.mxu0 0.0
    %166 = vmatprep.subr.mxu0 0.0
    %167 = vmatpush2.msra.mxu0 0.0
    %168 = vmatprep.subr.mxu0 0.0
    %169 = vmatpush2.msra.mxu0 0.0
    %170 = vmatprep.mubr.f32.mxu0 0.0
    %171 = vmatmul.mubr.f32.gmra.mxu0 %v101
    %v172 = vpop.f32.mrf.mxu0
    %v173 = vadd.f32 %v98, %v172
    %v174 = vpop.f32.mrf.mxu0
    %175 = vmatprep.mubr.f32.mxu0 0.0
    %176 = vmatmul.mubr.f32.gmra.mxu0 %v104
    %v177 = vpop.f32.mrf.mxu0
    %v178 = vadd.f32 %v98, %v177
    %v179 = vpop.f32.mrf.mxu0
    %180 = vdwg.mxu0
    %181 = vxpose.xlu0.b32.start [1/16] %v173, 128
    %182 = vxpose.xlu0.b32.cont [2/16] 0.0, 128
    %183 = vxpose.xlu0.b32.cont [3/16] 0.0, 128
    %184 = vxpose.xlu0.b32.cont [4/16] 0.0, 128
    %185 = vxpose.xlu0.b32.cont [5/16] 0.0, 128
    %186 = vxpose.xlu0.b32.cont [6/16] 0.0, 128
    %187 = vxpose.xlu0.b32.cont [7/16] 0.0, 128
    %188 = vxpose.xlu0.b32.cont [8/16] 0.0, 128
    %189 = vxpose.xlu0.b32.cont [9/16] 0.0, 128
    %190 = vxpose.xlu0.b32.cont [10/16] 0.0, 128
    %191 = vxpose.xlu0.b32.cont [11/16] 0.0, 128
    %192 = vxpose.xlu0.b32.cont [12/16] 0.0, 128
    %193 = vxpose.xlu0.b32.cont [13/16] 0.0, 128
    %194 = vxpose.xlu0.b32.cont [14/16] 0.0, 128
    %195 = vxpose.xlu0.b32.cont [15/16] 0.0, 128
    %196 = vxpose.xlu0.b32.end [16/16] 0.0, 128
    %v197 = vpop.trf.xlu0
    %v198 = vpop.trf.xlu0
    %v199 = vpop.trf.xlu0
    %v200 = vpop.trf.xlu0
    %v201 = vpop.trf.xlu0
    %v202 = vpop.trf.xlu0
    %v203 = vpop.trf.xlu0
    %v204 = vpop.trf.xlu0
    %v205 = vpop.trf.xlu0
    %v206 = vpop.trf.xlu0
    %v207 = vpop.trf.xlu0
    %v208 = vpop.trf.xlu0
    %v209 = vpop.trf.xlu0
    %v210 = vpop.trf.xlu0
    %v211 = vpop.trf.xlu0
    %v212 = vpop.trf.xlu0
    %213 = vxpose.xlu0.b32.start [1/16] %v197, 128
    %214 = vxpose.xlu0.b32.cont [2/16] 0.0, 128
    %215 = vxpose.xlu0.b32.cont [3/16] 0.0, 128
    %216 = vxpose.xlu0.b32.cont [4/16] 0.0, 128
    %217 = vxpose.xlu0.b32.cont [5/16] 0.0, 128
    %218 = vxpose.xlu0.b32.cont [6/16] 0.0, 128
    %219 = vxpose.xlu0.b32.cont [7/16] 0.0, 128
    %220 = vxpose.xlu0.b32.cont [8/16] 0.0, 128
    %221 = vxpose.xlu0.b32.cont [9/16] 0.0, 128
    %222 = vxpose.xlu0.b32.cont [10/16] 0.0, 128
    %223 = vxpose.xlu0.b32.cont [11/16] 0.0, 128
    %224 = vxpose.xlu0.b32.cont [12/16] 0.0, 128
    %225 = vxpose.xlu0.b32.cont [13/16] 0.0, 128
    %226 = vxpose.xlu0.b32.cont [14/16] 0.0, 128
    %227 = vxpose.xlu0.b32.cont [15/16] 0.0, 128
    %228 = vxpose.xlu0.b32.end [16/16] 0.0, 128
    %v229 = vpop.trf.xlu0
    %v230 = vpop.trf.xlu0
    %v231 = vpop.trf.xlu0
    %v232 = vpop.trf.xlu0
    %v233 = vpop.trf.xlu0
    %v234 = vpop.trf.xlu0
    %v235 = vpop.trf.xlu0
    %v236 = vpop.trf.xlu0
    %v237 = vpop.trf.xlu0
    %v238 = vpop.trf.xlu0
    %v239 = vpop.trf.xlu0
    %v240 = vpop.trf.xlu0
    %v241 = vpop.trf.xlu0
    %v242 = vpop.trf.xlu0
    %v243 = vpop.trf.xlu0
    %v244 = vpop.trf.xlu0
    %245 = vxpose.xlu0.b32.start [1/16] %v198, 128
    %246 = vxpose.xlu0.b32.cont [2/16] 0.0, 128
    %247 = vxpose.xlu0.b32.cont [3/16] 0.0, 128
    %248 = vxpose.xlu0.b32.cont [4/16] 0.0, 128
    %249 = vxpose.xlu0.b32.cont [5/16] 0.0, 128
    %250 = vxpose.xlu0.b32.cont [6/16] 0.0, 128
    %251 = vxpose.xlu0.b32.cont [7/16] 0.0, 128
    %252 = vxpose.xlu0.b32.cont [8/16] 0.0, 128
    %253 = vxpose.xlu0.b32.cont [9/16] 0.0, 128
    %254 = vxpose.xlu0.b32.cont [10/16] 0.0, 128
    %255 = vxpose.xlu0.b32.cont [11/16] 0.0, 128
    %256 = vxpose.xlu0.b32.cont [12/16] 0.0, 128
    %257 = vxpose.xlu0.b32.cont [13/16] 0.0, 128
    %258 = vxpose.xlu0.b32.cont [14/16] 0.0, 128
    %259 = vxpose.xlu0.b32.cont [15/16] 0.0, 128
    %260 = vxpose.xlu0.b32.end [16/16] 0.0, 128
    %v261 = vpop.trf.xlu0
    %v262 = vpop.trf.xlu0
    %v263 = vpop.trf.xlu0
    %v264 = vpop.trf.xlu0
    %v265 = vpop.trf.xlu0
    %v266 = vpop.trf.xlu0
    %v267 = vpop.trf.xlu0
    %v268 = vpop.trf.xlu0
    %v269 = vpop.trf.xlu0
    %v270 = vpop.trf.xlu0
    %v271 = vpop.trf.xlu0
    %v272 = vpop.trf.xlu0
    %v273 = vpop.trf.xlu0
    %v274 = vpop.trf.xlu0
    %v275 = vpop.trf.xlu0
    %v276 = vpop.trf.xlu0
    %277 = vxpose.xlu0.b32.start [1/16] %v199, 128
    %278 = vxpose.xlu0.b32.cont [2/16] 0.0, 128
    %279 = vxpose.xlu0.b32.cont [3/16] 0.0, 128
    %280 = vxpose.xlu0.b32.cont [4/16] 0.0, 128
    %281 = vxpose.xlu0.b32.cont [5/16] 0.0, 128
    %282 = vxpose.xlu0.b32.cont [6/16] 0.0, 128
    %283 = vxpose.xlu0.b32.cont [7/16] 0.0, 128
    %284 = vxpose.xlu0.b32.cont [8/16] 0.0, 128
    %285 = vxpose.xlu0.b32.cont [9/16] 0.0, 128
    %286 = vxpose.xlu0.b32.cont [10/16] 0.0, 128
    %287 = vxpose.xlu0.b32.cont [11/16] 0.0, 128
    %288 = vxpose.xlu0.b32.cont [12/16] 0.0, 128
    %289 = vxpose.xlu0.b32.cont [13/16] 0.0, 128
    %290 = vxpose.xlu0.b32.cont [14/16] 0.0, 128
    %291 = vxpose.xlu0.b32.cont [15/16] 0.0, 128
    %292 = vxpose.xlu0.b32.end [16/16] 0.0, 128
    %v293 = vpop.trf.xlu0
    %v294 = vpop.trf.xlu0
    %v295 = vpop.trf.xlu0
    %v296 = vpop.trf.xlu0
    %v297 = vpop.trf.xlu0
    %v298 = vpop.trf.xlu0
    %v299 = vpop.trf.xlu0
    %v300 = vpop.trf.xlu0
    %v301 = vpop.trf.xlu0
    %v302 = vpop.trf.xlu0
    %v303 = vpop.trf.xlu0
    %v304 = vpop.trf.xlu0
    %v305 = vpop.trf.xlu0
    %v306 = vpop.trf.xlu0
    %v307 = vpop.trf.xlu0
    %v308 = vpop.trf.xlu0
    %309 = vxpose.xlu0.b32.start [1/16] %v200, 128
    %310 = vxpose.xlu0.b32.cont [2/16] 0.0, 128
    %311 = vxpose.xlu0.b32.cont [3/16] 0.0, 128
    %312 = vxpose.xlu0.b32.cont [4/16] 0.0, 128
    %313 = vxpose.xlu0.b32.cont [5/16] 0.0, 128
    %314 = vxpose.xlu0.b32.cont [6/16] 0.0, 128
    %315 = vxpose.xlu0.b32.cont [7/16] 0.0, 128
    %316 = vxpose.xlu0.b32.cont [8/16] 0.0, 128
    %317 = vxpose.xlu0.b32.cont [9/16] 0.0, 128
    %318 = vxpose.xlu0.b32.cont [10/16] 0.0, 128
    %319 = vxpose.xlu0.b32.cont [11/16] 0.0, 128
    %320 = vxpose.xlu0.b32.cont [12/16] 0.0, 128
    %321 = vxpose.xlu0.b32.cont [13/16] 0.0, 128
    %322 = vxpose.xlu0.b32.cont [14/16] 0.0, 128
    %323 = vxpose.xlu0.b32.cont [15/16] 0.0, 128
    %324 = vxpose.xlu0.b32.end [16/16] 0.0, 128
    %v325 = vpop.trf.xlu0
    %v326 = vpop.trf.xlu0
    %v327 = vpop.trf.xlu0
    %v328 = vpop.trf.xlu0
    %v329 = vpop.trf.xlu0
    %v330 = vpop.trf.xlu0
    %v331 = vpop.trf.xlu0
    %v332 = vpop.trf.xlu0
    %v333 = vpop.trf.xlu0
    %v334 = vpop.trf.xlu0
    %v335 = vpop.trf.xlu0
    %v336 = vpop.trf.xlu0
    %v337 = vpop.trf.xlu0
    %v338 = vpop.trf.xlu0
    %v339 = vpop.trf.xlu0
    %v340 = vpop.trf.xlu0
    %341 = vxpose.xlu0.b32.start [1/16] %v201, 128
    %342 = vxpose.xlu0.b32.cont [2/16] 0.0, 128
    %343 = vxpose.xlu0.b32.cont [3/16] 0.0, 128
    %344 = vxpose.xlu0.b32.cont [4/16] 0.0, 128
    %345 = vxpose.xlu0.b32.cont [5/16] 0.0, 128
    %346 = vxpose.xlu0.b32.cont [6/16] 0.0, 128
    %347 = vxpose.xlu0.b32.cont [7/16] 0.0, 128
    %348 = vxpose.xlu0.b32.cont [8/16] 0.0, 128
    %349 = vxpose.xlu0.b32.cont [9/16] 0.0, 128
    %350 = vxpose.xlu0.b32.cont [10/16] 0.0, 128
    %351 = vxpose.xlu0.b32.cont [11/16] 0.0, 128
    %352 = vxpose.xlu0.b32.cont [12/16] 0.0, 128
    %353 = vxpose.xlu0.b32.cont [13/16] 0.0, 128
    %354 = vxpose.xlu0.b32.cont [14/16] 0.0, 128
    %355 = vxpose.xlu0.b32.cont [15/16] 0.0, 128
    %356 = vxpose.xlu0.b32.end [16/16] 0.0, 128
    %v357 = vpop.trf.xlu0
    %v358 = vpop.trf.xlu0
    %v359 = vpop.trf.xlu0
    %v360 = vpop.trf.xlu0
    %v361 = vpop.trf.xlu0
    %v362 = vpop.trf.xlu0
    %v363 = vpop.trf.xlu0
    %v364 = vpop.trf.xlu0
    %v365 = vpop.trf.xlu0
    %v366 = vpop.trf.xlu0
    %v367 = vpop.trf.xlu0
    %v368 = vpop.trf.xlu0
    %v369 = vpop.trf.xlu0
    %v370 = vpop.trf.xlu0
    %v371 = vpop.trf.xlu0
    %v372 = vpop.trf.xlu0
    %373 = vxpose.xlu0.b32.start [1/16] %v202, 128
    %374 = vxpose.xlu0.b32.cont [2/16] 0.0, 128
    %375 = vxpose.xlu0.b32.cont [3/16] 0.0, 128
    %376 = vxpose.xlu0.b32.cont [4/16] 0.0, 128
    %377 = vxpose.xlu0.b32.cont [5/16] 0.0, 128
    %378 = vxpose.xlu0.b32.cont [6/16] 0.0, 128
    %379 = vxpose.xlu0.b32.cont [7/16] 0.0, 128
    %380 = vxpose.xlu0.b32.cont [8/16] 0.0, 128
    %381 = vxpose.xlu0.b32.cont [9/16] 0.0, 128
    %382 = vxpose.xlu0.b32.cont [10/16] 0.0, 128
    %383 = vxpose.xlu0.b32.cont [11/16] 0.0, 128
    %384 = vxpose.xlu0.b32.cont [12/16] 0.0, 128
    %385 = vxpose.xlu0.b32.cont [13/16] 0.0, 128
    %386 = vxpose.xlu0.b32.cont [14/16] 0.0, 128
    %387 = vxpose.xlu0.b32.cont [15/16] 0.0, 128
    %388 = vxpose.xlu0.b32.end [16/16] 0.0, 128
    %v389 = vpop.trf.xlu0
    %v390 = vpop.trf.xlu0
    %v391 = vpop.trf.xlu0
    %v392 = vpop.trf.xlu0
    %v393 = vpop.trf.xlu0
    %v394 = vpop.trf.xlu0
    %v395 = vpop.trf.xlu0
    %v396 = vpop.trf.xlu0
    %v397 = vpop.trf.xlu0
    %v398 = vpop.trf.xlu0
    %v399 = vpop.trf.xlu0
    %v400 = vpop.trf.xlu0
    %v401 = vpop.trf.xlu0
    %v402 = vpop.trf.xlu0
    %v403 = vpop.trf.xlu0
    %v404 = vpop.trf.xlu0
    %405 = vxpose.xlu0.b32.start [1/16] %v203, 128
    %406 = vxpose.xlu0.b32.cont [2/16] 0.0, 128
    %407 = vxpose.xlu0.b32.cont [3/16] 0.0, 128
    %408 = vxpose.xlu0.b32.cont [4/16] 0.0, 128
    %409 = vxpose.xlu0.b32.cont [5/16] 0.0, 128
    %410 = vxpose.xlu0.b32.cont [6/16] 0.0, 128
    %411 = vxpose.xlu0.b32.cont [7/16] 0.0, 128
    %412 = vxpose.xlu0.b32.cont [8/16] 0.0, 128
    %413 = vxpose.xlu0.b32.cont [9/16] 0.0, 128
    %414 = vxpose.xlu0.b32.cont [10/16] 0.0, 128
    %415 = vxpose.xlu0.b32.cont [11/16] 0.0, 128
    %416 = vxpose.xlu0.b32.cont [12/16] 0.0, 128
    %417 = vxpose.xlu0.b32.cont [13/16] 0.0, 128
    %418 = vxpose.xlu0.b32.cont [14/16] 0.0, 128
    %419 = vxpose.xlu0.b32.cont [15/16] 0.0, 128
    %420 = vxpose.xlu0.b32.end [16/16] 0.0, 128
    %v421 = vpop.trf.xlu0
    %v422 = vpop.trf.xlu0
    %v423 = vpop.trf.xlu0
    %v424 = vpop.trf.xlu0
    %v425 = vpop.trf.xlu0
    %v426 = vpop.trf.xlu0
    %v427 = vpop.trf.xlu0
    %v428 = vpop.trf.xlu0
    %v429 = vpop.trf.xlu0
    %v430 = vpop.trf.xlu0
    %v431 = vpop.trf.xlu0
    %v432 = vpop.trf.xlu0
    %v433 = vpop.trf.xlu0
    %v434 = vpop.trf.xlu0
    %v435 = vpop.trf.xlu0
    %v436 = vpop.trf.xlu0
    %437 = vxpose.xlu0.b32.start [1/16] %v204, 128
    %438 = vxpose.xlu0.b32.cont [2/16] 0.0, 128
    %439 = vxpose.xlu0.b32.cont [3/16] 0.0, 128
    %440 = vxpose.xlu0.b32.cont [4/16] 0.0, 128
    %441 = vxpose.xlu0.b32.cont [5/16] 0.0, 128
    %442 = vxpose.xlu0.b32.cont [6/16] 0.0, 128
    %443 = vxpose.xlu0.b32.cont [7/16] 0.0, 128
    %444 = vxpose.xlu0.b32.cont [8/16] 0.0, 128
    %445 = vxpose.xlu0.b32.cont [9/16] 0.0, 128
    %446 = vxpose.xlu0.b32.cont [10/16] 0.0, 128
    %447 = vxpose.xlu0.b32.cont [11/16] 0.0, 128
    %448 = vxpose.xlu0.b32.cont [12/16] 0.0, 128
    %449 = vxpose.xlu0.b32.cont [13/16] 0.0, 128
    %450 = vxpose.xlu0.b32.cont [14/16] 0.0, 128
    %451 = vxpose.xlu0.b32.cont [15/16] 0.0, 128
    %452 = vxpose.xlu0.b32.end [16/16] 0.0, 128
    %v453 = vpop.trf.xlu0
    %v454 = vpop.trf.xlu0
    %v455 = vpop.trf.xlu0
    %v456 = vpop.trf.xlu0
    %v457 = vpop.trf.xlu0
    %v458 = vpop.trf.xlu0
    %v459 = vpop.trf.xlu0
    %v460 = vpop.trf.xlu0
    %v461 = vpop.trf.xlu0
    %v462 = vpop.trf.xlu0
    %v463 = vpop.trf.xlu0
    %v464 = vpop.trf.xlu0
    %v465 = vpop.trf.xlu0
    %v466 = vpop.trf.xlu0
    %v467 = vpop.trf.xlu0
    %v468 = vpop.trf.xlu0
    %469 = vxpose.xlu0.b32.start [1/16] %v205, 128
    %470 = vxpose.xlu0.b32.cont [2/16] 0.0, 128
    %471 = vxpose.xlu0.b32.cont [3/16] 0.0, 128
    %472 = vxpose.xlu0.b32.cont [4/16] 0.0, 128
    %473 = vxpose.xlu0.b32.cont [5/16] 0.0, 128
    %474 = vxpose.xlu0.b32.cont [6/16] 0.0, 128
    %475 = vxpose.xlu0.b32.cont [7/16] 0.0, 128
    %476 = vxpose.xlu0.b32.cont [8/16] 0.0, 128
    %477 = vxpose.xlu0.b32.cont [9/16] 0.0, 128
    %478 = vxpose.xlu0.b32.cont [10/16] 0.0, 128
    %479 = vxpose.xlu0.b32.cont [11/16] 0.0, 128
    %480 = vxpose.xlu0.b32.cont [12/16] 0.0, 128
    %481 = vxpose.xlu0.b32.cont [13/16] 0.0, 128
    %482 = vxpose.xlu0.b32.cont [14/16] 0.0, 128
    %483 = vxpose.xlu0.b32.cont [15/16] 0.0, 128
    %484 = vxpose.xlu0.b32.end [16/16] 0.0, 128
    %v485 = vpop.trf.xlu0
    %v486 = vpop.trf.xlu0
    %v487 = vpop.trf.xlu0
    %v488 = vpop.trf.xlu0
    %v489 = vpop.trf.xlu0
    %v490 = vpop.trf.xlu0
    %v491 = vpop.trf.xlu0
    %v492 = vpop.trf.xlu0
    %v493 = vpop.trf.xlu0
    %v494 = vpop.trf.xlu0
    %v495 = vpop.trf.xlu0
    %v496 = vpop.trf.xlu0
    %v497 = vpop.trf.xlu0
    %v498 = vpop.trf.xlu0
    %v499 = vpop.trf.xlu0
    %v500 = vpop.trf.xlu0
    %501 = vxpose.xlu0.b32.start [1/16] %v206, 128
    %502 = vxpose.xlu0.b32.cont [2/16] 0.0, 128
    %503 = vxpose.xlu0.b32.cont [3/16] 0.0, 128
    %504 = vxpose.xlu0.b32.cont [4/16] 0.0, 128
    %505 = vxpose.xlu0.b32.cont [5/16] 0.0, 128
    %506 = vxpose.xlu0.b32.cont [6/16] 0.0, 128
    %507 = vxpose.xlu0.b32.cont [7/16] 0.0, 128
    %508 = vxpose.xlu0.b32.cont [8/16] 0.0, 128
    %509 = vxpose.xlu0.b32.cont [9/16] 0.0, 128
    %510 = vxpose.xlu0.b32.cont [10/16] 0.0, 128
    %511 = vxpose.xlu0.b32.cont [11/16] 0.0, 128
    %512 = vxpose.xlu0.b32.cont [12/16] 0.0, 128
    %513 = vxpose.xlu0.b32.cont [13/16] 0.0, 128
    %514 = vxpose.xlu0.b32.cont [14/16] 0.0, 128
    %515 = vxpose.xlu0.b32.cont [15/16] 0.0, 128
    %516 = vxpose.xlu0.b32.end [16/16] 0.0, 128
    %v517 = vpop.trf.xlu0
    %v518 = vpop.trf.xlu0
    %v519 = vpop.trf.xlu0
    %v520 = vpop.trf.xlu0
    %v521 = vpop.trf.xlu0
    %v522 = vpop.trf.xlu0
    %v523 = vpop.trf.xlu0
    %v524 = vpop.trf.xlu0
    %v525 = vpop.trf.xlu0
    %v526 = vpop.trf.xlu0
    %v527 = vpop.trf.xlu0
    %v528 = vpop.trf.xlu0
    %v529 = vpop.trf.xlu0
    %v530 = vpop.trf.xlu0
    %v531 = vpop.trf.xlu0
    %v532 = vpop.trf.xlu0
    %533 = vxpose.xlu0.b32.start [1/16] %v207, 128
    %534 = vxpose.xlu0.b32.cont [2/16] 0.0, 128
    %535 = vxpose.xlu0.b32.cont [3/16] 0.0, 128
    %536 = vxpose.xlu0.b32.cont [4/16] 0.0, 128
    %537 = vxpose.xlu0.b32.cont [5/16] 0.0, 128
    %538 = vxpose.xlu0.b32.cont [6/16] 0.0, 128
    %539 = vxpose.xlu0.b32.cont [7/16] 0.0, 128
    %540 = vxpose.xlu0.b32.cont [8/16] 0.0, 128
    %541 = vxpose.xlu0.b32.cont [9/16] 0.0, 128
    %542 = vxpose.xlu0.b32.cont [10/16] 0.0, 128
    %543 = vxpose.xlu0.b32.cont [11/16] 0.0, 128
    %544 = vxpose.xlu0.b32.cont [12/16] 0.0, 128
    %545 = vxpose.xlu0.b32.cont [13/16] 0.0, 128
    %546 = vxpose.xlu0.b32.cont [14/16] 0.0, 128
    %547 = vxpose.xlu0.b32.cont [15/16] 0.0, 128
    %548 = vxpose.xlu0.b32.end [16/16] 0.0, 128
    %v549 = vpop.trf.xlu0
    %v550 = vpop.trf.xlu0
    %v551 = vpop.trf.xlu0
    %v552 = vpop.trf.xlu0
    %v553 = vpop.trf.xlu0
    %v554 = vpop.trf.xlu0
    %v555 = vpop.trf.xlu0
    %v556 = vpop.trf.xlu0
    %v557 = vpop.trf.xlu0
    %v558 = vpop.trf.xlu0
    %v559 = vpop.trf.xlu0
    %v560 = vpop.trf.xlu0
    %v561 = vpop.trf.xlu0
    %v562 = vpop.trf.xlu0
    %v563 = vpop.trf.xlu0
    %v564 = vpop.trf.xlu0
    %565 = vxpose.xlu0.b32.start [1/16] %v208, 128
    %566 = vxpose.xlu0.b32.cont [2/16] 0.0, 128
    %567 = vxpose.xlu0.b32.cont [3/16] 0.0, 128
    %568 = vxpose.xlu0.b32.cont [4/16] 0.0, 128
    %569 = vxpose.xlu0.b32.cont [5/16] 0.0, 128
    %570 = vxpose.xlu0.b32.cont [6/16] 0.0, 128
    %571 = vxpose.xlu0.b32.cont [7/16] 0.0, 128
    %572 = vxpose.xlu0.b32.cont [8/16] 0.0, 128
    %573 = vxpose.xlu0.b32.cont [9/16] 0.0, 128
    %574 = vxpose.xlu0.b32.cont [10/16] 0.0, 128
    %575 = vxpose.xlu0.b32.cont [11/16] 0.0, 128
    %576 = vxpose.xlu0.b32.cont [12/16] 0.0, 128
    %577 = vxpose.xlu0.b32.cont [13/16] 0.0, 128
    %578 = vxpose.xlu0.b32.cont [14/16] 0.0, 128
    %579 = vxpose.xlu0.b32.cont [15/16] 0.0, 128
    %580 = vxpose.xlu0.b32.end [16/16] 0.0, 128
    %v581 = vpop.trf.xlu0
    %v582 = vpop.trf.xlu0
    %v583 = vpop.trf.xlu0
    %v584 = vpop.trf.xlu0
    %v585 = vpop.trf.xlu0
    %v586 = vpop.trf.xlu0
    %v587 = vpop.trf.xlu0
    %v588 = vpop.trf.xlu0
    %v589 = vpop.trf.xlu0
    %v590 = vpop.trf.xlu0
    %v591 = vpop.trf.xlu0
    %v592 = vpop.trf.xlu0
    %v593 = vpop.trf.xlu0
    %v594 = vpop.trf.xlu0
    %v595 = vpop.trf.xlu0
    %v596 = vpop.trf.xlu0
    %v597 = vld [vmem:[%s1] sm:$0xff]
    %vm598 = vcmask 64512
    %v600 = vsel %vm598, %v229, 0
    %v603 = vsel %vm598, %v357, 0
    %605 = vmatprep.subr.mxu0 0.0
    %606 = vmatpush1.xpose.msra.mxu0 0.0
    %607 = vmatprep.subr.mxu0 0.0
    %608 = vmatpush1.xpose.msra.mxu0 0.0
    %609 = vmatprep.subr.mxu0 0.0
    %610 = vmatpush1.xpose.msra.mxu0 0.0
    %611 = vmatprep.subr.mxu0 0.0
    %612 = vmatpush1.xpose.msra.mxu0 0.0
    %613 = vmatprep.subr.mxu0 0.0
    %614 = vmatpush1.xpose.msra.mxu0 0.0
    %615 = vmatprep.subr.mxu0 0.0
    %616 = vmatpush1.xpose.msra.mxu0 0.0
    %617 = vmatprep.subr.mxu0 0.0
    %618 = vmatpush1.xpose.msra.mxu0 0.0
    %619 = vmatprep.subr.mxu0 0.0
    %620 = vmatpush1.xpose.msra.mxu0 0.0
    %621 = vmatprep.subr.mxu0 0.0
    %622 = vmatpush1.xpose.msra.mxu0 0.0
    %623 = vmatprep.subr.mxu0 0.0
    %624 = vmatpush1.xpose.msra.mxu0 0.0
    %625 = vmatprep.subr.mxu0 0.0
    %626 = vmatpush1.xpose.msra.mxu0 0.0
    %627 = vmatprep.subr.mxu0 0.0
    %628 = vmatpush1.xpose.msra.mxu0 0.0
    %629 = vmatprep.subr.mxu0 0.0
    %630 = vmatpush1.xpose.msra.mxu0 0.0
    %631 = vmatprep.subr.mxu0 0.0
    %632 = vmatpush1.xpose.msra.mxu0 0.0
    %633 = vmatprep.subr.mxu0 0.0
    %634 = vmatpush1.xpose.msra.mxu0 0.0
    %635 = vmatprep.subr.mxu0 0.0
    %636 = vmatpush1.xpose.msra.mxu0 %v603
    %637 = vmatprep.subr.mxu0 0.0
    %638 = vmatpush2.xpose.msra.mxu0 0.0
    %639 = vmatprep.subr.mxu0 0.0
    %640 = vmatpush2.xpose.msra.mxu0 0.0
    %641 = vmatprep.subr.mxu0 0.0
    %642 = vmatpush2.xpose.msra.mxu0 0.0
    %643 = vmatprep.subr.mxu0 0.0
    %644 = vmatpush2.xpose.msra.mxu0 0.0
    %645 = vmatprep.subr.mxu0 0.0
    %646 = vmatpush2.xpose.msra.mxu0 0.0
    %647 = vmatprep.subr.mxu0 0.0
    %648 = vmatpush2.xpose.msra.mxu0 0.0
    %649 = vmatprep.subr.mxu0 0.0
    %650 = vmatpush2.xpose.msra.mxu0 0.0
    %651 = vmatprep.subr.mxu0 0.0
    %652 = vmatpush2.xpose.msra.mxu0 0.0
    %653 = vmatprep.subr.mxu0 0.0
    %654 = vmatpush2.xpose.msra.mxu0 0.0
    %655 = vmatprep.subr.mxu0 0.0
    %656 = vmatpush2.xpose.msra.mxu0 0.0
    %657 = vmatprep.subr.mxu0 0.0
    %658 = vmatpush2.xpose.msra.mxu0 0.0
    %659 = vmatprep.subr.mxu0 0.0
    %660 = vmatpush2.xpose.msra.mxu0 0.0
    %661 = vmatprep.subr.mxu0 0.0
    %662 = vmatpush2.xpose.msra.mxu0 0.0
    %663 = vmatprep.subr.mxu0 0.0
    %664 = vmatpush2.xpose.msra.mxu0 0.0
    %665 = vmatprep.subr.mxu0 0.0
    %666 = vmatpush2.xpose.msra.mxu0 0.0
    %667 = vmatprep.subr.mxu0 0.0
    %668 = vmatpush2.xpose.msra.mxu0 0.0
    %669 = vmatprep.mubr.f32.mxu0 0.0
    %670 = vmatmul.mubr.f32.gmra.mxu0 %v600
    %v671 = vpop.f32.mrf.mxu0
    %v672 = vadd.f32 %v597, %v671
    %v673 = vpop.f32.mrf.mxu0
    %674 = vdwg.mxu0
    %v676 = vsel %vm598, %v261, 0
    %v679 = vsel %vm598, %v389, 0
    %681 = vmatprep.subr.mxu0 0.0
    %682 = vmatpush1.xpose.msra.mxu0 0.0
    %683 = vmatprep.subr.mxu0 0.0
    %684 = vmatpush1.xpose.msra.mxu0 0.0
    %685 = vmatprep.subr.mxu0 0.0
    %686 = vmatpush1.xpose.msra.mxu0 0.0
    %687 = vmatprep.subr.mxu0 0.0
    %688 = vmatpush1.xpose.msra.mxu0 0.0
    %689 = vmatprep.subr.mxu0 0.0
    %690 = vmatpush1.xpose.msra.mxu0 0.0
    %691 = vmatprep.subr.mxu0 0.0
    %692 = vmatpush1.xpose.msra.mxu0 0.0
    %693 = vmatprep.subr.mxu0 0.0
    %694 = vmatpush1.xpose.msra.mxu0 0.0
    %695 = vmatprep.subr.mxu0 0.0
    %696 = vmatpush1.xpose.msra.mxu0 0.0
    %697 = vmatprep.subr.mxu0 0.0
    %698 = vmatpush1.xpose.msra.mxu0 0.0
    %699 = vmatprep.subr.mxu0 0.0
    %700 = vmatpush1.xpose.msra.mxu0 0.0
    %701 = vmatprep.subr.mxu0 0.0
    %702 = vmatpush1.xpose.msra.mxu0 0.0
    %703 = vmatprep.subr.mxu0 0.0
    %704 = vmatpush1.xpose.msra.mxu0 0.0
    %705 = vmatprep.subr.mxu0 0.0
    %706 = vmatpush1.xpose.msra.mxu0 0.0
    %707 = vmatprep.subr.mxu0 0.0
    %708 = vmatpush1.xpose.msra.mxu0 0.0
    %709 = vmatprep.subr.mxu0 0.0
    %710 = vmatpush1.xpose.msra.mxu0 0.0
    %711 = vmatprep.subr.mxu0 0.0
    %712 = vmatpush1.xpose.msra.mxu0 %v679
    %713 = vmatprep.subr.mxu0 0.0
    %714 = vmatpush2.xpose.msra.mxu0 0.0
    %715 = vmatprep.subr.mxu0 0.0
    %716 = vmatpush2.xpose.msra.mxu0 0.0
    %717 = vmatprep.subr.mxu0 0.0
    %718 = vmatpush2.xpose.msra.mxu0 0.0
    %719 = vmatprep.subr.mxu0 0.0
    %720 = vmatpush2.xpose.msra.mxu0 0.0
    %721 = vmatprep.subr.mxu0 0.0
    %722 = vmatpush2.xpose.msra.mxu0 0.0
    %723 = vmatprep.subr.mxu0 0.0
    %724 = vmatpush2.xpose.msra.mxu0 0.0
    %725 = vmatprep.subr.mxu0 0.0
    %726 = vmatpush2.xpose.msra.mxu0 0.0
    %727 = vmatprep.subr.mxu0 0.0
    %728 = vmatpush2.xpose.msra.mxu0 0.0
    %729 = vmatprep.subr.mxu0 0.0
    %730 = vmatpush2.xpose.msra.mxu0 0.0
    %731 = vmatprep.subr.mxu0 0.0
    %732 = vmatpush2.xpose.msra.mxu0 0.0
    %733 = vmatprep.subr.mxu0 0.0
    %734 = vmatpush2.xpose.msra.mxu0 0.0
    %735 = vmatprep.subr.mxu0 0.0
    %736 = vmatpush2.xpose.msra.mxu0 0.0
    %737 = vmatprep.subr.mxu0 0.0
    %738 = vmatpush2.xpose.msra.mxu0 0.0
    %739 = vmatprep.subr.mxu0 0.0
    %740 = vmatpush2.xpose.msra.mxu0 0.0
    %741 = vmatprep.subr.mxu0 0.0
    %742 = vmatpush2.xpose.msra.mxu0 0.0
    %743 = vmatprep.subr.mxu0 0.0
    %744 = vmatpush2.xpose.msra.mxu0 0.0
    %745 = vmatprep.mubr.f32.mxu0 0.0
    %746 = vmatmul.mubr.f32.gmra.mxu0 %v676
    %v747 = vpop.f32.mrf.mxu0
    %v748 = vadd.f32 %v597, %v747
    %v749 = vpop.f32.mrf.mxu0
    %750 = vdwg.mxu0
    %v752 = vsel %vm598, %v293, 0
    %v755 = vsel %vm598, %v421, 0
    %757 = vmatprep.subr.mxu0 0.0
    %758 = vmatpush1.xpose.msra.mxu0 0.0
    %759 = vmatprep.subr.mxu0 0.0
    %760 = vmatpush1.xpose.msra.mxu0 0.0
    %761 = vmatprep.subr.mxu0 0.0
    %762 = vmatpush1.xpose.msra.mxu0 0.0
    %763 = vmatprep.subr.mxu0 0.0
    %764 = vmatpush1.xpose.msra.mxu0 0.0
    %765 = vmatprep.subr.mxu0 0.0
    %766 = vmatpush1.xpose.msra.mxu0 0.0
    %767 = vmatprep.subr.mxu0 0.0
    %768 = vmatpush1.xpose.msra.mxu0 0.0
    %769 = vmatprep.subr.mxu0 0.0
    %770 = vmatpush1.xpose.msra.mxu0 0.0
    %771 = vmatprep.subr.mxu0 0.0
    %772 = vmatpush1.xpose.msra.mxu0 0.0
    %773 = vmatprep.subr.mxu0 0.0
    %774 = vmatpush1.xpose.msra.mxu0 0.0
    %775 = vmatprep.subr.mxu0 0.0
    %776 = vmatpush1.xpose.msra.mxu0 0.0
    %777 = vmatprep.subr.mxu0 0.0
    %778 = vmatpush1.xpose.msra.mxu0 0.0
    %779 = vmatprep.subr.mxu0 0.0
    %780 = vmatpush1.xpose.msra.mxu0 0.0
    %781 = vmatprep.subr.mxu0 0.0
    %782 = vmatpush1.xpose.msra.mxu0 0.0
    %783 = vmatprep.subr.mxu0 0.0
    %784 = vmatpush1.xpose.msra.mxu0 0.0
    %785 = vmatprep.subr.mxu0 0.0
    %786 = vmatpush1.xpose.msra.mxu0 0.0
    %787 = vmatprep.subr.mxu0 0.0
    %788 = vmatpush1.xpose.msra.mxu0 %v755
    %789 = vmatprep.subr.mxu0 0.0
    %790 = vmatpush2.xpose.msra.mxu0 0.0
    %791 = vmatprep.subr.mxu0 0.0
    %792 = vmatpush2.xpose.msra.mxu0 0.0
    %793 = vmatprep.subr.mxu0 0.0
    %794 = vmatpush2.xpose.msra.mxu0 0.0
    %795 = vmatprep.subr.mxu0 0.0
    %796 = vmatpush2.xpose.msra.mxu0 0.0
    %797 = vmatprep.subr.mxu0 0.0
    %798 = vmatpush2.xpose.msra.mxu0 0.0
    %799 = vmatprep.subr.mxu0 0.0
    %800 = vmatpush2.xpose.msra.mxu0 0.0
    %801 = vmatprep.subr.mxu0 0.0
    %802 = vmatpush2.xpose.msra.mxu0 0.0
    %803 = vmatprep.subr.mxu0 0.0
    %804 = vmatpush2.xpose.msra.mxu0 0.0
    %805 = vmatprep.subr.mxu0 0.0
    %806 = vmatpush2.xpose.msra.mxu0 0.0
    %807 = vmatprep.subr.mxu0 0.0
    %808 = vmatpush2.xpose.msra.mxu0 0.0
    %809 = vmatprep.subr.mxu0 0.0
    %810 = vmatpush2.xpose.msra.mxu0 0.0
    %811 = vmatprep.subr.mxu0 0.0
    %812 = vmatpush2.xpose.msra.mxu0 0.0
    %813 = vmatprep.subr.mxu0 0.0
    %814 = vmatpush2.xpose.msra.mxu0 0.0
    %815 = vmatprep.subr.mxu0 0.0
    %816 = vmatpush2.xpose.msra.mxu0 0.0
    %817 = vmatprep.subr.mxu0 0.0
    %818 = vmatpush2.xpose.msra.mxu0 0.0
    %819 = vmatprep.subr.mxu0 0.0
    %820 = vmatpush2.xpose.msra.mxu0 0.0
    %821 = vmatprep.mubr.f32.mxu0 0.0
    %822 = vmatmul.mubr.f32.gmra.mxu0 %v752
    %v823 = vpop.f32.mrf.mxu0
    %v824 = vadd.f32 %v597, %v823
    %v825 = vpop.f32.mrf.mxu0
    %826 = vdwg.mxu0
    %v828 = vsel %vm598, %v325, 0
    %v831 = vsel %vm598, %v453, 0
    %833 = vmatprep.subr.mxu0 0.0
    %834 = vmatpush1.xpose.msra.mxu0 0.0
    %835 = vmatprep.subr.mxu0 0.0
    %836 = vmatpush1.xpose.msra.mxu0 0.0
    %837 = vmatprep.subr.mxu0 0.0
    %838 = vmatpush1.xpose.msra.mxu0 0.0
    %839 = vmatprep.subr.mxu0 0.0
    %840 = vmatpush1.xpose.msra.mxu0 0.0
    %841 = vmatprep.subr.mxu0 0.0
    %842 = vmatpush1.xpose.msra.mxu0 0.0
    %843 = vmatprep.subr.mxu0 0.0
    %844 = vmatpush1.xpose.msra.mxu0 0.0
    %845 = vmatprep.subr.mxu0 0.0
    %846 = vmatpush1.xpose.msra.mxu0 0.0
    %847 = vmatprep.subr.mxu0 0.0
    %848 = vmatpush1.xpose.msra.mxu0 0.0
    %849 = vmatprep.subr.mxu0 0.0
    %850 = vmatpush1.xpose.msra.mxu0 0.0
    %851 = vmatprep.subr.mxu0 0.0
    %852 = vmatpush1.xpose.msra.mxu0 0.0
    %853 = vmatprep.subr.mxu0 0.0
    %854 = vmatpush1.xpose.msra.mxu0 0.0
    %855 = vmatprep.subr.mxu0 0.0
    %856 = vmatpush1.xpose.msra.mxu0 0.0
    %857 = vmatprep.subr.mxu0 0.0
    %858 = vmatpush1.xpose.msra.mxu0 0.0
    %859 = vmatprep.subr.mxu0 0.0
    %860 = vmatpush1.xpose.msra.mxu0 0.0
    %861 = vmatprep.subr.mxu0 0.0
    %862 = vmatpush1.xpose.msra.mxu0 0.0
    %863 = vmatprep.subr.mxu0 0.0
    %864 = vmatpush1.xpose.msra.mxu0 %v831
    %865 = vmatprep.subr.mxu0 0.0
    %866 = vmatpush2.xpose.msra.mxu0 0.0
    %867 = vmatprep.subr.mxu0 0.0
    %868 = vmatpush2.xpose.msra.mxu0 0.0
    %869 = vmatprep.subr.mxu0 0.0
    %870 = vmatpush2.xpose.msra.mxu0 0.0
    %871 = vmatprep.subr.mxu0 0.0
    %872 = vmatpush2.xpose.msra.mxu0 0.0
    %873 = vmatprep.subr.mxu0 0.0
    %874 = vmatpush2.xpose.msra.mxu0 0.0
    %875 = vmatprep.subr.mxu0 0.0
    %876 = vmatpush2.xpose.msra.mxu0 0.0
    %877 = vmatprep.subr.mxu0 0.0
    %878 = vmatpush2.xpose.msra.mxu0 0.0
    %879 = vmatprep.subr.mxu0 0.0
    %880 = vmatpush2.xpose.msra.mxu0 0.0
    %881 = vmatprep.subr.mxu0 0.0
    %882 = vmatpush2.xpose.msra.mxu0 0.0
    %883 = vmatprep.subr.mxu0 0.0
    %884 = vmatpush2.xpose.msra.mxu0 0.0
    %885 = vmatprep.subr.mxu0 0.0
    %886 = vmatpush2.xpose.msra.mxu0 0.0
    %887 = vmatprep.subr.mxu0 0.0
    %888 = vmatpush2.xpose.msra.mxu0 0.0
    %889 = vmatprep.subr.mxu0 0.0
    %890 = vmatpush2.xpose.msra.mxu0 0.0
    %891 = vmatprep.subr.mxu0 0.0
    %892 = vmatpush2.xpose.msra.mxu0 0.0
    %893 = vmatprep.subr.mxu0 0.0
    %894 = vmatpush2.xpose.msra.mxu0 0.0
    %895 = vmatprep.subr.mxu0 0.0
    %896 = vmatpush2.xpose.msra.mxu0 0.0
    %897 = vmatprep.mubr.f32.mxu0 0.0
    %898 = vmatmul.mubr.f32.gmra.mxu0 %v828
    %v899 = vpop.f32.mrf.mxu0
    %v900 = vadd.f32 %v597, %v899
    %v901 = vpop.f32.mrf.mxu0
    %902 = vdwg.mxu0
    %v903 = vsel %vm598, %v672, -inf
    %904 = vmax.xlane.f32.xlu0 %v903
    %v905 = vpop.xlane.xlu0 %904
    %v906 = vsel %vm598, %v748, -inf
    %907 = vmax.xlane.f32.xlu0 %v906
    %v908 = vpop.xlane.xlu0 %907
    %v909 = vsel %vm598, %v824, -inf
    %910 = vmax.xlane.f32.xlu0 %v909
    %v911 = vpop.xlane.xlu0 %910
    %v912 = vsel %vm598, %v900, -inf
    %913 = vmax.xlane.f32.xlu0 %v912
    %v914 = vpop.xlane.xlu0 %913
    %v915 = vsub.f32 %v672, %v905
    %v916 = vsub.f32 %v748, %v908
    %v917 = vsub.f32 %v824, %v911
    %v918 = vsub.f32 %v900, %v914
    %v919 = vmul.f32 %v915, 1.442695
    %v920 = vpow.pop %v919
    %v921 = vmul.f32 %v916, 1.442695
    %v922 = vpow.pop %v921
    %v923 = vmul.f32 %v917, 1.442695
    %v924 = vpow.pop %v923
    %v925 = vmul.f32 %v918, 1.442695
    %v926 = vpow.pop %v925
    %v927 = vsel %vm598, %v920, 0.0
    %928 = vadd.xlane.f32.xlu0 %v927
    %v929 = vpop.xlane.xlu0 %928
    %v930 = vsel %vm598, %v922, 0.0
    %931 = vadd.xlane.f32.xlu0 %v930
    %v932 = vpop.xlane.xlu0 %931
    %v933 = vsel %vm598, %v924, 0.0
    %934 = vadd.xlane.f32.xlu0 %v933
    %v935 = vpop.xlane.xlu0 %934
    %v936 = vsel %vm598, %v926, 0.0
    %937 = vadd.xlane.f32.xlu0 %v936
    %v938 = vpop.xlane.xlu0 %937
    %v939 = vrcp.pop %v929
    %v940 = vrcp.pop %v932
    %v941 = vrcp.pop %v935
    %v942 = vrcp.pop %v938
    %v943 = vmul.f32 %v920, %v939
    %v944 = vmul.f32 %v922, %v940
    %v945 = vmul.f32 %v924, %v941
    %v946 = vmul.f32 %v926, %v942
    %v948 = vsel %vm598, %v943, 0
    %950 = vmatprep.subr.mxu0 0.0
    %951 = vmatpush1.msra.mxu0 0.0
    %952 = vmatprep.subr.mxu0 0.0
    %953 = vmatpush1.msra.mxu0 0.0
    %954 = vmatprep.subr.mxu0 0.0
    %955 = vmatpush1.msra.mxu0 0.0
    %956 = vmatprep.subr.mxu0 0.0
    %957 = vmatpush1.msra.mxu0 0.0
    %958 = vmatprep.subr.mxu0 0.0
    %959 = vmatpush1.msra.mxu0 0.0
    %960 = vmatprep.subr.mxu0 0.0
    %961 = vmatpush1.msra.mxu0 0.0
    %962 = vmatprep.subr.mxu0 0.0
    %963 = vmatpush1.msra.mxu0 0.0
    %964 = vmatprep.subr.mxu0 0.0
    %965 = vmatpush1.msra.mxu0 0.0
    %966 = vmatprep.subr.mxu0 0.0
    %967 = vmatpush1.msra.mxu0 0.0
    %968 = vmatprep.subr.mxu0 0.0
    %969 = vmatpush1.msra.mxu0 0.0
    %970 = vmatprep.subr.mxu0 0.0
    %971 = vmatpush1.msra.mxu0 0.0
    %972 = vmatprep.subr.mxu0 0.0
    %973 = vmatpush1.msra.mxu0 0.0
    %974 = vmatprep.subr.mxu0 0.0
    %975 = vmatpush1.msra.mxu0 0.0
    %976 = vmatprep.subr.mxu0 0.0
    %977 = vmatpush1.msra.mxu0 0.0
    %978 = vmatprep.subr.mxu0 0.0
    %979 = vmatpush1.msra.mxu0 0.0
    %980 = vmatprep.subr.mxu0 0.0
    %981 = vmatpush1.msra.mxu0 %v485
    %982 = vmatprep.subr.mxu0 0.0
    %983 = vmatpush2.msra.mxu0 0.0
    %984 = vmatprep.subr.mxu0 0.0
    %985 = vmatpush2.msra.mxu0 0.0
    %986 = vmatprep.subr.mxu0 0.0
    %987 = vmatpush2.msra.mxu0 0.0
    %988 = vmatprep.subr.mxu0 0.0
    %989 = vmatpush2.msra.mxu0 0.0
    %990 = vmatprep.subr.mxu0 0.0
    %991 = vmatpush2.msra.mxu0 0.0
    %992 = vmatprep.subr.mxu0 0.0
    %993 = vmatpush2.msra.mxu0 0.0
    %994 = vmatprep.subr.mxu0 0.0
    %995 = vmatpush2.msra.mxu0 0.0
    %996 = vmatprep.subr.mxu0 0.0
    %997 = vmatpush2.msra.mxu0 0.0
    %998 = vmatprep.subr.mxu0 0.0
    %999 = vmatpush2.msra.mxu0 0.0
    %1000 = vmatprep.subr.mxu0 0.0
    %1001 = vmatpush2.msra.mxu0 0.0
    %1002 = vmatprep.subr.mxu0 0.0
    %1003 = vmatpush2.msra.mxu0 0.0
    %1004 = vmatprep.subr.mxu0 0.0
    %1005 = vmatpush2.msra.mxu0 0.0
    %1006 = vmatprep.subr.mxu0 0.0
    %1007 = vmatpush2.msra.mxu0 0.0
    %1008 = vmatprep.subr.mxu0 0.0
    %1009 = vmatpush2.msra.mxu0 0.0
    %1010 = vmatprep.subr.mxu0 0.0
    %1011 = vmatpush2.msra.mxu0 0.0
    %1012 = vmatprep.subr.mxu0 0.0
    %1013 = vmatpush2.msra.mxu0 0.0
    %1014 = vmatprep.mubr.f32.mxu0 0.0
    %1015 = vmatmul.mubr.f32.gmra.mxu0 %v948
    %v1016 = vpop.f32.mrf.mxu0
    %v1017 = vadd.f32 0.0, %v1016
    %v1018 = vpop.f32.mrf.mxu0
    %1019 = vdwg.mxu0
    %v1021 = vsel %vm598, %v944, 0
    %1023 = vmatprep.subr.mxu0 0.0
    %1024 = vmatpush1.msra.mxu0 0.0
    %1025 = vmatprep.subr.mxu0 0.0
    %1026 = vmatpush1.msra.mxu0 0.0
    %1027 = vmatprep.subr.mxu0 0.0
    %1028 = vmatpush1.msra.mxu0 0.0
    %1029 = vmatprep.subr.mxu0 0.0
    %1030 = vmatpush1.msra.mxu0 0.0
    %1031 = vmatprep.subr.mxu0 0.0
    %1032 = vmatpush1.msra.mxu0 0.0
    %1033 = vmatprep.subr.mxu0 0.0
    %1034 = vmatpush1.msra.mxu0 0.0
    %1035 = vmatprep.subr.mxu0 0.0
    %1036 = vmatpush1.msra.mxu0 0.0
    %1037 = vmatprep.subr.mxu0 0.0
    %1038 = vmatpush1.msra.mxu0 0.0
    %1039 = vmatprep.subr.mxu0 0.0
    %1040 = vmatpush1.msra.mxu0 0.0
    %1041 = vmatprep.subr.mxu0 0.0
    %1042 = vmatpush1.msra.mxu0 0.0
    %1043 = vmatprep.subr.mxu0 0.0
    %1044 = vmatpush1.msra.mxu0 0.0
    %1045 = vmatprep.subr.mxu0 0.0
    %1046 = vmatpush1.msra.mxu0 0.0
    %1047 = vmatprep.subr.mxu0 0.0
    %1048 = vmatpush1.msra.mxu0 0.0
    %1049 = vmatprep.subr.mxu0 0.0
    %1050 = vmatpush1.msra.mxu0 0.0
    %1051 = vmatprep.subr.mxu0 0.0
    %1052 = vmatpush1.msra.mxu0 0.0
    %1053 = vmatprep.subr.mxu0 0.0
    %1054 = vmatpush1.msra.mxu0 %v517
    %1055 = vmatprep.subr.mxu0 0.0
    %1056 = vmatpush2.msra.mxu0 0.0
    %1057 = vmatprep.subr.mxu0 0.0
    %1058 = vmatpush2.msra.mxu0 0.0
    %1059 = vmatprep.subr.mxu0 0.0
    %1060 = vmatpush2.msra.mxu0 0.0
    %1061 = vmatprep.subr.mxu0 0.0
    %1062 = vmatpush2.msra.mxu0 0.0
    %1063 = vmatprep.subr.mxu0 0.0
    %1064 = vmatpush2.msra.mxu0 0.0
    %1065 = vmatprep.subr.mxu0 0.0
    %1066 = vmatpush2.msra.mxu0 0.0
    %1067 = vmatprep.subr.mxu0 0.0
    %1068 = vmatpush2.msra.mxu0 0.0
    %1069 = vmatprep.subr.mxu0 0.0
    %1070 = vmatpush2.msra.mxu0 0.0
    %1071 = vmatprep.subr.mxu0 0.0
    %1072 = vmatpush2.msra.mxu0 0.0
    %1073 = vmatprep.subr.mxu0 0.0
    %1074 = vmatpush2.msra.mxu0 0.0
    %1075 = vmatprep.subr.mxu0 0.0
    %1076 = vmatpush2.msra.mxu0 0.0
    %1077 = vmatprep.subr.mxu0 0.0
    %1078 = vmatpush2.msra.mxu0 0.0
    %1079 = vmatprep.subr.mxu0 0.0
    %1080 = vmatpush2.msra.mxu0 0.0
    %1081 = vmatprep.subr.mxu0 0.0
    %1082 = vmatpush2.msra.mxu0 0.0
    %1083 = vmatprep.subr.mxu0 0.0
    %1084 = vmatpush2.msra.mxu0 0.0
    %1085 = vmatprep.subr.mxu0 0.0
    %1086 = vmatpush2.msra.mxu0 0.0
    %1087 = vmatprep.mubr.f32.mxu0 0.0
    %1088 = vmatmul.mubr.f32.gmra.mxu0 %v1021
    %v1089 = vpop.f32.mrf.mxu0
    %v1090 = vadd.f32 0.0, %v1089
    %v1091 = vpop.f32.mrf.mxu0
    %1092 = vdwg.mxu0
    %v1094 = vsel %vm598, %v945, 0
    %1096 = vmatprep.subr.mxu0 0.0
    %1097 = vmatpush1.msra.mxu0 0.0
    %1098 = vmatprep.subr.mxu0 0.0
    %1099 = vmatpush1.msra.mxu0 0.0
    %1100 = vmatprep.subr.mxu0 0.0
    %1101 = vmatpush1.msra.mxu0 0.0
    %1102 = vmatprep.subr.mxu0 0.0
    %1103 = vmatpush1.msra.mxu0 0.0
    %1104 = vmatprep.subr.mxu0 0.0
    %1105 = vmatpush1.msra.mxu0 0.0
    %1106 = vmatprep.subr.mxu0 0.0
    %1107 = vmatpush1.msra.mxu0 0.0
    %1108 = vmatprep.subr.mxu0 0.0
    %1109 = vmatpush1.msra.mxu0 0.0
    %1110 = vmatprep.subr.mxu0 0.0
    %1111 = vmatpush1.msra.mxu0 0.0
    %1112 = vmatprep.subr.mxu0 0.0
    %1113 = vmatpush1.msra.mxu0 0.0
    %1114 = vmatprep.subr.mxu0 0.0
    %1115 = vmatpush1.msra.mxu0 0.0
    %1116 = vmatprep.subr.mxu0 0.0
    %1117 = vmatpush1.msra.mxu0 0.0
    %1118 = vmatprep.subr.mxu0 0.0
    %1119 = vmatpush1.msra.mxu0 0.0
    %1120 = vmatprep.subr.mxu0 0.0
    %1121 = vmatpush1.msra.mxu0 0.0
    %1122 = vmatprep.subr.mxu0 0.0
    %1123 = vmatpush1.msra.mxu0 0.0
    %1124 = vmatprep.subr.mxu0 0.0
    %1125 = vmatpush1.msra.mxu0 0.0
    %1126 = vmatprep.subr.mxu0 0.0
    %1127 = vmatpush1.msra.mxu0 %v549
    %1128 = vmatprep.subr.mxu0 0.0
    %1129 = vmatpush2.msra.mxu0 0.0
    %1130 = vmatprep.subr.mxu0 0.0
    %1131 = vmatpush2.msra.mxu0 0.0
    %1132 = vmatprep.subr.mxu0 0.0
    %1133 = vmatpush2.msra.mxu0 0.0
    %1134 = vmatprep.subr.mxu0 0.0
    %1135 = vmatpush2.msra.mxu0 0.0
    %1136 = vmatprep.subr.mxu0 0.0
    %1137 = vmatpush2.msra.mxu0 0.0
    %1138 = vmatprep.subr.mxu0 0.0
    %1139 = vmatpush2.msra.mxu0 0.0
    %1140 = vmatprep.subr.mxu0 0.0
    %1141 = vmatpush2.msra.mxu0 0.0
    %1142 = vmatprep.subr.mxu0 0.0
    %1143 = vmatpush2.msra.mxu0 0.0
    %1144 = vmatprep.subr.mxu0 0.0
    %1145 = vmatpush2.msra.mxu0 0.0
    %1146 = vmatprep.subr.mxu0 0.0
    %1147 = vmatpush2.msra.mxu0 0.0
    %1148 = vmatprep.subr.mxu0 0.0
    %1149 = vmatpush2.msra.mxu0 0.0
    %1150 = vmatprep.subr.mxu0 0.0
    %1151 = vmatpush2.msra.mxu0 0.0
    %1152 = vmatprep.subr.mxu0 0.0
    %1153 = vmatpush2.msra.mxu0 0.0
    %1154 = vmatprep.subr.mxu0 0.0
    %1155 = vmatpush2.msra.mxu0 0.0
    %1156 = vmatprep.subr.mxu0 0.0
    %1157 = vmatpush2.msra.mxu0 0.0
    %1158 = vmatprep.subr.mxu0 0.0
    %1159 = vmatpush2.msra.mxu0 0.0
    %1160 = vmatprep.mubr.f32.mxu0 0.0
    %1161 = vmatmul.mubr.f32.gmra.mxu0 %v1094
    %v1162 = vpop.f32.mrf.mxu0
    %v1163 = vadd.f32 0.0, %v1162
    %v1164 = vpop.f32.mrf.mxu0
    %1165 = vdwg.mxu0
    %v1167 = vsel %vm598, %v946, 0
    %1169 = vmatprep.subr.mxu0 0.0
    %1170 = vmatpush1.msra.mxu0 0.0
    %1171 = vmatprep.subr.mxu0 0.0
    %1172 = vmatpush1.msra.mxu0 0.0
    %1173 = vmatprep.subr.mxu0 0.0
    %1174 = vmatpush1.msra.mxu0 0.0
    %1175 = vmatprep.subr.mxu0 0.0
    %1176 = vmatpush1.msra.mxu0 0.0
    %1177 = vmatprep.subr.mxu0 0.0
    %1178 = vmatpush1.msra.mxu0 0.0
    %1179 = vmatprep.subr.mxu0 0.0
    %1180 = vmatpush1.msra.mxu0 0.0
    %1181 = vmatprep.subr.mxu0 0.0
    %1182 = vmatpush1.msra.mxu0 0.0
    %1183 = vmatprep.subr.mxu0 0.0
    %1184 = vmatpush1.msra.mxu0 0.0
    %1185 = vmatprep.subr.mxu0 0.0
    %1186 = vmatpush1.msra.mxu0 0.0
    %1187 = vmatprep.subr.mxu0 0.0
    %1188 = vmatpush1.msra.mxu0 0.0
    %1189 = vmatprep.subr.mxu0 0.0
    %1190 = vmatpush1.msra.mxu0 0.0
    %1191 = vmatprep.subr.mxu0 0.0
    %1192 = vmatpush1.msra.mxu0 0.0
    %1193 = vmatprep.subr.mxu0 0.0
    %1194 = vmatpush1.msra.mxu0 0.0
    %1195 = vmatprep.subr.mxu0 0.0
    %1196 = vmatpush1.msra.mxu0 0.0
    %1197 = vmatprep.subr.mxu0 0.0
    %1198 = vmatpush1.msra.mxu0 0.0
    %1199 = vmatprep.subr.mxu0 0.0
    %1200 = vmatpush1.msra.mxu0 %v581
    %1201 = vmatprep.subr.mxu0 0.0
    %1202 = vmatpush2.msra.mxu0 0.0
    %1203 = vmatprep.subr.mxu0 0.0
    %1204 = vmatpush2.msra.mxu0 0.0
    %1205 = vmatprep.subr.mxu0 0.0
    %1206 = vmatpush2.msra.mxu0 0.0
    %1207 = vmatprep.subr.mxu0 0.0
    %1208 = vmatpush2.msra.mxu0 0.0
    %1209 = vmatprep.subr.mxu0 0.0
    %1210 = vmatpush2.msra.mxu0 0.0
    %1211 = vmatprep.subr.mxu0 0.0
    %1212 = vmatpush2.msra.mxu0 0.0
    %1213 = vmatprep.subr.mxu0 0.0
    %1214 = vmatpush2.msra.mxu0 0.0
    %1215 = vmatprep.subr.mxu0 0.0
    %1216 = vmatpush2.msra.mxu0 0.0
    %1217 = vmatprep.subr.mxu0 0.0
    %1218 = vmatpush2.msra.mxu0 0.0
    %1219 = vmatprep.subr.mxu0 0.0
    %1220 = vmatpush2.msra.mxu0 0.0
    %1221 = vmatprep.subr.mxu0 0.0
    %1222 = vmatpush2.msra.mxu0 0.0
    %1223 = vmatprep.subr.mxu0 0.0
    %1224 = vmatpush2.msra.mxu0 0.0
    %1225 = vmatprep.subr.mxu0 0.0
    %1226 = vmatpush2.msra.mxu0 0.0
    %1227 = vmatprep.subr.mxu0 0.0
    %1228 = vmatpush2.msra.mxu0 0.0
    %1229 = vmatprep.subr.mxu0 0.0
    %1230 = vmatpush2.msra.mxu0 0.0
    %1231 = vmatprep.subr.mxu0 0.0
    %1232 = vmatpush2.msra.mxu0 0.0
    %1233 = vmatprep.mubr.f32.mxu0 0.0
    %1234 = vmatmul.mubr.f32.gmra.mxu0 %v1167
    %v1235 = vpop.f32.mrf.mxu0
    %v1236 = vadd.f32 0.0, %v1235
    %v1237 = vpop.f32.mrf.mxu0
    %1238 = vdwg.mxu0
    %1239 = vxpose.xlu0.b32.start [1/16] %v1017, 128
    %1240 = vxpose.xlu0.b32.cont [2/16] 0.0, 128
    %1241 = vxpose.xlu0.b32.cont [3/16] 0.0, 128
    %1242 = vxpose.xlu0.b32.cont [4/16] 0.0, 128
    %1243 = vxpose.xlu0.b32.cont [5/16] 0.0, 128
    %1244 = vxpose.xlu0.b32.cont [6/16] 0.0, 128
    %1245 = vxpose.xlu0.b32.cont [7/16] 0.0, 128
    %1246 = vxpose.xlu0.b32.cont [8/16] 0.0, 128
    %1247 = vxpose.xlu0.b32.cont [9/16] 0.0, 128
    %1248 = vxpose.xlu0.b32.cont [10/16] 0.0, 128
    %1249 = vxpose.xlu0.b32.cont [11/16] 0.0, 128
    %1250 = vxpose.xlu0.b32.cont [12/16] 0.0, 128
    %1251 = vxpose.xlu0.b32.cont [13/16] 0.0, 128
    %1252 = vxpose.xlu0.b32.cont [14/16] 0.0, 128
    %1253 = vxpose.xlu0.b32.cont [15/16] 0.0, 128
    %1254 = vxpose.xlu0.b32.end [16/16] 0.0, 128
    %v1255 = vpop.trf.xlu0
    %v1256 = vpop.trf.xlu0
    %v1257 = vpop.trf.xlu0
    %v1258 = vpop.trf.xlu0
    %v1259 = vpop.trf.xlu0
    %v1260 = vpop.trf.xlu0
    %v1261 = vpop.trf.xlu0
    %v1262 = vpop.trf.xlu0
    %v1263 = vpop.trf.xlu0
    %v1264 = vpop.trf.xlu0
    %v1265 = vpop.trf.xlu0
    %v1266 = vpop.trf.xlu0
    %v1267 = vpop.trf.xlu0
    %v1268 = vpop.trf.xlu0
    %v1269 = vpop.trf.xlu0
    %v1270 = vpop.trf.xlu0
    %1271 = vxpose.xlu0.b32.start [1/16] %v1090, 128
    %1272 = vxpose.xlu0.b32.cont [2/16] 0.0, 128
    %1273 = vxpose.xlu0.b32.cont [3/16] 0.0, 128
    %1274 = vxpose.xlu0.b32.cont [4/16] 0.0, 128
    %1275 = vxpose.xlu0.b32.cont [5/16] 0.0, 128
    %1276 = vxpose.xlu0.b32.cont [6/16] 0.0, 128
    %1277 = vxpose.xlu0.b32.cont [7/16] 0.0, 128
    %1278 = vxpose.xlu0.b32.cont [8/16] 0.0, 128
    %1279 = vxpose.xlu0.b32.cont [9/16] 0.0, 128
    %1280 = vxpose.xlu0.b32.cont [10/16] 0.0, 128
    %1281 = vxpose.xlu0.b32.cont [11/16] 0.0, 128
    %1282 = vxpose.xlu0.b32.cont [12/16] 0.0, 128
    %1283 = vxpose.xlu0.b32.cont [13/16] 0.0, 128
    %1284 = vxpose.xlu0.b32.cont [14/16] 0.0, 128
    %1285 = vxpose.xlu0.b32.cont [15/16] 0.0, 128
    %1286 = vxpose.xlu0.b32.end [16/16] 0.0, 128
    %v1287 = vpop.trf.xlu0
    %v1288 = vpop.trf.xlu0
    %v1289 = vpop.trf.xlu0
    %v1290 = vpop.trf.xlu0
    %v1291 = vpop.trf.xlu0
    %v1292 = vpop.trf.xlu0
    %v1293 = vpop.trf.xlu0
    %v1294 = vpop.trf.xlu0
    %v1295 = vpop.trf.xlu0
    %v1296 = vpop.trf.xlu0
    %v1297 = vpop.trf.xlu0
    %v1298 = vpop.trf.xlu0
    %v1299 = vpop.trf.xlu0
    %v1300 = vpop.trf.xlu0
    %v1301 = vpop.trf.xlu0
    %v1302 = vpop.trf.xlu0
    %1303 = vxpose.xlu0.b32.start [1/16] %v1163, 128
    %1304 = vxpose.xlu0.b32.cont [2/16] 0.0, 128
    %1305 = vxpose.xlu0.b32.cont [3/16] 0.0, 128
    %1306 = vxpose.xlu0.b32.cont [4/16] 0.0, 128
    %1307 = vxpose.xlu0.b32.cont [5/16] 0.0, 128
    %1308 = vxpose.xlu0.b32.cont [6/16] 0.0, 128
    %1309 = vxpose.xlu0.b32.cont [7/16] 0.0, 128
    %1310 = vxpose.xlu0.b32.cont [8/16] 0.0, 128
    %1311 = vxpose.xlu0.b32.cont [9/16] 0.0, 128
    %1312 = vxpose.xlu0.b32.cont [10/16] 0.0, 128
    %1313 = vxpose.xlu0.b32.cont [11/16] 0.0, 128
    %1314 = vxpose.xlu0.b32.cont [12/16] 0.0, 128
    %1315 = vxpose.xlu0.b32.cont [13/16] 0.0, 128
    %1316 = vxpose.xlu0.b32.cont [14/16] 0.0, 128
    %1317 = vxpose.xlu0.b32.cont [15/16] 0.0, 128
    %1318 = vxpose.xlu0.b32.end [16/16] 0.0, 128
    %v1319 = vpop.trf.xlu0
    %v1320 = vpop.trf.xlu0
    %v1321 = vpop.trf.xlu0
    %v1322 = vpop.trf.xlu0
    %v1323 = vpop.trf.xlu0
    %v1324 = vpop.trf.xlu0
    %v1325 = vpop.trf.xlu0
    %v1326 = vpop.trf.xlu0
    %v1327 = vpop.trf.xlu0
    %v1328 = vpop.trf.xlu0
    %v1329 = vpop.trf.xlu0
    %v1330 = vpop.trf.xlu0
    %v1331 = vpop.trf.xlu0
    %v1332 = vpop.trf.xlu0
    %v1333 = vpop.trf.xlu0
    %v1334 = vpop.trf.xlu0
    %1335 = vxpose.xlu0.b32.start [1/16] %v1236, 128
    %1336 = vxpose.xlu0.b32.cont [2/16] 0.0, 128
    %1337 = vxpose.xlu0.b32.cont [3/16] 0.0, 128
    %1338 = vxpose.xlu0.b32.cont [4/16] 0.0, 128
    %1339 = vxpose.xlu0.b32.cont [5/16] 0.0, 128
    %1340 = vxpose.xlu0.b32.cont [6/16] 0.0, 128
    %1341 = vxpose.xlu0.b32.cont [7/16] 0.0, 128
    %1342 = vxpose.xlu0.b32.cont [8/16] 0.0, 128
    %1343 = vxpose.xlu0.b32.cont [9/16] 0.0, 128
    %1344 = vxpose.xlu0.b32.cont [10/16] 0.0, 128
    %1345 = vxpose.xlu0.b32.cont [11/16] 0.0, 128
    %1346 = vxpose.xlu0.b32.cont [12/16] 0.0, 128
    %1347 = vxpose.xlu0.b32.cont [13/16] 0.0, 128
    %1348 = vxpose.xlu0.b32.cont [14/16] 0.0, 128
    %1349 = vxpose.xlu0.b32.cont [15/16] 0.0, 128
    %1350 = vxpose.xlu0.b32.end [16/16] 0.0, 128
    %v1351 = vpop.trf.xlu0
    %v1352 = vpop.trf.xlu0
    %v1353 = vpop.trf.xlu0
    %v1354 = vpop.trf.xlu0
    %v1355 = vpop.trf.xlu0
    %v1356 = vpop.trf.xlu0
    %v1357 = vpop.trf.xlu0
    %v1358 = vpop.trf.xlu0
    %v1359 = vpop.trf.xlu0
    %v1360 = vpop.trf.xlu0
    %v1361 = vpop.trf.xlu0
    %v1362 = vpop.trf.xlu0
    %v1363 = vpop.trf.xlu0
    %v1364 = vpop.trf.xlu0
    %v1365 = vpop.trf.xlu0
    %v1366 = vpop.trf.xlu0
    %1367 = vxpose.xlu0.b32.start [1/16] %v1255, 128
    %1368 = vxpose.xlu0.b32.cont [2/16] %v1287, 128
    %1369 = vxpose.xlu0.b32.cont [3/16] %v1319, 128
    %1370 = vxpose.xlu0.b32.cont [4/16] %v1351, 128
    %1371 = vxpose.xlu0.b32.cont [5/16] 0.0, 128
    %1372 = vxpose.xlu0.b32.cont [6/16] 0.0, 128
    %1373 = vxpose.xlu0.b32.cont [7/16] 0.0, 128
    %1374 = vxpose.xlu0.b32.cont [8/16] 0.0, 128
    %1375 = vxpose.xlu0.b32.cont [9/16] 0.0, 128
    %1376 = vxpose.xlu0.b32.cont [10/16] 0.0, 128
    %1377 = vxpose.xlu0.b32.cont [11/16] 0.0, 128
    %1378 = vxpose.xlu0.b32.cont [12/16] 0.0, 128
    %1379 = vxpose.xlu0.b32.cont [13/16] 0.0, 128
    %1380 = vxpose.xlu0.b32.cont [14/16] 0.0, 128
    %1381 = vxpose.xlu0.b32.cont [15/16] 0.0, 128
    %1382 = vxpose.xlu0.b32.end [16/16] 0.0, 128
    %v1383 = vpop.trf.xlu0
    %v1384 = vpop.trf.xlu0
    %v1385 = vpop.trf.xlu0
    %v1386 = vpop.trf.xlu0
    %v1387 = vpop.trf.xlu0
    %v1388 = vpop.trf.xlu0
    %v1389 = vpop.trf.xlu0
    %v1390 = vpop.trf.xlu0
    %v1391 = vpop.trf.xlu0
    %v1392 = vpop.trf.xlu0
    %v1393 = vpop.trf.xlu0
    %v1394 = vpop.trf.xlu0
    %v1395 = vpop.trf.xlu0
    %v1396 = vpop.trf.xlu0
    %v1397 = vpop.trf.xlu0
    %v1398 = vpop.trf.xlu0
    %1399 = vxpose.xlu0.b32.start [1/16] %v178, 128
    %1400 = vxpose.xlu0.b32.cont [2/16] 0.0, 128
    %1401 = vxpose.xlu0.b32.cont [3/16] 0.0, 128
    %1402 = vxpose.xlu0.b32.cont [4/16] 0.0, 128
    %1403 = vxpose.xlu0.b32.cont [5/16] 0.0, 128
    %1404 = vxpose.xlu0.b32.cont [6/16] 0.0, 128
    %1405 = vxpose.xlu0.b32.cont [7/16] 0.0, 128
    %1406 = vxpose.xlu0.b32.cont [8/16] 0.0, 128
    %1407 = vxpose.xlu0.b32.cont [9/16] 0.0, 128
    %1408 = vxpose.xlu0.b32.cont [10/16] 0.0, 128
    %1409 = vxpose.xlu0.b32.cont [11/16] 0.0, 128
    %1410 = vxpose.xlu0.b32.cont [12/16] 0.0, 128
    %1411 = vxpose.xlu0.b32.cont [13/16] 0.0, 128
    %1412 = vxpose.xlu0.b32.cont [14/16] 0.0, 128
    %1413 = vxpose.xlu0.b32.cont [15/16] 0.0, 128
    %1414 = vxpose.xlu0.b32.end [16/16] 0.0, 128
    %v1415 = vpop.trf.xlu0
    %v1416 = vpop.trf.xlu0
    %v1417 = vpop.trf.xlu0
    %v1418 = vpop.trf.xlu0
    %v1419 = vpop.trf.xlu0
    %v1420 = vpop.trf.xlu0
    %v1421 = vpop.trf.xlu0
    %v1422 = vpop.trf.xlu0
    %v1423 = vpop.trf.xlu0
    %v1424 = vpop.trf.xlu0
    %v1425 = vpop.trf.xlu0
    %v1426 = vpop.trf.xlu0
    %v1427 = vpop.trf.xlu0
    %v1428 = vpop.trf.xlu0
    %v1429 = vpop.trf.xlu0
    %v1430 = vpop.trf.xlu0
    %1431 = vxpose.xlu0.b32.start [1/16] %v1415, 128
    %1432 = vxpose.xlu0.b32.cont [2/16] 0.0, 128
    %1433 = vxpose.xlu0.b32.cont [3/16] 0.0, 128
    %1434 = vxpose.xlu0.b32.cont [4/16] 0.0, 128
    %1435 = vxpose.xlu0.b32.cont [5/16] 0.0, 128
    %1436 = vxpose.xlu0.b32.cont [6/16] 0.0, 128
    %1437 = vxpose.xlu0.b32.cont [7/16] 0.0, 128
    %1438 = vxpose.xlu0.b32.cont [8/16] 0.0, 128
    %1439 = vxpose.xlu0.b32.cont [9/16] 0.0, 128
    %1440 = vxpose.xlu0.b32.cont [10/16] 0.0, 128
    %1441 = vxpose.xlu0.b32.cont [11/16] 0.0, 128
    %1442 = vxpose.xlu0.b32.cont [12/16] 0.0, 128
    %1443 = vxpose.xlu0.b32.cont [13/16] 0.0, 128
    %1444 = vxpose.xlu0.b32.cont [14/16] 0.0, 128
    %1445 = vxpose.xlu0.b32.cont [15/16] 0.0, 128
    %1446 = vxpose.xlu0.b32.end [16/16] 0.0, 128
    %v1447 = vpop.trf.xlu0
    %v1448 = vpop.trf.xlu0
    %v1449 = vpop.trf.xlu0
    %v1450 = vpop.trf.xlu0
    %v1451 = vpop.trf.xlu0
    %v1452 = vpop.trf.xlu0
    %v1453 = vpop.trf.xlu0
    %v1454 = vpop.trf.xlu0
    %v1455 = vpop.trf.xlu0
    %v1456 = vpop.trf.xlu0
    %v1457 = vpop.trf.xlu0
    %v1458 = vpop.trf.xlu0
    %v1459 = vpop.trf.xlu0
    %v1460 = vpop.trf.xlu0
    %v1461 = vpop.trf.xlu0
    %v1462 = vpop.trf.xlu0
    %1463 = vxpose.xlu0.b32.start [1/16] %v1416, 128
    %1464 = vxpose.xlu0.b32.cont [2/16] 0.0, 128
    %1465 = vxpose.xlu0.b32.cont [3/16] 0.0, 128
    %1466 = vxpose.xlu0.b32.cont [4/16] 0.0, 128
    %1467 = vxpose.xlu0.b32.cont [5/16] 0.0, 128
    %1468 = vxpose.xlu0.b32.cont [6/16] 0.0, 128
    %1469 = vxpose.xlu0.b32.cont [7/16] 0.0, 128
    %1470 = vxpose.xlu0.b32.cont [8/16] 0.0, 128
    %1471 = vxpose.xlu0.b32.cont [9/16] 0.0, 128
    %1472 = vxpose.xlu0.b32.cont [10/16] 0.0, 128
    %1473 = vxpose.xlu0.b32.cont [11/16] 0.0, 128
    %1474 = vxpose.xlu0.b32.cont [12/16] 0.0, 128
    %1475 = vxpose.xlu0.b32.cont [13/16] 0.0, 128
    %1476 = vxpose.xlu0.b32.cont [14/16] 0.0, 128
    %1477 = vxpose.xlu0.b32.cont [15/16] 0.0, 128
    %1478 = vxpose.xlu0.b32.end [16/16] 0.0, 128
    %v1479 = vpop.trf.xlu0
    %v1480 = vpop.trf.xlu0
    %v1481 = vpop.trf.xlu0
    %v1482 = vpop.trf.xlu0
    %v1483 = vpop.trf.xlu0
    %v1484 = vpop.trf.xlu0
    %v1485 = vpop.trf.xlu0
    %v1486 = vpop.trf.xlu0
    %v1487 = vpop.trf.xlu0
    %v1488 = vpop.trf.xlu0
    %v1489 = vpop.trf.xlu0
    %v1490 = vpop.trf.xlu0
    %v1491 = vpop.trf.xlu0
    %v1492 = vpop.trf.xlu0
    %v1493 = vpop.trf.xlu0
    %v1494 = vpop.trf.xlu0
    %1495 = vxpose.xlu0.b32.start [1/16] %v1417, 128
    %1496 = vxpose.xlu0.b32.cont [2/16] 0.0, 128
    %1497 = vxpose.xlu0.b32.cont [3/16] 0.0, 128
    %1498 = vxpose.xlu0.b32.cont [4/16] 0.0, 128
    %1499 = vxpose.xlu0.b32.cont [5/16] 0.0, 128
    %1500 = vxpose.xlu0.b32.cont [6/16] 0.0, 128
    %1501 = vxpose.xlu0.b32.cont [7/16] 0.0, 128
    %1502 = vxpose.xlu0.b32.cont [8/16] 0.0, 128
    %1503 = vxpose.xlu0.b32.cont [9/16] 0.0, 128
    %1504 = vxpose.xlu0.b32.cont [10/16] 0.0, 128
    %1505 = vxpose.xlu0.b32.cont [11/16] 0.0, 128
    %1506 = vxpose.xlu0.b32.cont [12/16] 0.0, 128
    %1507 = vxpose.xlu0.b32.cont [13/16] 0.0, 128
    %1508 = vxpose.xlu0.b32.cont [14/16] 0.0, 128
    %1509 = vxpose.xlu0.b32.cont [15/16] 0.0, 128
    %1510 = vxpose.xlu0.b32.end [16/16] 0.0, 128
    %v1511 = vpop.trf.xlu0
    %v1512 = vpop.trf.xlu0
    %v1513 = vpop.trf.xlu0
    %v1514 = vpop.trf.xlu0
    %v1515 = vpop.trf.xlu0
    %v1516 = vpop.trf.xlu0
    %v1517 = vpop.trf.xlu0
    %v1518 = vpop.trf.xlu0
    %v1519 = vpop.trf.xlu0
    %v1520 = vpop.trf.xlu0
    %v1521 = vpop.trf.xlu0
    %v1522 = vpop.trf.xlu0
    %v1523 = vpop.trf.xlu0
    %v1524 = vpop.trf.xlu0
    %v1525 = vpop.trf.xlu0
    %v1526 = vpop.trf.xlu0
    %1527 = vxpose.xlu0.b32.start [1/16] %v1418, 128
    %1528 = vxpose.xlu0.b32.cont [2/16] 0.0, 128
    %1529 = vxpose.xlu0.b32.cont [3/16] 0.0, 128
    %1530 = vxpose.xlu0.b32.cont [4/16] 0.0, 128
    %1531 = vxpose.xlu0.b32.cont [5/16] 0.0, 128
    %1532 = vxpose.xlu0.b32.cont [6/16] 0.0, 128
    %1533 = vxpose.xlu0.b32.cont [7/16] 0.0, 128
    %1534 = vxpose.xlu0.b32.cont [8/16] 0.0, 128
    %1535 = vxpose.xlu0.b32.cont [9/16] 0.0, 128
    %1536 = vxpose.xlu0.b32.cont [10/16] 0.0, 128
    %1537 = vxpose.xlu0.b32.cont [11/16] 0.0, 128
    %1538 = vxpose.xlu0.b32.cont [12/16] 0.0, 128
    %1539 = vxpose.xlu0.b32.cont [13/16] 0.0, 128
    %1540 = vxpose.xlu0.b32.cont [14/16] 0.0, 128
    %1541 = vxpose.xlu0.b32.cont [15/16] 0.0, 128
    %1542 = vxpose.xlu0.b32.end [16/16] 0.0, 128
    %v1543 = vpop.trf.xlu0
    %v1544 = vpop.trf.xlu0
    %v1545 = vpop.trf.xlu0
    %v1546 = vpop.trf.xlu0
    %v1547 = vpop.trf.xlu0
    %v1548 = vpop.trf.xlu0
    %v1549 = vpop.trf.xlu0
    %v1550 = vpop.trf.xlu0
    %v1551 = vpop.trf.xlu0
    %v1552 = vpop.trf.xlu0
    %v1553 = vpop.trf.xlu0
    %v1554 = vpop.trf.xlu0
    %v1555 = vpop.trf.xlu0
    %v1556 = vpop.trf.xlu0
    %v1557 = vpop.trf.xlu0
    %v1558 = vpop.trf.xlu0
    %1559 = vxpose.xlu0.b32.start [1/16] %v1419, 128
    %1560 = vxpose.xlu0.b32.cont [2/16] 0.0, 128
    %1561 = vxpose.xlu0.b32.cont [3/16] 0.0, 128
    %1562 = vxpose.xlu0.b32.cont [4/16] 0.0, 128
    %1563 = vxpose.xlu0.b32.cont [5/16] 0.0, 128
    %1564 = vxpose.xlu0.b32.cont [6/16] 0.0, 128
    %1565 = vxpose.xlu0.b32.cont [7/16] 0.0, 128
    %1566 = vxpose.xlu0.b32.cont [8/16] 0.0, 128
    %1567 = vxpose.xlu0.b32.cont [9/16] 0.0, 128
    %1568 = vxpose.xlu0.b32.cont [10/16] 0.0, 128
    %1569 = vxpose.xlu0.b32.cont [11/16] 0.0, 128
    %1570 = vxpose.xlu0.b32.cont [12/16] 0.0, 128
    %1571 = vxpose.xlu0.b32.cont [13/16] 0.0, 128
    %1572 = vxpose.xlu0.b32.cont [14/16] 0.0, 128
    %1573 = vxpose.xlu0.b32.cont [15/16] 0.0, 128
    %1574 = vxpose.xlu0.b32.end [16/16] 0.0, 128
    %v1575 = vpop.trf.xlu0
    %v1576 = vpop.trf.xlu0
    %v1577 = vpop.trf.xlu0
    %v1578 = vpop.trf.xlu0
    %v1579 = vpop.trf.xlu0
    %v1580 = vpop.trf.xlu0
    %v1581 = vpop.trf.xlu0
    %v1582 = vpop.trf.xlu0
    %v1583 = vpop.trf.xlu0
    %v1584 = vpop.trf.xlu0
    %v1585 = vpop.trf.xlu0
    %v1586 = vpop.trf.xlu0
    %v1587 = vpop.trf.xlu0
    %v1588 = vpop.trf.xlu0
    %v1589 = vpop.trf.xlu0
    %v1590 = vpop.trf.xlu0
    %1591 = vxpose.xlu0.b32.start [1/16] %v1420, 128
    %1592 = vxpose.xlu0.b32.cont [2/16] 0.0, 128
    %1593 = vxpose.xlu0.b32.cont [3/16] 0.0, 128
    %1594 = vxpose.xlu0.b32.cont [4/16] 0.0, 128
    %1595 = vxpose.xlu0.b32.cont [5/16] 0.0, 128
    %1596 = vxpose.xlu0.b32.cont [6/16] 0.0, 128
    %1597 = vxpose.xlu0.b32.cont [7/16] 0.0, 128
    %1598 = vxpose.xlu0.b32.cont [8/16] 0.0, 128
    %1599 = vxpose.xlu0.b32.cont [9/16] 0.0, 128
    %1600 = vxpose.xlu0.b32.cont [10/16] 0.0, 128
    %1601 = vxpose.xlu0.b32.cont [11/16] 0.0, 128
    %1602 = vxpose.xlu0.b32.cont [12/16] 0.0, 128
    %1603 = vxpose.xlu0.b32.cont [13/16] 0.0, 128
    %1604 = vxpose.xlu0.b32.cont [14/16] 0.0, 128
    %1605 = vxpose.xlu0.b32.cont [15/16] 0.0, 128
    %1606 = vxpose.xlu0.b32.end [16/16] 0.0, 128
    %v1607 = vpop.trf.xlu0
    %v1608 = vpop.trf.xlu0
    %v1609 = vpop.trf.xlu0
    %v1610 = vpop.trf.xlu0
    %v1611 = vpop.trf.xlu0
    %v1612 = vpop.trf.xlu0
    %v1613 = vpop.trf.xlu0
    %v1614 = vpop.trf.xlu0
    %v1615 = vpop.trf.xlu0
    %v1616 = vpop.trf.xlu0
    %v1617 = vpop.trf.xlu0
    %v1618 = vpop.trf.xlu0
    %v1619 = vpop.trf.xlu0
    %v1620 = vpop.trf.xlu0
    %v1621 = vpop.trf.xlu0
    %v1622 = vpop.trf.xlu0
    %1623 = vxpose.xlu0.b32.start [1/16] %v1421, 128
    %1624 = vxpose.xlu0.b32.cont [2/16] 0.0, 128
    %1625 = vxpose.xlu0.b32.cont [3/16] 0.0, 128
    %1626 = vxpose.xlu0.b32.cont [4/16] 0.0, 128
    %1627 = vxpose.xlu0.b32.cont [5/16] 0.0, 128
    %1628 = vxpose.xlu0.b32.cont [6/16] 0.0, 128
    %1629 = vxpose.xlu0.b32.cont [7/16] 0.0, 128
    %1630 = vxpose.xlu0.b32.cont [8/16] 0.0, 128
    %1631 = vxpose.xlu0.b32.cont [9/16] 0.0, 128
    %1632 = vxpose.xlu0.b32.cont [10/16] 0.0, 128
    %1633 = vxpose.xlu0.b32.cont [11/16] 0.0, 128
    %1634 = vxpose.xlu0.b32.cont [12/16] 0.0, 128
    %1635 = vxpose.xlu0.b32.cont [13/16] 0.0, 128
    %1636 = vxpose.xlu0.b32.cont [14/16] 0.0, 128
    %1637 = vxpose.xlu0.b32.cont [15/16] 0.0, 128
    %1638 = vxpose.xlu0.b32.end [16/16] 0.0, 128
    %v1639 = vpop.trf.xlu0
    %v1640 = vpop.trf.xlu0
    %v1641 = vpop.trf.xlu0
    %v1642 = vpop.trf.xlu0
    %v1643 = vpop.trf.xlu0
    %v1644 = vpop.trf.xlu0
    %v1645 = vpop.trf.xlu0
    %v1646 = vpop.trf.xlu0
    %v1647 = vpop.trf.xlu0
    %v1648 = vpop.trf.xlu0
    %v1649 = vpop.trf.xlu0
    %v1650 = vpop.trf.xlu0
    %v1651 = vpop.trf.xlu0
    %v1652 = vpop.trf.xlu0
    %v1653 = vpop.trf.xlu0
    %v1654 = vpop.trf.xlu0
    %1655 = vxpose.xlu0.b32.start [1/16] %v1422, 128
    %1656 = vxpose.xlu0.b32.cont [2/16] 0.0, 128
    %1657 = vxpose.xlu0.b32.cont [3/16] 0.0, 128
    %1658 = vxpose.xlu0.b32.cont [4/16] 0.0, 128
    %1659 = vxpose.xlu0.b32.cont [5/16] 0.0, 128
    %1660 = vxpose.xlu0.b32.cont [6/16] 0.0, 128
    %1661 = vxpose.xlu0.b32.cont [7/16] 0.0, 128
    %1662 = vxpose.xlu0.b32.cont [8/16] 0.0, 128
    %1663 = vxpose.xlu0.b32.cont [9/16] 0.0, 128
    %1664 = vxpose.xlu0.b32.cont [10/16] 0.0, 128
    %1665 = vxpose.xlu0.b32.cont [11/16] 0.0, 128
    %1666 = vxpose.xlu0.b32.cont [12/16] 0.0, 128
    %1667 = vxpose.xlu0.b32.cont [13/16] 0.0, 128
    %1668 = vxpose.xlu0.b32.cont [14/16] 0.0, 128
    %1669 = vxpose.xlu0.b32.cont [15/16] 0.0, 128
    %1670 = vxpose.xlu0.b32.end [16/16] 0.0, 128
    %v1671 = vpop.trf.xlu0
    %v1672 = vpop.trf.xlu0
    %v1673 = vpop.trf.xlu0
    %v1674 = vpop.trf.xlu0
    %v1675 = vpop.trf.xlu0
    %v1676 = vpop.trf.xlu0
    %v1677 = vpop.trf.xlu0
    %v1678 = vpop.trf.xlu0
    %v1679 = vpop.trf.xlu0
    %v1680 = vpop.trf.xlu0
    %v1681 = vpop.trf.xlu0
    %v1682 = vpop.trf.xlu0
    %v1683 = vpop.trf.xlu0
    %v1684 = vpop.trf.xlu0
    %v1685 = vpop.trf.xlu0
    %v1686 = vpop.trf.xlu0
    %1687 = vxpose.xlu0.b32.start [1/16] %v1423, 128
    %1688 = vxpose.xlu0.b32.cont [2/16] 0.0, 128
    %1689 = vxpose.xlu0.b32.cont [3/16] 0.0, 128
    %1690 = vxpose.xlu0.b32.cont [4/16] 0.0, 128
    %1691 = vxpose.xlu0.b32.cont [5/16] 0.0, 128
    %1692 = vxpose.xlu0.b32.cont [6/16] 0.0, 128
    %1693 = vxpose.xlu0.b32.cont [7/16] 0.0, 128
    %1694 = vxpose.xlu0.b32.cont [8/16] 0.0, 128
    %1695 = vxpose.xlu0.b32.cont [9/16] 0.0, 128
    %1696 = vxpose.xlu0.b32.cont [10/16] 0.0, 128
    %1697 = vxpose.xlu0.b32.cont [11/16] 0.0, 128
    %1698 = vxpose.xlu0.b32.cont [12/16] 0.0, 128
    %1699 = vxpose.xlu0.b32.cont [13/16] 0.0, 128
    %1700 = vxpose.xlu0.b32.cont [14/16] 0.0, 128
    %1701 = vxpose.xlu0.b32.cont [15/16] 0.0, 128
    %1702 = vxpose.xlu0.b32.end [16/16] 0.0, 128
    %v1703 = vpop.trf.xlu0
    %v1704 = vpop.trf.xlu0
    %v1705 = vpop.trf.xlu0
    %v1706 = vpop.trf.xlu0
    %v1707 = vpop.trf.xlu0
    %v1708 = vpop.trf.xlu0
    %v1709 = vpop.trf.xlu0
    %v1710 = vpop.trf.xlu0
    %v1711 = vpop.trf.xlu0
    %v1712 = vpop.trf.xlu0
    %v1713 = vpop.trf.xlu0
    %v1714 = vpop.trf.xlu0
    %v1715 = vpop.trf.xlu0
    %v1716 = vpop.trf.xlu0
    %v1717 = vpop.trf.xlu0
    %v1718 = vpop.trf.xlu0
    %1719 = vxpose.xlu0.b32.start [1/16] %v1424, 128
    %1720 = vxpose.xlu0.b32.cont [2/16] 0.0, 128
    %1721 = vxpose.xlu0.b32.cont [3/16] 0.0, 128
    %1722 = vxpose.xlu0.b32.cont [4/16] 0.0, 128
    %1723 = vxpose.xlu0.b32.cont [5/16] 0.0, 128
    %1724 = vxpose.xlu0.b32.cont [6/16] 0.0, 128
    %1725 = vxpose.xlu0.b32.cont [7/16] 0.0, 128
    %1726 = vxpose.xlu0.b32.cont [8/16] 0.0, 128
    %1727 = vxpose.xlu0.b32.cont [9/16] 0.0, 128
    %1728 = vxpose.xlu0.b32.cont [10/16] 0.0, 128
    %1729 = vxpose.xlu0.b32.cont [11/16] 0.0, 128
    %1730 = vxpose.xlu0.b32.cont [12/16] 0.0, 128
    %1731 = vxpose.xlu0.b32.cont [13/16] 0.0, 128
    %1732 = vxpose.xlu0.b32.cont [14/16] 0.0, 128
    %1733 = vxpose.xlu0.b32.cont [15/16] 0.0, 128
    %1734 = vxpose.xlu0.b32.end [16/16] 0.0, 128
    %v1735 = vpop.trf.xlu0
    %v1736 = vpop.trf.xlu0
    %v1737 = vpop.trf.xlu0
    %v1738 = vpop.trf.xlu0
    %v1739 = vpop.trf.xlu0
    %v1740 = vpop.trf.xlu0
    %v1741 = vpop.trf.xlu0
    %v1742 = vpop.trf.xlu0
    %v1743 = vpop.trf.xlu0
    %v1744 = vpop.trf.xlu0
    %v1745 = vpop.trf.xlu0
    %v1746 = vpop.trf.xlu0
    %v1747 = vpop.trf.xlu0
    %v1748 = vpop.trf.xlu0
    %v1749 = vpop.trf.xlu0
    %v1750 = vpop.trf.xlu0
    %1751 = vxpose.xlu0.b32.start [1/16] %v1425, 128
    %1752 = vxpose.xlu0.b32.cont [2/16] 0.0, 128
    %1753 = vxpose.xlu0.b32.cont [3/16] 0.0, 128
    %1754 = vxpose.xlu0.b32.cont [4/16] 0.0, 128
    %1755 = vxpose.xlu0.b32.cont [5/16] 0.0, 128
    %1756 = vxpose.xlu0.b32.cont [6/16] 0.0, 128
    %1757 = vxpose.xlu0.b32.cont [7/16] 0.0, 128
    %1758 = vxpose.xlu0.b32.cont [8/16] 0.0, 128
    %1759 = vxpose.xlu0.b32.cont [9/16] 0.0, 128
    %1760 = vxpose.xlu0.b32.cont [10/16] 0.0, 128
    %1761 = vxpose.xlu0.b32.cont [11/16] 0.0, 128
    %1762 = vxpose.xlu0.b32.cont [12/16] 0.0, 128
    %1763 = vxpose.xlu0.b32.cont [13/16] 0.0, 128
    %1764 = vxpose.xlu0.b32.cont [14/16] 0.0, 128
    %1765 = vxpose.xlu0.b32.cont [15/16] 0.0, 128
    %1766 = vxpose.xlu0.b32.end [16/16] 0.0, 128
    %v1767 = vpop.trf.xlu0
    %v1768 = vpop.trf.xlu0
    %v1769 = vpop.trf.xlu0
    %v1770 = vpop.trf.xlu0
    %v1771 = vpop.trf.xlu0
    %v1772 = vpop.trf.xlu0
    %v1773 = vpop.trf.xlu0
    %v1774 = vpop.trf.xlu0
    %v1775 = vpop.trf.xlu0
    %v1776 = vpop.trf.xlu0
    %v1777 = vpop.trf.xlu0
    %v1778 = vpop.trf.xlu0
    %v1779 = vpop.trf.xlu0
    %v1780 = vpop.trf.xlu0
    %v1781 = vpop.trf.xlu0
    %v1782 = vpop.trf.xlu0
    %1783 = vxpose.xlu0.b32.start [1/16] %v1426, 128
    %1784 = vxpose.xlu0.b32.cont [2/16] 0.0, 128
    %1785 = vxpose.xlu0.b32.cont [3/16] 0.0, 128
    %1786 = vxpose.xlu0.b32.cont [4/16] 0.0, 128
    %1787 = vxpose.xlu0.b32.cont [5/16] 0.0, 128
    %1788 = vxpose.xlu0.b32.cont [6/16] 0.0, 128
    %1789 = vxpose.xlu0.b32.cont [7/16] 0.0, 128
    %1790 = vxpose.xlu0.b32.cont [8/16] 0.0, 128
    %1791 = vxpose.xlu0.b32.cont [9/16] 0.0, 128
    %1792 = vxpose.xlu0.b32.cont [10/16] 0.0, 128
    %1793 = vxpose.xlu0.b32.cont [11/16] 0.0, 128
    %1794 = vxpose.xlu0.b32.cont [12/16] 0.0, 128
    %1795 = vxpose.xlu0.b32.cont [13/16] 0.0, 128
    %1796 = vxpose.xlu0.b32.cont [14/16] 0.0, 128
    %1797 = vxpose.xlu0.b32.cont [15/16] 0.0, 128
    %1798 = vxpose.xlu0.b32.end [16/16] 0.0, 128
    %v1799 = vpop.trf.xlu0
    %v1800 = vpop.trf.xlu0
    %v1801 = vpop.trf.xlu0
    %v1802 = vpop.trf.xlu0
    %v1803 = vpop.trf.xlu0
    %v1804 = vpop.trf.xlu0
    %v1805 = vpop.trf.xlu0
    %v1806 = vpop.trf.xlu0
    %v1807 = vpop.trf.xlu0
    %v1808 = vpop.trf.xlu0
    %v1809 = vpop.trf.xlu0
    %v1810 = vpop.trf.xlu0
    %v1811 = vpop.trf.xlu0
    %v1812 = vpop.trf.xlu0
    %v1813 = vpop.trf.xlu0
    %v1814 = vpop.trf.xlu0
    %s1815 = scalar_lea.vmem %s1, 8
    %v1816 = vld [vmem:[%s1815] sm:$0xff]
    %v1818 = vsel %vm598, %v1447, 0
    %v1821 = vsel %vm598, %v1575, 0
    %1823 = vmatprep.subr.mxu0 0.0
    %1824 = vmatpush1.xpose.msra.mxu0 0.0
    %1825 = vmatprep.subr.mxu0 0.0
    %1826 = vmatpush1.xpose.msra.mxu0 0.0
    %1827 = vmatprep.subr.mxu0 0.0
    %1828 = vmatpush1.xpose.msra.mxu0 0.0
    %1829 = vmatprep.subr.mxu0 0.0
    %1830 = vmatpush1.xpose.msra.mxu0 0.0
    %1831 = vmatprep.subr.mxu0 0.0
    %1832 = vmatpush1.xpose.msra.mxu0 0.0
    %1833 = vmatprep.subr.mxu0 0.0
    %1834 = vmatpush1.xpose.msra.mxu0 0.0
    %1835 = vmatprep.subr.mxu0 0.0
    %1836 = vmatpush1.xpose.msra.mxu0 0.0
    %1837 = vmatprep.subr.mxu0 0.0
    %1838 = vmatpush1.xpose.msra.mxu0 0.0
    %1839 = vmatprep.subr.mxu0 0.0
    %1840 = vmatpush1.xpose.msra.mxu0 0.0
    %1841 = vmatprep.subr.mxu0 0.0
    %1842 = vmatpush1.xpose.msra.mxu0 0.0
    %1843 = vmatprep.subr.mxu0 0.0
    %1844 = vmatpush1.xpose.msra.mxu0 0.0
    %1845 = vmatprep.subr.mxu0 0.0
    %1846 = vmatpush1.xpose.msra.mxu0 0.0
    %1847 = vmatprep.subr.mxu0 0.0
    %1848 = vmatpush1.xpose.msra.mxu0 0.0
    %1849 = vmatprep.subr.mxu0 0.0
    %1850 = vmatpush1.xpose.msra.mxu0 0.0
    %1851 = vmatprep.subr.mxu0 0.0
    %1852 = vmatpush1.xpose.msra.mxu0 0.0
    %1853 = vmatprep.subr.mxu0 0.0
    %1854 = vmatpush1.xpose.msra.mxu0 %v1821
    %1855 = vmatprep.subr.mxu0 0.0
    %1856 = vmatpush2.xpose.msra.mxu0 0.0
    %1857 = vmatprep.subr.mxu0 0.0
    %1858 = vmatpush2.xpose.msra.mxu0 0.0
    %1859 = vmatprep.subr.mxu0 0.0
    %1860 = vmatpush2.xpose.msra.mxu0 0.0
    %1861 = vmatprep.subr.mxu0 0.0
    %1862 = vmatpush2.xpose.msra.mxu0 0.0
    %1863 = vmatprep.subr.mxu0 0.0
    %1864 = vmatpush2.xpose.msra.mxu0 0.0
    %1865 = vmatprep.subr.mxu0 0.0
    %1866 = vmatpush2.xpose.msra.mxu0 0.0
    %1867 = vmatprep.subr.mxu0 0.0
    %1868 = vmatpush2.xpose.msra.mxu0 0.0
    %1869 = vmatprep.subr.mxu0 0.0
    %1870 = vmatpush2.xpose.msra.mxu0 0.0
    %1871 = vmatprep.subr.mxu0 0.0
    %1872 = vmatpush2.xpose.msra.mxu0 0.0
    %1873 = vmatprep.subr.mxu0 0.0
    %1874 = vmatpush2.xpose.msra.mxu0 0.0
    %1875 = vmatprep.subr.mxu0 0.0
    %1876 = vmatpush2.xpose.msra.mxu0 0.0
    %1877 = vmatprep.subr.mxu0 0.0
    %1878 = vmatpush2.xpose.msra.mxu0 0.0
    %1879 = vmatprep.subr.mxu0 0.0
    %1880 = vmatpush2.xpose.msra.mxu0 0.0
    %1881 = vmatprep.subr.mxu0 0.0
    %1882 = vmatpush2.xpose.msra.mxu0 0.0
    %1883 = vmatprep.subr.mxu0 0.0
    %1884 = vmatpush2.xpose.msra.mxu0 0.0
    %1885 = vmatprep.subr.mxu0 0.0
    %1886 = vmatpush2.xpose.msra.mxu0 0.0
    %1887 = vmatprep.mubr.f32.mxu0 0.0
    %1888 = vmatmul.mubr.f32.gmra.mxu0 %v1818
    %v1889 = vpop.f32.mrf.mxu0
    %v1890 = vadd.f32 %v1816, %v1889
    %v1891 = vpop.f32.mrf.mxu0
    %1892 = vdwg.mxu0
    %v1894 = vsel %vm598, %v1479, 0
    %v1897 = vsel %vm598, %v1607, 0
    %1899 = vmatprep.subr.mxu0 0.0
    %1900 = vmatpush1.xpose.msra.mxu0 0.0
    %1901 = vmatprep.subr.mxu0 0.0
    %1902 = vmatpush1.xpose.msra.mxu0 0.0
    %1903 = vmatprep.subr.mxu0 0.0
    %1904 = vmatpush1.xpose.msra.mxu0 0.0
    %1905 = vmatprep.subr.mxu0 0.0
    %1906 = vmatpush1.xpose.msra.mxu0 0.0
    %1907 = vmatprep.subr.mxu0 0.0
    %1908 = vmatpush1.xpose.msra.mxu0 0.0
    %1909 = vmatprep.subr.mxu0 0.0
    %1910 = vmatpush1.xpose.msra.mxu0 0.0
    %1911 = vmatprep.subr.mxu0 0.0
    %1912 = vmatpush1.xpose.msra.mxu0 0.0
    %1913 = vmatprep.subr.mxu0 0.0
    %1914 = vmatpush1.xpose.msra.mxu0 0.0
    %1915 = vmatprep.subr.mxu0 0.0
    %1916 = vmatpush1.xpose.msra.mxu0 0.0
    %1917 = vmatprep.subr.mxu0 0.0
    %1918 = vmatpush1.xpose.msra.mxu0 0.0
    %1919 = vmatprep.subr.mxu0 0.0
    %1920 = vmatpush1.xpose.msra.mxu0 0.0
    %1921 = vmatprep.subr.mxu0 0.0
    %1922 = vmatpush1.xpose.msra.mxu0 0.0
    %1923 = vmatprep.subr.mxu0 0.0
    %1924 = vmatpush1.xpose.msra.mxu0 0.0
    %1925 = vmatprep.subr.mxu0 0.0
    %1926 = vmatpush1.xpose.msra.mxu0 0.0
    %1927 = vmatprep.subr.mxu0 0.0
    %1928 = vmatpush1.xpose.msra.mxu0 0.0
    %1929 = vmatprep.subr.mxu0 0.0
    %1930 = vmatpush1.xpose.msra.mxu0 %v1897
    %1931 = vmatprep.subr.mxu0 0.0
    %1932 = vmatpush2.xpose.msra.mxu0 0.0
    %1933 = vmatprep.subr.mxu0 0.0
    %1934 = vmatpush2.xpose.msra.mxu0 0.0
    %1935 = vmatprep.subr.mxu0 0.0
    %1936 = vmatpush2.xpose.msra.mxu0 0.0
    %1937 = vmatprep.subr.mxu0 0.0
    %1938 = vmatpush2.xpose.msra.mxu0 0.0
    %1939 = vmatprep.subr.mxu0 0.0
    %1940 = vmatpush2.xpose.msra.mxu0 0.0
    %1941 = vmatprep.subr.mxu0 0.0
    %1942 = vmatpush2.xpose.msra.mxu0 0.0
    %1943 = vmatprep.subr.mxu0 0.0
    %1944 = vmatpush2.xpose.msra.mxu0 0.0
    %1945 = vmatprep.subr.mxu0 0.0
    %1946 = vmatpush2.xpose.msra.mxu0 0.0
    %1947 = vmatprep.subr.mxu0 0.0
    %1948 = vmatpush2.xpose.msra.mxu0 0.0
    %1949 = vmatprep.subr.mxu0 0.0
    %1950 = vmatpush2.xpose.msra.mxu0 0.0
    %1951 = vmatprep.subr.mxu0 0.0
    %1952 = vmatpush2.xpose.msra.mxu0 0.0
    %1953 = vmatprep.subr.mxu0 0.0
    %1954 = vmatpush2.xpose.msra.mxu0 0.0
    %1955 = vmatprep.subr.mxu0 0.0
    %1956 = vmatpush2.xpose.msra.mxu0 0.0
    %1957 = vmatprep.subr.mxu0 0.0
    %1958 = vmatpush2.xpose.msra.mxu0 0.0
    %1959 = vmatprep.subr.mxu0 0.0
    %1960 = vmatpush2.xpose.msra.mxu0 0.0
    %1961 = vmatprep.subr.mxu0 0.0
    %1962 = vmatpush2.xpose.msra.mxu0 0.0
    %1963 = vmatprep.mubr.f32.mxu0 0.0
    %1964 = vmatmul.mubr.f32.gmra.mxu0 %v1894
    %v1965 = vpop.f32.mrf.mxu0
    %v1966 = vadd.f32 %v1816, %v1965
    %v1967 = vpop.f32.mrf.mxu0
    %1968 = vdwg.mxu0
    %v1970 = vsel %vm598, %v1511, 0
    %v1973 = vsel %vm598, %v1639, 0
    %1975 = vmatprep.subr.mxu0 0.0
    %1976 = vmatpush1.xpose.msra.mxu0 0.0
    %1977 = vmatprep.subr.mxu0 0.0
    %1978 = vmatpush1.xpose.msra.mxu0 0.0
    %1979 = vmatprep.subr.mxu0 0.0
    %1980 = vmatpush1.xpose.msra.mxu0 0.0
    %1981 = vmatprep.subr.mxu0 0.0
    %1982 = vmatpush1.xpose.msra.mxu0 0.0
    %1983 = vmatprep.subr.mxu0 0.0
    %1984 = vmatpush1.xpose.msra.mxu0 0.0
    %1985 = vmatprep.subr.mxu0 0.0
    %1986 = vmatpush1.xpose.msra.mxu0 0.0
    %1987 = vmatprep.subr.mxu0 0.0
    %1988 = vmatpush1.xpose.msra.mxu0 0.0
    %1989 = vmatprep.subr.mxu0 0.0
    %1990 = vmatpush1.xpose.msra.mxu0 0.0
    %1991 = vmatprep.subr.mxu0 0.0
    %1992 = vmatpush1.xpose.msra.mxu0 0.0
    %1993 = vmatprep.subr.mxu0 0.0
    %1994 = vmatpush1.xpose.msra.mxu0 0.0
    %1995 = vmatprep.subr.mxu0 0.0
    %1996 = vmatpush1.xpose.msra.mxu0 0.0
    %1997 = vmatprep.subr.mxu0 0.0
    %1998 = vmatpush1.xpose.msra.mxu0 0.0
    %1999 = vmatprep.subr.mxu0 0.0
    %2000 = vmatpush1.xpose.msra.mxu0 0.0
    %2001 = vmatprep.subr.mxu0 0.0
    %2002 = vmatpush1.xpose.msra.mxu0 0.0
    %2003 = vmatprep.subr.mxu0 0.0
    %2004 = vmatpush1.xpose.msra.mxu0 0.0
    %2005 = vmatprep.subr.mxu0 0.0
    %2006 = vmatpush1.xpose.msra.mxu0 %v1973
    %2007 = vmatprep.subr.mxu0 0.0
    %2008 = vmatpush2.xpose.msra.mxu0 0.0
    %2009 = vmatprep.subr.mxu0 0.0
    %2010 = vmatpush2.xpose.msra.mxu0 0.0
    %2011 = vmatprep.subr.mxu0 0.0
    %2012 = vmatpush2.xpose.msra.mxu0 0.0
    %2013 = vmatprep.subr.mxu0 0.0
    %2014 = vmatpush2.xpose.msra.mxu0 0.0
    %2015 = vmatprep.subr.mxu0 0.0
    %2016 = vmatpush2.xpose.msra.mxu0 0.0
    %2017 = vmatprep.subr.mxu0 0.0
    %2018 = vmatpush2.xpose.msra.mxu0 0.0
    %2019 = vmatprep.subr.mxu0 0.0
    %2020 = vmatpush2.xpose.msra.mxu0 0.0
    %2021 = vmatprep.subr.mxu0 0.0
    %2022 = vmatpush2.xpose.msra.mxu0 0.0
    %2023 = vmatprep.subr.mxu0 0.0
    %2024 = vmatpush2.xpose.msra.mxu0 0.0
    %2025 = vmatprep.subr.mxu0 0.0
    %2026 = vmatpush2.xpose.msra.mxu0 0.0
    %2027 = vmatprep.subr.mxu0 0.0
    %2028 = vmatpush2.xpose.msra.mxu0 0.0
    %2029 = vmatprep.subr.mxu0 0.0
    %2030 = vmatpush2.xpose.msra.mxu0 0.0
    %2031 = vmatprep.subr.mxu0 0.0
    %2032 = vmatpush2.xpose.msra.mxu0 0.0
    %2033 = vmatprep.subr.mxu0 0.0
    %2034 = vmatpush2.xpose.msra.mxu0 0.0
    %2035 = vmatprep.subr.mxu0 0.0
    %2036 = vmatpush2.xpose.msra.mxu0 0.0
    %2037 = vmatprep.subr.mxu0 0.0
    %2038 = vmatpush2.xpose.msra.mxu0 0.0
    %2039 = vmatprep.mubr.f32.mxu0 0.0
    %2040 = vmatmul.mubr.f32.gmra.mxu0 %v1970
    %v2041 = vpop.f32.mrf.mxu0
    %v2042 = vadd.f32 %v1816, %v2041
    %v2043 = vpop.f32.mrf.mxu0
    %2044 = vdwg.mxu0
    %v2046 = vsel %vm598, %v1543, 0
    %v2049 = vsel %vm598, %v1671, 0
    %2051 = vmatprep.subr.mxu0 0.0
    %2052 = vmatpush1.xpose.msra.mxu0 0.0
    %2053 = vmatprep.subr.mxu0 0.0
    %2054 = vmatpush1.xpose.msra.mxu0 0.0
    %2055 = vmatprep.subr.mxu0 0.0
    %2056 = vmatpush1.xpose.msra.mxu0 0.0
    %2057 = vmatprep.subr.mxu0 0.0
    %2058 = vmatpush1.xpose.msra.mxu0 0.0
    %2059 = vmatprep.subr.mxu0 0.0
    %2060 = vmatpush1.xpose.msra.mxu0 0.0
    %2061 = vmatprep.subr.mxu0 0.0
    %2062 = vmatpush1.xpose.msra.mxu0 0.0
    %2063 = vmatprep.subr.mxu0 0.0
    %2064 = vmatpush1.xpose.msra.mxu0 0.0
    %2065 = vmatprep.subr.mxu0 0.0
    %2066 = vmatpush1.xpose.msra.mxu0 0.0
    %2067 = vmatprep.subr.mxu0 0.0
    %2068 = vmatpush1.xpose.msra.mxu0 0.0
    %2069 = vmatprep.subr.mxu0 0.0
    %2070 = vmatpush1.xpose.msra.mxu0 0.0
    %2071 = vmatprep.subr.mxu0 0.0
    %2072 = vmatpush1.xpose.msra.mxu0 0.0
    %2073 = vmatprep.subr.mxu0 0.0
    %2074 = vmatpush1.xpose.msra.mxu0 0.0
    %2075 = vmatprep.subr.mxu0 0.0
    %2076 = vmatpush1.xpose.msra.mxu0 0.0
    %2077 = vmatprep.subr.mxu0 0.0
    %2078 = vmatpush1.xpose.msra.mxu0 0.0
    %2079 = vmatprep.subr.mxu0 0.0
    %2080 = vmatpush1.xpose.msra.mxu0 0.0
    %2081 = vmatprep.subr.mxu0 0.0
    %2082 = vmatpush1.xpose.msra.mxu0 %v2049
    %2083 = vmatprep.subr.mxu0 0.0
    %2084 = vmatpush2.xpose.msra.mxu0 0.0
    %2085 = vmatprep.subr.mxu0 0.0
    %2086 = vmatpush2.xpose.msra.mxu0 0.0
    %2087 = vmatprep.subr.mxu0 0.0
    %2088 = vmatpush2.xpose.msra.mxu0 0.0
    %2089 = vmatprep.subr.mxu0 0.0
    %2090 = vmatpush2.xpose.msra.mxu0 0.0
    %2091 = vmatprep.subr.mxu0 0.0
    %2092 = vmatpush2.xpose.msra.mxu0 0.0
    %2093 = vmatprep.subr.mxu0 0.0
    %2094 = vmatpush2.xpose.msra.mxu0 0.0
    %2095 = vmatprep.subr.mxu0 0.0
    %2096 = vmatpush2.xpose.msra.mxu0 0.0
    %2097 = vmatprep.subr.mxu0 0.0
    %2098 = vmatpush2.xpose.msra.mxu0 0.0
    %2099 = vmatprep.subr.mxu0 0.0
    %2100 = vmatpush2.xpose.msra.mxu0 0.0
    %2101 = vmatprep.subr.mxu0 0.0
    %2102 = vmatpush2.xpose.msra.mxu0 0.0
    %2103 = vmatprep.subr.mxu0 0.0
    %2104 = vmatpush2.xpose.msra.mxu0 0.0
    %2105 = vmatprep.subr.mxu0 0.0
    %2106 = vmatpush2.xpose.msra.mxu0 0.0
    %2107 = vmatprep.subr.mxu0 0.0
    %2108 = vmatpush2.xpose.msra.mxu0 0.0
    %2109 = vmatprep.subr.mxu0 0.0
    %2110 = vmatpush2.xpose.msra.mxu0 0.0
    %2111 = vmatprep.subr.mxu0 0.0
    %2112 = vmatpush2.xpose.msra.mxu0 0.0
    %2113 = vmatprep.subr.mxu0 0.0
    %2114 = vmatpush2.xpose.msra.mxu0 0.0
    %2115 = vmatprep.mubr.f32.mxu0 0.0
    %2116 = vmatmul.mubr.f32.gmra.mxu0 %v2046
    %v2117 = vpop.f32.mrf.mxu0
    %v2118 = vadd.f32 %v1816, %v2117
    %v2119 = vpop.f32.mrf.mxu0
    %2120 = vdwg.mxu0
    %v2121 = vsel %vm598, %v1890, -inf
    %2122 = vmax.xlane.f32.xlu0 %v2121
    %v2123 = vpop.xlane.xlu0 %2122
    %v2124 = vsel %vm598, %v1966, -inf
    %2125 = vmax.xlane.f32.xlu0 %v2124
    %v2126 = vpop.xlane.xlu0 %2125
    %v2127 = vsel %vm598, %v2042, -inf
    %2128 = vmax.xlane.f32.xlu0 %v2127
    %v2129 = vpop.xlane.xlu0 %2128
    %v2130 = vsel %vm598, %v2118, -inf
    %2131 = vmax.xlane.f32.xlu0 %v2130
    %v2132 = vpop.xlane.xlu0 %2131
    %v2133 = vsub.f32 %v1890, %v2123
    %v2134 = vsub.f32 %v1966, %v2126
    %v2135 = vsub.f32 %v2042, %v2129
    %v2136 = vsub.f32 %v2118, %v2132
    %v2137 = vmul.f32 %v2133, 1.442695
    %v2138 = vpow.pop %v2137
    %v2139 = vmul.f32 %v2134, 1.442695
    %v2140 = vpow.pop %v2139
    %v2141 = vmul.f32 %v2135, 1.442695
    %v2142 = vpow.pop %v2141
    %v2143 = vmul.f32 %v2136, 1.442695
    %v2144 = vpow.pop %v2143
    %v2145 = vsel %vm598, %v2138, 0.0
    %2146 = vadd.xlane.f32.xlu0 %v2145
    %v2147 = vpop.xlane.xlu0 %2146
    %v2148 = vsel %vm598, %v2140, 0.0
    %2149 = vadd.xlane.f32.xlu0 %v2148
    %v2150 = vpop.xlane.xlu0 %2149
    %v2151 = vsel %vm598, %v2142, 0.0
    %2152 = vadd.xlane.f32.xlu0 %v2151
    %v2153 = vpop.xlane.xlu0 %2152
    %v2154 = vsel %vm598, %v2144, 0.0
    %2155 = vadd.xlane.f32.xlu0 %v2154
    %v2156 = vpop.xlane.xlu0 %2155
    %v2157 = vrcp.pop %v2147
    %v2158 = vrcp.pop %v2150
    %v2159 = vrcp.pop %v2153
    %v2160 = vrcp.pop %v2156
    %v2161 = vmul.f32 %v2138, %v2157
    %v2162 = vmul.f32 %v2140, %v2158
    %v2163 = vmul.f32 %v2142, %v2159
    %v2164 = vmul.f32 %v2144, %v2160
    %v2166 = vsel %vm598, %v2161, 0
    %2168 = vmatprep.subr.mxu0 0.0
    %2169 = vmatpush1.msra.mxu0 0.0
    %2170 = vmatprep.subr.mxu0 0.0
    %2171 = vmatpush1.msra.mxu0 0.0
    %2172 = vmatprep.subr.mxu0 0.0
    %2173 = vmatpush1.msra.mxu0 0.0
    %2174 = vmatprep.subr.mxu0 0.0
    %2175 = vmatpush1.msra.mxu0 0.0
    %2176 = vmatprep.subr.mxu0 0.0
    %2177 = vmatpush1.msra.mxu0 0.0
    %2178 = vmatprep.subr.mxu0 0.0
    %2179 = vmatpush1.msra.mxu0 0.0
    %2180 = vmatprep.subr.mxu0 0.0
    %2181 = vmatpush1.msra.mxu0 0.0
    %2182 = vmatprep.subr.mxu0 0.0
    %2183 = vmatpush1.msra.mxu0 0.0
    %2184 = vmatprep.subr.mxu0 0.0
    %2185 = vmatpush1.msra.mxu0 0.0
    %2186 = vmatprep.subr.mxu0 0.0
    %2187 = vmatpush1.msra.mxu0 0.0
    %2188 = vmatprep.subr.mxu0 0.0
    %2189 = vmatpush1.msra.mxu0 0.0
    %2190 = vmatprep.subr.mxu0 0.0
    %2191 = vmatpush1.msra.mxu0 0.0
    %2192 = vmatprep.subr.mxu0 0.0
    %2193 = vmatpush1.msra.mxu0 0.0
    %2194 = vmatprep.subr.mxu0 0.0
    %2195 = vmatpush1.msra.mxu0 0.0
    %2196 = vmatprep.subr.mxu0 0.0
    %2197 = vmatpush1.msra.mxu0 0.0
    %2198 = vmatprep.subr.mxu0 0.0
    %2199 = vmatpush1.msra.mxu0 %v1703
    %2200 = vmatprep.subr.mxu0 0.0
    %2201 = vmatpush2.msra.mxu0 0.0
    %2202 = vmatprep.subr.mxu0 0.0
    %2203 = vmatpush2.msra.mxu0 0.0
    %2204 = vmatprep.subr.mxu0 0.0
    %2205 = vmatpush2.msra.mxu0 0.0
    %2206 = vmatprep.subr.mxu0 0.0
    %2207 = vmatpush2.msra.mxu0 0.0
    %2208 = vmatprep.subr.mxu0 0.0
    %2209 = vmatpush2.msra.mxu0 0.0
    %2210 = vmatprep.subr.mxu0 0.0
    %2211 = vmatpush2.msra.mxu0 0.0
    %2212 = vmatprep.subr.mxu0 0.0
    %2213 = vmatpush2.msra.mxu0 0.0
    %2214 = vmatprep.subr.mxu0 0.0
    %2215 = vmatpush2.msra.mxu0 0.0
    %2216 = vmatprep.subr.mxu0 0.0
    %2217 = vmatpush2.msra.mxu0 0.0
    %2218 = vmatprep.subr.mxu0 0.0
    %2219 = vmatpush2.msra.mxu0 0.0
    %2220 = vmatprep.subr.mxu0 0.0
    %2221 = vmatpush2.msra.mxu0 0.0
    %2222 = vmatprep.subr.mxu0 0.0
    %2223 = vmatpush2.msra.mxu0 0.0
    %2224 = vmatprep.subr.mxu0 0.0
    %2225 = vmatpush2.msra.mxu0 0.0
    %2226 = vmatprep.subr.mxu0 0.0
    %2227 = vmatpush2.msra.mxu0 0.0
    %2228 = vmatprep.subr.mxu0 0.0
    %2229 = vmatpush2.msra.mxu0 0.0
    %2230 = vmatprep.subr.mxu0 0.0
    %2231 = vmatpush2.msra.mxu0 0.0
    %2232 = vmatprep.mubr.f32.mxu0 0.0
    %2233 = vmatmul.mubr.f32.gmra.mxu0 %v2166
    %v2234 = vpop.f32.mrf.mxu0
    %v2235 = vadd.f32 0.0, %v2234
    %v2236 = vpop.f32.mrf.mxu0
    %2237 = vdwg.mxu0
    %v2239 = vsel %vm598, %v2162, 0
    %2241 = vmatprep.subr.mxu0 0.0
    %2242 = vmatpush1.msra.mxu0 0.0
    %2243 = vmatprep.subr.mxu0 0.0
    %2244 = vmatpush1.msra.mxu0 0.0
    %2245 = vmatprep.subr.mxu0 0.0
    %2246 = vmatpush1.msra.mxu0 0.0
    %2247 = vmatprep.subr.mxu0 0.0
    %2248 = vmatpush1.msra.mxu0 0.0
    %2249 = vmatprep.subr.mxu0 0.0
    %2250 = vmatpush1.msra.mxu0 0.0
    %2251 = vmatprep.subr.mxu0 0.0
    %2252 = vmatpush1.msra.mxu0 0.0
    %2253 = vmatprep.subr.mxu0 0.0
    %2254 = vmatpush1.msra.mxu0 0.0
    %2255 = vmatprep.subr.mxu0 0.0
    %2256 = vmatpush1.msra.mxu0 0.0
    %2257 = vmatprep.subr.mxu0 0.0
    %2258 = vmatpush1.msra.mxu0 0.0
    %2259 = vmatprep.subr.mxu0 0.0
    %2260 = vmatpush1.msra.mxu0 0.0
    %2261 = vmatprep.subr.mxu0 0.0
    %2262 = vmatpush1.msra.mxu0 0.0
    %2263 = vmatprep.subr.mxu0 0.0
    %2264 = vmatpush1.msra.mxu0 0.0
    %2265 = vmatprep.subr.mxu0 0.0
    %2266 = vmatpush1.msra.mxu0 0.0
    %2267 = vmatprep.subr.mxu0 0.0
    %2268 = vmatpush1.msra.mxu0 0.0
    %2269 = vmatprep.subr.mxu0 0.0
    %2270 = vmatpush1.msra.mxu0 0.0
    %2271 = vmatprep.subr.mxu0 0.0
    %2272 = vmatpush1.msra.mxu0 %v1735
    %2273 = vmatprep.subr.mxu0 0.0
    %2274 = vmatpush2.msra.mxu0 0.0
    %2275 = vmatprep.subr.mxu0 0.0
    %2276 = vmatpush2.msra.mxu0 0.0
    %2277 = vmatprep.subr.mxu0 0.0
    %2278 = vmatpush2.msra.mxu0 0.0
    %2279 = vmatprep.subr.mxu0 0.0
    %2280 = vmatpush2.msra.mxu0 0.0
    %2281 = vmatprep.subr.mxu0 0.0
    %2282 = vmatpush2.msra.mxu0 0.0
    %2283 = vmatprep.subr.mxu0 0.0
    %2284 = vmatpush2.msra.mxu0 0.0
    %2285 = vmatprep.subr.mxu0 0.0
    %2286 = vmatpush2.msra.mxu0 0.0
    %2287 = vmatprep.subr.mxu0 0.0
    %2288 = vmatpush2.msra.mxu0 0.0
    %2289 = vmatprep.subr.mxu0 0.0
    %2290 = vmatpush2.msra.mxu0 0.0
    %2291 = vmatprep.subr.mxu0 0.0
    %2292 = vmatpush2.msra.mxu0 0.0
    %2293 = vmatprep.subr.mxu0 0.0
    %2294 = vmatpush2.msra.mxu0 0.0
    %2295 = vmatprep.subr.mxu0 0.0
    %2296 = vmatpush2.msra.mxu0 0.0
    %2297 = vmatprep.subr.mxu0 0.0
    %2298 = vmatpush2.msra.mxu0 0.0
    %2299 = vmatprep.subr.mxu0 0.0
    %2300 = vmatpush2.msra.mxu0 0.0
    %2301 = vmatprep.subr.mxu0 0.0
    %2302 = vmatpush2.msra.mxu0 0.0
    %2303 = vmatprep.subr.mxu0 0.0
    %2304 = vmatpush2.msra.mxu0 0.0
    %2305 = vmatprep.mubr.f32.mxu0 0.0
    %2306 = vmatmul.mubr.f32.gmra.mxu0 %v2239
    %v2307 = vpop.f32.mrf.mxu0
    %v2308 = vadd.f32 0.0, %v2307
    %v2309 = vpop.f32.mrf.mxu0
    %2310 = vdwg.mxu0
    %v2312 = vsel %vm598, %v2163, 0
    %2314 = vmatprep.subr.mxu0 0.0
    %2315 = vmatpush1.msra.mxu0 0.0
    %2316 = vmatprep.subr.mxu0 0.0
    %2317 = vmatpush1.msra.mxu0 0.0
    %2318 = vmatprep.subr.mxu0 0.0
    %2319 = vmatpush1.msra.mxu0 0.0
    %2320 = vmatprep.subr.mxu0 0.0
    %2321 = vmatpush1.msra.mxu0 0.0
    %2322 = vmatprep.subr.mxu0 0.0
    %2323 = vmatpush1.msra.mxu0 0.0
    %2324 = vmatprep.subr.mxu0 0.0
    %2325 = vmatpush1.msra.mxu0 0.0
    %2326 = vmatprep.subr.mxu0 0.0
    %2327 = vmatpush1.msra.mxu0 0.0
    %2328 = vmatprep.subr.mxu0 0.0
    %2329 = vmatpush1.msra.mxu0 0.0
    %2330 = vmatprep.subr.mxu0 0.0
    %2331 = vmatpush1.msra.mxu0 0.0
    %2332 = vmatprep.subr.mxu0 0.0
    %2333 = vmatpush1.msra.mxu0 0.0
    %2334 = vmatprep.subr.mxu0 0.0
    %2335 = vmatpush1.msra.mxu0 0.0
    %2336 = vmatprep.subr.mxu0 0.0
    %2337 = vmatpush1.msra.mxu0 0.0
    %2338 = vmatprep.subr.mxu0 0.0
    %2339 = vmatpush1.msra.mxu0 0.0
    %2340 = vmatprep.subr.mxu0 0.0
    %2341 = vmatpush1.msra.mxu0 0.0
    %2342 = vmatprep.subr.mxu0 0.0
    %2343 = vmatpush1.msra.mxu0 0.0
    %2344 = vmatprep.subr.mxu0 0.0
    %2345 = vmatpush1.msra.mxu0 %v1767
    %2346 = vmatprep.subr.mxu0 0.0
    %2347 = vmatpush2.msra.mxu0 0.0
    %2348 = vmatprep.subr.mxu0 0.0
    %2349 = vmatpush2.msra.mxu0 0.0
    %2350 = vmatprep.subr.mxu0 0.0
    %2351 = vmatpush2.msra.mxu0 0.0
    %2352 = vmatprep.subr.mxu0 0.0
    %2353 = vmatpush2.msra.mxu0 0.0
    %2354 = vmatprep.subr.mxu0 0.0
    %2355 = vmatpush2.msra.mxu0 0.0
    %2356 = vmatprep.subr.mxu0 0.0
    %2357 = vmatpush2.msra.mxu0 0.0
    %2358 = vmatprep.subr.mxu0 0.0
    %2359 = vmatpush2.msra.mxu0 0.0
    %2360 = vmatprep.subr.mxu0 0.0
    %2361 = vmatpush2.msra.mxu0 0.0
    %2362 = vmatprep.subr.mxu0 0.0
    %2363 = vmatpush2.msra.mxu0 0.0
    %2364 = vmatprep.subr.mxu0 0.0
    %2365 = vmatpush2.msra.mxu0 0.0
    %2366 = vmatprep.subr.mxu0 0.0
    %2367 = vmatpush2.msra.mxu0 0.0
    %2368 = vmatprep.subr.mxu0 0.0
    %2369 = vmatpush2.msra.mxu0 0.0
    %2370 = vmatprep.subr.mxu0 0.0
    %2371 = vmatpush2.msra.mxu0 0.0
    %2372 = vmatprep.subr.mxu0 0.0
    %2373 = vmatpush2.msra.mxu0 0.0
    %2374 = vmatprep.subr.mxu0 0.0
    %2375 = vmatpush2.msra.mxu0 0.0
    %2376 = vmatprep.subr.mxu0 0.0
    %2377 = vmatpush2.msra.mxu0 0.0
    %2378 = vmatprep.mubr.f32.mxu0 0.0
    %2379 = vmatmul.mubr.f32.gmra.mxu0 %v2312
    %v2380 = vpop.f32.mrf.mxu0
    %v2381 = vadd.f32 0.0, %v2380
    %v2382 = vpop.f32.mrf.mxu0
    %2383 = vdwg.mxu0
    %v2385 = vsel %vm598, %v2164, 0
    %2387 = vmatprep.subr.mxu0 0.0
    %2388 = vmatpush1.msra.mxu0 0.0
    %2389 = vmatprep.subr.mxu0 0.0
    %2390 = vmatpush1.msra.mxu0 0.0
    %2391 = vmatprep.subr.mxu0 0.0
    %2392 = vmatpush1.msra.mxu0 0.0
    %2393 = vmatprep.subr.mxu0 0.0
    %2394 = vmatpush1.msra.mxu0 0.0
    %2395 = vmatprep.subr.mxu0 0.0
    %2396 = vmatpush1.msra.mxu0 0.0
    %2397 = vmatprep.subr.mxu0 0.0
    %2398 = vmatpush1.msra.mxu0 0.0
    %2399 = vmatprep.subr.mxu0 0.0
    %2400 = vmatpush1.msra.mxu0 0.0
    %2401 = vmatprep.subr.mxu0 0.0
    %2402 = vmatpush1.msra.mxu0 0.0
    %2403 = vmatprep.subr.mxu0 0.0
    %2404 = vmatpush1.msra.mxu0 0.0
    %2405 = vmatprep.subr.mxu0 0.0
    %2406 = vmatpush1.msra.mxu0 0.0
    %2407 = vmatprep.subr.mxu0 0.0
    %2408 = vmatpush1.msra.mxu0 0.0
    %2409 = vmatprep.subr.mxu0 0.0
    %2410 = vmatpush1.msra.mxu0 0.0
    %2411 = vmatprep.subr.mxu0 0.0
    %2412 = vmatpush1.msra.mxu0 0.0
    %2413 = vmatprep.subr.mxu0 0.0
    %2414 = vmatpush1.msra.mxu0 0.0
    %2415 = vmatprep.subr.mxu0 0.0
    %2416 = vmatpush1.msra.mxu0 0.0
    %2417 = vmatprep.subr.mxu0 0.0
    %2418 = vmatpush1.msra.mxu0 %v1799
    %2419 = vmatprep.subr.mxu0 0.0
    %2420 = vmatpush2.msra.mxu0 0.0
    %2421 = vmatprep.subr.mxu0 0.0
    %2422 = vmatpush2.msra.mxu0 0.0
    %2423 = vmatprep.subr.mxu0 0.0
    %2424 = vmatpush2.msra.mxu0 0.0
    %2425 = vmatprep.subr.mxu0 0.0
    %2426 = vmatpush2.msra.mxu0 0.0
    %2427 = vmatprep.subr.mxu0 0.0
    %2428 = vmatpush2.msra.mxu0 0.0
    %2429 = vmatprep.subr.mxu0 0.0
    %2430 = vmatpush2.msra.mxu0 0.0
    %2431 = vmatprep.subr.mxu0 0.0
    %2432 = vmatpush2.msra.mxu0 0.0
    %2433 = vmatprep.subr.mxu0 0.0
    %2434 = vmatpush2.msra.mxu0 0.0
    %2435 = vmatprep.subr.mxu0 0.0
    %2436 = vmatpush2.msra.mxu0 0.0
    %2437 = vmatprep.subr.mxu0 0.0
    %2438 = vmatpush2.msra.mxu0 0.0
    %2439 = vmatprep.subr.mxu0 0.0
    %2440 = vmatpush2.msra.mxu0 0.0
    %2441 = vmatprep.subr.mxu0 0.0
    %2442 = vmatpush2.msra.mxu0 0.0
    %2443 = vmatprep.subr.mxu0 0.0
    %2444 = vmatpush2.msra.mxu0 0.0
    %2445 = vmatprep.subr.mxu0 0.0
    %2446 = vmatpush2.msra.mxu0 0.0
    %2447 = vmatprep.subr.mxu0 0.0
    %2448 = vmatpush2.msra.mxu0 0.0
    %2449 = vmatprep.subr.mxu0 0.0
    %2450 = vmatpush2.msra.mxu0 0.0
    %2451 = vmatprep.mubr.f32.mxu0 0.0
    %2452 = vmatmul.mubr.f32.gmra.mxu0 %v2385
    %v2453 = vpop.f32.mrf.mxu0
    %v2454 = vadd.f32 0.0, %v2453
    %v2455 = vpop.f32.mrf.mxu0
    %2456 = vdwg.mxu0
    %2457 = vxpose.xlu0.b32.start [1/16] %v2235, 128
    %2458 = vxpose.xlu0.b32.cont [2/16] 0.0, 128
    %2459 = vxpose.xlu0.b32.cont [3/16] 0.0, 128
    %2460 = vxpose.xlu0.b32.cont [4/16] 0.0, 128
    %2461 = vxpose.xlu0.b32.cont [5/16] 0.0, 128
    %2462 = vxpose.xlu0.b32.cont [6/16] 0.0, 128
    %2463 = vxpose.xlu0.b32.cont [7/16] 0.0, 128
    %2464 = vxpose.xlu0.b32.cont [8/16] 0.0, 128
    %2465 = vxpose.xlu0.b32.cont [9/16] 0.0, 128
    %2466 = vxpose.xlu0.b32.cont [10/16] 0.0, 128
    %2467 = vxpose.xlu0.b32.cont [11/16] 0.0, 128
    %2468 = vxpose.xlu0.b32.cont [12/16] 0.0, 128
    %2469 = vxpose.xlu0.b32.cont [13/16] 0.0, 128
    %2470 = vxpose.xlu0.b32.cont [14/16] 0.0, 128
    %2471 = vxpose.xlu0.b32.cont [15/16] 0.0, 128
    %2472 = vxpose.xlu0.b32.end [16/16] 0.0, 128
    %v2473 = vpop.trf.xlu0
    %v2474 = vpop.trf.xlu0
    %v2475 = vpop.trf.xlu0
    %v2476 = vpop.trf.xlu0
    %v2477 = vpop.trf.xlu0
    %v2478 = vpop.trf.xlu0
    %v2479 = vpop.trf.xlu0
    %v2480 = vpop.trf.xlu0
    %v2481 = vpop.trf.xlu0
    %v2482 = vpop.trf.xlu0
    %v2483 = vpop.trf.xlu0
    %v2484 = vpop.trf.xlu0
    %v2485 = vpop.trf.xlu0
    %v2486 = vpop.trf.xlu0
    %v2487 = vpop.trf.xlu0
    %v2488 = vpop.trf.xlu0
    %2489 = vxpose.xlu0.b32.start [1/16] %v2308, 128
    %2490 = vxpose.xlu0.b32.cont [2/16] 0.0, 128
    %2491 = vxpose.xlu0.b32.cont [3/16] 0.0, 128
    %2492 = vxpose.xlu0.b32.cont [4/16] 0.0, 128
    %2493 = vxpose.xlu0.b32.cont [5/16] 0.0, 128
    %2494 = vxpose.xlu0.b32.cont [6/16] 0.0, 128
    %2495 = vxpose.xlu0.b32.cont [7/16] 0.0, 128
    %2496 = vxpose.xlu0.b32.cont [8/16] 0.0, 128
    %2497 = vxpose.xlu0.b32.cont [9/16] 0.0, 128
    %2498 = vxpose.xlu0.b32.cont [10/16] 0.0, 128
    %2499 = vxpose.xlu0.b32.cont [11/16] 0.0, 128
    %2500 = vxpose.xlu0.b32.cont [12/16] 0.0, 128
    %2501 = vxpose.xlu0.b32.cont [13/16] 0.0, 128
    %2502 = vxpose.xlu0.b32.cont [14/16] 0.0, 128
    %2503 = vxpose.xlu0.b32.cont [15/16] 0.0, 128
    %2504 = vxpose.xlu0.b32.end [16/16] 0.0, 128
    %v2505 = vpop.trf.xlu0
    %v2506 = vpop.trf.xlu0
    %v2507 = vpop.trf.xlu0
    %v2508 = vpop.trf.xlu0
    %v2509 = vpop.trf.xlu0
    %v2510 = vpop.trf.xlu0
    %v2511 = vpop.trf.xlu0
    %v2512 = vpop.trf.xlu0
    %v2513 = vpop.trf.xlu0
    %v2514 = vpop.trf.xlu0
    %v2515 = vpop.trf.xlu0
    %v2516 = vpop.trf.xlu0
    %v2517 = vpop.trf.xlu0
    %v2518 = vpop.trf.xlu0
    %v2519 = vpop.trf.xlu0
    %v2520 = vpop.trf.xlu0
    %2521 = vxpose.xlu0.b32.start [1/16] %v2381, 128
    %2522 = vxpose.xlu0.b32.cont [2/16] 0.0, 128
    %2523 = vxpose.xlu0.b32.cont [3/16] 0.0, 128
    %2524 = vxpose.xlu0.b32.cont [4/16] 0.0, 128
    %2525 = vxpose.xlu0.b32.cont [5/16] 0.0, 128
    %2526 = vxpose.xlu0.b32.cont [6/16] 0.0, 128
    %2527 = vxpose.xlu0.b32.cont [7/16] 0.0, 128
    %2528 = vxpose.xlu0.b32.cont [8/16] 0.0, 128
    %2529 = vxpose.xlu0.b32.cont [9/16] 0.0, 128
    %2530 = vxpose.xlu0.b32.cont [10/16] 0.0, 128
    %2531 = vxpose.xlu0.b32.cont [11/16] 0.0, 128
    %2532 = vxpose.xlu0.b32.cont [12/16] 0.0, 128
    %2533 = vxpose.xlu0.b32.cont [13/16] 0.0, 128
    %2534 = vxpose.xlu0.b32.cont [14/16] 0.0, 128
    %2535 = vxpose.xlu0.b32.cont [15/16] 0.0, 128
    %2536 = vxpose.xlu0.b32.end [16/16] 0.0, 128
    %v2537 = vpop.trf.xlu0
    %v2538 = vpop.trf.xlu0
    %v2539 = vpop.trf.xlu0
    %v2540 = vpop.trf.xlu0
    %v2541 = vpop.trf.xlu0
    %v2542 = vpop.trf.xlu0
    %v2543 = vpop.trf.xlu0
    %v2544 = vpop.trf.xlu0
    %v2545 = vpop.trf.xlu0
    %v2546 = vpop.trf.xlu0
    %v2547 = vpop.trf.xlu0
    %v2548 = vpop.trf.xlu0
    %v2549 = vpop.trf.xlu0
    %v2550 = vpop.trf.xlu0
    %v2551 = vpop.trf.xlu0
    %v2552 = vpop.trf.xlu0
    %2553 = vxpose.xlu0.b32.start [1/16] %v2454, 128
    %2554 = vxpose.xlu0.b32.cont [2/16] 0.0, 128
    %2555 = vxpose.xlu0.b32.cont [3/16] 0.0, 128
    %2556 = vxpose.xlu0.b32.cont [4/16] 0.0, 128
    %2557 = vxpose.xlu0.b32.cont [5/16] 0.0, 128
    %2558 = vxpose.xlu0.b32.cont [6/16] 0.0, 128
    %2559 = vxpose.xlu0.b32.cont [7/16] 0.0, 128
    %2560 = vxpose.xlu0.b32.cont [8/16] 0.0, 128
    %2561 = vxpose.xlu0.b32.cont [9/16] 0.0, 128
    %2562 = vxpose.xlu0.b32.cont [10/16] 0.0, 128
    %2563 = vxpose.xlu0.b32.cont [11/16] 0.0, 128
    %2564 = vxpose.xlu0.b32.cont [12/16] 0.0, 128
    %2565 = vxpose.xlu0.b32.cont [13/16] 0.0, 128
    %2566 = vxpose.xlu0.b32.cont [14/16] 0.0, 128
    %2567 = vxpose.xlu0.b32.cont [15/16] 0.0, 128
    %2568 = vxpose.xlu0.b32.end [16/16] 0.0, 128
    %v2569 = vpop.trf.xlu0
    %v2570 = vpop.trf.xlu0
    %v2571 = vpop.trf.xlu0
    %v2572 = vpop.trf.xlu0
    %v2573 = vpop.trf.xlu0
    %v2574 = vpop.trf.xlu0
    %v2575 = vpop.trf.xlu0
    %v2576 = vpop.trf.xlu0
    %v2577 = vpop.trf.xlu0
    %v2578 = vpop.trf.xlu0
    %v2579 = vpop.trf.xlu0
    %v2580 = vpop.trf.xlu0
    %v2581 = vpop.trf.xlu0
    %v2582 = vpop.trf.xlu0
    %v2583 = vpop.trf.xlu0
    %v2584 = vpop.trf.xlu0
    %2585 = vxpose.xlu0.b32.start [1/16] %v2473, 128
    %2586 = vxpose.xlu0.b32.cont [2/16] %v2505, 128
    %2587 = vxpose.xlu0.b32.cont [3/16] %v2537, 128
    %2588 = vxpose.xlu0.b32.cont [4/16] %v2569, 128
    %2589 = vxpose.xlu0.b32.cont [5/16] 0.0, 128
    %2590 = vxpose.xlu0.b32.cont [6/16] 0.0, 128
    %2591 = vxpose.xlu0.b32.cont [7/16] 0.0, 128
    %2592 = vxpose.xlu0.b32.cont [8/16] 0.0, 128
    %2593 = vxpose.xlu0.b32.cont [9/16] 0.0, 128
    %2594 = vxpose.xlu0.b32.cont [10/16] 0.0, 128
    %2595 = vxpose.xlu0.b32.cont [11/16] 0.0, 128
    %2596 = vxpose.xlu0.b32.cont [12/16] 0.0, 128
    %2597 = vxpose.xlu0.b32.cont [13/16] 0.0, 128
    %2598 = vxpose.xlu0.b32.cont [14/16] 0.0, 128
    %2599 = vxpose.xlu0.b32.cont [15/16] 0.0, 128
    %2600 = vxpose.xlu0.b32.end [16/16] 0.0, 128
    %v2601 = vpop.trf.xlu0
    %v2602 = vpop.trf.xlu0
    %v2603 = vpop.trf.xlu0
    %v2604 = vpop.trf.xlu0
    %v2605 = vpop.trf.xlu0
    %v2606 = vpop.trf.xlu0
    %v2607 = vpop.trf.xlu0
    %v2608 = vpop.trf.xlu0
    %v2609 = vpop.trf.xlu0
    %v2610 = vpop.trf.xlu0
    %v2611 = vpop.trf.xlu0
    %v2612 = vpop.trf.xlu0
    %v2613 = vpop.trf.xlu0
    %v2614 = vpop.trf.xlu0
    %v2615 = vpop.trf.xlu0
    %v2616 = vpop.trf.xlu0
    %v2617 = vld [vmem:[%s5] sm:$0xff]
    %v2618 = vld [vmem:[%s5 + $0x8] sm:$0xff]
    %v2619 = vld [vmem:[%s5 + $0x10] sm:$0xff]
    %v2620 = vld [vmem:[%s5 + $0x18] sm:$0xff]
    %v2621 = vlaneseq
    %v2622 = vshrl.u32 %v2621, 7
    %v2623 = vsub.s32 0, %v2622
    %v2624 = vrot.slane %v88, %v2623
    %v2626 = vsel %vm48, %v1383, 0
    %v2629 = vsel %vm48, %v2601, 0
    %2631 = vmatprep.subr.mxu0 0.0
    %2632 = vmatpush1.msra.mxu0 0.0
    %2633 = vmatprep.subr.mxu0 0.0
    %2634 = vmatpush1.msra.mxu0 0.0
    %2635 = vmatprep.subr.mxu0 0.0
    %2636 = vmatpush1.msra.mxu0 0.0
    %2637 = vmatprep.subr.mxu0 0.0
    %2638 = vmatpush1.msra.mxu0 0.0
    %2639 = vmatprep.subr.mxu0 0.0
    %2640 = vmatpush1.msra.mxu0 0.0
    %2641 = vmatprep.subr.mxu0 0.0
    %2642 = vmatpush1.msra.mxu0 0.0
    %2643 = vmatprep.subr.mxu0 0.0
    %2644 = vmatpush1.msra.mxu0 0.0
    %2645 = vmatprep.subr.mxu0 0.0
    %2646 = vmatpush1.msra.mxu0 0.0
    %2647 = vmatprep.subr.mxu0 0.0
    %2648 = vmatpush1.msra.mxu0 0.0
    %2649 = vmatprep.subr.mxu0 0.0
    %2650 = vmatpush1.msra.mxu0 0.0
    %2651 = vmatprep.subr.mxu0 0.0
    %2652 = vmatpush1.msra.mxu0 0.0
    %2653 = vmatprep.subr.mxu0 0.0
    %2654 = vmatpush1.msra.mxu0 0.0
    %2655 = vmatprep.subr.mxu0 0.0
    %2656 = vmatpush1.msra.mxu0 %v2620
    %2657 = vmatprep.subr.mxu0 0.0
    %2658 = vmatpush1.msra.mxu0 %v2619
    %2659 = vmatprep.subr.mxu0 0.0
    %2660 = vmatpush1.msra.mxu0 %v2618
    %2661 = vmatprep.subr.mxu0 0.0
    %2662 = vmatpush1.msra.mxu0 %v2617
    %2663 = vmatprep.subr.mxu0 0.0
    %2664 = vmatpush2.msra.mxu0 0.0
    %2665 = vmatprep.subr.mxu0 0.0
    %2666 = vmatpush2.msra.mxu0 0.0
    %2667 = vmatprep.subr.mxu0 0.0
    %2668 = vmatpush2.msra.mxu0 0.0
    %2669 = vmatprep.subr.mxu0 0.0
    %2670 = vmatpush2.msra.mxu0 0.0
    %2671 = vmatprep.subr.mxu0 0.0
    %2672 = vmatpush2.msra.mxu0 0.0
    %2673 = vmatprep.subr.mxu0 0.0
    %2674 = vmatpush2.msra.mxu0 0.0
    %2675 = vmatprep.subr.mxu0 0.0
    %2676 = vmatpush2.msra.mxu0 0.0
    %2677 = vmatprep.subr.mxu0 0.0
    %2678 = vmatpush2.msra.mxu0 0.0
    %2679 = vmatprep.subr.mxu0 0.0
    %2680 = vmatpush2.msra.mxu0 0.0
    %2681 = vmatprep.subr.mxu0 0.0
    %2682 = vmatpush2.msra.mxu0 0.0
    %2683 = vmatprep.subr.mxu0 0.0
    %2684 = vmatpush2.msra.mxu0 0.0
    %2685 = vmatprep.subr.mxu0 0.0
    %2686 = vmatpush2.msra.mxu0 0.0
    %2687 = vmatprep.subr.mxu0 0.0
    %2688 = vmatpush2.msra.mxu0 0.0
    %2689 = vmatprep.subr.mxu0 0.0
    %2690 = vmatpush2.msra.mxu0 0.0
    %2691 = vmatprep.subr.mxu0 0.0
    %2692 = vmatpush2.msra.mxu0 0.0
    %2693 = vmatprep.subr.mxu0 0.0
    %2694 = vmatpush2.msra.mxu0 0.0
    %2695 = vmatprep.mubr.f32.mxu0 0.0
    %2696 = vmatmul.mubr.f32.gmra.mxu0 %v2626
    %v2697 = vpop.f32.mrf.mxu0
    %v2698 = vadd.f32 %v2624, %v2697
    %v2699 = vpop.f32.mrf.mxu0
    %2700 = vmatprep.mubr.f32.mxu0 0.0
    %2701 = vmatmul.mubr.f32.gmra.mxu0 %v2629
    %v2702 = vpop.f32.mrf.mxu0
    %v2703 = vadd.f32 %v2624, %v2702
    %v2704 = vpop.f32.mrf.mxu0
    %2705 = vdwg.mxu0
    %v2706 = vadd.f32 %v86, %v2698
    %v2707 = vadd.f32 %v87, %v2703
    %v2708 = vsel %vm48, %v2706, 0.0
    %2709 = vadd.xlane.f32.xlu0 %v2708
    %v2710 = vpop.xlane.xlu0 %2709
    %v2711 = vsel %vm48, %v2707, 0.0
    %2712 = vadd.xlane.f32.xlu0 %v2711
    %v2713 = vpop.xlane.xlu0 %2712
    %v2714 = vmul.f32 %v2710, %v55
    %v2715 = vmul.f32 %v2713, %v55
    %v2716 = vsub.f32 %v2706, %v2714
    %v2717 = vsub.f32 %v2707, %v2715
    %v2718 = vmul.f32 %v2716, %v2716
    %v2719 = vmul.f32 %v2717, %v2717
    %v2720 = vsel %vm48, %v2718, 0.0
    %2721 = vadd.xlane.f32.xlu0 %v2720
    %v2722 = vpop.xlane.xlu0 %2721
    %v2723 = vsel %vm48, %v2719, 0.0
    %2724 = vadd.xlane.f32.xlu0 %v2723
    %v2725 = vpop.xlane.xlu0 %2724
    %v2726 = vmul.f32 %v2722, %v55
    %v2727 = vmul.f32 %v2725, %v55
    %v2728 = vadd.f32 %v2726, 1e-12
    %v2729 = vadd.f32 %v2727, 1e-12
    %v2730 = vrsqrt.pop %v2728
    %v2731 = vrsqrt.pop %v2729
    %v2732 = vmul.f32 %v2716, %v2730
    %v2733 = vmul.f32 %v2717, %v2731
    %v2734 = vlaneseq
    %v2735 = vshrl.u32 %v2734, 7
    %v2736 = vsub.s32 1, %v2735
    %v2737 = vrot.slane %v88, %v2736
    %v2738 = vmul.f32 %v2732, %v2737
    %v2739 = vmul.f32 %v2733, %v2737
    %v2740 = vlaneseq
    %v2741 = vshrl.u32 %v2740, 7
    %v2742 = vsub.s32 2, %v2741
    %v2743 = vrot.slane %v88, %v2742
    %v2744 = vadd.f32 %v2738, %v2743
    %v2745 = vadd.f32 %v2739, %v2743
    %v2746 = vld [vmem:[%s7] sm:$0xff]
    %v2747 = vld [vmem:[%s7 + $0x8] sm:$0xff]
    %v2748 = vld [vmem:[%s7 + $0x10] sm:$0xff]
    %v2749 = vld [vmem:[%s7 + $0x18] sm:$0xff]
    %v2750 = vld [vmem:[%s8] sm:$0x1]
    %v2752 = vlaneseq
    %v2753 = vshrl.u32 %v2752, 7
    %v2754 = vsub.s32 0, %v2753
    %v2755 = vrot.slane %v2750, %v2754
    %v2758 = vsel %vm48, %v2744, 0
    %v2761 = vsel %vm48, %v2745, 0
    %2763 = vmatprep.subr.mxu0 0.0
    %2764 = vmatpush1.msra.mxu0 0.0
    %2765 = vmatprep.subr.mxu0 0.0
    %2766 = vmatpush1.msra.mxu0 0.0
    %2767 = vmatprep.subr.mxu0 0.0
    %2768 = vmatpush1.msra.mxu0 0.0
    %2769 = vmatprep.subr.mxu0 0.0
    %2770 = vmatpush1.msra.mxu0 0.0
    %2771 = vmatprep.subr.mxu0 0.0
    %2772 = vmatpush1.msra.mxu0 0.0
    %2773 = vmatprep.subr.mxu0 0.0
    %2774 = vmatpush1.msra.mxu0 0.0
    %2775 = vmatprep.subr.mxu0 0.0
    %2776 = vmatpush1.msra.mxu0 0.0
    %2777 = vmatprep.subr.mxu0 0.0
    %2778 = vmatpush1.msra.mxu0 0.0
    %2779 = vmatprep.subr.mxu0 0.0
    %2780 = vmatpush1.msra.mxu0 0.0
    %2781 = vmatprep.subr.mxu0 0.0
    %2782 = vmatpush1.msra.mxu0 0.0
    %2783 = vmatprep.subr.mxu0 0.0
    %2784 = vmatpush1.msra.mxu0 0.0
    %2785 = vmatprep.subr.mxu0 0.0
    %2786 = vmatpush1.msra.mxu0 0.0
    %2787 = vmatprep.subr.mxu0 0.0
    %2788 = vmatpush1.msra.mxu0 %v2749
    %2789 = vmatprep.subr.mxu0 0.0
    %2790 = vmatpush1.msra.mxu0 %v2748
    %2791 = vmatprep.subr.mxu0 0.0
    %2792 = vmatpush1.msra.mxu0 %v2747
    %2793 = vmatprep.subr.mxu0 0.0
    %2794 = vmatpush1.msra.mxu0 %v2746
    %2795 = vmatprep.subr.mxu0 0.0
    %2796 = vmatpush2.msra.mxu0 0.0
    %2797 = vmatprep.subr.mxu0 0.0
    %2798 = vmatpush2.msra.mxu0 0.0
    %2799 = vmatprep.subr.mxu0 0.0
    %2800 = vmatpush2.msra.mxu0 0.0
    %2801 = vmatprep.subr.mxu0 0.0
    %2802 = vmatpush2.msra.mxu0 0.0
    %2803 = vmatprep.subr.mxu0 0.0
    %2804 = vmatpush2.msra.mxu0 0.0
    %2805 = vmatprep.subr.mxu0 0.0
    %2806 = vmatpush2.msra.mxu0 0.0
    %2807 = vmatprep.subr.mxu0 0.0
    %2808 = vmatpush2.msra.mxu0 0.0
    %2809 = vmatprep.subr.mxu0 0.0
    %2810 = vmatpush2.msra.mxu0 0.0
    %2811 = vmatprep.subr.mxu0 0.0
    %2812 = vmatpush2.msra.mxu0 0.0
    %2813 = vmatprep.subr.mxu0 0.0
    %2814 = vmatpush2.msra.mxu0 0.0
    %2815 = vmatprep.subr.mxu0 0.0
    %2816 = vmatpush2.msra.mxu0 0.0
    %2817 = vmatprep.subr.mxu0 0.0
    %2818 = vmatpush2.msra.mxu0 0.0
    %2819 = vmatprep.subr.mxu0 0.0
    %2820 = vmatpush2.msra.mxu0 0.0
    %2821 = vmatprep.subr.mxu0 0.0
    %2822 = vmatpush2.msra.mxu0 0.0
    %2823 = vmatprep.subr.mxu0 0.0
    %2824 = vmatpush2.msra.mxu0 0.0
    %2825 = vmatprep.subr.mxu0 0.0
    %2826 = vmatpush2.msra.mxu0 0.0
    %2827 = vmatprep.mubr.f32.mxu0 0.0
    %2828 = vmatmul.mubr.f32.gmra.mxu0 %v2758
    %v2829 = vpop.f32.mrf.mxu0
    %v2830 = vadd.f32 %v2755, %v2829
    %v2831 = vpop.f32.mrf.mxu0
    %2832 = vmatprep.mubr.f32.mxu0 0.0
    %2833 = vmatmul.mubr.f32.gmra.mxu0 %v2761
    %v2834 = vpop.f32.mrf.mxu0
    %v2835 = vadd.f32 %v2755, %v2834
    %v2836 = vpop.f32.mrf.mxu0
    %2837 = vdwg.mxu0
    %v2838 = vmul.f32 %v2830, %v2830
    %v2839 = vmul.f32 %v2835, %v2835
    %v2840 = vmul.f32 %v2830, %v2838
    %v2841 = vmul.f32 %v2835, %v2839
    %v2842 = vmul.f32 %v2840, 0.044715
    %v2843 = vmul.f32 %v2841, 0.044715
    %v2844 = vadd.f32 %v2830, %v2842
    %v2845 = vadd.f32 %v2835, %v2843
    %v2846 = vmul.f32 %v2844, 0.7978846
    %v2847 = vmul.f32 %v2845, 0.7978846
    %v2848 = vtanh.pop %v2846
    %v2849 = vtanh.pop %v2847
    %v2850 = vadd.f32 %v2848, 1.0
    %v2851 = vadd.f32 %v2849, 1.0
    %v2852 = vmul.f32 %v2850, 0.5
    %v2853 = vmul.f32 %v2851, 0.5
    %v2854 = vmul.f32 %v2830, %v2852
    %v2855 = vmul.f32 %v2835, %v2853
    %v2856 = vld [vmem:[%s9] sm:$0xff]
    %v2857 = vld [vmem:[%s9 + $0x8] sm:$0xff]
    %v2858 = vld [vmem:[%s9 + $0x10] sm:$0xff]
    %v2859 = vld [vmem:[%s9 + $0x18] sm:$0xff]
    %v2860 = vld [vmem:[%s9 + $0x20] sm:$0xff]
    %v2861 = vld [vmem:[%s9 + $0x28] sm:$0xff]
    %v2862 = vld [vmem:[%s9 + $0x30] sm:$0xff]
    %v2863 = vld [vmem:[%s9 + $0x38] sm:$0xff]
    %v2864 = vlaneseq
    %v2865 = vshrl.u32 %v2864, 7
    %v2866 = vsub.s32 3, %v2865
    %v2867 = vrot.slane %v88, %v2866
    %vm2868 = vcmask 523264
    %v2870 = vsel %vm2868, %v2854, 0
    %v2873 = vsel %vm2868, %v2855, 0
    %2875 = vmatprep.subr.mxu0 0.0
    %2876 = vmatpush1.msra.mxu0 0.0
    %2877 = vmatprep.subr.mxu0 0.0
    %2878 = vmatpush1.msra.mxu0 0.0
    %2879 = vmatprep.subr.mxu0 0.0
    %2880 = vmatpush1.msra.mxu0 0.0
    %2881 = vmatprep.subr.mxu0 0.0
    %2882 = vmatpush1.msra.mxu0 0.0
    %2883 = vmatprep.subr.mxu0 0.0
    %2884 = vmatpush1.msra.mxu0 0.0
    %2885 = vmatprep.subr.mxu0 0.0
    %2886 = vmatpush1.msra.mxu0 0.0
    %2887 = vmatprep.subr.mxu0 0.0
    %2888 = vmatpush1.msra.mxu0 0.0
    %2889 = vmatprep.subr.mxu0 0.0
    %2890 = vmatpush1.msra.mxu0 0.0
    %2891 = vmatprep.subr.mxu0 0.0
    %2892 = vmatpush1.msra.mxu0 %v2863
    %2893 = vmatprep.subr.mxu0 0.0
    %2894 = vmatpush1.msra.mxu0 %v2862
    %2895 = vmatprep.subr.mxu0 0.0
    %2896 = vmatpush1.msra.mxu0 %v2861
    %2897 = vmatprep.subr.mxu0 0.0
    %2898 = vmatpush1.msra.mxu0 %v2860
    %2899 = vmatprep.subr.mxu0 0.0
    %2900 = vmatpush1.msra.mxu0 %v2859
    %2901 = vmatprep.subr.mxu0 0.0
    %2902 = vmatpush1.msra.mxu0 %v2858
    %2903 = vmatprep.subr.mxu0 0.0
    %2904 = vmatpush1.msra.mxu0 %v2857
    %2905 = vmatprep.subr.mxu0 0.0
    %2906 = vmatpush1.msra.mxu0 %v2856
    %2907 = vmatprep.subr.mxu0 0.0
    %2908 = vmatpush2.msra.mxu0 0.0
    %2909 = vmatprep.subr.mxu0 0.0
    %2910 = vmatpush2.msra.mxu0 0.0
    %2911 = vmatprep.subr.mxu0 0.0
    %2912 = vmatpush2.msra.mxu0 0.0
    %2913 = vmatprep.subr.mxu0 0.0
    %2914 = vmatpush2.msra.mxu0 0.0
    %2915 = vmatprep.subr.mxu0 0.0
    %2916 = vmatpush2.msra.mxu0 0.0
    %2917 = vmatprep.subr.mxu0 0.0
    %2918 = vmatpush2.msra.mxu0 0.0
    %2919 = vmatprep.subr.mxu0 0.0
    %2920 = vmatpush2.msra.mxu0 0.0
    %2921 = vmatprep.subr.mxu0 0.0
    %2922 = vmatpush2.msra.mxu0 0.0
    %2923 = vmatprep.subr.mxu0 0.0
    %2924 = vmatpush2.msra.mxu0 0.0
    %2925 = vmatprep.subr.mxu0 0.0
    %2926 = vmatpush2.msra.mxu0 0.0
    %2927 = vmatprep.subr.mxu0 0.0
    %2928 = vmatpush2.msra.mxu0 0.0
    %2929 = vmatprep.subr.mxu0 0.0
    %2930 = vmatpush2.msra.mxu0 0.0
    %2931 = vmatprep.subr.mxu0 0.0
    %2932 = vmatpush2.msra.mxu0 0.0
    %2933 = vmatprep.subr.mxu0 0.0
    %2934 = vmatpush2.msra.mxu0 0.0
    %2935 = vmatprep.subr.mxu0 0.0
    %2936 = vmatpush2.msra.mxu0 0.0
    %2937 = vmatprep.subr.mxu0 0.0
    %2938 = vmatpush2.msra.mxu0 0.0
    %2939 = vmatprep.mubr.f32.mxu0 0.0
    %2940 = vmatmul.mubr.f32.gmra.mxu0 %v2870
    %v2941 = vpop.f32.mrf.mxu0
    %v2942 = vadd.f32 %v2867, %v2941
    %v2943 = vpop.f32.mrf.mxu0
    %2944 = vmatprep.mubr.f32.mxu0 0.0
    %2945 = vmatmul.mubr.f32.gmra.mxu0 %v2873
    %v2946 = vpop.f32.mrf.mxu0
    %v2947 = vadd.f32 %v2867, %v2946
    %v2948 = vpop.f32.mrf.mxu0
    %2949 = vdwg.mxu0
    %v2950 = vadd.f32 %v2744, %v2942
    %v2951 = vadd.f32 %v2745, %v2947
    %v2952 = vsel %vm48, %v2950, 0.0
    %2953 = vadd.xlane.f32.xlu0 %v2952
    %v2954 = vpop.xlane.xlu0 %2953
    %v2955 = vsel %vm48, %v2951, 0.0
    %2956 = vadd.xlane.f32.xlu0 %v2955
    %v2957 = vpop.xlane.xlu0 %2956
    %v2958 = vmul.f32 %v2954, %v55
    %v2959 = vmul.f32 %v2957, %v55
    %v2960 = vsub.f32 %v2950, %v2958
    %v2961 = vsub.f32 %v2951, %v2959
    %v2962 = vmul.f32 %v2960, %v2960
    %v2963 = vmul.f32 %v2961, %v2961
    %v2964 = vsel %vm48, %v2962, 0.0
    %2965 = vadd.xlane.f32.xlu0 %v2964
    %v2966 = vpop.xlane.xlu0 %2965
    %v2967 = vsel %vm48, %v2963, 0.0
    %2968 = vadd.xlane.f32.xlu0 %v2967
    %v2969 = vpop.xlane.xlu0 %2968
    %v2970 = vmul.f32 %v2966, %v55
    %v2971 = vmul.f32 %v2969, %v55
    %v2972 = vadd.f32 %v2970, 1e-12
    %v2973 = vadd.f32 %v2971, 1e-12
    %v2974 = vrsqrt.pop %v2972
    %v2975 = vrsqrt.pop %v2973
    %v2976 = vmul.f32 %v2960, %v2974
    %v2977 = vmul.f32 %v2961, %v2975
    %v2978 = vlaneseq
    %v2979 = vshrl.u32 %v2978, 7
    %v2980 = vsub.s32 4, %v2979
    %v2981 = vrot.slane %v88, %v2980
    %v2982 = vmul.f32 %v2976, %v2981
    %v2983 = vmul.f32 %v2977, %v2981
    %v2984 = vlaneseq
    %v2985 = vshrl.u32 %v2984, 7
    %v2986 = vsub.s32 5, %v2985
    %v2987 = vrot.slane %v88, %v2986
    %v2988 = vadd.f32 %v2982, %v2987
    %v2989 = vadd.f32 %v2983, %v2987
    %s2990 = scalar_lea.vmem %s6, 8
    %v2991 = vld [vmem:[%s2990] sm:$0x3f]
    %s2992 = scalar_lea.vmem %s3, 32
    %v2993 = vld [vmem:[%s2992] sm:$0xff]
    %v2994 = vld [vmem:[%s2992 + $0x8] sm:$0xff]
    %v2995 = vld [vmem:[%s2992 + $0x10] sm:$0xff]
    %v2996 = vld [vmem:[%s2992 + $0x18] sm:$0xff]
    %s2997 = scalar_lea.vmem %s4, 1
    %v2998 = vld [vmem:[%s2997] sm:$0x1]
    %v3000 = vlaneseq
    %v3001 = vshrl.u32 %v3000, 7
    %v3002 = vsub.s32 0, %v3001
    %v3003 = vrot.slane %v2998, %v3002
    %v3006 = vsel %vm48, %v2988, 0
    %v3009 = vsel %vm48, %v2989, 0
    %3011 = vmatprep.subr.mxu0 0.0
    %3012 = vmatpush1.msra.mxu0 0.0
    %3013 = vmatprep.subr.mxu0 0.0
    %3014 = vmatpush1.msra.mxu0 0.0
    %3015 = vmatprep.subr.mxu0 0.0
    %3016 = vmatpush1.msra.mxu0 0.0
    %3017 = vmatprep.subr.mxu0 0.0
    %3018 = vmatpush1.msra.mxu0 0.0
    %3019 = vmatprep.subr.mxu0 0.0
    %3020 = vmatpush1.msra.mxu0 0.0
    %3021 = vmatprep.subr.mxu0 0.0
    %3022 = vmatpush1.msra.mxu0 0.0
    %3023 = vmatprep.subr.mxu0 0.0
    %3024 = vmatpush1.msra.mxu0 0.0
    %3025 = vmatprep.subr.mxu0 0.0
    %3026 = vmatpush1.msra.mxu0 0.0
    %3027 = vmatprep.subr.mxu0 0.0
    %3028 = vmatpush1.msra.mxu0 0.0
    %3029 = vmatprep.subr.mxu0 0.0
    %3030 = vmatpush1.msra.mxu0 0.0
    %3031 = vmatprep.subr.mxu0 0.0
    %3032 = vmatpush1.msra.mxu0 0.0
    %3033 = vmatprep.subr.mxu0 0.0
    %3034 = vmatpush1.msra.mxu0 0.0
    %3035 = vmatprep.subr.mxu0 0.0
    %3036 = vmatpush1.msra.mxu0 %v2996
    %3037 = vmatprep.subr.mxu0 0.0
    %3038 = vmatpush1.msra.mxu0 %v2995
    %3039 = vmatprep.subr.mxu0 0.0
    %3040 = vmatpush1.msra.mxu0 %v2994
    %3041 = vmatprep.subr.mxu0 0.0
    %3042 = vmatpush1.msra.mxu0 %v2993
    %3043 = vmatprep.subr.mxu0 0.0
    %3044 = vmatpush2.msra.mxu0 0.0
    %3045 = vmatprep.subr.mxu0 0.0
    %3046 = vmatpush2.msra.mxu0 0.0
    %3047 = vmatprep.subr.mxu0 0.0
    %3048 = vmatpush2.msra.mxu0 0.0
    %3049 = vmatprep.subr.mxu0 0.0
    %3050 = vmatpush2.msra.mxu0 0.0
    %3051 = vmatprep.subr.mxu0 0.0
    %3052 = vmatpush2.msra.mxu0 0.0
    %3053 = vmatprep.subr.mxu0 0.0
    %3054 = vmatpush2.msra.mxu0 0.0
    %3055 = vmatprep.subr.mxu0 0.0
    %3056 = vmatpush2.msra.mxu0 0.0
    %3057 = vmatprep.subr.mxu0 0.0
    %3058 = vmatpush2.msra.mxu0 0.0
    %3059 = vmatprep.subr.mxu0 0.0
    %3060 = vmatpush2.msra.mxu0 0.0
    %3061 = vmatprep.subr.mxu0 0.0
    %3062 = vmatpush2.msra.mxu0 0.0
    %3063 = vmatprep.subr.mxu0 0.0
    %3064 = vmatpush2.msra.mxu0 0.0
    %3065 = vmatprep.subr.mxu0 0.0
    %3066 = vmatpush2.msra.mxu0 0.0
    %3067 = vmatprep.subr.mxu0 0.0
    %3068 = vmatpush2.msra.mxu0 0.0
    %3069 = vmatprep.subr.mxu0 0.0
    %3070 = vmatpush2.msra.mxu0 0.0
    %3071 = vmatprep.subr.mxu0 0.0
    %3072 = vmatpush2.msra.mxu0 0.0
    %3073 = vmatprep.subr.mxu0 0.0
    %3074 = vmatpush2.msra.mxu0 0.0
    %3075 = vmatprep.mubr.f32.mxu0 0.0
    %3076 = vmatmul.mubr.f32.gmra.mxu0 %v3006
    %v3077 = vpop.f32.mrf.mxu0
    %v3078 = vadd.f32 %v3003, %v3077
    %v3079 = vpop.f32.mrf.mxu0
    %3080 = vmatprep.mubr.f32.mxu0 0.0
    %3081 = vmatmul.mubr.f32.gmra.mxu0 %v3009
    %v3082 = vpop.f32.mrf.mxu0
    %v3083 = vadd.f32 %v3003, %v3082
    %v3084 = vpop.f32.mrf.mxu0
    %3085 = vdwg.mxu0
    %3086 = vxpose.xlu0.b32.start [1/16] %v3078, 128
    %3087 = vxpose.xlu0.b32.cont [2/16] 0.0, 128
    %3088 = vxpose.xlu0.b32.cont [3/16] 0.0, 128
    %3089 = vxpose.xlu0.b32.cont [4/16] 0.0, 128
    %3090 = vxpose.xlu0.b32.cont [5/16] 0.0, 128
    %3091 = vxpose.xlu0.b32.cont [6/16] 0.0, 128
    %3092 = vxpose.xlu0.b32.cont [7/16] 0.0, 128
    %3093 = vxpose.xlu0.b32.cont [8/16] 0.0, 128
    %3094 = vxpose.xlu0.b32.cont [9/16] 0.0, 128
    %3095 = vxpose.xlu0.b32.cont [10/16] 0.0, 128
    %3096 = vxpose.xlu0.b32.cont [11/16] 0.0, 128
    %3097 = vxpose.xlu0.b32.cont [12/16] 0.0, 128
    %3098 = vxpose.xlu0.b32.cont [13/16] 0.0, 128
    %3099 = vxpose.xlu0.b32.cont [14/16] 0.0, 128
    %3100 = vxpose.xlu0.b32.cont [15/16] 0.0, 128
    %3101 = vxpose.xlu0.b32.end [16/16] 0.0, 128
    %v3102 = vpop.trf.xlu0
    %v3103 = vpop.trf.xlu0
    %v3104 = vpop.trf.xlu0
    %v3105 = vpop.trf.xlu0
    %v3106 = vpop.trf.xlu0
    %v3107 = vpop.trf.xlu0
    %v3108 = vpop.trf.xlu0
    %v3109 = vpop.trf.xlu0
    %v3110 = vpop.trf.xlu0
    %v3111 = vpop.trf.xlu0
    %v3112 = vpop.trf.xlu0
    %v3113 = vpop.trf.xlu0
    %v3114 = vpop.trf.xlu0
    %v3115 = vpop.trf.xlu0
    %v3116 = vpop.trf.xlu0
    %v3117 = vpop.trf.xlu0
    %3118 = vxpose.xlu0.b32.start [1/16] %v3102, 128
    %3119 = vxpose.xlu0.b32.cont [2/16] 0.0, 128
    %3120 = vxpose.xlu0.b32.cont [3/16] 0.0, 128
    %3121 = vxpose.xlu0.b32.cont [4/16] 0.0, 128
    %3122 = vxpose.xlu0.b32.cont [5/16] 0.0, 128
    %3123 = vxpose.xlu0.b32.cont [6/16] 0.0, 128
    %3124 = vxpose.xlu0.b32.cont [7/16] 0.0, 128
    %3125 = vxpose.xlu0.b32.cont [8/16] 0.0, 128
    %3126 = vxpose.xlu0.b32.cont [9/16] 0.0, 128
    %3127 = vxpose.xlu0.b32.cont [10/16] 0.0, 128
    %3128 = vxpose.xlu0.b32.cont [11/16] 0.0, 128
    %3129 = vxpose.xlu0.b32.cont [12/16] 0.0, 128
    %3130 = vxpose.xlu0.b32.cont [13/16] 0.0, 128
    %3131 = vxpose.xlu0.b32.cont [14/16] 0.0, 128
    %3132 = vxpose.xlu0.b32.cont [15/16] 0.0, 128
    %3133 = vxpose.xlu0.b32.end [16/16] 0.0, 128
    %v3134 = vpop.trf.xlu0
    %v3135 = vpop.trf.xlu0
    %v3136 = vpop.trf.xlu0
    %v3137 = vpop.trf.xlu0
    %v3138 = vpop.trf.xlu0
    %v3139 = vpop.trf.xlu0
    %v3140 = vpop.trf.xlu0
    %v3141 = vpop.trf.xlu0
    %v3142 = vpop.trf.xlu0
    %v3143 = vpop.trf.xlu0
    %v3144 = vpop.trf.xlu0
    %v3145 = vpop.trf.xlu0
    %v3146 = vpop.trf.xlu0
    %v3147 = vpop.trf.xlu0
    %v3148 = vpop.trf.xlu0
    %v3149 = vpop.trf.xlu0
    %3150 = vxpose.xlu0.b32.start [1/16] %v3103, 128
    %3151 = vxpose.xlu0.b32.cont [2/16] 0.0, 128
    %3152 = vxpose.xlu0.b32.cont [3/16] 0.0, 128
    %3153 = vxpose.xlu0.b32.cont [4/16] 0.0, 128
    %3154 = vxpose.xlu0.b32.cont [5/16] 0.0, 128
    %3155 = vxpose.xlu0.b32.cont [6/16] 0.0, 128
    %3156 = vxpose.xlu0.b32.cont [7/16] 0.0, 128
    %3157 = vxpose.xlu0.b32.cont [8/16] 0.0, 128
    %3158 = vxpose.xlu0.b32.cont [9/16] 0.0, 128
    %3159 = vxpose.xlu0.b32.cont [10/16] 0.0, 128
    %3160 = vxpose.xlu0.b32.cont [11/16] 0.0, 128
    %3161 = vxpose.xlu0.b32.cont [12/16] 0.0, 128
    %3162 = vxpose.xlu0.b32.cont [13/16] 0.0, 128
    %3163 = vxpose.xlu0.b32.cont [14/16] 0.0, 128
    %3164 = vxpose.xlu0.b32.cont [15/16] 0.0, 128
    %3165 = vxpose.xlu0.b32.end [16/16] 0.0, 128
    %v3166 = vpop.trf.xlu0
    %v3167 = vpop.trf.xlu0
    %v3168 = vpop.trf.xlu0
    %v3169 = vpop.trf.xlu0
    %v3170 = vpop.trf.xlu0
    %v3171 = vpop.trf.xlu0
    %v3172 = vpop.trf.xlu0
    %v3173 = vpop.trf.xlu0
    %v3174 = vpop.trf.xlu0
    %v3175 = vpop.trf.xlu0
    %v3176 = vpop.trf.xlu0
    %v3177 = vpop.trf.xlu0
    %v3178 = vpop.trf.xlu0
    %v3179 = vpop.trf.xlu0
    %v3180 = vpop.trf.xlu0
    %v3181 = vpop.trf.xlu0
    %3182 = vxpose.xlu0.b32.start [1/16] %v3104, 128
    %3183 = vxpose.xlu0.b32.cont [2/16] 0.0, 128
    %3184 = vxpose.xlu0.b32.cont [3/16] 0.0, 128
    %3185 = vxpose.xlu0.b32.cont [4/16] 0.0, 128
    %3186 = vxpose.xlu0.b32.cont [5/16] 0.0, 128
    %3187 = vxpose.xlu0.b32.cont [6/16] 0.0, 128
    %3188 = vxpose.xlu0.b32.cont [7/16] 0.0, 128
    %3189 = vxpose.xlu0.b32.cont [8/16] 0.0, 128
    %3190 = vxpose.xlu0.b32.cont [9/16] 0.0, 128
    %3191 = vxpose.xlu0.b32.cont [10/16] 0.0, 128
    %3192 = vxpose.xlu0.b32.cont [11/16] 0.0, 128
    %3193 = vxpose.xlu0.b32.cont [12/16] 0.0, 128
    %3194 = vxpose.xlu0.b32.cont [13/16] 0.0, 128
    %3195 = vxpose.xlu0.b32.cont [14/16] 0.0, 128
    %3196 = vxpose.xlu0.b32.cont [15/16] 0.0, 128
    %3197 = vxpose.xlu0.b32.end [16/16] 0.0, 128
    %v3198 = vpop.trf.xlu0
    %v3199 = vpop.trf.xlu0
    %v3200 = vpop.trf.xlu0
    %v3201 = vpop.trf.xlu0
    %v3202 = vpop.trf.xlu0
    %v3203 = vpop.trf.xlu0
    %v3204 = vpop.trf.xlu0
    %v3205 = vpop.trf.xlu0
    %v3206 = vpop.trf.xlu0
    %v3207 = vpop.trf.xlu0
    %v3208 = vpop.trf.xlu0
    %v3209 = vpop.trf.xlu0
    %v3210 = vpop.trf.xlu0
    %v3211 = vpop.trf.xlu0
    %v3212 = vpop.trf.xlu0
    %v3213 = vpop.trf.xlu0
    %3214 = vxpose.xlu0.b32.start [1/16] %v3105, 128
    %3215 = vxpose.xlu0.b32.cont [2/16] 0.0, 128
    %3216 = vxpose.xlu0.b32.cont [3/16] 0.0, 128
    %3217 = vxpose.xlu0.b32.cont [4/16] 0.0, 128
    %3218 = vxpose.xlu0.b32.cont [5/16] 0.0, 128
    %3219 = vxpose.xlu0.b32.cont [6/16] 0.0, 128
    %3220 = vxpose.xlu0.b32.cont [7/16] 0.0, 128
    %3221 = vxpose.xlu0.b32.cont [8/16] 0.0, 128
    %3222 = vxpose.xlu0.b32.cont [9/16] 0.0, 128
    %3223 = vxpose.xlu0.b32.cont [10/16] 0.0, 128
    %3224 = vxpose.xlu0.b32.cont [11/16] 0.0, 128
    %3225 = vxpose.xlu0.b32.cont [12/16] 0.0, 128
    %3226 = vxpose.xlu0.b32.cont [13/16] 0.0, 128
    %3227 = vxpose.xlu0.b32.cont [14/16] 0.0, 128
    %3228 = vxpose.xlu0.b32.cont [15/16] 0.0, 128
    %3229 = vxpose.xlu0.b32.end [16/16] 0.0, 128
    %v3230 = vpop.trf.xlu0
    %v3231 = vpop.trf.xlu0
    %v3232 = vpop.trf.xlu0
    %v3233 = vpop.trf.xlu0
    %v3234 = vpop.trf.xlu0
    %v3235 = vpop.trf.xlu0
    %v3236 = vpop.trf.xlu0
    %v3237 = vpop.trf.xlu0
    %v3238 = vpop.trf.xlu0
    %v3239 = vpop.trf.xlu0
    %v3240 = vpop.trf.xlu0
    %v3241 = vpop.trf.xlu0
    %v3242 = vpop.trf.xlu0
    %v3243 = vpop.trf.xlu0
    %v3244 = vpop.trf.xlu0
    %v3245 = vpop.trf.xlu0
    %3246 = vxpose.xlu0.b32.start [1/16] %v3106, 128
    %3247 = vxpose.xlu0.b32.cont [2/16] 0.0, 128
    %3248 = vxpose.xlu0.b32.cont [3/16] 0.0, 128
    %3249 = vxpose.xlu0.b32.cont [4/16] 0.0, 128
    %3250 = vxpose.xlu0.b32.cont [5/16] 0.0, 128
    %3251 = vxpose.xlu0.b32.cont [6/16] 0.0, 128
    %3252 = vxpose.xlu0.b32.cont [7/16] 0.0, 128
    %3253 = vxpose.xlu0.b32.cont [8/16] 0.0, 128
    %3254 = vxpose.xlu0.b32.cont [9/16] 0.0, 128
    %3255 = vxpose.xlu0.b32.cont [10/16] 0.0, 128
    %3256 = vxpose.xlu0.b32.cont [11/16] 0.0, 128
    %3257 = vxpose.xlu0.b32.cont [12/16] 0.0, 128
    %3258 = vxpose.xlu0.b32.cont [13/16] 0.0, 128
    %3259 = vxpose.xlu0.b32.cont [14/16] 0.0, 128
    %3260 = vxpose.xlu0.b32.cont [15/16] 0.0, 128
    %3261 = vxpose.xlu0.b32.end [16/16] 0.0, 128
    %v3262 = vpop.trf.xlu0
    %v3263 = vpop.trf.xlu0
    %v3264 = vpop.trf.xlu0
    %v3265 = vpop.trf.xlu0
    %v3266 = vpop.trf.xlu0
    %v3267 = vpop.trf.xlu0
    %v3268 = vpop.trf.xlu0
    %v3269 = vpop.trf.xlu0
    %v3270 = vpop.trf.xlu0
    %v3271 = vpop.trf.xlu0
    %v3272 = vpop.trf.xlu0
    %v3273 = vpop.trf.xlu0
    %v3274 = vpop.trf.xlu0
    %v3275 = vpop.trf.xlu0
    %v3276 = vpop.trf.xlu0
    %v3277 = vpop.trf.xlu0
    %3278 = vxpose.xlu0.b32.start [1/16] %v3107, 128
    %3279 = vxpose.xlu0.b32.cont [2/16] 0.0, 128
    %3280 = vxpose.xlu0.b32.cont [3/16] 0.0, 128
    %3281 = vxpose.xlu0.b32.cont [4/16] 0.0, 128
    %3282 = vxpose.xlu0.b32.cont [5/16] 0.0, 128
    %3283 = vxpose.xlu0.b32.cont [6/16] 0.0, 128
    %3284 = vxpose.xlu0.b32.cont [7/16] 0.0, 128
    %3285 = vxpose.xlu0.b32.cont [8/16] 0.0, 128
    %3286 = vxpose.xlu0.b32.cont [9/16] 0.0, 128
    %3287 = vxpose.xlu0.b32.cont [10/16] 0.0, 128
    %3288 = vxpose.xlu0.b32.cont [11/16] 0.0, 128
    %3289 = vxpose.xlu0.b32.cont [12/16] 0.0, 128
    %3290 = vxpose.xlu0.b32.cont [13/16] 0.0, 128
    %3291 = vxpose.xlu0.b32.cont [14/16] 0.0, 128
    %3292 = vxpose.xlu0.b32.cont [15/16] 0.0, 128
    %3293 = vxpose.xlu0.b32.end [16/16] 0.0, 128
    %v3294 = vpop.trf.xlu0
    %v3295 = vpop.trf.xlu0
    %v3296 = vpop.trf.xlu0
    %v3297 = vpop.trf.xlu0
    %v3298 = vpop.trf.xlu0
    %v3299 = vpop.trf.xlu0
    %v3300 = vpop.trf.xlu0
    %v3301 = vpop.trf.xlu0
    %v3302 = vpop.trf.xlu0
    %v3303 = vpop.trf.xlu0
    %v3304 = vpop.trf.xlu0
    %v3305 = vpop.trf.xlu0
    %v3306 = vpop.trf.xlu0
    %v3307 = vpop.trf.xlu0
    %v3308 = vpop.trf.xlu0
    %v3309 = vpop.trf.xlu0
    %3310 = vxpose.xlu0.b32.start [1/16] %v3108, 128
    %3311 = vxpose.xlu0.b32.cont [2/16] 0.0, 128
    %3312 = vxpose.xlu0.b32.cont [3/16] 0.0, 128
    %3313 = vxpose.xlu0.b32.cont [4/16] 0.0, 128
    %3314 = vxpose.xlu0.b32.cont [5/16] 0.0, 128
    %3315 = vxpose.xlu0.b32.cont [6/16] 0.0, 128
    %3316 = vxpose.xlu0.b32.cont [7/16] 0.0, 128
    %3317 = vxpose.xlu0.b32.cont [8/16] 0.0, 128
    %3318 = vxpose.xlu0.b32.cont [9/16] 0.0, 128
    %3319 = vxpose.xlu0.b32.cont [10/16] 0.0, 128
    %3320 = vxpose.xlu0.b32.cont [11/16] 0.0, 128
    %3321 = vxpose.xlu0.b32.cont [12/16] 0.0, 128
    %3322 = vxpose.xlu0.b32.cont [13/16] 0.0, 128
    %3323 = vxpose.xlu0.b32.cont [14/16] 0.0, 128
    %3324 = vxpose.xlu0.b32.cont [15/16] 0.0, 128
    %3325 = vxpose.xlu0.b32.end [16/16] 0.0, 128
    %v3326 = vpop.trf.xlu0
    %v3327 = vpop.trf.xlu0
    %v3328 = vpop.trf.xlu0
    %v3329 = vpop.trf.xlu0
    %v3330 = vpop.trf.xlu0
    %v3331 = vpop.trf.xlu0
    %v3332 = vpop.trf.xlu0
    %v3333 = vpop.trf.xlu0
    %v3334 = vpop.trf.xlu0
    %v3335 = vpop.trf.xlu0
    %v3336 = vpop.trf.xlu0
    %v3337 = vpop.trf.xlu0
    %v3338 = vpop.trf.xlu0
    %v3339 = vpop.trf.xlu0
    %v3340 = vpop.trf.xlu0
    %v3341 = vpop.trf.xlu0
    %3342 = vxpose.xlu0.b32.start [1/16] %v3109, 128
    %3343 = vxpose.xlu0.b32.cont [2/16] 0.0, 128
    %3344 = vxpose.xlu0.b32.cont [3/16] 0.0, 128
    %3345 = vxpose.xlu0.b32.cont [4/16] 0.0, 128
    %3346 = vxpose.xlu0.b32.cont [5/16] 0.0, 128
    %3347 = vxpose.xlu0.b32.cont [6/16] 0.0, 128
    %3348 = vxpose.xlu0.b32.cont [7/16] 0.0, 128
    %3349 = vxpose.xlu0.b32.cont [8/16] 0.0, 128
    %3350 = vxpose.xlu0.b32.cont [9/16] 0.0, 128
    %3351 = vxpose.xlu0.b32.cont [10/16] 0.0, 128
    %3352 = vxpose.xlu0.b32.cont [11/16] 0.0, 128
    %3353 = vxpose.xlu0.b32.cont [12/16] 0.0, 128
    %3354 = vxpose.xlu0.b32.cont [13/16] 0.0, 128
    %3355 = vxpose.xlu0.b32.cont [14/16] 0.0, 128
    %3356 = vxpose.xlu0.b32.cont [15/16] 0.0, 128
    %3357 = vxpose.xlu0.b32.end [16/16] 0.0, 128
    %v3358 = vpop.trf.xlu0
    %v3359 = vpop.trf.xlu0
    %v3360 = vpop.trf.xlu0
    %v3361 = vpop.trf.xlu0
    %v3362 = vpop.trf.xlu0
    %v3363 = vpop.trf.xlu0
    %v3364 = vpop.trf.xlu0
    %v3365 = vpop.trf.xlu0
    %v3366 = vpop.trf.xlu0
    %v3367 = vpop.trf.xlu0
    %v3368 = vpop.trf.xlu0
    %v3369 = vpop.trf.xlu0
    %v3370 = vpop.trf.xlu0
    %v3371 = vpop.trf.xlu0
    %v3372 = vpop.trf.xlu0
    %v3373 = vpop.trf.xlu0
    %3374 = vxpose.xlu0.b32.start [1/16] %v3110, 128
    %3375 = vxpose.xlu0.b32.cont [2/16] 0.0, 128
    %3376 = vxpose.xlu0.b32.cont [3/16] 0.0, 128
    %3377 = vxpose.xlu0.b32.cont [4/16] 0.0, 128
    %3378 = vxpose.xlu0.b32.cont [5/16] 0.0, 128
    %3379 = vxpose.xlu0.b32.cont [6/16] 0.0, 128
    %3380 = vxpose.xlu0.b32.cont [7/16] 0.0, 128
    %3381 = vxpose.xlu0.b32.cont [8/16] 0.0, 128
    %3382 = vxpose.xlu0.b32.cont [9/16] 0.0, 128
    %3383 = vxpose.xlu0.b32.cont [10/16] 0.0, 128
    %3384 = vxpose.xlu0.b32.cont [11/16] 0.0, 128
    %3385 = vxpose.xlu0.b32.cont [12/16] 0.0, 128
    %3386 = vxpose.xlu0.b32.cont [13/16] 0.0, 128
    %3387 = vxpose.xlu0.b32.cont [14/16] 0.0, 128
    %3388 = vxpose.xlu0.b32.cont [15/16] 0.0, 128
    %3389 = vxpose.xlu0.b32.end [16/16] 0.0, 128
    %v3390 = vpop.trf.xlu0
    %v3391 = vpop.trf.xlu0
    %v3392 = vpop.trf.xlu0
    %v3393 = vpop.trf.xlu0
    %v3394 = vpop.trf.xlu0
    %v3395 = vpop.trf.xlu0
    %v3396 = vpop.trf.xlu0
    %v3397 = vpop.trf.xlu0
    %v3398 = vpop.trf.xlu0
    %v3399 = vpop.trf.xlu0
    %v3400 = vpop.trf.xlu0
    %v3401 = vpop.trf.xlu0
    %v3402 = vpop.trf.xlu0
    %v3403 = vpop.trf.xlu0
    %v3404 = vpop.trf.xlu0
    %v3405 = vpop.trf.xlu0
    %3406 = vxpose.xlu0.b32.start [1/16] %v3111, 128
    %3407 = vxpose.xlu0.b32.cont [2/16] 0.0, 128
    %3408 = vxpose.xlu0.b32.cont [3/16] 0.0, 128
    %3409 = vxpose.xlu0.b32.cont [4/16] 0.0, 128
    %3410 = vxpose.xlu0.b32.cont [5/16] 0.0, 128
    %3411 = vxpose.xlu0.b32.cont [6/16] 0.0, 128
    %3412 = vxpose.xlu0.b32.cont [7/16] 0.0, 128
    %3413 = vxpose.xlu0.b32.cont [8/16] 0.0, 128
    %3414 = vxpose.xlu0.b32.cont [9/16] 0.0, 128
    %3415 = vxpose.xlu0.b32.cont [10/16] 0.0, 128
    %3416 = vxpose.xlu0.b32.cont [11/16] 0.0, 128
    %3417 = vxpose.xlu0.b32.cont [12/16] 0.0, 128
    %3418 = vxpose.xlu0.b32.cont [13/16] 0.0, 128
    %3419 = vxpose.xlu0.b32.cont [14/16] 0.0, 128
    %3420 = vxpose.xlu0.b32.cont [15/16] 0.0, 128
    %3421 = vxpose.xlu0.b32.end [16/16] 0.0, 128
    %v3422 = vpop.trf.xlu0
    %v3423 = vpop.trf.xlu0
    %v3424 = vpop.trf.xlu0
    %v3425 = vpop.trf.xlu0
    %v3426 = vpop.trf.xlu0
    %v3427 = vpop.trf.xlu0
    %v3428 = vpop.trf.xlu0
    %v3429 = vpop.trf.xlu0
    %v3430 = vpop.trf.xlu0
    %v3431 = vpop.trf.xlu0
    %v3432 = vpop.trf.xlu0
    %v3433 = vpop.trf.xlu0
    %v3434 = vpop.trf.xlu0
    %v3435 = vpop.trf.xlu0
    %v3436 = vpop.trf.xlu0
    %v3437 = vpop.trf.xlu0
    %3438 = vxpose.xlu0.b32.start [1/16] %v3112, 128
    %3439 = vxpose.xlu0.b32.cont [2/16] 0.0, 128
    %3440 = vxpose.xlu0.b32.cont [3/16] 0.0, 128
    %3441 = vxpose.xlu0.b32.cont [4/16] 0.0, 128
    %3442 = vxpose.xlu0.b32.cont [5/16] 0.0, 128
    %3443 = vxpose.xlu0.b32.cont [6/16] 0.0, 128
    %3444 = vxpose.xlu0.b32.cont [7/16] 0.0, 128
    %3445 = vxpose.xlu0.b32.cont [8/16] 0.0, 128
    %3446 = vxpose.xlu0.b32.cont [9/16] 0.0, 128
    %3447 = vxpose.xlu0.b32.cont [10/16] 0.0, 128
    %3448 = vxpose.xlu0.b32.cont [11/16] 0.0, 128
    %3449 = vxpose.xlu0.b32.cont [12/16] 0.0, 128
    %3450 = vxpose.xlu0.b32.cont [13/16] 0.0, 128
    %3451 = vxpose.xlu0.b32.cont [14/16] 0.0, 128
    %3452 = vxpose.xlu0.b32.cont [15/16] 0.0, 128
    %3453 = vxpose.xlu0.b32.end [16/16] 0.0, 128
    %v3454 = vpop.trf.xlu0
    %v3455 = vpop.trf.xlu0
    %v3456 = vpop.trf.xlu0
    %v3457 = vpop.trf.xlu0
    %v3458 = vpop.trf.xlu0
    %v3459 = vpop.trf.xlu0
    %v3460 = vpop.trf.xlu0
    %v3461 = vpop.trf.xlu0
    %v3462 = vpop.trf.xlu0
    %v3463 = vpop.trf.xlu0
    %v3464 = vpop.trf.xlu0
    %v3465 = vpop.trf.xlu0
    %v3466 = vpop.trf.xlu0
    %v3467 = vpop.trf.xlu0
    %v3468 = vpop.trf.xlu0
    %v3469 = vpop.trf.xlu0
    %3470 = vxpose.xlu0.b32.start [1/16] %v3113, 128
    %3471 = vxpose.xlu0.b32.cont [2/16] 0.0, 128
    %3472 = vxpose.xlu0.b32.cont [3/16] 0.0, 128
    %3473 = vxpose.xlu0.b32.cont [4/16] 0.0, 128
    %3474 = vxpose.xlu0.b32.cont [5/16] 0.0, 128
    %3475 = vxpose.xlu0.b32.cont [6/16] 0.0, 128
    %3476 = vxpose.xlu0.b32.cont [7/16] 0.0, 128
    %3477 = vxpose.xlu0.b32.cont [8/16] 0.0, 128
    %3478 = vxpose.xlu0.b32.cont [9/16] 0.0, 128
    %3479 = vxpose.xlu0.b32.cont [10/16] 0.0, 128
    %3480 = vxpose.xlu0.b32.cont [11/16] 0.0, 128
    %3481 = vxpose.xlu0.b32.cont [12/16] 0.0, 128
    %3482 = vxpose.xlu0.b32.cont [13/16] 0.0, 128
    %3483 = vxpose.xlu0.b32.cont [14/16] 0.0, 128
    %3484 = vxpose.xlu0.b32.cont [15/16] 0.0, 128
    %3485 = vxpose.xlu0.b32.end [16/16] 0.0, 128
    %v3486 = vpop.trf.xlu0
    %v3487 = vpop.trf.xlu0
    %v3488 = vpop.trf.xlu0
    %v3489 = vpop.trf.xlu0
    %v3490 = vpop.trf.xlu0
    %v3491 = vpop.trf.xlu0
    %v3492 = vpop.trf.xlu0
    %v3493 = vpop.trf.xlu0
    %v3494 = vpop.trf.xlu0
    %v3495 = vpop.trf.xlu0
    %v3496 = vpop.trf.xlu0
    %v3497 = vpop.trf.xlu0
    %v3498 = vpop.trf.xlu0
    %v3499 = vpop.trf.xlu0
    %v3500 = vpop.trf.xlu0
    %v3501 = vpop.trf.xlu0
    %v3502 = vld [vmem:[%s1] sm:$0xff]
    %v3504 = vsel %vm598, %v3134, 0
    %v3507 = vsel %vm598, %v3262, 0
    %3509 = vmatprep.subr.mxu0 0.0
    %3510 = vmatpush1.xpose.msra.mxu0 0.0
    %3511 = vmatprep.subr.mxu0 0.0
    %3512 = vmatpush1.xpose.msra.mxu0 0.0
    %3513 = vmatprep.subr.mxu0 0.0
    %3514 = vmatpush1.xpose.msra.mxu0 0.0
    %3515 = vmatprep.subr.mxu0 0.0
    %3516 = vmatpush1.xpose.msra.mxu0 0.0
    %3517 = vmatprep.subr.mxu0 0.0
    %3518 = vmatpush1.xpose.msra.mxu0 0.0
    %3519 = vmatprep.subr.mxu0 0.0
    %3520 = vmatpush1.xpose.msra.mxu0 0.0
    %3521 = vmatprep.subr.mxu0 0.0
    %3522 = vmatpush1.xpose.msra.mxu0 0.0
    %3523 = vmatprep.subr.mxu0 0.0
    %3524 = vmatpush1.xpose.msra.mxu0 0.0
    %3525 = vmatprep.subr.mxu0 0.0
    %3526 = vmatpush1.xpose.msra.mxu0 0.0
    %3527 = vmatprep.subr.mxu0 0.0
    %3528 = vmatpush1.xpose.msra.mxu0 0.0
    %3529 = vmatprep.subr.mxu0 0.0
    %3530 = vmatpush1.xpose.msra.mxu0 0.0
    %3531 = vmatprep.subr.mxu0 0.0
    %3532 = vmatpush1.xpose.msra.mxu0 0.0
    %3533 = vmatprep.subr.mxu0 0.0
    %3534 = vmatpush1.xpose.msra.mxu0 0.0
    %3535 = vmatprep.subr.mxu0 0.0
    %3536 = vmatpush1.xpose.msra.mxu0 0.0
    %3537 = vmatprep.subr.mxu0 0.0
    %3538 = vmatpush1.xpose.msra.mxu0 0.0
    %3539 = vmatprep.subr.mxu0 0.0
    %3540 = vmatpush1.xpose.msra.mxu0 %v3507
    %3541 = vmatprep.subr.mxu0 0.0
    %3542 = vmatpush2.xpose.msra.mxu0 0.0
    %3543 = vmatprep.subr.mxu0 0.0
    %3544 = vmatpush2.xpose.msra.mxu0 0.0
    %3545 = vmatprep.subr.mxu0 0.0
    %3546 = vmatpush2.xpose.msra.mxu0 0.0
    %3547 = vmatprep.subr.mxu0 0.0
    %3548 = vmatpush2.xpose.msra.mxu0 0.0
    %3549 = vmatprep.subr.mxu0 0.0
    %3550 = vmatpush2.xpose.msra.mxu0 0.0
    %3551 = vmatprep.subr.mxu0 0.0
    %3552 = vmatpush2.xpose.msra.mxu0 0.0
    %3553 = vmatprep.subr.mxu0 0.0
    %3554 = vmatpush2.xpose.msra.mxu0 0.0
    %3555 = vmatprep.subr.mxu0 0.0
    %3556 = vmatpush2.xpose.msra.mxu0 0.0
    %3557 = vmatprep.subr.mxu0 0.0
    %3558 = vmatpush2.xpose.msra.mxu0 0.0
    %3559 = vmatprep.subr.mxu0 0.0
    %3560 = vmatpush2.xpose.msra.mxu0 0.0
    %3561 = vmatprep.subr.mxu0 0.0
    %3562 = vmatpush2.xpose.msra.mxu0 0.0
    %3563 = vmatprep.subr.mxu0 0.0
    %3564 = vmatpush2.xpose.msra.mxu0 0.0
    %3565 = vmatprep.subr.mxu0 0.0
    %3566 = vmatpush2.xpose.msra.mxu0 0.0
    %3567 = vmatprep.subr.mxu0 0.0
    %3568 = vmatpush2.xpose.msra.mxu0 0.0
    %3569 = vmatprep.subr.mxu0 0.0
    %3570 = vmatpush2.xpose.msra.mxu0 0.0
    %3571 = vmatprep.subr.mxu0 0.0
    %3572 = vmatpush2.xpose.msra.mxu0 0.0
    %3573 = vmatprep.mubr.f32.mxu0 0.0
    %3574 = vmatmul.mubr.f32.gmra.mxu0 %v3504
    %v3575 = vpop.f32.mrf.mxu0
    %v3576 = vadd.f32 %v3502, %v3575
    %v3577 = vpop.f32.mrf.mxu0
    %3578 = vdwg.mxu0
    %v3580 = vsel %vm598, %v3166, 0
    %v3583 = vsel %vm598, %v3294, 0
    %3585 = vmatprep.subr.mxu0 0.0
    %3586 = vmatpush1.xpose.msra.mxu0 0.0
    %3587 = vmatprep.subr.mxu0 0.0
    %3588 = vmatpush1.xpose.msra.mxu0 0.0
    %3589 = vmatprep.subr.mxu0 0.0
    %3590 = vmatpush1.xpose.msra.mxu0 0.0
    %3591 = vmatprep.subr.mxu0 0.0
    %3592 = vmatpush1.xpose.msra.mxu0 0.0
    %3593 = vmatprep.subr.mxu0 0.0
    %3594 = vmatpush1.xpose.msra.mxu0 0.0
    %3595 = vmatprep.subr.mxu0 0.0
    %3596 = vmatpush1.xpose.msra.mxu0 0.0
    %3597 = vmatprep.subr.mxu0 0.0
    %3598 = vmatpush1.xpose.msra.mxu0 0.0
    %3599 = vmatprep.subr.mxu0 0.0
    %3600 = vmatpush1.xpose.msra.mxu0 0.0
    %3601 = vmatprep.subr.mxu0 0.0
    %3602 = vmatpush1.xpose.msra.mxu0 0.0
    %3603 = vmatprep.subr.mxu0 0.0
    %3604 = vmatpush1.xpose.msra.mxu0 0.0
    %3605 = vmatprep.subr.mxu0 0.0
    %3606 = vmatpush1.xpose.msra.mxu0 0.0
    %3607 = vmatprep.subr.mxu0 0.0
    %3608 = vmatpush1.xpose.msra.mxu0 0.0
    %3609 = vmatprep.subr.mxu0 0.0
    %3610 = vmatpush1.xpose.msra.mxu0 0.0
    %3611 = vmatprep.subr.mxu0 0.0
    %3612 = vmatpush1.xpose.msra.mxu0 0.0
    %3613 = vmatprep.subr.mxu0 0.0
    %3614 = vmatpush1.xpose.msra.mxu0 0.0
    %3615 = vmatprep.subr.mxu0 0.0
    %3616 = vmatpush1.xpose.msra.mxu0 %v3583
    %3617 = vmatprep.subr.mxu0 0.0
    %3618 = vmatpush2.xpose.msra.mxu0 0.0
    %3619 = vmatprep.subr.mxu0 0.0
    %3620 = vmatpush2.xpose.msra.mxu0 0.0
    %3621 = vmatprep.subr.mxu0 0.0
    %3622 = vmatpush2.xpose.msra.mxu0 0.0
    %3623 = vmatprep.subr.mxu0 0.0
    %3624 = vmatpush2.xpose.msra.mxu0 0.0
    %3625 = vmatprep.subr.mxu0 0.0
    %3626 = vmatpush2.xpose.msra.mxu0 0.0
    %3627 = vmatprep.subr.mxu0 0.0
    %3628 = vmatpush2.xpose.msra.mxu0 0.0
    %3629 = vmatprep.subr.mxu0 0.0
    %3630 = vmatpush2.xpose.msra.mxu0 0.0
    %3631 = vmatprep.subr.mxu0 0.0
    %3632 = vmatpush2.xpose.msra.mxu0 0.0
    %3633 = vmatprep.subr.mxu0 0.0
    %3634 = vmatpush2.xpose.msra.mxu0 0.0
    %3635 = vmatprep.subr.mxu0 0.0
    %3636 = vmatpush2.xpose.msra.mxu0 0.0
    %3637 = vmatprep.subr.mxu0 0.0
    %3638 = vmatpush2.xpose.msra.mxu0 0.0
    %3639 = vmatprep.subr.mxu0 0.0
    %3640 = vmatpush2.xpose.msra.mxu0 0.0
    %3641 = vmatprep.subr.mxu0 0.0
    %3642 = vmatpush2.xpose.msra.mxu0 0.0
    %3643 = vmatprep.subr.mxu0 0.0
    %3644 = vmatpush2.xpose.msra.mxu0 0.0
    %3645 = vmatprep.subr.mxu0 0.0
    %3646 = vmatpush2.xpose.msra.mxu0 0.0
    %3647 = vmatprep.subr.mxu0 0.0
    %3648 = vmatpush2.xpose.msra.mxu0 0.0
    %3649 = vmatprep.mubr.f32.mxu0 0.0
    %3650 = vmatmul.mubr.f32.gmra.mxu0 %v3580
    %v3651 = vpop.f32.mrf.mxu0
    %v3652 = vadd.f32 %v3502, %v3651
    %v3653 = vpop.f32.mrf.mxu0
    %3654 = vdwg.mxu0
    %v3656 = vsel %vm598, %v3198, 0
    %v3659 = vsel %vm598, %v3326, 0
    %3661 = vmatprep.subr.mxu0 0.0
    %3662 = vmatpush1.xpose.msra.mxu0 0.0
    %3663 = vmatprep.subr.mxu0 0.0
    %3664 = vmatpush1.xpose.msra.mxu0 0.0
    %3665 = vmatprep.subr.mxu0 0.0
    %3666 = vmatpush1.xpose.msra.mxu0 0.0
    %3667 = vmatprep.subr.mxu0 0.0
    %3668 = vmatpush1.xpose.msra.mxu0 0.0
    %3669 = vmatprep.subr.mxu0 0.0
    %3670 = vmatpush1.xpose.msra.mxu0 0.0
    %3671 = vmatprep.subr.mxu0 0.0
    %3672 = vmatpush1.xpose.msra.mxu0 0.0
    %3673 = vmatprep.subr.mxu0 0.0
    %3674 = vmatpush1.xpose.msra.mxu0 0.0
    %3675 = vmatprep.subr.mxu0 0.0
    %3676 = vmatpush1.xpose.msra.mxu0 0.0
    %3677 = vmatprep.subr.mxu0 0.0
    %3678 = vmatpush1.xpose.msra.mxu0 0.0
    %3679 = vmatprep.subr.mxu0 0.0
    %3680 = vmatpush1.xpose.msra.mxu0 0.0
    %3681 = vmatprep.subr.mxu0 0.0
    %3682 = vmatpush1.xpose.msra.mxu0 0.0
    %3683 = vmatprep.subr.mxu0 0.0
    %3684 = vmatpush1.xpose.msra.mxu0 0.0
    %3685 = vmatprep.subr.mxu0 0.0
    %3686 = vmatpush1.xpose.msra.mxu0 0.0
    %3687 = vmatprep.subr.mxu0 0.0
    %3688 = vmatpush1.xpose.msra.mxu0 0.0
    %3689 = vmatprep.subr.mxu0 0.0
    %3690 = vmatpush1.xpose.msra.mxu0 0.0
    %3691 = vmatprep.subr.mxu0 0.0
    %3692 = vmatpush1.xpose.msra.mxu0 %v3659
    %3693 = vmatprep.subr.mxu0 0.0
    %3694 = vmatpush2.xpose.msra.mxu0 0.0
    %3695 = vmatprep.subr.mxu0 0.0
    %3696 = vmatpush2.xpose.msra.mxu0 0.0
    %3697 = vmatprep.subr.mxu0 0.0
    %3698 = vmatpush2.xpose.msra.mxu0 0.0
    %3699 = vmatprep.subr.mxu0 0.0
    %3700 = vmatpush2.xpose.msra.mxu0 0.0
    %3701 = vmatprep.subr.mxu0 0.0
    %3702 = vmatpush2.xpose.msra.mxu0 0.0
    %3703 = vmatprep.subr.mxu0 0.0
    %3704 = vmatpush2.xpose.msra.mxu0 0.0
    %3705 = vmatprep.subr.mxu0 0.0
    %3706 = vmatpush2.xpose.msra.mxu0 0.0
    %3707 = vmatprep.subr.mxu0 0.0
    %3708 = vmatpush2.xpose.msra.mxu0 0.0
    %3709 = vmatprep.subr.mxu0 0.0
    %3710 = vmatpush2.xpose.msra.mxu0 0.0
    %3711 = vmatprep.subr.mxu0 0.0
    %3712 = vmatpush2.xpose.msra.mxu0 0.0
    %3713 = vmatprep.subr.mxu0 0.0
    %3714 = vmatpush2.xpose.msra.mxu0 0.0
    %3715 = vmatprep.subr.mxu0 0.0
    %3716 = vmatpush2.xpose.msra.mxu0 0.0
    %3717 = vmatprep.subr.mxu0 0.0
    %3718 = vmatpush2.xpose.msra.mxu0 0.0
    %3719 = vmatprep.subr.mxu0 0.0
    %3720 = vmatpush2.xpose.msra.mxu0 0.0
    %3721 = vmatprep.subr.mxu0 0.0
    %3722 = vmatpush2.xpose.msra.mxu0 0.0
    %3723 = vmatprep.subr.mxu0 0.0
    %3724 = vmatpush2.xpose.msra.mxu0 0.0
    %3725 = vmatprep.mubr.f32.mxu0 0.0
    %3726 = vmatmul.mubr.f32.gmra.mxu0 %v3656
    %v3727 = vpop.f32.mrf.mxu0
    %v3728 = vadd.f32 %v3502, %v3727
    %v3729 = vpop.f32.mrf.mxu0
    %3730 = vdwg.mxu0
    %v3732 = vsel %vm598, %v3230, 0
    %v3735 = vsel %vm598, %v3358, 0
    %3737 = vmatprep.subr.mxu0 0.0
    %3738 = vmatpush1.xpose.msra.mxu0 0.0
    %3739 = vmatprep.subr.mxu0 0.0
    %3740 = vmatpush1.xpose.msra.mxu0 0.0
    %3741 = vmatprep.subr.mxu0 0.0
    %3742 = vmatpush1.xpose.msra.mxu0 0.0
    %3743 = vmatprep.subr.mxu0 0.0
    %3744 = vmatpush1.xpose.msra.mxu0 0.0
    %3745 = vmatprep.subr.mxu0 0.0
    %3746 = vmatpush1.xpose.msra.mxu0 0.0
    %3747 = vmatprep.subr.mxu0 0.0
    %3748 = vmatpush1.xpose.msra.mxu0 0.0
    %3749 = vmatprep.subr.mxu0 0.0
    %3750 = vmatpush1.xpose.msra.mxu0 0.0
    %3751 = vmatprep.subr.mxu0 0.0
    %3752 = vmatpush1.xpose.msra.mxu0 0.0
    %3753 = vmatprep.subr.mxu0 0.0
    %3754 = vmatpush1.xpose.msra.mxu0 0.0
    %3755 = vmatprep.subr.mxu0 0.0
    %3756 = vmatpush1.xpose.msra.mxu0 0.0
    %3757 = vmatprep.subr.mxu0 0.0
    %3758 = vmatpush1.xpose.msra.mxu0 0.0
    %3759 = vmatprep.subr.mxu0 0.0
    %3760 = vmatpush1.xpose.msra.mxu0 0.0
    %3761 = vmatprep.subr.mxu0 0.0
    %3762 = vmatpush1.xpose.msra.mxu0 0.0
    %3763 = vmatprep.subr.mxu0 0.0
    %3764 = vmatpush1.xpose.msra.mxu0 0.0
    %3765 = vmatprep.subr.mxu0 0.0
    %3766 = vmatpush1.xpose.msra.mxu0 0.0
    %3767 = vmatprep.subr.mxu0 0.0
    %3768 = vmatpush1.xpose.msra.mxu0 %v3735
    %3769 = vmatprep.subr.mxu0 0.0
    %3770 = vmatpush2.xpose.msra.mxu0 0.0
    %3771 = vmatprep.subr.mxu0 0.0
    %3772 = vmatpush2.xpose.msra.mxu0 0.0
    %3773 = vmatprep.subr.mxu0 0.0
    %3774 = vmatpush2.xpose.msra.mxu0 0.0
    %3775 = vmatprep.subr.mxu0 0.0
    %3776 = vmatpush2.xpose.msra.mxu0 0.0
    %3777 = vmatprep.subr.mxu0 0.0
    %3778 = vmatpush2.xpose.msra.mxu0 0.0
    %3779 = vmatprep.subr.mxu0 0.0
    %3780 = vmatpush2.xpose.msra.mxu0 0.0
    %3781 = vmatprep.subr.mxu0 0.0
    %3782 = vmatpush2.xpose.msra.mxu0 0.0
    %3783 = vmatprep.subr.mxu0 0.0
    %3784 = vmatpush2.xpose.msra.mxu0 0.0
    %3785 = vmatprep.subr.mxu0 0.0
    %3786 = vmatpush2.xpose.msra.mxu0 0.0
    %3787 = vmatprep.subr.mxu0 0.0
    %3788 = vmatpush2.xpose.msra.mxu0 0.0
    %3789 = vmatprep.subr.mxu0 0.0
    %3790 = vmatpush2.xpose.msra.mxu0 0.0
    %3791 = vmatprep.subr.mxu0 0.0
    %3792 = vmatpush2.xpose.msra.mxu0 0.0
    %3793 = vmatprep.subr.mxu0 0.0
    %3794 = vmatpush2.xpose.msra.mxu0 0.0
    %3795 = vmatprep.subr.mxu0 0.0
    %3796 = vmatpush2.xpose.msra.mxu0 0.0
    %3797 = vmatprep.subr.mxu0 0.0
    %3798 = vmatpush2.xpose.msra.mxu0 0.0
    %3799 = vmatprep.subr.mxu0 0.0
    %3800 = vmatpush2.xpose.msra.mxu0 0.0
    %3801 = vmatprep.mubr.f32.mxu0 0.0
    %3802 = vmatmul.mubr.f32.gmra.mxu0 %v3732
    %v3803 = vpop.f32.mrf.mxu0
    %v3804 = vadd.f32 %v3502, %v3803
    %v3805 = vpop.f32.mrf.mxu0
    %3806 = vdwg.mxu0
    %v3807 = vsel %vm598, %v3576, -inf
    %3808 = vmax.xlane.f32.xlu0 %v3807
    %v3809 = vpop.xlane.xlu0 %3808
    %v3810 = vsel %vm598, %v3652, -inf
    %3811 = vmax.xlane.f32.xlu0 %v3810
    %v3812 = vpop.xlane.xlu0 %3811
    %v3813 = vsel %vm598, %v3728, -inf
    %3814 = vmax.xlane.f32.xlu0 %v3813
    %v3815 = vpop.xlane.xlu0 %3814
    %v3816 = vsel %vm598, %v3804, -inf
    %3817 = vmax.xlane.f32.xlu0 %v3816
    %v3818 = vpop.xlane.xlu0 %3817
    %v3819 = vsub.f32 %v3576, %v3809
    %v3820 = vsub.f32 %v3652, %v3812
    %v3821 = vsub.f32 %v3728, %v3815
    %v3822 = vsub.f32 %v3804, %v3818
    %v3823 = vmul.f32 %v3819, 1.442695
    %v3824 = vpow.pop %v3823
    %v3825 = vmul.f32 %v3820, 1.442695
    %v3826 = vpow.pop %v3825
    %v3827 = vmul.f32 %v3821, 1.442695
    %v3828 = vpow.pop %v3827
    %v3829 = vmul.f32 %v3822, 1.442695
    %v3830 = vpow.pop %v3829
    %v3831 = vsel %vm598, %v3824, 0.0
    %3832 = vadd.xlane.f32.xlu0 %v3831
    %v3833 = vpop.xlane.xlu0 %3832
    %v3834 = vsel %vm598, %v3826, 0.0
    %3835 = vadd.xlane.f32.xlu0 %v3834
    %v3836 = vpop.xlane.xlu0 %3835
    %v3837 = vsel %vm598, %v3828, 0.0
    %3838 = vadd.xlane.f32.xlu0 %v3837
    %v3839 = vpop.xlane.xlu0 %3838
    %v3840 = vsel %vm598, %v3830, 0.0
    %3841 = vadd.xlane.f32.xlu0 %v3840
    %v3842 = vpop.xlane.xlu0 %3841
    %v3843 = vrcp.pop %v3833
    %v3844 = vrcp.pop %v3836
    %v3845 = vrcp.pop %v3839
    %v3846 = vrcp.pop %v3842
    %v3847 = vmul.f32 %v3824, %v3843
    %v3848 = vmul.f32 %v3826, %v3844
    %v3849 = vmul.f32 %v3828, %v3845
    %v3850 = vmul.f32 %v3830, %v3846
    %v3852 = vsel %vm598, %v3847, 0
    %3854 = vmatprep.subr.mxu0 0.0
    %3855 = vmatpush1.msra.mxu0 0.0
    %3856 = vmatprep.subr.mxu0 0.0
    %3857 = vmatpush1.msra.mxu0 0.0
    %3858 = vmatprep.subr.mxu0 0.0
    %3859 = vmatpush1.msra.mxu0 0.0
    %3860 = vmatprep.subr.mxu0 0.0
    %3861 = vmatpush1.msra.mxu0 0.0
    %3862 = vmatprep.subr.mxu0 0.0
    %3863 = vmatpush1.msra.mxu0 0.0
    %3864 = vmatprep.subr.mxu0 0.0
    %3865 = vmatpush1.msra.mxu0 0.0
    %3866 = vmatprep.subr.mxu0 0.0
    %3867 = vmatpush1.msra.mxu0 0.0
    %3868 = vmatprep.subr.mxu0 0.0
    %3869 = vmatpush1.msra.mxu0 0.0
    %3870 = vmatprep.subr.mxu0 0.0
    %3871 = vmatpush1.msra.mxu0 0.0
    %3872 = vmatprep.subr.mxu0 0.0
    %3873 = vmatpush1.msra.mxu0 0.0
    %3874 = vmatprep.subr.mxu0 0.0
    %3875 = vmatpush1.msra.mxu0 0.0
    %3876 = vmatprep.subr.mxu0 0.0
    %3877 = vmatpush1.msra.mxu0 0.0
    %3878 = vmatprep.subr.mxu0 0.0
    %3879 = vmatpush1.msra.mxu0 0.0
    %3880 = vmatprep.subr.mxu0 0.0
    %3881 = vmatpush1.msra.mxu0 0.0
    %3882 = vmatprep.subr.mxu0 0.0
    %3883 = vmatpush1.msra.mxu0 0.0
    %3884 = vmatprep.subr.mxu0 0.0
    %3885 = vmatpush1.msra.mxu0 %v3390
    %3886 = vmatprep.subr.mxu0 0.0
    %3887 = vmatpush2.msra.mxu0 0.0
    %3888 = vmatprep.subr.mxu0 0.0
    %3889 = vmatpush2.msra.mxu0 0.0
    %3890 = vmatprep.subr.mxu0 0.0
    %3891 = vmatpush2.msra.mxu0 0.0
    %3892 = vmatprep.subr.mxu0 0.0
    %3893 = vmatpush2.msra.mxu0 0.0
    %3894 = vmatprep.subr.mxu0 0.0
    %3895 = vmatpush2.msra.mxu0 0.0
    %3896 = vmatprep.subr.mxu0 0.0
    %3897 = vmatpush2.msra.mxu0 0.0
    %3898 = vmatprep.subr.mxu0 0.0
    %3899 = vmatpush2.msra.mxu0 0.0
    %3900 = vmatprep.subr.mxu0 0.0
    %3901 = vmatpush2.msra.mxu0 0.0
    %3902 = vmatprep.subr.mxu0 0.0
    %3903 = vmatpush2.msra.mxu0 0.0
    %3904 = vmatprep.subr.mxu0 0.0
    %3905 = vmatpush2.msra.mxu0 0.0
    %3906 = vmatprep.subr.mxu0 0.0
    %3907 = vmatpush2.msra.mxu0 0.0
    %3908 = vmatprep.subr.mxu0 0.0
    %3909 = vmatpush2.msra.mxu0 0.0
    %3910 = vmatprep.subr.mxu0 0.0
    %3911 = vmatpush2.msra.mxu0 0.0
    %3912 = vmatprep.subr.mxu0 0.0
    %3913 = vmatpush2.msra.mxu0 0.0
    %3914 = vmatprep.subr.mxu0 0.0
    %3915 = vmatpush2.msra.mxu0 0.0
    %3916 = vmatprep.subr.mxu0 0.0
    %3917 = vmatpush2.msra.mxu0 0.0
    %3918 = vmatprep.mubr.f32.mxu0 0.0
    %3919 = vmatmul.mubr.f32.gmra.mxu0 %v3852
    %v3920 = vpop.f32.mrf.mxu0
    %v3921 = vadd.f32 0.0, %v3920
    %v3922 = vpop.f32.mrf.mxu0
    %3923 = vdwg.mxu0
    %v3925 = vsel %vm598, %v3848, 0
    %3927 = vmatprep.subr.mxu0 0.0
    %3928 = vmatpush1.msra.mxu0 0.0
    %3929 = vmatprep.subr.mxu0 0.0
    %3930 = vmatpush1.msra.mxu0 0.0
    %3931 = vmatprep.subr.mxu0 0.0
    %3932 = vmatpush1.msra.mxu0 0.0
    %3933 = vmatprep.subr.mxu0 0.0
    %3934 = vmatpush1.msra.mxu0 0.0
    %3935 = vmatprep.subr.mxu0 0.0
    %3936 = vmatpush1.msra.mxu0 0.0
    %3937 = vmatprep.subr.mxu0 0.0
    %3938 = vmatpush1.msra.mxu0 0.0
    %3939 = vmatprep.subr.mxu0 0.0
    %3940 = vmatpush1.msra.mxu0 0.0
    %3941 = vmatprep.subr.mxu0 0.0
    %3942 = vmatpush1.msra.mxu0 0.0
    %3943 = vmatprep.subr.mxu0 0.0
    %3944 = vmatpush1.msra.mxu0 0.0
    %3945 = vmatprep.subr.mxu0 0.0
    %3946 = vmatpush1.msra.mxu0 0.0
    %3947 = vmatprep.subr.mxu0 0.0
    %3948 = vmatpush1.msra.mxu0 0.0
    %3949 = vmatprep.subr.mxu0 0.0
    %3950 = vmatpush1.msra.mxu0 0.0
    %3951 = vmatprep.subr.mxu0 0.0
    %3952 = vmatpush1.msra.mxu0 0.0
    %3953 = vmatprep.subr.mxu0 0.0
    %3954 = vmatpush1.msra.mxu0 0.0
    %3955 = vmatprep.subr.mxu0 0.0
    %3956 = vmatpush1.msra.mxu0 0.0
    %3957 = vmatprep.subr.mxu0 0.0
    %3958 = vmatpush1.msra.mxu0 %v3422
    %3959 = vmatprep.subr.mxu0 0.0
    %3960 = vmatpush2.msra.mxu0 0.0
    %3961 = vmatprep.subr.mxu0 0.0
    %3962 = vmatpush2.msra.mxu0 0.0
    %3963 = vmatprep.subr.mxu0 0.0
    %3964 = vmatpush2.msra.mxu0 0.0
    %3965 = vmatprep.subr.mxu0 0.0
    %3966 = vmatpush2.msra.mxu0 0.0
    %3967 = vmatprep.subr.mxu0 0.0
    %3968 = vmatpush2.msra.mxu0 0.0
    %3969 = vmatprep.subr.mxu0 0.0
    %3970 = vmatpush2.msra.mxu0 0.0
    %3971 = vmatprep.subr.mxu0 0.0
    %3972 = vmatpush2.msra.mxu0 0.0
    %3973 = vmatprep.subr.mxu0 0.0
    %3974 = vmatpush2.msra.mxu0 0.0
    %3975 = vmatprep.subr.mxu0 0.0
    %3976 = vmatpush2.msra.mxu0 0.0
    %3977 = vmatprep.subr.mxu0 0.0
    %3978 = vmatpush2.msra.mxu0 0.0
    %3979 = vmatprep.subr.mxu0 0.0
    %3980 = vmatpush2.msra.mxu0 0.0
    %3981 = vmatprep.subr.mxu0 0.0
    %3982 = vmatpush2.msra.mxu0 0.0
    %3983 = vmatprep.subr.mxu0 0.0
    %3984 = vmatpush2.msra.mxu0 0.0
    %3985 = vmatprep.subr.mxu0 0.0
    %3986 = vmatpush2.msra.mxu0 0.0
    %3987 = vmatprep.subr.mxu0 0.0
    %3988 = vmatpush2.msra.mxu0 0.0
    %3989 = vmatprep.subr.mxu0 0.0
    %3990 = vmatpush2.msra.mxu0 0.0
    %3991 = vmatprep.mubr.f32.mxu0 0.0
    %3992 = vmatmul.mubr.f32.gmra.mxu0 %v3925
    %v3993 = vpop.f32.mrf.mxu0
    %v3994 = vadd.f32 0.0, %v3993
    %v3995 = vpop.f32.mrf.mxu0
    %3996 = vdwg.mxu0
    %v3998 = vsel %vm598, %v3849, 0
    %4000 = vmatprep.subr.mxu0 0.0
    %4001 = vmatpush1.msra.mxu0 0.0
    %4002 = vmatprep.subr.mxu0 0.0
    %4003 = vmatpush1.msra.mxu0 0.0
    %4004 = vmatprep.subr.mxu0 0.0
    %4005 = vmatpush1.msra.mxu0 0.0
    %4006 = vmatprep.subr.mxu0 0.0
    %4007 = vmatpush1.msra.mxu0 0.0
    %4008 = vmatprep.subr.mxu0 0.0
    %4009 = vmatpush1.msra.mxu0 0.0
    %4010 = vmatprep.subr.mxu0 0.0
    %4011 = vmatpush1.msra.mxu0 0.0
    %4012 = vmatprep.subr.mxu0 0.0
    %4013 = vmatpush1.msra.mxu0 0.0
    %4014 = vmatprep.subr.mxu0 0.0
    %4015 = vmatpush1.msra.mxu0 0.0
    %4016 = vmatprep.subr.mxu0 0.0
    %4017 = vmatpush1.msra.mxu0 0.0
    %4018 = vmatprep.subr.mxu0 0.0
    %4019 = vmatpush1.msra.mxu0 0.0
    %4020 = vmatprep.subr.mxu0 0.0
    %4021 = vmatpush1.msra.mxu0 0.0
    %4022 = vmatprep.subr.mxu0 0.0
    %4023 = vmatpush1.msra.mxu0 0.0
    %4024 = vmatprep.subr.mxu0 0.0
    %4025 = vmatpush1.msra.mxu0 0.0
    %4026 = vmatprep.subr.mxu0 0.0
    %4027 = vmatpush1.msra.mxu0 0.0
    %4028 = vmatprep.subr.mxu0 0.0
    %4029 = vmatpush1.msra.mxu0 0.0
    %4030 = vmatprep.subr.mxu0 0.0
    %4031 = vmatpush1.msra.mxu0 %v3454
    %4032 = vmatprep.subr.mxu0 0.0
    %4033 = vmatpush2.msra.mxu0 0.0
    %4034 = vmatprep.subr.mxu0 0.0
    %4035 = vmatpush2.msra.mxu0 0.0
    %4036 = vmatprep.subr.mxu0 0.0
    %4037 = vmatpush2.msra.mxu0 0.0
    %4038 = vmatprep.subr.mxu0 0.0
    %4039 = vmatpush2.msra.mxu0 0.0
    %4040 = vmatprep.subr.mxu0 0.0
    %4041 = vmatpush2.msra.mxu0 0.0
    %4042 = vmatprep.subr.mxu0 0.0
    %4043 = vmatpush2.msra.mxu0 0.0
    %4044 = vmatprep.subr.mxu0 0.0
    %4045 = vmatpush2.msra.mxu0 0.0
    %4046 = vmatprep.subr.mxu0 0.0
    %4047 = vmatpush2.msra.mxu0 0.0
    %4048 = vmatprep.subr.mxu0 0.0
    %4049 = vmatpush2.msra.mxu0 0.0
    %4050 = vmatprep.subr.mxu0 0.0
    %4051 = vmatpush2.msra.mxu0 0.0
    %4052 = vmatprep.subr.mxu0 0.0
    %4053 = vmatpush2.msra.mxu0 0.0
    %4054 = vmatprep.subr.mxu0 0.0
    %4055 = vmatpush2.msra.mxu0 0.0
    %4056 = vmatprep.subr.mxu0 0.0
    %4057 = vmatpush2.msra.mxu0 0.0
    %4058 = vmatprep.subr.mxu0 0.0
    %4059 = vmatpush2.msra.mxu0 0.0
    %4060 = vmatprep.subr.mxu0 0.0
    %4061 = vmatpush2.msra.mxu0 0.0
    %4062 = vmatprep.subr.mxu0 0.0
    %4063 = vmatpush2.msra.mxu0 0.0
    %4064 = vmatprep.mubr.f32.mxu0 0.0
    %4065 = vmatmul.mubr.f32.gmra.mxu0 %v3998
    %v4066 = vpop.f32.mrf.mxu0
    %v4067 = vadd.f32 0.0, %v4066
    %v4068 = vpop.f32.mrf.mxu0
    %4069 = vdwg.mxu0
    %v4071 = vsel %vm598, %v3850, 0
    %4073 = vmatprep.subr.mxu0 0.0
    %4074 = vmatpush1.msra.mxu0 0.0
    %4075 = vmatprep.subr.mxu0 0.0
    %4076 = vmatpush1.msra.mxu0 0.0
    %4077 = vmatprep.subr.mxu0 0.0
    %4078 = vmatpush1.msra.mxu0 0.0
    %4079 = vmatprep.subr.mxu0 0.0
    %4080 = vmatpush1.msra.mxu0 0.0
    %4081 = vmatprep.subr.mxu0 0.0
    %4082 = vmatpush1.msra.mxu0 0.0
    %4083 = vmatprep.subr.mxu0 0.0
    %4084 = vmatpush1.msra.mxu0 0.0
    %4085 = vmatprep.subr.mxu0 0.0
    %4086 = vmatpush1.msra.mxu0 0.0
    %4087 = vmatprep.subr.mxu0 0.0
    %4088 = vmatpush1.msra.mxu0 0.0
    %4089 = vmatprep.subr.mxu0 0.0
    %4090 = vmatpush1.msra.mxu0 0.0
    %4091 = vmatprep.subr.mxu0 0.0
    %4092 = vmatpush1.msra.mxu0 0.0
    %4093 = vmatprep.subr.mxu0 0.0
    %4094 = vmatpush1.msra.mxu0 0.0
    %4095 = vmatprep.subr.mxu0 0.0
    %4096 = vmatpush1.msra.mxu0 0.0
    %4097 = vmatprep.subr.mxu0 0.0
    %4098 = vmatpush1.msra.mxu0 0.0
    %4099 = vmatprep.subr.mxu0 0.0
    %4100 = vmatpush1.msra.mxu0 0.0
    %4101 = vmatprep.subr.mxu0 0.0
    %4102 = vmatpush1.msra.mxu0 0.0
    %4103 = vmatprep.subr.mxu0 0.0
    %4104 = vmatpush1.msra.mxu0 %v3486
    %4105 = vmatprep.subr.mxu0 0.0
    %4106 = vmatpush2.msra.mxu0 0.0
    %4107 = vmatprep.subr.mxu0 0.0
    %4108 = vmatpush2.msra.mxu0 0.0
    %4109 = vmatprep.subr.mxu0 0.0
    %4110 = vmatpush2.msra.mxu0 0.0
    %4111 = vmatprep.subr.mxu0 0.0
    %4112 = vmatpush2.msra.mxu0 0.0
    %4113 = vmatprep.subr.mxu0 0.0
    %4114 = vmatpush2.msra.mxu0 0.0
    %4115 = vmatprep.subr.mxu0 0.0
    %4116 = vmatpush2.msra.mxu0 0.0
    %4117 = vmatprep.subr.mxu0 0.0
    %4118 = vmatpush2.msra.mxu0 0.0
    %4119 = vmatprep.subr.mxu0 0.0
    %4120 = vmatpush2.msra.mxu0 0.0
    %4121 = vmatprep.subr.mxu0 0.0
    %4122 = vmatpush2.msra.mxu0 0.0
    %4123 = vmatprep.subr.mxu0 0.0
    %4124 = vmatpush2.msra.mxu0 0.0
    %4125 = vmatprep.subr.mxu0 0.0
    %4126 = vmatpush2.msra.mxu0 0.0
    %4127 = vmatprep.subr.mxu0 0.0
    %4128 = vmatpush2.msra.mxu0 0.0
    %4129 = vmatprep.subr.mxu0 0.0
    %4130 = vmatpush2.msra.mxu0 0.0
    %4131 = vmatprep.subr.mxu0 0.0
    %4132 = vmatpush2.msra.mxu0 0.0
    %4133 = vmatprep.subr.mxu0 0.0
    %4134 = vmatpush2.msra.mxu0 0.0
    %4135 = vmatprep.subr.mxu0 0.0
    %4136 = vmatpush2.msra.mxu0 0.0
    %4137 = vmatprep.mubr.f32.mxu0 0.0
    %4138 = vmatmul.mubr.f32.gmra.mxu0 %v4071
    %v4139 = vpop.f32.mrf.mxu0
    %v4140 = vadd.f32 0.0, %v4139
    %v4141 = vpop.f32.mrf.mxu0
    %4142 = vdwg.mxu0
    %4143 = vxpose.xlu0.b32.start [1/16] %v3921, 128
    %4144 = vxpose.xlu0.b32.cont [2/16] 0.0, 128
    %4145 = vxpose.xlu0.b32.cont [3/16] 0.0, 128
    %4146 = vxpose.xlu0.b32.cont [4/16] 0.0, 128
    %4147 = vxpose.xlu0.b32.cont [5/16] 0.0, 128
    %4148 = vxpose.xlu0.b32.cont [6/16] 0.0, 128
    %4149 = vxpose.xlu0.b32.cont [7/16] 0.0, 128
    %4150 = vxpose.xlu0.b32.cont [8/16] 0.0, 128
    %4151 = vxpose.xlu0.b32.cont [9/16] 0.0, 128
    %4152 = vxpose.xlu0.b32.cont [10/16] 0.0, 128
    %4153 = vxpose.xlu0.b32.cont [11/16] 0.0, 128
    %4154 = vxpose.xlu0.b32.cont [12/16] 0.0, 128
    %4155 = vxpose.xlu0.b32.cont [13/16] 0.0, 128
    %4156 = vxpose.xlu0.b32.cont [14/16] 0.0, 128
    %4157 = vxpose.xlu0.b32.cont [15/16] 0.0, 128
    %4158 = vxpose.xlu0.b32.end [16/16] 0.0, 128
    %v4159 = vpop.trf.xlu0
    %v4160 = vpop.trf.xlu0
    %v4161 = vpop.trf.xlu0
    %v4162 = vpop.trf.xlu0
    %v4163 = vpop.trf.xlu0
    %v4164 = vpop.trf.xlu0
    %v4165 = vpop.trf.xlu0
    %v4166 = vpop.trf.xlu0
    %v4167 = vpop.trf.xlu0
    %v4168 = vpop.trf.xlu0
    %v4169 = vpop.trf.xlu0
    %v4170 = vpop.trf.xlu0
    %v4171 = vpop.trf.xlu0
    %v4172 = vpop.trf.xlu0
    %v4173 = vpop.trf.xlu0
    %v4174 = vpop.trf.xlu0
    %4175 = vxpose.xlu0.b32.start [1/16] %v3994, 128
    %4176 = vxpose.xlu0.b32.cont [2/16] 0.0, 128
    %4177 = vxpose.xlu0.b32.cont [3/16] 0.0, 128
    %4178 = vxpose.xlu0.b32.cont [4/16] 0.0, 128
    %4179 = vxpose.xlu0.b32.cont [5/16] 0.0, 128
    %4180 = vxpose.xlu0.b32.cont [6/16] 0.0, 128
    %4181 = vxpose.xlu0.b32.cont [7/16] 0.0, 128
    %4182 = vxpose.xlu0.b32.cont [8/16] 0.0, 128
    %4183 = vxpose.xlu0.b32.cont [9/16] 0.0, 128
    %4184 = vxpose.xlu0.b32.cont [10/16] 0.0, 128
    %4185 = vxpose.xlu0.b32.cont [11/16] 0.0, 128
    %4186 = vxpose.xlu0.b32.cont [12/16] 0.0, 128
    %4187 = vxpose.xlu0.b32.cont [13/16] 0.0, 128
    %4188 = vxpose.xlu0.b32.cont [14/16] 0.0, 128
    %4189 = vxpose.xlu0.b32.cont [15/16] 0.0, 128
    %4190 = vxpose.xlu0.b32.end [16/16] 0.0, 128
    %v4191 = vpop.trf.xlu0
    %v4192 = vpop.trf.xlu0
    %v4193 = vpop.trf.xlu0
    %v4194 = vpop.trf.xlu0
    %v4195 = vpop.trf.xlu0
    %v4196 = vpop.trf.xlu0
    %v4197 = vpop.trf.xlu0
    %v4198 = vpop.trf.xlu0
    %v4199 = vpop.trf.xlu0
    %v4200 = vpop.trf.xlu0
    %v4201 = vpop.trf.xlu0
    %v4202 = vpop.trf.xlu0
    %v4203 = vpop.trf.xlu0
    %v4204 = vpop.trf.xlu0
    %v4205 = vpop.trf.xlu0
    %v4206 = vpop.trf.xlu0
    %4207 = vxpose.xlu0.b32.start [1/16] %v4067, 128
    %4208 = vxpose.xlu0.b32.cont [2/16] 0.0, 128
    %4209 = vxpose.xlu0.b32.cont [3/16] 0.0, 128
    %4210 = vxpose.xlu0.b32.cont [4/16] 0.0, 128
    %4211 = vxpose.xlu0.b32.cont [5/16] 0.0, 128
    %4212 = vxpose.xlu0.b32.cont [6/16] 0.0, 128
    %4213 = vxpose.xlu0.b32.cont [7/16] 0.0, 128
    %4214 = vxpose.xlu0.b32.cont [8/16] 0.0, 128
    %4215 = vxpose.xlu0.b32.cont [9/16] 0.0, 128
    %4216 = vxpose.xlu0.b32.cont [10/16] 0.0, 128
    %4217 = vxpose.xlu0.b32.cont [11/16] 0.0, 128
    %4218 = vxpose.xlu0.b32.cont [12/16] 0.0, 128
    %4219 = vxpose.xlu0.b32.cont [13/16] 0.0, 128
    %4220 = vxpose.xlu0.b32.cont [14/16] 0.0, 128
    %4221 = vxpose.xlu0.b32.cont [15/16] 0.0, 128
    %4222 = vxpose.xlu0.b32.end [16/16] 0.0, 128
    %v4223 = vpop.trf.xlu0
    %v4224 = vpop.trf.xlu0
    %v4225 = vpop.trf.xlu0
    %v4226 = vpop.trf.xlu0
    %v4227 = vpop.trf.xlu0
    %v4228 = vpop.trf.xlu0
    %v4229 = vpop.trf.xlu0
    %v4230 = vpop.trf.xlu0
    %v4231 = vpop.trf.xlu0
    %v4232 = vpop.trf.xlu0
    %v4233 = vpop.trf.xlu0
    %v4234 = vpop.trf.xlu0
    %v4235 = vpop.trf.xlu0
    %v4236 = vpop.trf.xlu0
    %v4237 = vpop.trf.xlu0
    %v4238 = vpop.trf.xlu0
    %4239 = vxpose.xlu0.b32.start [1/16] %v4140, 128
    %4240 = vxpose.xlu0.b32.cont [2/16] 0.0, 128
    %4241 = vxpose.xlu0.b32.cont [3/16] 0.0, 128
    %4242 = vxpose.xlu0.b32.cont [4/16] 0.0, 128
    %4243 = vxpose.xlu0.b32.cont [5/16] 0.0, 128
    %4244 = vxpose.xlu0.b32.cont [6/16] 0.0, 128
    %4245 = vxpose.xlu0.b32.cont [7/16] 0.0, 128
    %4246 = vxpose.xlu0.b32.cont [8/16] 0.0, 128
    %4247 = vxpose.xlu0.b32.cont [9/16] 0.0, 128
    %4248 = vxpose.xlu0.b32.cont [10/16] 0.0, 128
    %4249 = vxpose.xlu0.b32.cont [11/16] 0.0, 128
    %4250 = vxpose.xlu0.b32.cont [12/16] 0.0, 128
    %4251 = vxpose.xlu0.b32.cont [13/16] 0.0, 128
    %4252 = vxpose.xlu0.b32.cont [14/16] 0.0, 128
    %4253 = vxpose.xlu0.b32.cont [15/16] 0.0, 128
    %4254 = vxpose.xlu0.b32.end [16/16] 0.0, 128
    %v4255 = vpop.trf.xlu0
    %v4256 = vpop.trf.xlu0
    %v4257 = vpop.trf.xlu0
    %v4258 = vpop.trf.xlu0
    %v4259 = vpop.trf.xlu0
    %v4260 = vpop.trf.xlu0
    %v4261 = vpop.trf.xlu0
    %v4262 = vpop.trf.xlu0
    %v4263 = vpop.trf.xlu0
    %v4264 = vpop.trf.xlu0
    %v4265 = vpop.trf.xlu0
    %v4266 = vpop.trf.xlu0
    %v4267 = vpop.trf.xlu0
    %v4268 = vpop.trf.xlu0
    %v4269 = vpop.trf.xlu0
    %v4270 = vpop.trf.xlu0
    %4271 = vxpose.xlu0.b32.start [1/16] %v4159, 128
    %4272 = vxpose.xlu0.b32.cont [2/16] %v4191, 128
    %4273 = vxpose.xlu0.b32.cont [3/16] %v4223, 128
    %4274 = vxpose.xlu0.b32.cont [4/16] %v4255, 128
    %4275 = vxpose.xlu0.b32.cont [5/16] 0.0, 128
    %4276 = vxpose.xlu0.b32.cont [6/16] 0.0, 128
    %4277 = vxpose.xlu0.b32.cont [7/16] 0.0, 128
    %4278 = vxpose.xlu0.b32.cont [8/16] 0.0, 128
    %4279 = vxpose.xlu0.b32.cont [9/16] 0.0, 128
    %4280 = vxpose.xlu0.b32.cont [10/16] 0.0, 128
    %4281 = vxpose.xlu0.b32.cont [11/16] 0.0, 128
    %4282 = vxpose.xlu0.b32.cont [12/16] 0.0, 128
    %4283 = vxpose.xlu0.b32.cont [13/16] 0.0, 128
    %4284 = vxpose.xlu0.b32.cont [14/16] 0.0, 128
    %4285 = vxpose.xlu0.b32.cont [15/16] 0.0, 128
    %4286 = vxpose.xlu0.b32.end [16/16] 0.0, 128
    %v4287 = vpop.trf.xlu0
    %v4288 = vpop.trf.xlu0
    %v4289 = vpop.trf.xlu0
    %v4290 = vpop.trf.xlu0
    %v4291 = vpop.trf.xlu0
    %v4292 = vpop.trf.xlu0
    %v4293 = vpop.trf.xlu0
    %v4294 = vpop.trf.xlu0
    %v4295 = vpop.trf.xlu0
    %v4296 = vpop.trf.xlu0
    %v4297 = vpop.trf.xlu0
    %v4298 = vpop.trf.xlu0
    %v4299 = vpop.trf.xlu0
    %v4300 = vpop.trf.xlu0
    %v4301 = vpop.trf.xlu0
    %v4302 = vpop.trf.xlu0
    %4303 = vxpose.xlu0.b32.start [1/16] %v3083, 128
    %4304 = vxpose.xlu0.b32.cont [2/16] 0.0, 128
    %4305 = vxpose.xlu0.b32.cont [3/16] 0.0, 128
    %4306 = vxpose.xlu0.b32.cont [4/16] 0.0, 128
    %4307 = vxpose.xlu0.b32.cont [5/16] 0.0, 128
    %4308 = vxpose.xlu0.b32.cont [6/16] 0.0, 128
    %4309 = vxpose.xlu0.b32.cont [7/16] 0.0, 128
    %4310 = vxpose.xlu0.b32.cont [8/16] 0.0, 128
    %4311 = vxpose.xlu0.b32.cont [9/16] 0.0, 128
    %4312 = vxpose.xlu0.b32.cont [10/16] 0.0, 128
    %4313 = vxpose.xlu0.b32.cont [11/16] 0.0, 128
    %4314 = vxpose.xlu0.b32.cont [12/16] 0.0, 128
    %4315 = vxpose.xlu0.b32.cont [13/16] 0.0, 128
    %4316 = vxpose.xlu0.b32.cont [14/16] 0.0, 128
    %4317 = vxpose.xlu0.b32.cont [15/16] 0.0, 128
    %4318 = vxpose.xlu0.b32.end [16/16] 0.0, 128
    %v4319 = vpop.trf.xlu0
    %v4320 = vpop.trf.xlu0
    %v4321 = vpop.trf.xlu0
    %v4322 = vpop.trf.xlu0
    %v4323 = vpop.trf.xlu0
    %v4324 = vpop.trf.xlu0
    %v4325 = vpop.trf.xlu0
    %v4326 = vpop.trf.xlu0
    %v4327 = vpop.trf.xlu0
    %v4328 = vpop.trf.xlu0
    %v4329 = vpop.trf.xlu0
    %v4330 = vpop.trf.xlu0
    %v4331 = vpop.trf.xlu0
    %v4332 = vpop.trf.xlu0
    %v4333 = vpop.trf.xlu0
    %v4334 = vpop.trf.xlu0
    %4335 = vxpose.xlu0.b32.start [1/16] %v4319, 128
    %4336 = vxpose.xlu0.b32.cont [2/16] 0.0, 128
    %4337 = vxpose.xlu0.b32.cont [3/16] 0.0, 128
    %4338 = vxpose.xlu0.b32.cont [4/16] 0.0, 128
    %4339 = vxpose.xlu0.b32.cont [5/16] 0.0, 128
    %4340 = vxpose.xlu0.b32.cont [6/16] 0.0, 128
    %4341 = vxpose.xlu0.b32.cont [7/16] 0.0, 128
    %4342 = vxpose.xlu0.b32.cont [8/16] 0.0, 128
    %4343 = vxpose.xlu0.b32.cont [9/16] 0.0, 128
    %4344 = vxpose.xlu0.b32.cont [10/16] 0.0, 128
    %4345 = vxpose.xlu0.b32.cont [11/16] 0.0, 128
    %4346 = vxpose.xlu0.b32.cont [12/16] 0.0, 128
    %4347 = vxpose.xlu0.b32.cont [13/16] 0.0, 128
    %4348 = vxpose.xlu0.b32.cont [14/16] 0.0, 128
    %4349 = vxpose.xlu0.b32.cont [15/16] 0.0, 128
    %4350 = vxpose.xlu0.b32.end [16/16] 0.0, 128
    %v4351 = vpop.trf.xlu0
    %v4352 = vpop.trf.xlu0
    %v4353 = vpop.trf.xlu0
    %v4354 = vpop.trf.xlu0
    %v4355 = vpop.trf.xlu0
    %v4356 = vpop.trf.xlu0
    %v4357 = vpop.trf.xlu0
    %v4358 = vpop.trf.xlu0
    %v4359 = vpop.trf.xlu0
    %v4360 = vpop.trf.xlu0
    %v4361 = vpop.trf.xlu0
    %v4362 = vpop.trf.xlu0
    %v4363 = vpop.trf.xlu0
    %v4364 = vpop.trf.xlu0
    %v4365 = vpop.trf.xlu0
    %v4366 = vpop.trf.xlu0
    %4367 = vxpose.xlu0.b32.start [1/16] %v4320, 128
    %4368 = vxpose.xlu0.b32.cont [2/16] 0.0, 128
    %4369 = vxpose.xlu0.b32.cont [3/16] 0.0, 128
    %4370 = vxpose.xlu0.b32.cont [4/16] 0.0, 128
    %4371 = vxpose.xlu0.b32.cont [5/16] 0.0, 128
    %4372 = vxpose.xlu0.b32.cont [6/16] 0.0, 128
    %4373 = vxpose.xlu0.b32.cont [7/16] 0.0, 128
    %4374 = vxpose.xlu0.b32.cont [8/16] 0.0, 128
    %4375 = vxpose.xlu0.b32.cont [9/16] 0.0, 128
    %4376 = vxpose.xlu0.b32.cont [10/16] 0.0, 128
    %4377 = vxpose.xlu0.b32.cont [11/16] 0.0, 128
    %4378 = vxpose.xlu0.b32.cont [12/16] 0.0, 128
    %4379 = vxpose.xlu0.b32.cont [13/16] 0.0, 128
    %4380 = vxpose.xlu0.b32.cont [14/16] 0.0, 128
    %4381 = vxpose.xlu0.b32.cont [15/16] 0.0, 128
    %4382 = vxpose.xlu0.b32.end [16/16] 0.0, 128
    %v4383 = vpop.trf.xlu0
    %v4384 = vpop.trf.xlu0
    %v4385 = vpop.trf.xlu0
    %v4386 = vpop.trf.xlu0
    %v4387 = vpop.trf.xlu0
    %v4388 = vpop.trf.xlu0
    %v4389 = vpop.trf.xlu0
    %v4390 = vpop.trf.xlu0
    %v4391 = vpop.trf.xlu0
    %v4392 = vpop.trf.xlu0
    %v4393 = vpop.trf.xlu0
    %v4394 = vpop.trf.xlu0
    %v4395 = vpop.trf.xlu0
    %v4396 = vpop.trf.xlu0
    %v4397 = vpop.trf.xlu0
    %v4398 = vpop.trf.xlu0
    %4399 = vxpose.xlu0.b32.start [1/16] %v4321, 128
    %4400 = vxpose.xlu0.b32.cont [2/16] 0.0, 128
    %4401 = vxpose.xlu0.b32.cont [3/16] 0.0, 128
    %4402 = vxpose.xlu0.b32.cont [4/16] 0.0, 128
    %4403 = vxpose.xlu0.b32.cont [5/16] 0.0, 128
    %4404 = vxpose.xlu0.b32.cont [6/16] 0.0, 128
    %4405 = vxpose.xlu0.b32.cont [7/16] 0.0, 128
    %4406 = vxpose.xlu0.b32.cont [8/16] 0.0, 128
    %4407 = vxpose.xlu0.b32.cont [9/16] 0.0, 128
    %4408 = vxpose.xlu0.b32.cont [10/16] 0.0, 128
    %4409 = vxpose.xlu0.b32.cont [11/16] 0.0, 128
    %4410 = vxpose.xlu0.b32.cont [12/16] 0.0, 128
    %4411 = vxpose.xlu0.b32.cont [13/16] 0.0, 128
    %4412 = vxpose.xlu0.b32.cont [14/16] 0.0, 128
    %4413 = vxpose.xlu0.b32.cont [15/16] 0.0, 128
    %4414 = vxpose.xlu0.b32.end [16/16] 0.0, 128
    %v4415 = vpop.trf.xlu0
    %v4416 = vpop.trf.xlu0
    %v4417 = vpop.trf.xlu0
    %v4418 = vpop.trf.xlu0
    %v4419 = vpop.trf.xlu0
    %v4420 = vpop.trf.xlu0
    %v4421 = vpop.trf.xlu0
    %v4422 = vpop.trf.xlu0
    %v4423 = vpop.trf.xlu0
    %v4424 = vpop.trf.xlu0
    %v4425 = vpop.trf.xlu0
    %v4426 = vpop.trf.xlu0
    %v4427 = vpop.trf.xlu0
    %v4428 = vpop.trf.xlu0
    %v4429 = vpop.trf.xlu0
    %v4430 = vpop.trf.xlu0
    %4431 = vxpose.xlu0.b32.start [1/16] %v4322, 128
    %4432 = vxpose.xlu0.b32.cont [2/16] 0.0, 128
    %4433 = vxpose.xlu0.b32.cont [3/16] 0.0, 128
    %4434 = vxpose.xlu0.b32.cont [4/16] 0.0, 128
    %4435 = vxpose.xlu0.b32.cont [5/16] 0.0, 128
    %4436 = vxpose.xlu0.b32.cont [6/16] 0.0, 128
    %4437 = vxpose.xlu0.b32.cont [7/16] 0.0, 128
    %4438 = vxpose.xlu0.b32.cont [8/16] 0.0, 128
    %4439 = vxpose.xlu0.b32.cont [9/16] 0.0, 128
    %4440 = vxpose.xlu0.b32.cont [10/16] 0.0, 128
    %4441 = vxpose.xlu0.b32.cont [11/16] 0.0, 128
    %4442 = vxpose.xlu0.b32.cont [12/16] 0.0, 128
    %4443 = vxpose.xlu0.b32.cont [13/16] 0.0, 128
    %4444 = vxpose.xlu0.b32.cont [14/16] 0.0, 128
    %4445 = vxpose.xlu0.b32.cont [15/16] 0.0, 128
    %4446 = vxpose.xlu0.b32.end [16/16] 0.0, 128
    %v4447 = vpop.trf.xlu0
    %v4448 = vpop.trf.xlu0
    %v4449 = vpop.trf.xlu0
    %v4450 = vpop.trf.xlu0
    %v4451 = vpop.trf.xlu0
    %v4452 = vpop.trf.xlu0
    %v4453 = vpop.trf.xlu0
    %v4454 = vpop.trf.xlu0
    %v4455 = vpop.trf.xlu0
    %v4456 = vpop.trf.xlu0
    %v4457 = vpop.trf.xlu0
    %v4458 = vpop.trf.xlu0
    %v4459 = vpop.trf.xlu0
    %v4460 = vpop.trf.xlu0
    %v4461 = vpop.trf.xlu0
    %v4462 = vpop.trf.xlu0
    %4463 = vxpose.xlu0.b32.start [1/16] %v4323, 128
    %4464 = vxpose.xlu0.b32.cont [2/16] 0.0, 128
    %4465 = vxpose.xlu0.b32.cont [3/16] 0.0, 128
    %4466 = vxpose.xlu0.b32.cont [4/16] 0.0, 128
    %4467 = vxpose.xlu0.b32.cont [5/16] 0.0, 128
    %4468 = vxpose.xlu0.b32.cont [6/16] 0.0, 128
    %4469 = vxpose.xlu0.b32.cont [7/16] 0.0, 128
    %4470 = vxpose.xlu0.b32.cont [8/16] 0.0, 128
    %4471 = vxpose.xlu0.b32.cont [9/16] 0.0, 128
    %4472 = vxpose.xlu0.b32.cont [10/16] 0.0, 128
    %4473 = vxpose.xlu0.b32.cont [11/16] 0.0, 128
    %4474 = vxpose.xlu0.b32.cont [12/16] 0.0, 128
    %4475 = vxpose.xlu0.b32.cont [13/16] 0.0, 128
    %4476 = vxpose.xlu0.b32.cont [14/16] 0.0, 128
    %4477 = vxpose.xlu0.b32.cont [15/16] 0.0, 128
    %4478 = vxpose.xlu0.b32.end [16/16] 0.0, 128
    %v4479 = vpop.trf.xlu0
    %v4480 = vpop.trf.xlu0
    %v4481 = vpop.trf.xlu0
    %v4482 = vpop.trf.xlu0
    %v4483 = vpop.trf.xlu0
    %v4484 = vpop.trf.xlu0
    %v4485 = vpop.trf.xlu0
    %v4486 = vpop.trf.xlu0
    %v4487 = vpop.trf.xlu0
    %v4488 = vpop.trf.xlu0
    %v4489 = vpop.trf.xlu0
    %v4490 = vpop.trf.xlu0
    %v4491 = vpop.trf.xlu0
    %v4492 = vpop.trf.xlu0
    %v4493 = vpop.trf.xlu0
    %v4494 = vpop.trf.xlu0
    %4495 = vxpose.xlu0.b32.start [1/16] %v4324, 128
    %4496 = vxpose.xlu0.b32.cont [2/16] 0.0, 128
    %4497 = vxpose.xlu0.b32.cont [3/16] 0.0, 128
    %4498 = vxpose.xlu0.b32.cont [4/16] 0.0, 128
    %4499 = vxpose.xlu0.b32.cont [5/16] 0.0, 128
    %4500 = vxpose.xlu0.b32.cont [6/16] 0.0, 128
    %4501 = vxpose.xlu0.b32.cont [7/16] 0.0, 128
    %4502 = vxpose.xlu0.b32.cont [8/16] 0.0, 128
    %4503 = vxpose.xlu0.b32.cont [9/16] 0.0, 128
    %4504 = vxpose.xlu0.b32.cont [10/16] 0.0, 128
    %4505 = vxpose.xlu0.b32.cont [11/16] 0.0, 128
    %4506 = vxpose.xlu0.b32.cont [12/16] 0.0, 128
    %4507 = vxpose.xlu0.b32.cont [13/16] 0.0, 128
    %4508 = vxpose.xlu0.b32.cont [14/16] 0.0, 128
    %4509 = vxpose.xlu0.b32.cont [15/16] 0.0, 128
    %4510 = vxpose.xlu0.b32.end [16/16] 0.0, 128
    %v4511 = vpop.trf.xlu0
    %v4512 = vpop.trf.xlu0
    %v4513 = vpop.trf.xlu0
    %v4514 = vpop.trf.xlu0
    %v4515 = vpop.trf.xlu0
    %v4516 = vpop.trf.xlu0
    %v4517 = vpop.trf.xlu0
    %v4518 = vpop.trf.xlu0
    %v4519 = vpop.trf.xlu0
    %v4520 = vpop.trf.xlu0
    %v4521 = vpop.trf.xlu0
    %v4522 = vpop.trf.xlu0
    %v4523 = vpop.trf.xlu0
    %v4524 = vpop.trf.xlu0
    %v4525 = vpop.trf.xlu0
    %v4526 = vpop.trf.xlu0
    %4527 = vxpose.xlu0.b32.start [1/16] %v4325, 128
    %4528 = vxpose.xlu0.b32.cont [2/16] 0.0, 128
    %4529 = vxpose.xlu0.b32.cont [3/16] 0.0, 128
    %4530 = vxpose.xlu0.b32.cont [4/16] 0.0, 128
    %4531 = vxpose.xlu0.b32.cont [5/16] 0.0, 128
    %4532 = vxpose.xlu0.b32.cont [6/16] 0.0, 128
    %4533 = vxpose.xlu0.b32.cont [7/16] 0.0, 128
    %4534 = vxpose.xlu0.b32.cont [8/16] 0.0, 128
    %4535 = vxpose.xlu0.b32.cont [9/16] 0.0, 128
    %4536 = vxpose.xlu0.b32.cont [10/16] 0.0, 128
    %4537 = vxpose.xlu0.b32.cont [11/16] 0.0, 128
    %4538 = vxpose.xlu0.b32.cont [12/16] 0.0, 128
    %4539 = vxpose.xlu0.b32.cont [13/16] 0.0, 128
    %4540 = vxpose.xlu0.b32.cont [14/16] 0.0, 128
    %4541 = vxpose.xlu0.b32.cont [15/16] 0.0, 128
    %4542 = vxpose.xlu0.b32.end [16/16] 0.0, 128
    %v4543 = vpop.trf.xlu0
    %v4544 = vpop.trf.xlu0
    %v4545 = vpop.trf.xlu0
    %v4546 = vpop.trf.xlu0
    %v4547 = vpop.trf.xlu0
    %v4548 = vpop.trf.xlu0
    %v4549 = vpop.trf.xlu0
    %v4550 = vpop.trf.xlu0
    %v4551 = vpop.trf.xlu0
    %v4552 = vpop.trf.xlu0
    %v4553 = vpop.trf.xlu0
    %v4554 = vpop.trf.xlu0
    %v4555 = vpop.trf.xlu0
    %v4556 = vpop.trf.xlu0
    %v4557 = vpop.trf.xlu0
    %v4558 = vpop.trf.xlu0
    %4559 = vxpose.xlu0.b32.start [1/16] %v4326, 128
    %4560 = vxpose.xlu0.b32.cont [2/16] 0.0, 128
    %4561 = vxpose.xlu0.b32.cont [3/16] 0.0, 128
    %4562 = vxpose.xlu0.b32.cont [4/16] 0.0, 128
    %4563 = vxpose.xlu0.b32.cont [5/16] 0.0, 128
    %4564 = vxpose.xlu0.b32.cont [6/16] 0.0, 128
    %4565 = vxpose.xlu0.b32.cont [7/16] 0.0, 128
    %4566 = vxpose.xlu0.b32.cont [8/16] 0.0, 128
    %4567 = vxpose.xlu0.b32.cont [9/16] 0.0, 128
    %4568 = vxpose.xlu0.b32.cont [10/16] 0.0, 128
    %4569 = vxpose.xlu0.b32.cont [11/16] 0.0, 128
    %4570 = vxpose.xlu0.b32.cont [12/16] 0.0, 128
    %4571 = vxpose.xlu0.b32.cont [13/16] 0.0, 128
    %4572 = vxpose.xlu0.b32.cont [14/16] 0.0, 128
    %4573 = vxpose.xlu0.b32.cont [15/16] 0.0, 128
    %4574 = vxpose.xlu0.b32.end [16/16] 0.0, 128
    %v4575 = vpop.trf.xlu0
    %v4576 = vpop.trf.xlu0
    %v4577 = vpop.trf.xlu0
    %v4578 = vpop.trf.xlu0
    %v4579 = vpop.trf.xlu0
    %v4580 = vpop.trf.xlu0
    %v4581 = vpop.trf.xlu0
    %v4582 = vpop.trf.xlu0
    %v4583 = vpop.trf.xlu0
    %v4584 = vpop.trf.xlu0
    %v4585 = vpop.trf.xlu0
    %v4586 = vpop.trf.xlu0
    %v4587 = vpop.trf.xlu0
    %v4588 = vpop.trf.xlu0
    %v4589 = vpop.trf.xlu0
    %v4590 = vpop.trf.xlu0
    %4591 = vxpose.xlu0.b32.start [1/16] %v4327, 128
    %4592 = vxpose.xlu0.b32.cont [2/16] 0.0, 128
    %4593 = vxpose.xlu0.b32.cont [3/16] 0.0, 128
    %4594 = vxpose.xlu0.b32.cont [4/16] 0.0, 128
    %4595 = vxpose.xlu0.b32.cont [5/16] 0.0, 128
    %4596 = vxpose.xlu0.b32.cont [6/16] 0.0, 128
    %4597 = vxpose.xlu0.b32.cont [7/16] 0.0, 128
    %4598 = vxpose.xlu0.b32.cont [8/16] 0.0, 128
    %4599 = vxpose.xlu0.b32.cont [9/16] 0.0, 128
    %4600 = vxpose.xlu0.b32.cont [10/16] 0.0, 128
    %4601 = vxpose.xlu0.b32.cont [11/16] 0.0, 128
    %4602 = vxpose.xlu0.b32.cont [12/16] 0.0, 128
    %4603 = vxpose.xlu0.b32.cont [13/16] 0.0, 128
    %4604 = vxpose.xlu0.b32.cont [14/16] 0.0, 128
    %4605 = vxpose.xlu0.b32.cont [15/16] 0.0, 128
    %4606 = vxpose.xlu0.b32.end [16/16] 0.0, 128
    %v4607 = vpop.trf.xlu0
    %v4608 = vpop.trf.xlu0
    %v4609 = vpop.trf.xlu0
    %v4610 = vpop.trf.xlu0
    %v4611 = vpop.trf.xlu0
    %v4612 = vpop.trf.xlu0
    %v4613 = vpop.trf.xlu0
    %v4614 = vpop.trf.xlu0
    %v4615 = vpop.trf.xlu0
    %v4616 = vpop.trf.xlu0
    %v4617 = vpop.trf.xlu0
    %v4618 = vpop.trf.xlu0
    %v4619 = vpop.trf.xlu0
    %v4620 = vpop.trf.xlu0
    %v4621 = vpop.trf.xlu0
    %v4622 = vpop.trf.xlu0
    %4623 = vxpose.xlu0.b32.start [1/16] %v4328, 128
    %4624 = vxpose.xlu0.b32.cont [2/16] 0.0, 128
    %4625 = vxpose.xlu0.b32.cont [3/16] 0.0, 128
    %4626 = vxpose.xlu0.b32.cont [4/16] 0.0, 128
    %4627 = vxpose.xlu0.b32.cont [5/16] 0.0, 128
    %4628 = vxpose.xlu0.b32.cont [6/16] 0.0, 128
    %4629 = vxpose.xlu0.b32.cont [7/16] 0.0, 128
    %4630 = vxpose.xlu0.b32.cont [8/16] 0.0, 128
    %4631 = vxpose.xlu0.b32.cont [9/16] 0.0, 128
    %4632 = vxpose.xlu0.b32.cont [10/16] 0.0, 128
    %4633 = vxpose.xlu0.b32.cont [11/16] 0.0, 128
    %4634 = vxpose.xlu0.b32.cont [12/16] 0.0, 128
    %4635 = vxpose.xlu0.b32.cont [13/16] 0.0, 128
    %4636 = vxpose.xlu0.b32.cont [14/16] 0.0, 128
    %4637 = vxpose.xlu0.b32.cont [15/16] 0.0, 128
    %4638 = vxpose.xlu0.b32.end [16/16] 0.0, 128
    %v4639 = vpop.trf.xlu0
    %v4640 = vpop.trf.xlu0
    %v4641 = vpop.trf.xlu0
    %v4642 = vpop.trf.xlu0
    %v4643 = vpop.trf.xlu0
    %v4644 = vpop.trf.xlu0
    %v4645 = vpop.trf.xlu0
    %v4646 = vpop.trf.xlu0
    %v4647 = vpop.trf.xlu0
    %v4648 = vpop.trf.xlu0
    %v4649 = vpop.trf.xlu0
    %v4650 = vpop.trf.xlu0
    %v4651 = vpop.trf.xlu0
    %v4652 = vpop.trf.xlu0
    %v4653 = vpop.trf.xlu0
    %v4654 = vpop.trf.xlu0
    %4655 = vxpose.xlu0.b32.start [1/16] %v4329, 128
    %4656 = vxpose.xlu0.b32.cont [2/16] 0.0, 128
    %4657 = vxpose.xlu0.b32.cont [3/16] 0.0, 128
    %4658 = vxpose.xlu0.b32.cont [4/16] 0.0, 128
    %4659 = vxpose.xlu0.b32.cont [5/16] 0.0, 128
    %4660 = vxpose.xlu0.b32.cont [6/16] 0.0, 128
    %4661 = vxpose.xlu0.b32.cont [7/16] 0.0, 128
    %4662 = vxpose.xlu0.b32.cont [8/16] 0.0, 128
    %4663 = vxpose.xlu0.b32.cont [9/16] 0.0, 128
    %4664 = vxpose.xlu0.b32.cont [10/16] 0.0, 128
    %4665 = vxpose.xlu0.b32.cont [11/16] 0.0, 128
    %4666 = vxpose.xlu0.b32.cont [12/16] 0.0, 128
    %4667 = vxpose.xlu0.b32.cont [13/16] 0.0, 128
    %4668 = vxpose.xlu0.b32.cont [14/16] 0.0, 128
    %4669 = vxpose.xlu0.b32.cont [15/16] 0.0, 128
    %4670 = vxpose.xlu0.b32.end [16/16] 0.0, 128
    %v4671 = vpop.trf.xlu0
    %v4672 = vpop.trf.xlu0
    %v4673 = vpop.trf.xlu0
    %v4674 = vpop.trf.xlu0
    %v4675 = vpop.trf.xlu0
    %v4676 = vpop.trf.xlu0
    %v4677 = vpop.trf.xlu0
    %v4678 = vpop.trf.xlu0
    %v4679 = vpop.trf.xlu0
    %v4680 = vpop.trf.xlu0
    %v4681 = vpop.trf.xlu0
    %v4682 = vpop.trf.xlu0
    %v4683 = vpop.trf.xlu0
    %v4684 = vpop.trf.xlu0
    %v4685 = vpop.trf.xlu0
    %v4686 = vpop.trf.xlu0
    %4687 = vxpose.xlu0.b32.start [1/16] %v4330, 128
    %4688 = vxpose.xlu0.b32.cont [2/16] 0.0, 128
    %4689 = vxpose.xlu0.b32.cont [3/16] 0.0, 128
    %4690 = vxpose.xlu0.b32.cont [4/16] 0.0, 128
    %4691 = vxpose.xlu0.b32.cont [5/16] 0.0, 128
    %4692 = vxpose.xlu0.b32.cont [6/16] 0.0, 128
    %4693 = vxpose.xlu0.b32.cont [7/16] 0.0, 128
    %4694 = vxpose.xlu0.b32.cont [8/16] 0.0, 128
    %4695 = vxpose.xlu0.b32.cont [9/16] 0.0, 128
    %4696 = vxpose.xlu0.b32.cont [10/16] 0.0, 128
    %4697 = vxpose.xlu0.b32.cont [11/16] 0.0, 128
    %4698 = vxpose.xlu0.b32.cont [12/16] 0.0, 128
    %4699 = vxpose.xlu0.b32.cont [13/16] 0.0, 128
    %4700 = vxpose.xlu0.b32.cont [14/16] 0.0, 128
    %4701 = vxpose.xlu0.b32.cont [15/16] 0.0, 128
    %4702 = vxpose.xlu0.b32.end [16/16] 0.0, 128
    %v4703 = vpop.trf.xlu0
    %v4704 = vpop.trf.xlu0
    %v4705 = vpop.trf.xlu0
    %v4706 = vpop.trf.xlu0
    %v4707 = vpop.trf.xlu0
    %v4708 = vpop.trf.xlu0
    %v4709 = vpop.trf.xlu0
    %v4710 = vpop.trf.xlu0
    %v4711 = vpop.trf.xlu0
    %v4712 = vpop.trf.xlu0
    %v4713 = vpop.trf.xlu0
    %v4714 = vpop.trf.xlu0
    %v4715 = vpop.trf.xlu0
    %v4716 = vpop.trf.xlu0
    %v4717 = vpop.trf.xlu0
    %v4718 = vpop.trf.xlu0
    %v4719 = vld [vmem:[%s1815] sm:$0xff]
    %v4721 = vsel %vm598, %v4351, 0
    %v4724 = vsel %vm598, %v4479, 0
    %4726 = vmatprep.subr.mxu0 0.0
    %4727 = vmatpush1.xpose.msra.mxu0 0.0
    %4728 = vmatprep.subr.mxu0 0.0
    %4729 = vmatpush1.xpose.msra.mxu0 0.0
    %4730 = vmatprep.subr.mxu0 0.0
    %4731 = vmatpush1.xpose.msra.mxu0 0.0
    %4732 = vmatprep.subr.mxu0 0.0
    %4733 = vmatpush1.xpose.msra.mxu0 0.0
    %4734 = vmatprep.subr.mxu0 0.0
    %4735 = vmatpush1.xpose.msra.mxu0 0.0
    %4736 = vmatprep.subr.mxu0 0.0
    %4737 = vmatpush1.xpose.msra.mxu0 0.0
    %4738 = vmatprep.subr.mxu0 0.0
    %4739 = vmatpush1.xpose.msra.mxu0 0.0
    %4740 = vmatprep.subr.mxu0 0.0
    %4741 = vmatpush1.xpose.msra.mxu0 0.0
    %4742 = vmatprep.subr.mxu0 0.0
    %4743 = vmatpush1.xpose.msra.mxu0 0.0
    %4744 = vmatprep.subr.mxu0 0.0
    %4745 = vmatpush1.xpose.msra.mxu0 0.0
    %4746 = vmatprep.subr.mxu0 0.0
    %4747 = vmatpush1.xpose.msra.mxu0 0.0
    %4748 = vmatprep.subr.mxu0 0.0
    %4749 = vmatpush1.xpose.msra.mxu0 0.0
    %4750 = vmatprep.subr.mxu0 0.0
    %4751 = vmatpush1.xpose.msra.mxu0 0.0
    %4752 = vmatprep.subr.mxu0 0.0
    %4753 = vmatpush1.xpose.msra.mxu0 0.0
    %4754 = vmatprep.subr.mxu0 0.0
    %4755 = vmatpush1.xpose.msra.mxu0 0.0
    %4756 = vmatprep.subr.mxu0 0.0
    %4757 = vmatpush1.xpose.msra.mxu0 %v4724
    %4758 = vmatprep.subr.mxu0 0.0
    %4759 = vmatpush2.xpose.msra.mxu0 0.0
    %4760 = vmatprep.subr.mxu0 0.0
    %4761 = vmatpush2.xpose.msra.mxu0 0.0
    %4762 = vmatprep.subr.mxu0 0.0
    %4763 = vmatpush2.xpose.msra.mxu0 0.0
    %4764 = vmatprep.subr.mxu0 0.0
    %4765 = vmatpush2.xpose.msra.mxu0 0.0
    %4766 = vmatprep.subr.mxu0 0.0
    %4767 = vmatpush2.xpose.msra.mxu0 0.0
    %4768 = vmatprep.subr.mxu0 0.0
    %4769 = vmatpush2.xpose.msra.mxu0 0.0
    %4770 = vmatprep.subr.mxu0 0.0
    %4771 = vmatpush2.xpose.msra.mxu0 0.0
    %4772 = vmatprep.subr.mxu0 0.0
    %4773 = vmatpush2.xpose.msra.mxu0 0.0
    %4774 = vmatprep.subr.mxu0 0.0
    %4775 = vmatpush2.xpose.msra.mxu0 0.0
    %4776 = vmatprep.subr.mxu0 0.0
    %4777 = vmatpush2.xpose.msra.mxu0 0.0
    %4778 = vmatprep.subr.mxu0 0.0
    %4779 = vmatpush2.xpose.msra.mxu0 0.0
    %4780 = vmatprep.subr.mxu0 0.0
    %4781 = vmatpush2.xpose.msra.mxu0 0.0
    %4782 = vmatprep.subr.mxu0 0.0
    %4783 = vmatpush2.xpose.msra.mxu0 0.0
    %4784 = vmatprep.subr.mxu0 0.0
    %4785 = vmatpush2.xpose.msra.mxu0 0.0
    %4786 = vmatprep.subr.mxu0 0.0
    %4787 = vmatpush2.xpose.msra.mxu0 0.0
    %4788 = vmatprep.subr.mxu0 0.0
    %4789 = vmatpush2.xpose.msra.mxu0 0.0
    %4790 = vmatprep.mubr.f32.mxu0 0.0
    %4791 = vmatmul.mubr.f32.gmra.mxu0 %v4721
    %v4792 = vpop.f32.mrf.mxu0
    %v4793 = vadd.f32 %v4719, %v4792
    %v4794 = vpop.f32.mrf.mxu0
    %4795 = vdwg.mxu0
    %v4797 = vsel %vm598, %v4383, 0
    %v4800 = vsel %vm598, %v4511, 0
    %4802 = vmatprep.subr.mxu0 0.0
    %4803 = vmatpush1.xpose.msra.mxu0 0.0
    %4804 = vmatprep.subr.mxu0 0.0
    %4805 = vmatpush1.xpose.msra.mxu0 0.0
    %4806 = vmatprep.subr.mxu0 0.0
    %4807 = vmatpush1.xpose.msra.mxu0 0.0
    %4808 = vmatprep.subr.mxu0 0.0
    %4809 = vmatpush1.xpose.msra.mxu0 0.0
    %4810 = vmatprep.subr.mxu0 0.0
    %4811 = vmatpush1.xpose.msra.mxu0 0.0
    %4812 = vmatprep.subr.mxu0 0.0
    %4813 = vmatpush1.xpose.msra.mxu0 0.0
    %4814 = vmatprep.subr.mxu0 0.0
    %4815 = vmatpush1.xpose.msra.mxu0 0.0
    %4816 = vmatprep.subr.mxu0 0.0
    %4817 = vmatpush1.xpose.msra.mxu0 0.0
    %4818 = vmatprep.subr.mxu0 0.0
    %4819 = vmatpush1.xpose.msra.mxu0 0.0
    %4820 = vmatprep.subr.mxu0 0.0
    %4821 = vmatpush1.xpose.msra.mxu0 0.0
    %4822 = vmatprep.subr.mxu0 0.0
    %4823 = vmatpush1.xpose.msra.mxu0 0.0
    %4824 = vmatprep.subr.mxu0 0.0
    %4825 = vmatpush1.xpose.msra.mxu0 0.0
    %4826 = vmatprep.subr.mxu0 0.0
    %4827 = vmatpush1.xpose.msra.mxu0 0.0
    %4828 = vmatprep.subr.mxu0 0.0
    %4829 = vmatpush1.xpose.msra.mxu0 0.0
    %4830 = vmatprep.subr.mxu0 0.0
    %4831 = vmatpush1.xpose.msra.mxu0 0.0
    %4832 = vmatprep.subr.mxu0 0.0
    %4833 = vmatpush1.xpose.msra.mxu0 %v4800
    %4834 = vmatprep.subr.mxu0 0.0
    %4835 = vmatpush2.xpose.msra.mxu0 0.0
    %4836 = vmatprep.subr.mxu0 0.0
    %4837 = vmatpush2.xpose.msra.mxu0 0.0
    %4838 = vmatprep.subr.mxu0 0.0
    %4839 = vmatpush2.xpose.msra.mxu0 0.0
    %4840 = vmatprep.subr.mxu0 0.0
    %4841 = vmatpush2.xpose.msra.mxu0 0.0
    %4842 = vmatprep.subr.mxu0 0.0
    %4843 = vmatpush2.xpose.msra.mxu0 0.0
    %4844 = vmatprep.subr.mxu0 0.0
    %4845 = vmatpush2.xpose.msra.mxu0 0.0
    %4846 = vmatprep.subr.mxu0 0.0
    %4847 = vmatpush2.xpose.msra.mxu0 0.0
    %4848 = vmatprep.subr.mxu0 0.0
    %4849 = vmatpush2.xpose.msra.mxu0 0.0
    %4850 = vmatprep.subr.mxu0 0.0
    %4851 = vmatpush2.xpose.msra.mxu0 0.0
    %4852 = vmatprep.subr.mxu0 0.0
    %4853 = vmatpush2.xpose.msra.mxu0 0.0
    %4854 = vmatprep.subr.mxu0 0.0
    %4855 = vmatpush2.xpose.msra.mxu0 0.0
    %4856 = vmatprep.subr.mxu0 0.0
    %4857 = vmatpush2.xpose.msra.mxu0 0.0
    %4858 = vmatprep.subr.mxu0 0.0
    %4859 = vmatpush2.xpose.msra.mxu0 0.0
    %4860 = vmatprep.subr.mxu0 0.0
    %4861 = vmatpush2.xpose.msra.mxu0 0.0
    %4862 = vmatprep.subr.mxu0 0.0
    %4863 = vmatpush2.xpose.msra.mxu0 0.0
    %4864 = vmatprep.subr.mxu0 0.0
    %4865 = vmatpush2.xpose.msra.mxu0 0.0
    %4866 = vmatprep.mubr.f32.mxu0 0.0
    %4867 = vmatmul.mubr.f32.gmra.mxu0 %v4797
    %v4868 = vpop.f32.mrf.mxu0
    %v4869 = vadd.f32 %v4719, %v4868
    %v4870 = vpop.f32.mrf.mxu0
    %4871 = vdwg.mxu0
    %v4873 = vsel %vm598, %v4415, 0
    %v4876 = vsel %vm598, %v4543, 0
    %4878 = vmatprep.subr.mxu0 0.0
    %4879 = vmatpush1.xpose.msra.mxu0 0.0
    %4880 = vmatprep.subr.mxu0 0.0
    %4881 = vmatpush1.xpose.msra.mxu0 0.0
    %4882 = vmatprep.subr.mxu0 0.0
    %4883 = vmatpush1.xpose.msra.mxu0 0.0
    %4884 = vmatprep.subr.mxu0 0.0
    %4885 = vmatpush1.xpose.msra.mxu0 0.0
    %4886 = vmatprep.subr.mxu0 0.0
    %4887 = vmatpush1.xpose.msra.mxu0 0.0
    %4888 = vmatprep.subr.mxu0 0.0
    %4889 = vmatpush1.xpose.msra.mxu0 0.0
    %4890 = vmatprep.subr.mxu0 0.0
    %4891 = vmatpush1.xpose.msra.mxu0 0.0
    %4892 = vmatprep.subr.mxu0 0.0
    %4893 = vmatpush1.xpose.msra.mxu0 0.0
    %4894 = vmatprep.subr.mxu0 0.0
    %4895 = vmatpush1.xpose.msra.mxu0 0.0
    %4896 = vmatprep.subr.mxu0 0.0
    %4897 = vmatpush1.xpose.msra.mxu0 0.0
    %4898 = vmatprep.subr.mxu0 0.0
    %4899 = vmatpush1.xpose.msra.mxu0 0.0
    %4900 = vmatprep.subr.mxu0 0.0
    %4901 = vmatpush1.xpose.msra.mxu0 0.0
    %4902 = vmatprep.subr.mxu0 0.0
    %4903 = vmatpush1.xpose.msra.mxu0 0.0
    %4904 = vmatprep.subr.mxu0 0.0
    %4905 = vmatpush1.xpose.msra.mxu0 0.0
    %4906 = vmatprep.subr.mxu0 0.0
    %4907 = vmatpush1.xpose.msra.mxu0 0.0
    %4908 = vmatprep.subr.mxu0 0.0
    %4909 = vmatpush1.xpose.msra.mxu0 %v4876
    %4910 = vmatprep.subr.mxu0 0.0
    %4911 = vmatpush2.xpose.msra.mxu0 0.0
    %4912 = vmatprep.subr.mxu0 0.0
    %4913 = vmatpush2.xpose.msra.mxu0 0.0
    %4914 = vmatprep.subr.mxu0 0.0
    %4915 = vmatpush2.xpose.msra.mxu0 0.0
    %4916 = vmatprep.subr.mxu0 0.0
    %4917 = vmatpush2.xpose.msra.mxu0 0.0
    %4918 = vmatprep.subr.mxu0 0.0
    %4919 = vmatpush2.xpose.msra.mxu0 0.0
    %4920 = vmatprep.subr.mxu0 0.0
    %4921 = vmatpush2.xpose.msra.mxu0 0.0
    %4922 = vmatprep.subr.mxu0 0.0
    %4923 = vmatpush2.xpose.msra.mxu0 0.0
    %4924 = vmatprep.subr.mxu0 0.0
    %4925 = vmatpush2.xpose.msra.mxu0 0.0
    %4926 = vmatprep.subr.mxu0 0.0
    %4927 = vmatpush2.xpose.msra.mxu0 0.0
    %4928 = vmatprep.subr.mxu0 0.0
    %4929 = vmatpush2.xpose.msra.mxu0 0.0
    %4930 = vmatprep.subr.mxu0 0.0
    %4931 = vmatpush2.xpose.msra.mxu0 0.0
    %4932 = vmatprep.subr.mxu0 0.0
    %4933 = vmatpush2.xpose.msra.mxu0 0.0
    %4934 = vmatprep.subr.mxu0 0.0
    %4935 = vmatpush2.xpose.msra.mxu0 0.0
    %4936 = vmatprep.subr.mxu0 0.0
    %4937 = vmatpush2.xpose.msra.mxu0 0.0
    %4938 = vmatprep.subr.mxu0 0.0
    %4939 = vmatpush2.xpose.msra.mxu0 0.0
    %4940 = vmatprep.subr.mxu0 0.0
    %4941 = vmatpush2.xpose.msra.mxu0 0.0
    %4942 = vmatprep.mubr.f32.mxu0 0.0
    %4943 = vmatmul.mubr.f32.gmra.mxu0 %v4873
    %v4944 = vpop.f32.mrf.mxu0
    %v4945 = vadd.f32 %v4719, %v4944
    %v4946 = vpop.f32.mrf.mxu0
    %4947 = vdwg.mxu0
    %v4949 = vsel %vm598, %v4447, 0
    %v4952 = vsel %vm598, %v4575, 0
    %4954 = vmatprep.subr.mxu0 0.0
    %4955 = vmatpush1.xpose.msra.mxu0 0.0
    %4956 = vmatprep.subr.mxu0 0.0
    %4957 = vmatpush1.xpose.msra.mxu0 0.0
    %4958 = vmatprep.subr.mxu0 0.0
    %4959 = vmatpush1.xpose.msra.mxu0 0.0
    %4960 = vmatprep.subr.mxu0 0.0
    %4961 = vmatpush1.xpose.msra.mxu0 0.0
    %4962 = vmatprep.subr.mxu0 0.0
    %4963 = vmatpush1.xpose.msra.mxu0 0.0
    %4964 = vmatprep.subr.mxu0 0.0
    %4965 = vmatpush1.xpose.msra.mxu0 0.0
    %4966 = vmatprep.subr.mxu0 0.0
    %4967 = vmatpush1.xpose.msra.mxu0 0.0
    %4968 = vmatprep.subr.mxu0 0.0
    %4969 = vmatpush1.xpose.msra.mxu0 0.0
    %4970 = vmatprep.subr.mxu0 0.0
    %4971 = vmatpush1.xpose.msra.mxu0 0.0
    %4972 = vmatprep.subr.mxu0 0.0
    %4973 = vmatpush1.xpose.msra.mxu0 0.0
    %4974 = vmatprep.subr.mxu0 0.0
    %4975 = vmatpush1.xpose.msra.mxu0 0.0
    %4976 = vmatprep.subr.mxu0 0.0
    %4977 = vmatpush1.xpose.msra.mxu0 0.0
    %4978 = vmatprep.subr.mxu0 0.0
    %4979 = vmatpush1.xpose.msra.mxu0 0.0
    %4980 = vmatprep.subr.mxu0 0.0
    %4981 = vmatpush1.xpose.msra.mxu0 0.0
    %4982 = vmatprep.subr.mxu0 0.0
    %4983 = vmatpush1.xpose.msra.mxu0 0.0
    %4984 = vmatprep.subr.mxu0 0.0
    %4985 = vmatpush1.xpose.msra.mxu0 %v4952
    %4986 = vmatprep.subr.mxu0 0.0
    %4987 = vmatpush2.xpose.msra.mxu0 0.0
    %4988 = vmatprep.subr.mxu0 0.0
    %4989 = vmatpush2.xpose.msra.mxu0 0.0
    %4990 = vmatprep.subr.mxu0 0.0
    %4991 = vmatpush2.xpose.msra.mxu0 0.0
    %4992 = vmatprep.subr.mxu0 0.0
    %4993 = vmatpush2.xpose.msra.mxu0 0.0
    %4994 = vmatprep.subr.mxu0 0.0
    %4995 = vmatpush2.xpose.msra.mxu0 0.0
    %4996 = vmatprep.subr.mxu0 0.0
    %4997 = vmatpush2.xpose.msra.mxu0 0.0
    %4998 = vmatprep.subr.mxu0 0.0
    %4999 = vmatpush2.xpose.msra.mxu0 0.0
    %5000 = vmatprep.subr.mxu0 0.0
    %5001 = vmatpush2.xpose.msra.mxu0 0.0
    %5002 = vmatprep.subr.mxu0 0.0
    %5003 = vmatpush2.xpose.msra.mxu0 0.0
    %5004 = vmatprep.subr.mxu0 0.0
    %5005 = vmatpush2.xpose.msra.mxu0 0.0
    %5006 = vmatprep.subr.mxu0 0.0
    %5007 = vmatpush2.xpose.msra.mxu0 0.0
    %5008 = vmatprep.subr.mxu0 0.0
    %5009 = vmatpush2.xpose.msra.mxu0 0.0
    %5010 = vmatprep.subr.mxu0 0.0
    %5011 = vmatpush2.xpose.msra.mxu0 0.0
    %5012 = vmatprep.subr.mxu0 0.0
    %5013 = vmatpush2.xpose.msra.mxu0 0.0
    %5014 = vmatprep.subr.mxu0 0.0
    %5015 = vmatpush2.xpose.msra.mxu0 0.0
    %5016 = vmatprep.subr.mxu0 0.0
    %5017 = vmatpush2.xpose.msra.mxu0 0.0
    %5018 = vmatprep.mubr.f32.mxu0 0.0
    %5019 = vmatmul.mubr.f32.gmra.mxu0 %v4949
    %v5020 = vpop.f32.mrf.mxu0
    %v5021 = vadd.f32 %v4719, %v5020
    %v5022 = vpop.f32.mrf.mxu0
    %5023 = vdwg.mxu0
    %v5024 = vsel %vm598, %v4793, -inf
    %5025 = vmax.xlane.f32.xlu0 %v5024
    %v5026 = vpop.xlane.xlu0 %5025
    %v5027 = vsel %vm598, %v4869, -inf
    %5028 = vmax.xlane.f32.xlu0 %v5027
    %v5029 = vpop.xlane.xlu0 %5028
    %v5030 = vsel %vm598, %v4945, -inf
    %5031 = vmax.xlane.f32.xlu0 %v5030
    %v5032 = vpop.xlane.xlu0 %5031
    %v5033 = vsel %vm598, %v5021, -inf
    %5034 = vmax.xlane.f32.xlu0 %v5033
    %v5035 = vpop.xlane.xlu0 %5034
    %v5036 = vsub.f32 %v4793, %v5026
    %v5037 = vsub.f32 %v4869, %v5029
    %v5038 = vsub.f32 %v4945, %v5032
    %v5039 = vsub.f32 %v5021, %v5035
    %v5040 = vmul.f32 %v5036, 1.442695
    %v5041 = vpow.pop %v5040
    %v5042 = vmul.f32 %v5037, 1.442695
    %v5043 = vpow.pop %v5042
    %v5044 = vmul.f32 %v5038, 1.442695
    %v5045 = vpow.pop %v5044
    %v5046 = vmul.f32 %v5039, 1.442695
    %v5047 = vpow.pop %v5046
    %v5048 = vsel %vm598, %v5041, 0.0
    %5049 = vadd.xlane.f32.xlu0 %v5048
    %v5050 = vpop.xlane.xlu0 %5049
    %v5051 = vsel %vm598, %v5043, 0.0
    %5052 = vadd.xlane.f32.xlu0 %v5051
    %v5053 = vpop.xlane.xlu0 %5052
    %v5054 = vsel %vm598, %v5045, 0.0
    %5055 = vadd.xlane.f32.xlu0 %v5054
    %v5056 = vpop.xlane.xlu0 %5055
    %v5057 = vsel %vm598, %v5047, 0.0
    %5058 = vadd.xlane.f32.xlu0 %v5057
    %v5059 = vpop.xlane.xlu0 %5058
    %v5060 = vrcp.pop %v5050
    %v5061 = vrcp.pop %v5053
    %v5062 = vrcp.pop %v5056
    %v5063 = vrcp.pop %v5059
    %v5064 = vmul.f32 %v5041, %v5060
    %v5065 = vmul.f32 %v5043, %v5061
    %v5066 = vmul.f32 %v5045, %v5062
    %v5067 = vmul.f32 %v5047, %v5063
    %v5069 = vsel %vm598, %v5064, 0
    %5071 = vmatprep.subr.mxu0 0.0
    %5072 = vmatpush1.msra.mxu0 0.0
    %5073 = vmatprep.subr.mxu0 0.0
    %5074 = vmatpush1.msra.mxu0 0.0
    %5075 = vmatprep.subr.mxu0 0.0
    %5076 = vmatpush1.msra.mxu0 0.0
    %5077 = vmatprep.subr.mxu0 0.0
    %5078 = vmatpush1.msra.mxu0 0.0
    %5079 = vmatprep.subr.mxu0 0.0
    %5080 = vmatpush1.msra.mxu0 0.0
    %5081 = vmatprep.subr.mxu0 0.0
    %5082 = vmatpush1.msra.mxu0 0.0
    %5083 = vmatprep.subr.mxu0 0.0
    %5084 = vmatpush1.msra.mxu0 0.0
    %5085 = vmatprep.subr.mxu0 0.0
    %5086 = vmatpush1.msra.mxu0 0.0
    %5087 = vmatprep.subr.mxu0 0.0
    %5088 = vmatpush1.msra.mxu0 0.0
    %5089 = vmatprep.subr.mxu0 0.0
    %5090 = vmatpush1.msra.mxu0 0.0
    %5091 = vmatprep.subr.mxu0 0.0
    %5092 = vmatpush1.msra.mxu0 0.0
    %5093 = vmatprep.subr.mxu0 0.0
    %5094 = vmatpush1.msra.mxu0 0.0
    %5095 = vmatprep.subr.mxu0 0.0
    %5096 = vmatpush1.msra.mxu0 0.0
    %5097 = vmatprep.subr.mxu0 0.0
    %5098 = vmatpush1.msra.mxu0 0.0
    %5099 = vmatprep.subr.mxu0 0.0
    %5100 = vmatpush1.msra.mxu0 0.0
    %5101 = vmatprep.subr.mxu0 0.0
    %5102 = vmatpush1.msra.mxu0 %v4607
    %5103 = vmatprep.subr.mxu0 0.0
    %5104 = vmatpush2.msra.mxu0 0.0
    %5105 = vmatprep.subr.mxu0 0.0
    %5106 = vmatpush2.msra.mxu0 0.0
    %5107 = vmatprep.subr.mxu0 0.0
    %5108 = vmatpush2.msra.mxu0 0.0
    %5109 = vmatprep.subr.mxu0 0.0
    %5110 = vmatpush2.msra.mxu0 0.0
    %5111 = vmatprep.subr.mxu0 0.0
    %5112 = vmatpush2.msra.mxu0 0.0
    %5113 = vmatprep.subr.mxu0 0.0
    %5114 = vmatpush2.msra.mxu0 0.0
    %5115 = vmatprep.subr.mxu0 0.0
    %5116 = vmatpush2.msra.mxu0 0.0
    %5117 = vmatprep.subr.mxu0 0.0
    %5118 = vmatpush2.msra.mxu0 0.0
    %5119 = vmatprep.subr.mxu0 0.0
    %5120 = vmatpush2.msra.mxu0 0.0
    %5121 = vmatprep.subr.mxu0 0.0
    %5122 = vmatpush2.msra.mxu0 0.0
    %5123 = vmatprep.subr.mxu0 0.0
    %5124 = vmatpush2.msra.mxu0 0.0
    %5125 = vmatprep.subr.mxu0 0.0
    %5126 = vmatpush2.msra.mxu0 0.0
    %5127 = vmatprep.subr.mxu0 0.0
    %5128 = vmatpush2.msra.mxu0 0.0
    %5129 = vmatprep.subr.mxu0 0.0
    %5130 = vmatpush2.msra.mxu0 0.0
    %5131 = vmatprep.subr.mxu0 0.0
    %5132 = vmatpush2.msra.mxu0 0.0
    %5133 = vmatprep.subr.mxu0 0.0
    %5134 = vmatpush2.msra.mxu0 0.0
    %5135 = vmatprep.mubr.f32.mxu0 0.0
    %5136 = vmatmul.mubr.f32.gmra.mxu0 %v5069
    %v5137 = vpop.f32.mrf.mxu0
    %v5138 = vadd.f32 0.0, %v5137
    %v5139 = vpop.f32.mrf.mxu0
    %5140 = vdwg.mxu0
    %v5142 = vsel %vm598, %v5065, 0
    %5144 = vmatprep.subr.mxu0 0.0
    %5145 = vmatpush1.msra.mxu0 0.0
    %5146 = vmatprep.subr.mxu0 0.0
    %5147 = vmatpush1.msra.mxu0 0.0
    %5148 = vmatprep.subr.mxu0 0.0
    %5149 = vmatpush1.msra.mxu0 0.0
    %5150 = vmatprep.subr.mxu0 0.0
    %5151 = vmatpush1.msra.mxu0 0.0
    %5152 = vmatprep.subr.mxu0 0.0
    %5153 = vmatpush1.msra.mxu0 0.0
    %5154 = vmatprep.subr.mxu0 0.0
    %5155 = vmatpush1.msra.mxu0 0.0
    %5156 = vmatprep.subr.mxu0 0.0
    %5157 = vmatpush1.msra.mxu0 0.0
    %5158 = vmatprep.subr.mxu0 0.0
    %5159 = vmatpush1.msra.mxu0 0.0
    %5160 = vmatprep.subr.mxu0 0.0
    %5161 = vmatpush1.msra.mxu0 0.0
    %5162 = vmatprep.subr.mxu0 0.0
    %5163 = vmatpush1.msra.mxu0 0.0
    %5164 = vmatprep.subr.mxu0 0.0
    %5165 = vmatpush1.msra.mxu0 0.0
    %5166 = vmatprep.subr.mxu0 0.0
    %5167 = vmatpush1.msra.mxu0 0.0
    %5168 = vmatprep.subr.mxu0 0.0
    %5169 = vmatpush1.msra.mxu0 0.0
    %5170 = vmatprep.subr.mxu0 0.0
    %5171 = vmatpush1.msra.mxu0 0.0
    %5172 = vmatprep.subr.mxu0 0.0
    %5173 = vmatpush1.msra.mxu0 0.0
    %5174 = vmatprep.subr.mxu0 0.0
    %5175 = vmatpush1.msra.mxu0 %v4639
    %5176 = vmatprep.subr.mxu0 0.0
    %5177 = vmatpush2.msra.mxu0 0.0
    %5178 = vmatprep.subr.mxu0 0.0
    %5179 = vmatpush2.msra.mxu0 0.0
    %5180 = vmatprep.subr.mxu0 0.0
    %5181 = vmatpush2.msra.mxu0 0.0
    %5182 = vmatprep.subr.mxu0 0.0
    %5183 = vmatpush2.msra.mxu0 0.0
    %5184 = vmatprep.subr.mxu0 0.0
    %5185 = vmatpush2.msra.mxu0 0.0
    %5186 = vmatprep.subr.mxu0 0.0
    %5187 = vmatpush2.msra.mxu0 0.0
    %5188 = vmatprep.subr.mxu0 0.0
    %5189 = vmatpush2.msra.mxu0 0.0
    %5190 = vmatprep.subr.mxu0 0.0
    %5191 = vmatpush2.msra.mxu0 0.0
    %5192 = vmatprep.subr.mxu0 0.0
    %5193 = vmatpush2.msra.mxu0 0.0
    %5194 = vmatprep.subr.mxu0 0.0
    %5195 = vmatpush2.msra.mxu0 0.0
    %5196 = vmatprep.subr.mxu0 0.0
    %5197 = vmatpush2.msra.mxu0 0.0
    %5198 = vmatprep.subr.mxu0 0.0
    %5199 = vmatpush2.msra.mxu0 0.0
    %5200 = vmatprep.subr.mxu0 0.0
    %5201 = vmatpush2.msra.mxu0 0.0
    %5202 = vmatprep.subr.mxu0 0.0
    %5203 = vmatpush2.msra.mxu0 0.0
    %5204 = vmatprep.subr.mxu0 0.0
    %5205 = vmatpush2.msra.mxu0 0.0
    %5206 = vmatprep.subr.mxu0 0.0
    %5207 = vmatpush2.msra.mxu0 0.0
    %5208 = vmatprep.mubr.f32.mxu0 0.0
    %5209 = vmatmul.mubr.f32.gmra.mxu0 %v5142
    %v5210 = vpop.f32.mrf.mxu0
    %v5211 = vadd.f32 0.0, %v5210
    %v5212 = vpop.f32.mrf.mxu0
    %5213 = vdwg.mxu0
    %v5215 = vsel %vm598, %v5066, 0
    %5217 = vmatprep.subr.mxu0 0.0
    %5218 = vmatpush1.msra.mxu0 0.0
    %5219 = vmatprep.subr.mxu0 0.0
    %5220 = vmatpush1.msra.mxu0 0.0
    %5221 = vmatprep.subr.mxu0 0.0
    %5222 = vmatpush1.msra.mxu0 0.0
    %5223 = vmatprep.subr.mxu0 0.0
    %5224 = vmatpush1.msra.mxu0 0.0
    %5225 = vmatprep.subr.mxu0 0.0
    %5226 = vmatpush1.msra.mxu0 0.0
    %5227 = vmatprep.subr.mxu0 0.0
    %5228 = vmatpush1.msra.mxu0 0.0
    %5229 = vmatprep.subr.mxu0 0.0
    %5230 = vmatpush1.msra.mxu0 0.0
    %5231 = vmatprep.subr.mxu0 0.0
    %5232 = vmatpush1.msra.mxu0 0.0
    %5233 = vmatprep.subr.mxu0 0.0
    %5234 = vmatpush1.msra.mxu0 0.0
    %5235 = vmatprep.subr.mxu0 0.0
    %5236 = vmatpush1.msra.mxu0 0.0
    %5237 = vmatprep.subr.mxu0 0.0
    %5238 = vmatpush1.msra.mxu0 0.0
    %5239 = vmatprep.subr.mxu0 0.0
    %5240 = vmatpush1.msra.mxu0 0.0
    %5241 = vmatprep.subr.mxu0 0.0
    %5242 = vmatpush1.msra.mxu0 0.0
    %5243 = vmatprep.subr.mxu0 0.0
    %5244 = vmatpush1.msra.mxu0 0.0
    %5245 = vmatprep.subr.mxu0 0.0
    %5246 = vmatpush1.msra.mxu0 0.0
    %5247 = vmatprep.subr.mxu0 0.0
    %5248 = vmatpush1.msra.mxu0 %v4671
    %5249 = vmatprep.subr.mxu0 0.0
    %5250 = vmatpush2.msra.mxu0 0.0
    %5251 = vmatprep.subr.mxu0 0.0
    %5252 = vmatpush2.msra.mxu0 0.0
    %5253 = vmatprep.subr.mxu0 0.0
    %5254 = vmatpush2.msra.mxu0 0.0
    %5255 = vmatprep.subr.mxu0 0.0
    %5256 = vmatpush2.msra.mxu0 0.0
    %5257 = vmatprep.subr.mxu0 0.0
    %5258 = vmatpush2.msra.mxu0 0.0
    %5259 = vmatprep.subr.mxu0 0.0
    %5260 = vmatpush2.msra.mxu0 0.0
    %5261 = vmatprep.subr.mxu0 0.0
    %5262 = vmatpush2.msra.mxu0 0.0
    %5263 = vmatprep.subr.mxu0 0.0
    %5264 = vmatpush2.msra.mxu0 0.0
    %5265 = vmatprep.subr.mxu0 0.0
    %5266 = vmatpush2.msra.mxu0 0.0
    %5267 = vmatprep.subr.mxu0 0.0
    %5268 = vmatpush2.msra.mxu0 0.0
    %5269 = vmatprep.subr.mxu0 0.0
    %5270 = vmatpush2.msra.mxu0 0.0
    %5271 = vmatprep.subr.mxu0 0.0
    %5272 = vmatpush2.msra.mxu0 0.0
    %5273 = vmatprep.subr.mxu0 0.0
    %5274 = vmatpush2.msra.mxu0 0.0
    %5275 = vmatprep.subr.mxu0 0.0
    %5276 = vmatpush2.msra.mxu0 0.0
    %5277 = vmatprep.subr.mxu0 0.0
    %5278 = vmatpush2.msra.mxu0 0.0
    %5279 = vmatprep.subr.mxu0 0.0
    %5280 = vmatpush2.msra.mxu0 0.0
    %5281 = vmatprep.mubr.f32.mxu0 0.0
    %5282 = vmatmul.mubr.f32.gmra.mxu0 %v5215
    %v5283 = vpop.f32.mrf.mxu0
    %v5284 = vadd.f32 0.0, %v5283
    %v5285 = vpop.f32.mrf.mxu0
    %5286 = vdwg.mxu0
    %v5288 = vsel %vm598, %v5067, 0
    %5290 = vmatprep.subr.mxu0 0.0
    %5291 = vmatpush1.msra.mxu0 0.0
    %5292 = vmatprep.subr.mxu0 0.0
    %5293 = vmatpush1.msra.mxu0 0.0
    %5294 = vmatprep.subr.mxu0 0.0
    %5295 = vmatpush1.msra.mxu0 0.0
    %5296 = vmatprep.subr.mxu0 0.0
    %5297 = vmatpush1.msra.mxu0 0.0
    %5298 = vmatprep.subr.mxu0 0.0
    %5299 = vmatpush1.msra.mxu0 0.0
    %5300 = vmatprep.subr.mxu0 0.0
    %5301 = vmatpush1.msra.mxu0 0.0
    %5302 = vmatprep.subr.mxu0 0.0
    %5303 = vmatpush1.msra.mxu0 0.0
    %5304 = vmatprep.subr.mxu0 0.0
    %5305 = vmatpush1.msra.mxu0 0.0
    %5306 = vmatprep.subr.mxu0 0.0
    %5307 = vmatpush1.msra.mxu0 0.0
    %5308 = vmatprep.subr.mxu0 0.0
    %5309 = vmatpush1.msra.mxu0 0.0
    %5310 = vmatprep.subr.mxu0 0.0
    %5311 = vmatpush1.msra.mxu0 0.0
    %5312 = vmatprep.subr.mxu0 0.0
    %5313 = vmatpush1.msra.mxu0 0.0
    %5314 = vmatprep.subr.mxu0 0.0
    %5315 = vmatpush1.msra.mxu0 0.0
    %5316 = vmatprep.subr.mxu0 0.0
    %5317 = vmatpush1.msra.mxu0 0.0
    %5318 = vmatprep.subr.mxu0 0.0
    %5319 = vmatpush1.msra.mxu0 0.0
    %5320 = vmatprep.subr.mxu0 0.0
    %5321 = vmatpush1.msra.mxu0 %v4703
    %5322 = vmatprep.subr.mxu0 0.0
    %5323 = vmatpush2.msra.mxu0 0.0
    %5324 = vmatprep.subr.mxu0 0.0
    %5325 = vmatpush2.msra.mxu0 0.0
    %5326 = vmatprep.subr.mxu0 0.0
    %5327 = vmatpush2.msra.mxu0 0.0
    %5328 = vmatprep.subr.mxu0 0.0
    %5329 = vmatpush2.msra.mxu0 0.0
    %5330 = vmatprep.subr.mxu0 0.0
    %5331 = vmatpush2.msra.mxu0 0.0
    %5332 = vmatprep.subr.mxu0 0.0
    %5333 = vmatpush2.msra.mxu0 0.0
    %5334 = vmatprep.subr.mxu0 0.0
    %5335 = vmatpush2.msra.mxu0 0.0
    %5336 = vmatprep.subr.mxu0 0.0
    %5337 = vmatpush2.msra.mxu0 0.0
    %5338 = vmatprep.subr.mxu0 0.0
    %5339 = vmatpush2.msra.mxu0 0.0
    %5340 = vmatprep.subr.mxu0 0.0
    %5341 = vmatpush2.msra.mxu0 0.0
    %5342 = vmatprep.subr.mxu0 0.0
    %5343 = vmatpush2.msra.mxu0 0.0
    %5344 = vmatprep.subr.mxu0 0.0
    %5345 = vmatpush2.msra.mxu0 0.0
    %5346 = vmatprep.subr.mxu0 0.0
    %5347 = vmatpush2.msra.mxu0 0.0
    %5348 = vmatprep.subr.mxu0 0.0
    %5349 = vmatpush2.msra.mxu0 0.0
    %5350 = vmatprep.subr.mxu0 0.0
    %5351 = vmatpush2.msra.mxu0 0.0
    %5352 = vmatprep.subr.mxu0 0.0
    %5353 = vmatpush2.msra.mxu0 0.0
    %5354 = vmatprep.mubr.f32.mxu0 0.0
    %5355 = vmatmul.mubr.f32.gmra.mxu0 %v5288
    %v5356 = vpop.f32.mrf.mxu0
    %v5357 = vadd.f32 0.0, %v5356
    %v5358 = vpop.f32.mrf.mxu0
    %5359 = vdwg.mxu0
    %5360 = vxpose.xlu0.b32.start [1/16] %v5138, 128
    %5361 = vxpose.xlu0.b32.cont [2/16] 0.0, 128
    %5362 = vxpose.xlu0.b32.cont [3/16] 0.0, 128
    %5363 = vxpose.xlu0.b32.cont [4/16] 0.0, 128
    %5364 = vxpose.xlu0.b32.cont [5/16] 0.0, 128
    %5365 = vxpose.xlu0.b32.cont [6/16] 0.0, 128
    %5366 = vxpose.xlu0.b32.cont [7/16] 0.0, 128
    %5367 = vxpose.xlu0.b32.cont [8/16] 0.0, 128
    %5368 = vxpose.xlu0.b32.cont [9/16] 0.0, 128
    %5369 = vxpose.xlu0.b32.cont [10/16] 0.0, 128
    %5370 = vxpose.xlu0.b32.cont [11/16] 0.0, 128
    %5371 = vxpose.xlu0.b32.cont [12/16] 0.0, 128
    %5372 = vxpose.xlu0.b32.cont [13/16] 0.0, 128
    %5373 = vxpose.xlu0.b32.cont [14/16] 0.0, 128
    %5374 = vxpose.xlu0.b32.cont [15/16] 0.0, 128
    %5375 = vxpose.xlu0.b32.end [16/16] 0.0, 128
    %v5376 = vpop.trf.xlu0
    %v5377 = vpop.trf.xlu0
    %v5378 = vpop.trf.xlu0
    %v5379 = vpop.trf.xlu0
    %v5380 = vpop.trf.xlu0
    %v5381 = vpop.trf.xlu0
    %v5382 = vpop.trf.xlu0
    %v5383 = vpop.trf.xlu0
    %v5384 = vpop.trf.xlu0
    %v5385 = vpop.trf.xlu0
    %v5386 = vpop.trf.xlu0
    %v5387 = vpop.trf.xlu0
    %v5388 = vpop.trf.xlu0
    %v5389 = vpop.trf.xlu0
    %v5390 = vpop.trf.xlu0
    %v5391 = vpop.trf.xlu0
    %5392 = vxpose.xlu0.b32.start [1/16] %v5211, 128
    %5393 = vxpose.xlu0.b32.cont [2/16] 0.0, 128
    %5394 = vxpose.xlu0.b32.cont [3/16] 0.0, 128
    %5395 = vxpose.xlu0.b32.cont [4/16] 0.0, 128
    %5396 = vxpose.xlu0.b32.cont [5/16] 0.0, 128
    %5397 = vxpose.xlu0.b32.cont [6/16] 0.0, 128
    %5398 = vxpose.xlu0.b32.cont [7/16] 0.0, 128
    %5399 = vxpose.xlu0.b32.cont [8/16] 0.0, 128
    %5400 = vxpose.xlu0.b32.cont [9/16] 0.0, 128
    %5401 = vxpose.xlu0.b32.cont [10/16] 0.0, 128
    %5402 = vxpose.xlu0.b32.cont [11/16] 0.0, 128
    %5403 = vxpose.xlu0.b32.cont [12/16] 0.0, 128
    %5404 = vxpose.xlu0.b32.cont [13/16] 0.0, 128
    %5405 = vxpose.xlu0.b32.cont [14/16] 0.0, 128
    %5406 = vxpose.xlu0.b32.cont [15/16] 0.0, 128
    %5407 = vxpose.xlu0.b32.end [16/16] 0.0, 128
    %v5408 = vpop.trf.xlu0
    %v5409 = vpop.trf.xlu0
    %v5410 = vpop.trf.xlu0
    %v5411 = vpop.trf.xlu0
    %v5412 = vpop.trf.xlu0
    %v5413 = vpop.trf.xlu0
    %v5414 = vpop.trf.xlu0
    %v5415 = vpop.trf.xlu0
    %v5416 = vpop.trf.xlu0
    %v5417 = vpop.trf.xlu0
    %v5418 = vpop.trf.xlu0
    %v5419 = vpop.trf.xlu0
    %v5420 = vpop.trf.xlu0
    %v5421 = vpop.trf.xlu0
    %v5422 = vpop.trf.xlu0
    %v5423 = vpop.trf.xlu0
    %5424 = vxpose.xlu0.b32.start [1/16] %v5284, 128
    %5425 = vxpose.xlu0.b32.cont [2/16] 0.0, 128
    %5426 = vxpose.xlu0.b32.cont [3/16] 0.0, 128
    %5427 = vxpose.xlu0.b32.cont [4/16] 0.0, 128
    %5428 = vxpose.xlu0.b32.cont [5/16] 0.0, 128
    %5429 = vxpose.xlu0.b32.cont [6/16] 0.0, 128
    %5430 = vxpose.xlu0.b32.cont [7/16] 0.0, 128
    %5431 = vxpose.xlu0.b32.cont [8/16] 0.0, 128
    %5432 = vxpose.xlu0.b32.cont [9/16] 0.0, 128
    %5433 = vxpose.xlu0.b32.cont [10/16] 0.0, 128
    %5434 = vxpose.xlu0.b32.cont [11/16] 0.0, 128
    %5435 = vxpose.xlu0.b32.cont [12/16] 0.0, 128
    %5436 = vxpose.xlu0.b32.cont [13/16] 0.0, 128
    %5437 = vxpose.xlu0.b32.cont [14/16] 0.0, 128
    %5438 = vxpose.xlu0.b32.cont [15/16] 0.0, 128
    %5439 = vxpose.xlu0.b32.end [16/16] 0.0, 128
    %v5440 = vpop.trf.xlu0
    %v5441 = vpop.trf.xlu0
    %v5442 = vpop.trf.xlu0
    %v5443 = vpop.trf.xlu0
    %v5444 = vpop.trf.xlu0
    %v5445 = vpop.trf.xlu0
    %v5446 = vpop.trf.xlu0
    %v5447 = vpop.trf.xlu0
    %v5448 = vpop.trf.xlu0
    %v5449 = vpop.trf.xlu0
    %v5450 = vpop.trf.xlu0
    %v5451 = vpop.trf.xlu0
    %v5452 = vpop.trf.xlu0
    %v5453 = vpop.trf.xlu0
    %v5454 = vpop.trf.xlu0
    %v5455 = vpop.trf.xlu0
    %5456 = vxpose.xlu0.b32.start [1/16] %v5357, 128
    %5457 = vxpose.xlu0.b32.cont [2/16] 0.0, 128
    %5458 = vxpose.xlu0.b32.cont [3/16] 0.0, 128
    %5459 = vxpose.xlu0.b32.cont [4/16] 0.0, 128
    %5460 = vxpose.xlu0.b32.cont [5/16] 0.0, 128
    %5461 = vxpose.xlu0.b32.cont [6/16] 0.0, 128
    %5462 = vxpose.xlu0.b32.cont [7/16] 0.0, 128
    %5463 = vxpose.xlu0.b32.cont [8/16] 0.0, 128
    %5464 = vxpose.xlu0.b32.cont [9/16] 0.0, 128
    %5465 = vxpose.xlu0.b32.cont [10/16] 0.0, 128
    %5466 = vxpose.xlu0.b32.cont [11/16] 0.0, 128
    %5467 = vxpose.xlu0.b32.cont [12/16] 0.0, 128
    %5468 = vxpose.xlu0.b32.cont [13/16] 0.0, 128
    %5469 = vxpose.xlu0.b32.cont [14/16] 0.0, 128
    %5470 = vxpose.xlu0.b32.cont [15/16] 0.0, 128
    %5471 = vxpose.xlu0.b32.end [16/16] 0.0, 128
    %v5472 = vpop.trf.xlu0
    %v5473 = vpop.trf.xlu0
    %v5474 = vpop.trf.xlu0
    %v5475 = vpop.trf.xlu0
    %v5476 = vpop.trf.xlu0
    %v5477 = vpop.trf.xlu0
    %v5478 = vpop.trf.xlu0
    %v5479 = vpop.trf.xlu0
    %v5480 = vpop.trf.xlu0
    %v5481 = vpop.trf.xlu0
    %v5482 = vpop.trf.xlu0
    %v5483 = vpop.trf.xlu0
    %v5484 = vpop.trf.xlu0
    %v5485 = vpop.trf.xlu0
    %v5486 = vpop.trf.xlu0
    %v5487 = vpop.trf.xlu0
    %5488 = vxpose.xlu0.b32.start [1/16] %v5376, 128
    %5489 = vxpose.xlu0.b32.cont [2/16] %v5408, 128
    %5490 = vxpose.xlu0.b32.cont [3/16] %v5440, 128
    %5491 = vxpose.xlu0.b32.cont [4/16] %v5472, 128
    %5492 = vxpose.xlu0.b32.cont [5/16] 0.0, 128
    %5493 = vxpose.xlu0.b32.cont [6/16] 0.0, 128
    %5494 = vxpose.xlu0.b32.cont [7/16] 0.0, 128
    %5495 = vxpose.xlu0.b32.cont [8/16] 0.0, 128
    %5496 = vxpose.xlu0.b32.cont [9/16] 0.0, 128
    %5497 = vxpose.xlu0.b32.cont [10/16] 0.0, 128
    %5498 = vxpose.xlu0.b32.cont [11/16] 0.0, 128
    %5499 = vxpose.xlu0.b32.cont [12/16] 0.0, 128
    %5500 = vxpose.xlu0.b32.cont [13/16] 0.0, 128
    %5501 = vxpose.xlu0.b32.cont [14/16] 0.0, 128
    %5502 = vxpose.xlu0.b32.cont [15/16] 0.0, 128
    %5503 = vxpose.xlu0.b32.end [16/16] 0.0, 128
    %v5504 = vpop.trf.xlu0
    %v5505 = vpop.trf.xlu0
    %v5506 = vpop.trf.xlu0
    %v5507 = vpop.trf.xlu0
    %v5508 = vpop.trf.xlu0
    %v5509 = vpop.trf.xlu0
    %v5510 = vpop.trf.xlu0
    %v5511 = vpop.trf.xlu0
    %v5512 = vpop.trf.xlu0
    %v5513 = vpop.trf.xlu0
    %v5514 = vpop.trf.xlu0
    %v5515 = vpop.trf.xlu0
    %v5516 = vpop.trf.xlu0
    %v5517 = vpop.trf.xlu0
    %v5518 = vpop.trf.xlu0
    %v5519 = vpop.trf.xlu0
    %s5520 = scalar_lea.vmem %s5, 32
    %v5521 = vld [vmem:[%s5520] sm:$0xff]
    %v5522 = vld [vmem:[%s5520 + $0x8] sm:$0xff]
    %v5523 = vld [vmem:[%s5520 + $0x10] sm:$0xff]
    %v5524 = vld [vmem:[%s5520 + $0x18] sm:$0xff]
    %v5525 = vlaneseq
    %v5526 = vshrl.u32 %v5525, 7
    %v5527 = vsub.s32 0, %v5526
    %v5528 = vrot.slane %v2991, %v5527
    %v5530 = vsel %vm48, %v4287, 0
    %v5533 = vsel %vm48, %v5504, 0
    %5535 = vmatprep.subr.mxu0 0.0
    %5536 = vmatpush1.msra.mxu0 0.0
    %5537 = vmatprep.subr.mxu0 0.0
    %5538 = vmatpush1.msra.mxu0 0.0
    %5539 = vmatprep.subr.mxu0 0.0
    %5540 = vmatpush1.msra.mxu0 0.0
    %5541 = vmatprep.subr.mxu0 0.0
    %5542 = vmatpush1.msra.mxu0 0.0
    %5543 = vmatprep.subr.mxu0 0.0
    %5544 = vmatpush1.msra.mxu0 0.0
    %5545 = vmatprep.subr.mxu0 0.0
    %5546 = vmatpush1.msra.mxu0 0.0
    %5547 = vmatprep.subr.mxu0 0.0
    %5548 = vmatpush1.msra.mxu0 0.0
    %5549 = vmatprep.subr.mxu0 0.0
    %5550 = vmatpush1.msra.mxu0 0.0
    %5551 = vmatprep.subr.mxu0 0.0
    %5552 = vmatpush1.msra.mxu0 0.0
    %5553 = vmatprep.subr.mxu0 0.0
    %5554 = vmatpush1.msra.mxu0 0.0
    %5555 = vmatprep.subr.mxu0 0.0
    %5556 = vmatpush1.msra.mxu0 0.0
    %5557 = vmatprep.subr.mxu0 0.0
    %5558 = vmatpush1.msra.mxu0 0.0
    %5559 = vmatprep.subr.mxu0 0.0
    %5560 = vmatpush1.msra.mxu0 %v5524
    %5561 = vmatprep.subr.mxu0 0.0
    %5562 = vmatpush1.msra.mxu0 %v5523
    %5563 = vmatprep.subr.mxu0 0.0
    %5564 = vmatpush1.msra.mxu0 %v5522
    %5565 = vmatprep.subr.mxu0 0.0
    %5566 = vmatpush1.msra.mxu0 %v5521
    %5567 = vmatprep.subr.mxu0 0.0
    %5568 = vmatpush2.msra.mxu0 0.0
    %5569 = vmatprep.subr.mxu0 0.0
    %5570 = vmatpush2.msra.mxu0 0.0
    %5571 = vmatprep.subr.mxu0 0.0
    %5572 = vmatpush2.msra.mxu0 0.0
    %5573 = vmatprep.subr.mxu0 0.0
    %5574 = vmatpush2.msra.mxu0 0.0
    %5575 = vmatprep.subr.mxu0 0.0
    %5576 = vmatpush2.msra.mxu0 0.0
    %5577 = vmatprep.subr.mxu0 0.0
    %5578 = vmatpush2.msra.mxu0 0.0
    %5579 = vmatprep.subr.mxu0 0.0
    %5580 = vmatpush2.msra.mxu0 0.0
    %5581 = vmatprep.subr.mxu0 0.0
    %5582 = vmatpush2.msra.mxu0 0.0
    %5583 = vmatprep.subr.mxu0 0.0
    %5584 = vmatpush2.msra.mxu0 0.0
    %5585 = vmatprep.subr.mxu0 0.0
    %5586 = vmatpush2.msra.mxu0 0.0
    %5587 = vmatprep.subr.mxu0 0.0
    %5588 = vmatpush2.msra.mxu0 0.0
    %5589 = vmatprep.subr.mxu0 0.0
    %5590 = vmatpush2.msra.mxu0 0.0
    %5591 = vmatprep.subr.mxu0 0.0
    %5592 = vmatpush2.msra.mxu0 0.0
    %5593 = vmatprep.subr.mxu0 0.0
    %5594 = vmatpush2.msra.mxu0 0.0
    %5595 = vmatprep.subr.mxu0 0.0
    %5596 = vmatpush2.msra.mxu0 0.0
    %5597 = vmatprep.subr.mxu0 0.0
    %5598 = vmatpush2.msra.mxu0 0.0
    %5599 = vmatprep.mubr.f32.mxu0 0.0
    %5600 = vmatmul.mubr.f32.gmra.mxu0 %v5530
    %v5601 = vpop.f32.mrf.mxu0
    %v5602 = vadd.f32 %v5528, %v5601
    %v5603 = vpop.f32.mrf.mxu0
    %5604 = vmatprep.mubr.f32.mxu0 0.0
    %5605 = vmatmul.mubr.f32.gmra.mxu0 %v5533
    %v5606 = vpop.f32.mrf.mxu0
    %v5607 = vadd.f32 %v5528, %v5606
    %v5608 = vpop.f32.mrf.mxu0
    %5609 = vdwg.mxu0
    %v5610 = vadd.f32 %v2988, %v5602
    %v5611 = vadd.f32 %v2989, %v5607
    %v5612 = vsel %vm48, %v5610, 0.0
    %5613 = vadd.xlane.f32.xlu0 %v5612
    %v5614 = vpop.xlane.xlu0 %5613
    %v5615 = vsel %vm48, %v5611, 0.0
    %5616 = vadd.xlane.f32.xlu0 %v5615
    %v5617 = vpop.xlane.xlu0 %5616
    %v5618 = vmul.f32 %v5614, %v55
    %v5619 = vmul.f32 %v5617, %v55
    %v5620 = vsub.f32 %v5610, %v5618
    %v5621 = vsub.f32 %v5611, %v5619
    %v5622 = vmul.f32 %v5620, %v5620
    %v5623 = vmul.f32 %v5621, %v5621
    %v5624 = vsel %vm48, %v5622, 0.0
    %5625 = vadd.xlane.f32.xlu0 %v5624
    %v5626 = vpop.xlane.xlu0 %5625
    %v5627 = vsel %vm48, %v5623, 0.0
    %5628 = vadd.xlane.f32.xlu0 %v5627
    %v5629 = vpop.xlane.xlu0 %5628
    %v5630 = vmul.f32 %v5626, %v55
    %v5631 = vmul.f32 %v5629, %v55
    %v5632 = vadd.f32 %v5630, 1e-12
    %v5633 = vadd.f32 %v5631, 1e-12
    %v5634 = vrsqrt.pop %v5632
    %v5635 = vrsqrt.pop %v5633
    %v5636 = vmul.f32 %v5620, %v5634
    %v5637 = vmul.f32 %v5621, %v5635
    %v5638 = vlaneseq
    %v5639 = vshrl.u32 %v5638, 7
    %v5640 = vsub.s32 1, %v5639
    %v5641 = vrot.slane %v2991, %v5640
    %v5642 = vmul.f32 %v5636, %v5641
    %v5643 = vmul.f32 %v5637, %v5641
    %v5644 = vlaneseq
    %v5645 = vshrl.u32 %v5644, 7
    %v5646 = vsub.s32 2, %v5645
    %v5647 = vrot.slane %v2991, %v5646
    %v5648 = vadd.f32 %v5642, %v5647
    %v5649 = vadd.f32 %v5643, %v5647
    %s5650 = scalar_lea.vmem %s7, 32
    %v5651 = vld [vmem:[%s5650] sm:$0xff]
    %v5652 = vld [vmem:[%s5650 + $0x8] sm:$0xff]
    %v5653 = vld [vmem:[%s5650 + $0x10] sm:$0xff]
    %v5654 = vld [vmem:[%s5650 + $0x18] sm:$0xff]
    %s5655 = scalar_lea.vmem %s8, 1
    %v5656 = vld [vmem:[%s5655] sm:$0x1]
    %v5658 = vlaneseq
    %v5659 = vshrl.u32 %v5658, 7
    %v5660 = vsub.s32 0, %v5659
    %v5661 = vrot.slane %v5656, %v5660
    %v5664 = vsel %vm48, %v5648, 0
    %v5667 = vsel %vm48, %v5649, 0
    %5669 = vmatprep.subr.mxu0 0.0
    %5670 = vmatpush1.msra.mxu0 0.0
    %5671 = vmatprep.subr.mxu0 0.0
    %5672 = vmatpush1.msra.mxu0 0.0
    %5673 = vmatprep.subr.mxu0 0.0
    %5674 = vmatpush1.msra.mxu0 0.0
    %5675 = vmatprep.subr.mxu0 0.0
    %5676 = vmatpush1.msra.mxu0 0.0
    %5677 = vmatprep.subr.mxu0 0.0
    %5678 = vmatpush1.msra.mxu0 0.0
    %5679 = vmatprep.subr.mxu0 0.0
    %5680 = vmatpush1.msra.mxu0 0.0
    %5681 = vmatprep.subr.mxu0 0.0
    %5682 = vmatpush1.msra.mxu0 0.0
    %5683 = vmatprep.subr.mxu0 0.0
    %5684 = vmatpush1.msra.mxu0 0.0
    %5685 = vmatprep.subr.mxu0 0.0
    %5686 = vmatpush1.msra.mxu0 0.0
    %5687 = vmatprep.subr.mxu0 0.0
    %5688 = vmatpush1.msra.mxu0 0.0
    %5689 = vmatprep.subr.mxu0 0.0
    %5690 = vmatpush1.msra.mxu0 0.0
    %5691 = vmatprep.subr.mxu0 0.0
    %5692 = vmatpush1.msra.mxu0 0.0
    %5693 = vmatprep.subr.mxu0 0.0
    %5694 = vmatpush1.msra.mxu0 %v5654
    %5695 = vmatprep.subr.mxu0 0.0
    %5696 = vmatpush1.msra.mxu0 %v5653
    %5697 = vmatprep.subr.mxu0 0.0
    %5698 = vmatpush1.msra.mxu0 %v5652
    %5699 = vmatprep.subr.mxu0 0.0
    %5700 = vmatpush1.msra.mxu0 %v5651
    %5701 = vmatprep.subr.mxu0 0.0
    %5702 = vmatpush2.msra.mxu0 0.0
    %5703 = vmatprep.subr.mxu0 0.0
    %5704 = vmatpush2.msra.mxu0 0.0
    %5705 = vmatprep.subr.mxu0 0.0
    %5706 = vmatpush2.msra.mxu0 0.0
    %5707 = vmatprep.subr.mxu0 0.0
    %5708 = vmatpush2.msra.mxu0 0.0
    %5709 = vmatprep.subr.mxu0 0.0
    %5710 = vmatpush2.msra.mxu0 0.0
    %5711 = vmatprep.subr.mxu0 0.0
    %5712 = vmatpush2.msra.mxu0 0.0
    %5713 = vmatprep.subr.mxu0 0.0
    %5714 = vmatpush2.msra.mxu0 0.0
    %5715 = vmatprep.subr.mxu0 0.0
    %5716 = vmatpush2.msra.mxu0 0.0
    %5717 = vmatprep.subr.mxu0 0.0
    %5718 = vmatpush2.msra.mxu0 0.0
    %5719 = vmatprep.subr.mxu0 0.0
    %5720 = vmatpush2.msra.mxu0 0.0
    %5721 = vmatprep.subr.mxu0 0.0
    %5722 = vmatpush2.msra.mxu0 0.0
    %5723 = vmatprep.subr.mxu0 0.0
    %5724 = vmatpush2.msra.mxu0 0.0
    %5725 = vmatprep.subr.mxu0 0.0
    %5726 = vmatpush2.msra.mxu0 0.0
    %5727 = vmatprep.subr.mxu0 0.0
    %5728 = vmatpush2.msra.mxu0 0.0
    %5729 = vmatprep.subr.mxu0 0.0
    %5730 = vmatpush2.msra.mxu0 0.0
    %5731 = vmatprep.subr.mxu0 0.0
    %5732 = vmatpush2.msra.mxu0 0.0
    %5733 = vmatprep.mubr.f32.mxu0 0.0
    %5734 = vmatmul.mubr.f32.gmra.mxu0 %v5664
    %v5735 = vpop.f32.mrf.mxu0
    %v5736 = vadd.f32 %v5661, %v5735
    %v5737 = vpop.f32.mrf.mxu0
    %5738 = vmatprep.mubr.f32.mxu0 0.0
    %5739 = vmatmul.mubr.f32.gmra.mxu0 %v5667
    %v5740 = vpop.f32.mrf.mxu0
    %v5741 = vadd.f32 %v5661, %v5740
    %v5742 = vpop.f32.mrf.mxu0
    %5743 = vdwg.mxu0
    %v5744 = vmul.f32 %v5736, %v5736
    %v5745 = vmul.f32 %v5741, %v5741
    %v5746 = vmul.f32 %v5736, %v5744
    %v5747 = vmul.f32 %v5741, %v5745
    %v5748 = vmul.f32 %v5746, 0.044715
    %v5749 = vmul.f32 %v5747, 0.044715
    %v5750 = vadd.f32 %v5736, %v5748
    %v5751 = vadd.f32 %v5741, %v5749
    %v5752 = vmul.f32 %v5750, 0.7978846
    %v5753 = vmul.f32 %v5751, 0.7978846
    %v5754 = vtanh.pop %v5752
    %v5755 = vtanh.pop %v5753
    %v5756 = vadd.f32 %v5754, 1.0
    %v5757 = vadd.f32 %v5755, 1.0
    %v5758 = vmul.f32 %v5756, 0.5
    %v5759 = vmul.f32 %v5757, 0.5
    %v5760 = vmul.f32 %v5736, %v5758
    %v5761 = vmul.f32 %v5741, %v5759
    %s5762 = scalar_lea.vmem %s9, 64
    %v5763 = vld [vmem:[%s5762] sm:$0xff]
    %v5764 = vld [vmem:[%s5762 + $0x8] sm:$0xff]
    %v5765 = vld [vmem:[%s5762 + $0x10] sm:$0xff]
    %v5766 = vld [vmem:[%s5762 + $0x18] sm:$0xff]
    %v5767 = vld [vmem:[%s5762 + $0x20] sm:$0xff]
    %v5768 = vld [vmem:[%s5762 + $0x28] sm:$0xff]
    %v5769 = vld [vmem:[%s5762 + $0x30] sm:$0xff]
    %v5770 = vld [vmem:[%s5762 + $0x38] sm:$0xff]
    %v5771 = vlaneseq
    %v5772 = vshrl.u32 %v5771, 7
    %v5773 = vsub.s32 3, %v5772
    %v5774 = vrot.slane %v2991, %v5773
    %v5776 = vsel %vm2868, %v5760, 0
    %v5779 = vsel %vm2868, %v5761, 0
    %5781 = vmatprep.subr.mxu0 0.0
    %5782 = vmatpush1.msra.mxu0 0.0
    %5783 = vmatprep.subr.mxu0 0.0
    %5784 = vmatpush1.msra.mxu0 0.0
    %5785 = vmatprep.subr.mxu0 0.0
    %5786 = vmatpush1.msra.mxu0 0.0
    %5787 = vmatprep.subr.mxu0 0.0
    %5788 = vmatpush1.msra.mxu0 0.0
    %5789 = vmatprep.subr.mxu0 0.0
    %5790 = vmatpush1.msra.mxu0 0.0
    %5791 = vmatprep.subr.mxu0 0.0
    %5792 = vmatpush1.msra.mxu0 0.0
    %5793 = vmatprep.subr.mxu0 0.0
    %5794 = vmatpush1.msra.mxu0 0.0
    %5795 = vmatprep.subr.mxu0 0.0
    %5796 = vmatpush1.msra.mxu0 0.0
    %5797 = vmatprep.subr.mxu0 0.0
    %5798 = vmatpush1.msra.mxu0 %v5770
    %5799 = vmatprep.subr.mxu0 0.0
    %5800 = vmatpush1.msra.mxu0 %v5769
    %5801 = vmatprep.subr.mxu0 0.0
    %5802 = vmatpush1.msra.mxu0 %v5768
    %5803 = vmatprep.subr.mxu0 0.0
    %5804 = vmatpush1.msra.mxu0 %v5767
    %5805 = vmatprep.subr.mxu0 0.0
    %5806 = vmatpush1.msra.mxu0 %v5766
    %5807 = vmatprep.subr.mxu0 0.0
    %5808 = vmatpush1.msra.mxu0 %v5765
    %5809 = vmatprep.subr.mxu0 0.0
    %5810 = vmatpush1.msra.mxu0 %v5764
    %5811 = vmatprep.subr.mxu0 0.0
    %5812 = vmatpush1.msra.mxu0 %v5763
    %5813 = vmatprep.subr.mxu0 0.0
    %5814 = vmatpush2.msra.mxu0 0.0
    %5815 = vmatprep.subr.mxu0 0.0
    %5816 = vmatpush2.msra.mxu0 0.0
    %5817 = vmatprep.subr.mxu0 0.0
    %5818 = vmatpush2.msra.mxu0 0.0
    %5819 = vmatprep.subr.mxu0 0.0
    %5820 = vmatpush2.msra.mxu0 0.0
    %5821 = vmatprep.subr.mxu0 0.0
    %5822 = vmatpush2.msra.mxu0 0.0
    %5823 = vmatprep.subr.mxu0 0.0
    %5824 = vmatpush2.msra.mxu0 0.0
    %5825 = vmatprep.subr.mxu0 0.0
    %5826 = vmatpush2.msra.mxu0 0.0
    %5827 = vmatprep.subr.mxu0 0.0
    %5828 = vmatpush2.msra.mxu0 0.0
    %5829 = vmatprep.subr.mxu0 0.0
    %5830 = vmatpush2.msra.mxu0 0.0
    %5831 = vmatprep.subr.mxu0 0.0
    %5832 = vmatpush2.msra.mxu0 0.0
    %5833 = vmatprep.subr.mxu0 0.0
    %5834 = vmatpush2.msra.mxu0 0.0
    %5835 = vmatprep.subr.mxu0 0.0
    %5836 = vmatpush2.msra.mxu0 0.0
    %5837 = vmatprep.subr.mxu0 0.0
    %5838 = vmatpush2.msra.mxu0 0.0
    %5839 = vmatprep.subr.mxu0 0.0
    %5840 = vmatpush2.msra.mxu0 0.0
    %5841 = vmatprep.subr.mxu0 0.0
    %5842 = vmatpush2.msra.mxu0 0.0
    %5843 = vmatprep.subr.mxu0 0.0
    %5844 = vmatpush2.msra.mxu0 0.0
    %5845 = vmatprep.mubr.f32.mxu0 0.0
    %5846 = vmatmul.mubr.f32.gmra.mxu0 %v5776
    %v5847 = vpop.f32.mrf.mxu0
    %v5848 = vadd.f32 %v5774, %v5847
    %v5849 = vpop.f32.mrf.mxu0
    %5850 = vmatprep.mubr.f32.mxu0 0.0
    %5851 = vmatmul.mubr.f32.gmra.mxu0 %v5779
    %v5852 = vpop.f32.mrf.mxu0
    %v5853 = vadd.f32 %v5774, %v5852
    %v5854 = vpop.f32.mrf.mxu0
    %5855 = vdwg.mxu0
    %v5856 = vadd.f32 %v5648, %v5848
    %v5857 = vadd.f32 %v5649, %v5853
    %v5858 = vsel %vm48, %v5856, 0.0
    %5859 = vadd.xlane.f32.xlu0 %v5858
    %v5860 = vpop.xlane.xlu0 %5859
    %v5861 = vsel %vm48, %v5857, 0.0
    %5862 = vadd.xlane.f32.xlu0 %v5861
    %v5863 = vpop.xlane.xlu0 %5862
    %v5864 = vmul.f32 %v5860, %v55
    %v5865 = vmul.f32 %v5863, %v55
    %v5866 = vsub.f32 %v5856, %v5864
    %v5867 = vsub.f32 %v5857, %v5865
    %v5868 = vmul.f32 %v5866, %v5866
    %v5869 = vmul.f32 %v5867, %v5867
    %v5870 = vsel %vm48, %v5868, 0.0
    %5871 = vadd.xlane.f32.xlu0 %v5870
    %v5872 = vpop.xlane.xlu0 %5871
    %v5873 = vsel %vm48, %v5869, 0.0
    %5874 = vadd.xlane.f32.xlu0 %v5873
    %v5875 = vpop.xlane.xlu0 %5874
    %v5876 = vmul.f32 %v5872, %v55
    %v5877 = vmul.f32 %v5875, %v55
    %v5878 = vadd.f32 %v5876, 1e-12
    %v5879 = vadd.f32 %v5877, 1e-12
    %v5880 = vrsqrt.pop %v5878
    %v5881 = vrsqrt.pop %v5879
    %v5882 = vmul.f32 %v5866, %v5880
    %v5883 = vmul.f32 %v5867, %v5881
    %v5884 = vlaneseq
    %v5885 = vshrl.u32 %v5884, 7
    %v5886 = vsub.s32 4, %v5885
    %v5887 = vrot.slane %v2991, %v5886
    %v5888 = vmul.f32 %v5882, %v5887
    %v5889 = vmul.f32 %v5883, %v5887
    %v5890 = vlaneseq
    %v5891 = vshrl.u32 %v5890, 7
    %v5892 = vsub.s32 5, %v5891
    %v5893 = vrot.slane %v2991, %v5892
    %v5894 = vadd.f32 %v5888, %v5893
    %v5895 = vadd.f32 %v5889, %v5893
    %5896 = vst.msk [vmem:[#allocation2] sm:$0xff] %vm48, %v5894
    %5897 = vst.msk [vmem:[#allocation2 + $0x8] sm:$0xff] %vm48, %v5895
    %v5899 = vrot.slane %v5895, 7
    %vm5901 = vcmask 1040384
    %v5902 = vsel %vm5901, %v5894, %v5899
    %v5903 = vld [vmem:[%s10] sm:$0xff]
    %v5904 = vld [vmem:[%s10 + $0x8] sm:$0xff]
    %v5905 = vld [vmem:[%s10 + $0x10] sm:$0xff]
    %v5906 = vld [vmem:[%s10 + $0x18] sm:$0xff]
    %v5907 = vld [vmem:[%s11] sm:$0x1]
    %v5909 = vlaneseq
    %v5910 = vshrl.u32 %v5909, 7
    %v5911 = vsub.s32 0, %v5910
    %v5912 = vrot.slane %v5907, %v5911
    %v5915 = vsel %vm48, %v5902, 0
    %5917 = vmatprep.subr.mxu0 0.0
    %5918 = vmatpush1.msra.mxu0 0.0
    %5919 = vmatprep.subr.mxu0 0.0
    %5920 = vmatpush1.msra.mxu0 0.0
    %5921 = vmatprep.subr.mxu0 0.0
    %5922 = vmatpush1.msra.mxu0 0.0
    %5923 = vmatprep.subr.mxu0 0.0
    %5924 = vmatpush1.msra.mxu0 0.0
    %5925 = vmatprep.subr.mxu0 0.0
    %5926 = vmatpush1.msra.mxu0 0.0
    %5927 = vmatprep.subr.mxu0 0.0
    %5928 = vmatpush1.msra.mxu0 0.0
    %5929 = vmatprep.subr.mxu0 0.0
    %5930 = vmatpush1.msra.mxu0 0.0
    %5931 = vmatprep.subr.mxu0 0.0
    %5932 = vmatpush1.msra.mxu0 0.0
    %5933 = vmatprep.subr.mxu0 0.0
    %5934 = vmatpush1.msra.mxu0 0.0
    %5935 = vmatprep.subr.mxu0 0.0
    %5936 = vmatpush1.msra.mxu0 0.0
    %5937 = vmatprep.subr.mxu0 0.0
    %5938 = vmatpush1.msra.mxu0 0.0
    %5939 = vmatprep.subr.mxu0 0.0
    %5940 = vmatpush1.msra.mxu0 0.0
    %5941 = vmatprep.subr.mxu0 0.0
    %5942 = vmatpush1.msra.mxu0 %v5906
    %5943 = vmatprep.subr.mxu0 0.0
    %5944 = vmatpush1.msra.mxu0 %v5905
    %5945 = vmatprep.subr.mxu0 0.0
    %5946 = vmatpush1.msra.mxu0 %v5904
    %5947 = vmatprep.subr.mxu0 0.0
    %5948 = vmatpush1.msra.mxu0 %v5903
    %5949 = vmatprep.subr.mxu0 0.0
    %5950 = vmatpush2.msra.mxu0 0.0
    %5951 = vmatprep.subr.mxu0 0.0
    %5952 = vmatpush2.msra.mxu0 0.0
    %5953 = vmatprep.subr.mxu0 0.0
    %5954 = vmatpush2.msra.mxu0 0.0
    %5955 = vmatprep.subr.mxu0 0.0
    %5956 = vmatpush2.msra.mxu0 0.0
    %5957 = vmatprep.subr.mxu0 0.0
    %5958 = vmatpush2.msra.mxu0 0.0
    %5959 = vmatprep.subr.mxu0 0.0
    %5960 = vmatpush2.msra.mxu0 0.0
    %5961 = vmatprep.subr.mxu0 0.0
    %5962 = vmatpush2.msra.mxu0 0.0
    %5963 = vmatprep.subr.mxu0 0.0
    %5964 = vmatpush2.msra.mxu0 0.0
    %5965 = vmatprep.subr.mxu0 0.0
    %5966 = vmatpush2.msra.mxu0 0.0
    %5967 = vmatprep.subr.mxu0 0.0
    %5968 = vmatpush2.msra.mxu0 0.0
    %5969 = vmatprep.subr.mxu0 0.0
    %5970 = vmatpush2.msra.mxu0 0.0
    %5971 = vmatprep.subr.mxu0 0.0
    %5972 = vmatpush2.msra.mxu0 0.0
    %5973 = vmatprep.subr.mxu0 0.0
    %5974 = vmatpush2.msra.mxu0 0.0
    %5975 = vmatprep.subr.mxu0 0.0
    %5976 = vmatpush2.msra.mxu0 0.0
    %5977 = vmatprep.subr.mxu0 0.0
    %5978 = vmatpush2.msra.mxu0 0.0
    %5979 = vmatprep.subr.mxu0 0.0
    %5980 = vmatpush2.msra.mxu0 0.0
    %5981 = vmatprep.mubr.f32.mxu0 0.0
    %5982 = vmatmul.mubr.f32.gmra.mxu0 %v5915
    %v5983 = vpop.f32.mrf.mxu0
    %v5984 = vadd.f32 %v5912, %v5983
    %v5985 = vpop.f32.mrf.mxu0
    %5986 = vdwg.mxu0
    %v5987 = vtanh.pop %v5984
    %vm5988 = vcmask 254976
    %5989 = vst.msk [vmem:[#allocation4] sm:$0x3] %vm5988, %v5987
    // Predicated region
    $region50: #{bert_forward.1} parent=1 // pred_check
      _
    $region51: #{bert_forward.1} parent=1 // pred_check_branch
      %5991 = sbr.rel (0) target = $region53
    $region52: #{bert_forward.1} parent=1 // pred_region
      %s5993 = ssub.s32 256, 256
      %5994 = vsyncadd [#allocation3], %s5993
      %s5995 = sshll.u32 [#allocation2], 4
      %s5996 = int_to_ptr.vmem [resolvable:$true] %s5995
      %6001 = dma.vmem_to_hbm [thread:$0]  %s5996, 256, %s12, [#allocation3], 128, 128, 8
    $region53: #{bert_forward.1} parent=1 // pred_fallthru
      _
    // Predicated region
    $region54: #{bert_forward.1} parent=1 // pred_check
      _
    $region55: #{bert_forward.1} parent=1 // pred_check_branch
      %6003 = sbr.rel (0) target = $region57
    $region56: #{bert_forward.1} parent=1 // pred_region
      %s6005 = ssub.s32 32, 32
      %6006 = vsyncadd [#allocation5], %s6005
      %s6008 = sshll.u32 [#allocation4], 4
      %s6009 = int_to_ptr.vmem [resolvable:$true] %s6008
      %6011 = dma.vmem_to_hbm [thread:$0]  %s6009, 32, %s13, [#allocation5]
    $region57: #{bert_forward.1} parent=1 // pred_fallthru
      _
    // Predicated region
    $region58: #{bert_forward.1} parent=1 // pred_check
      _
    $region59: #{bert_forward.1} parent=1 // pred_check_branch
      %6013 = sbr.rel (0) target = $region61
    $region60: #{bert_forward.1} parent=1 // pred_region
      %6014 = dma.done [#allocation3], 256
    $region61: #{bert_forward.1} parent=1 // pred_fallthru
      _
    // Predicated region
    $region62: #{bert_forward.1} parent=1 // pred_check
      _
    $region63: #{bert_forward.1} parent=1 // pred_check_branch
      %6016 = sbr.rel (0) target = $region65
    $region64: #{bert_forward.1} parent=1 // pred_region
      %6017 = dma.done [#allocation5], 32
    $region65: #{bert_forward.1} parent=1 // pred_fallthru
      _
    %6018 = vsyncpa [#allocation3], 1
    %6019 = vsyncpa [#allocation5], 1

</llo_original>
